<compile_context>
chip_gen: v7x
topology: tpu7x:2x2x1
jax: 0.10.0
libtpu: 0.0.40
codegen_flags: <defaults>
</compile_context>

<pallas_src>
import functools

import numpy as np

import jax
import jax.numpy as jnp
from jax.experimental import pallas as pl
from jax.experimental.pallas import tpu as pltpu


def _round_up(x, m):
    return (x + m - 1) // m * m


def _reflect_index(idx, n):
    """PyTorch 'reflect' (no edge repeat) index map, clipped for safety."""
    idx = np.abs(idx)
    idx = np.where(idx >= n, 2 * (n - 1) - idx, idx)
    return np.clip(idx, 0, n - 1)


def _disc_conv_kernel(x_ref, w_ref, b_ref, m_ref, o_ref, *scratch, K, stride,
                      Wq, Qin_p, Qout_p, tile, C, Cs, Cout, inv_count, do_norm,
                      act):
    # x_ref: (1, C, s*s*Qin_p) bf16   phase-concatenated, flattened input planes
    # w_ref: (Coutp, K*K*Cs)   bf16   folded weight, tap-major / channel-minor
    # b_ref: (Coutp, 1)        f32
    # m_ref: (1, Qout_p)       f32    1.0 on valid output positions
    # o_ref: (1, Cout, Qout_p)
    if do_norm:
        im_ref, pre_ref = scratch
    else:
        (im_ref,) = scratch

    Coutp = w_ref.shape[0]
    num_tiles = Qout_p // tile

    if Cs != C:
        # Zero once so padded channel rows contribute exactly 0 (their folded
        # weights are 0, but uninitialized VMEM could hold NaN/Inf).
        im_ref[...] = jnp.zeros_like(im_ref)

    tot_sum = jnp.zeros((Coutp, 1), jnp.float32)
    tot_sq = jnp.zeros((Coutp, 1), jnp.float32)

    # TODO(synk): for very large resolutions move this tile loop onto a
    # "parallel" grid axis with a split stats/normalize pass (review #4), and
    # add a Cout tile loop for 512-channel layers; the static unroll below is
    # sized for whole-image-in-VMEM workloads.
    for t in range(num_tiles):
        q0 = t * tile
        # VMEM im2col: stack the K*K shifted views of this P tile.
        for kh in range(K):
            for kw in range(K):
                k_idx = kh * K + kw
                phase = (kh % stride) * stride + (kw % stride)
                shift = (kh // stride) * Wq + (kw // stride)
                im_ref[pl.ds(k_idx * Cs, C), :] = x_ref[
                    0, :, pl.ds(phase * Qin_p + q0 + shift, tile)]

        # Single deep MXU contraction: (Coutp, K*K*Cs) x (K*K*Cs, tile).
        res = jnp.dot(w_ref[...], im_ref[...],
                      preferred_element_type=jnp.float32)
        res = res + b_ref[...]

        if do_norm:
            m = m_ref[:, pl.ds(q0, tile)]                       # (1, tile)
            sm = res * m
            tot_sum = tot_sum + jnp.sum(sm, axis=1, keepdims=True)
            tot_sq = tot_sq + jnp.sum(sm * res, axis=1, keepdims=True)
            pre_ref[:, pl.ds(q0, tile)] = res
        else:
            if act == "leaky":
                res = jnp.where(res >= 0.0, res, 0.2 * res)
            elif act == "sigmoid":
                res = 0.5 * (jnp.tanh(0.5 * res) + 1.0)         # == sigmoid
            o_ref[0, :, pl.ds(q0, tile)] = res[:Cout].astype(o_ref.dtype)

    if do_norm:
        # InstanceNorm2d(affine=False), eps=1e-5, biased variance over the
        # OH*OW valid positions.  Single-pass f32 stats; variance clamped >= 0.
        mean = tot_sum * inv_count
        var = jnp.maximum(tot_sq * inv_count - mean * mean, 0.0)
        scale = jax.lax.rsqrt(var + 1e-5)
        for t in range(num_tiles):
            q0 = t * tile
            v = (pre_ref[:, pl.ds(q0, tile)] - mean) * scale
            if act == "leaky":
                v = jnp.where(v >= 0.0, v, 0.2 * v)
            o_ref[0, :, pl.ds(q0, tile)] = v[:Cout].astype(o_ref.dtype)


def fused_conv_layer(data, h_in, w_in, pitch_in, weight, bias, *, stride,
                     padding, do_norm, act, out_dtype=jnp.bfloat16):
    """Conv2d(reflect) [+ InstanceNorm2d] + activation, one pallas_call.

    `data` is the flat lane-padded carrier (N, C, P): valid pixel (h, w) lives
    at flat index h*pitch_in + w for h < h_in, w < w_in.  Returns the next
    carrier (data', OH, OW, Wq).
    """
    N, C, _ = data.shape
    Cout, Cin, K, _ = weight.shape
    assert Cin == C
    s = stride
    assert padding < h_in and padding < w_in      # reflect-pad validity

    Hp, Wp = h_in + 2 * padding, w_in + 2 * padding
    OH = (Hp - K) // s + 1
    OW = (Wp - K) // s + 1
    D = -(-K // s)                     # taps per axis sharing a stride phase
    Hq = OH + D - 1
    Wq = OW + D - 1
    if OW >= 128:                      # keep dh*Wq tap shifts lane-aligned
        Wq = _round_up(Wq, 128)

    Qout = OH * Wq
    Qout_p = _round_up(Qout, 128)
    tile = 128
    for cand in (512, 256):
        if Qout_p % cand == 0:
            tile = cand
            break
    shift_max = (D - 1) * Wq + (D - 1)
    Qin_p = _round_up(Qout_p + shift_max, 128)
    SS = s * s

    # --- glue: crop + reflect-pad + stride-phase split + lane pad as ONE gather
    q = np.arange(Qin_p)
    ti, tj = q // Wq, q % Wq
    idx = []
    for ph in range(s):
        for pw in range(s):
            hs = _reflect_index(ph + s * ti - padding, h_in)
            ws = _reflect_index(pw + s * tj - padding, w_in)
            idx.append(hs * pitch_in + ws)
    idx = jnp.asarray(np.concatenate(idx).astype(np.int32))       # (SS*Qin_p,)
    xflat = jnp.take(data, idx, axis=-1).astype(jnp.bfloat16)     # (N, C, SS*Qin_p)

    # --- folded weight (Coutp, K*K*Cs), tap-major / channel-minor
    Cs = _round_up(C, 8)
    Coutp = _round_up(Cout, 8)
    w_r = jnp.transpose(weight, (0, 2, 3, 1)).reshape(Cout, K * K, C)
    if Cs != C:
        w_r = jnp.pad(w_r, ((0, 0), (0, 0), (0, Cs - C)))
    w_fold = w_r.reshape(Cout, K * K * Cs)
    b_col = bias.reshape(Cout, 1)
    if Coutp != Cout:
        w_fold = jnp.pad(w_fold, ((0, Coutp - Cout), (0, 0)))
        b_col = jnp.pad(b_col, ((0, Coutp - Cout), (0, 0)))
    w_fold = w_fold.astype(jnp.bfloat16)
    b_col = b_col.astype(jnp.float32)

    # Valid-position mask for the masked InstanceNorm statistics.
    qo = np.arange(Qout_p)
    mask = jnp.asarray((((qo % Wq) < OW) & (qo < Qout)).astype(np.float32))[None, :]

    kernel = functools.partial(
        _disc_conv_kernel, K=K, stride=s, Wq=Wq, Qin_p=Qin_p, Qout_p=Qout_p,
        tile=tile, C=C, Cs=Cs, Cout=Cout, inv_count=1.0 / float(OH * OW),
        do_norm=do_norm, act=act)

    scratch = [pltpu.VMEM((K * K * Cs, tile), jnp.bfloat16)]
    if do_norm:
        scratch.append(pltpu.VMEM((Coutp, Qout_p), jnp.float32))

    # Per-layer VMEM budget from the actual block sizes (double-buffered
    # operands + scratch) with generous headroom, capped for v7x's 64 MiB.
    out_bytes = 2 if out_dtype == jnp.bfloat16 else 4
    need = (2 * (C * SS * Qin_p * 2 + Cout * Qout_p * out_bytes
                 + Coutp * K * K * Cs * 2 + Coutp * 4 + Qout_p * 4)
            + K * K * Cs * tile * 2
            + (Coutp * Qout_p * 4 if do_norm else 0))
    vmem_limit = int(min(96 * 2**20, max(32 * 2**20, 2 * need + (16 << 20))))

    out = pl.pallas_call(
        kernel,
        out_shape=jax.ShapeDtypeStruct((N, Cout, Qout_p), out_dtype),
        grid_spec=pltpu.PrefetchScalarGridSpec(
            num_scalar_prefetch=0,
            grid=(N,),
            in_specs=[
                pl.BlockSpec((1, C, SS * Qin_p), lambda n: (n, 0, 0)),
                pl.BlockSpec((Coutp, K * K * Cs), lambda n: (0, 0)),
                pl.BlockSpec((Coutp, 1), lambda n: (0, 0)),
                pl.BlockSpec((1, Qout_p), lambda n: (0, 0)),
            ],
            out_specs=pl.BlockSpec((1, Cout, Qout_p), lambda n: (n, 0, 0)),
            scratch_shapes=scratch,
        ),
        compiler_params=pltpu.CompilerParams(
            dimension_semantics=("parallel",),
            vmem_limit_bytes=vmem_limit,
        ),
    )(xflat, w_fold, b_col, mask)

    return out, OH, OW, Wq


def init_discriminator_params(key, img_ch=3, num_hid_channels=64):
    """Deterministic synthetic init (shapes match the PyTorch module)."""
    nh = num_hid_channels
    chans = [(img_ch, nh), (nh, nh * 2), (nh * 2, nh * 4), (nh * 4, nh * 8), (nh * 8, 1)]
    params = []
    keys = jax.random.split(key, len(chans))
    for k_, (cin, cout) in zip(keys, chans):
        kw_, kb_ = jax.random.split(k_)
        w = 0.02 * jax.random.normal(kw_, (cout, cin, 4, 4), jnp.float32)
        b = 0.01 * jax.random.normal(kb_, (cout,), jnp.float32)
        params.append((w, b))
    return params


def discriminator_forward(params, x):
    # Matches nn.Sequential in Discriminator.__init__.
    N, C, H, W = x.shape
    data = x.reshape(N, C, H * W).astype(jnp.bfloat16)   # flat carrier
    h, w, pitch = H, W, W

    layer_specs = [
        dict(stride=2, padding=1, do_norm=False, act="leaky", out_dtype=jnp.bfloat16),
        dict(stride=2, padding=1, do_norm=True, act="leaky", out_dtype=jnp.bfloat16),
        dict(stride=2, padding=1, do_norm=True, act="leaky", out_dtype=jnp.bfloat16),
        dict(stride=1, padding=1, do_norm=True, act="leaky", out_dtype=jnp.bfloat16),
        dict(stride=1, padding=1, do_norm=False, act="sigmoid", out_dtype=jnp.float32),
    ]
    # TODO(synk): fuse the 1-channel head + sigmoid into the previous layer's
    # kernel epilogue (review #6) to drop one launch + one HBM round trip of
    # the widest activation.
    for (wgt, b), spec in zip(params, layer_specs):
        data, h, w, pitch = fused_conv_layer(data, h, w, pitch, wgt, b, **spec)

    Cout = data.shape[1]
    out = data[:, :, :h * pitch].reshape(N, Cout, h, pitch)[:, :, :, :w]
    return out


if __name__ == "__main__":
    key = jax.random.PRNGKey(0)
    k_params, k_input = jax.random.split(key)

    # Small shapes: batch=2, img_ch=3, hidden=8, spatial=32.
    IMG_CH, NUM_HID, H = 3, 8, 32
    params = init_discriminator_params(k_params, img_ch=IMG_CH, num_hid_channels=NUM_HID)
    x = jax.random.normal(k_input, (2, IMG_CH, H, H), jnp.float32)

    fwd = jax.jit(discriminator_forward)
    out = jax.block_until_ready(fwd(params, x))

    assert out.shape == (2, 1, 2, 2), out.shape
    assert out.dtype == jnp.float32
    assert bool(jnp.all((out >= 0.0) & (out <= 1.0)))  # sigmoid range, no NaN
    print("KERNEL_OK")
</pallas_src>

<mosaic_0001>
module attributes {stable_mosaic.version = 11 : i64} {
  func.func @_disc_conv_kernel(%arg0: i32, %arg1: memref<1x3x2048xbf16, #tpu.memory_space<vmem>>, %arg2: memref<8x128xbf16, #tpu.memory_space<vmem>>, %arg3: memref<8x1xf32, #tpu.memory_space<vmem>>, %arg4: memref<1x384xf32, #tpu.memory_space<vmem>>, %arg5: memref<1x8x384xbf16, #tpu.memory_space<vmem>>, %arg6: memref<128x128xbf16, #tpu.memory_space<vmem>>) attributes {dimension_semantics = [#tpu.dimension_semantics<parallel>], iteration_bounds = array<i64: 2>, scalar_prefetch = 0 : i64, scratch_operands = 1 : i64, tpu.core_type = #tpu.core_type<tc>, window_params = [{transform_indices = @transform_0, window_bounds = array<i64: 1, 3, 2048>}, {pipeline_mode = #tpu.pipeline_mode<synchronous>, transform_indices = @transform_1, window_bounds = array<i64: 8, 128>}, {pipeline_mode = #tpu.pipeline_mode<synchronous>, transform_indices = @transform_2, window_bounds = array<i64: 8, 1>}, {pipeline_mode = #tpu.pipeline_mode<synchronous>, transform_indices = @transform_3, window_bounds = array<i64: 1, 384>}, {transform_indices = @transform_4, window_bounds = array<i64: 1, 8, 384>}]} {
    %cst = arith.constant 0.000000e+00 : bf16
    %0 = vector.broadcast %cst : bf16 to vector<128x128xbf16>
    %c0 = arith.constant 0 : index
    %c0_0 = arith.constant 0 : index
    %1 = vector.load %arg6[%c0, %c0_0] : memref<128x128xbf16, #tpu.memory_space<vmem>>, vector<128x128xbf16>
    tpu.vector_store %arg6[%c0, %c0_0], %0 {strides = array<i32>} : memref<128x128xbf16, #tpu.memory_space<vmem>>, vector<128x128xbf16>,
    %c0_1 = arith.constant 0 : index
    %c0_2 = arith.constant 0 : index
    %c0_3 = arith.constant 0 : index
    %2 = vector.load %arg1[%c0_1, %c0_2, %c0_3] : memref<1x3x2048xbf16, #tpu.memory_space<vmem>>, vector<1x3x128xbf16>
    %3 = vector.shape_cast %2 : vector<1x3x128xbf16> to vector<3x128xbf16>
    %c0_4 = arith.constant 0 : index
    %c0_5 = arith.constant 0 : index
    %4 = vector.load %arg6[%c0_4, %c0_5] : memref<128x128xbf16, #tpu.memory_space<vmem>>, vector<3x128xbf16>
    tpu.vector_store %arg6[%c0_4, %c0_5], %3 {strides = array<i32>} : memref<128x128xbf16, #tpu.memory_space<vmem>>, vector<3x128xbf16>,
    %c0_6 = arith.constant 0 : index
    %c0_7 = arith.constant 0 : index
    %c512 = arith.constant 512 : index
    %5 = vector.load %arg1[%c0_6, %c0_7, %c512] : memref<1x3x2048xbf16, #tpu.memory_space<vmem>>, vector<1x3x128xbf16>
    %6 = vector.shape_cast %5 : vector<1x3x128xbf16> to vector<3x128xbf16>
    %c8 = arith.constant 8 : index
    %c0_8 = arith.constant 0 : index
    %7 = vector.load %arg6[%c8, %c0_8] : memref<128x128xbf16, #tpu.memory_space<vmem>>, vector<3x128xbf16>
    tpu.vector_store %arg6[%c8, %c0_8], %6 {strides = array<i32>} : memref<128x128xbf16, #tpu.memory_space<vmem>>, vector<3x128xbf16>,
    %c0_9 = arith.constant 0 : index
    %c0_10 = arith.constant 0 : index
    %c1 = arith.constant 1 : index
    %8 = vector.load %arg1[%c0_9, %c0_10, %c1] : memref<1x3x2048xbf16, #tpu.memory_space<vmem>>, vector<1x3x128xbf16>
    %9 = vector.shape_cast %8 : vector<1x3x128xbf16> to vector<3x128xbf16>
    %c16 = arith.constant 16 : index
    %c0_11 = arith.constant 0 : index
    %10 = vector.load %arg6[%c16, %c0_11] : memref<128x128xbf16, #tpu.memory_space<vmem>>, vector<3x128xbf16>
    tpu.vector_store %arg6[%c16, %c0_11], %9 {strides = array<i32>} : memref<128x128xbf16, #tpu.memory_space<vmem>>, vector<3x128xbf16>,
    %c0_12 = arith.constant 0 : index
    %c0_13 = arith.constant 0 : index
    %c513 = arith.constant 513 : index
    %11 = vector.load %arg1[%c0_12, %c0_13, %c513] : memref<1x3x2048xbf16, #tpu.memory_space<vmem>>, vector<1x3x128xbf16>
    %12 = vector.shape_cast %11 : vector<1x3x128xbf16> to vector<3x128xbf16>
    %c24 = arith.constant 24 : index
    %c0_14 = arith.constant 0 : index
    %13 = vector.load %arg6[%c24, %c0_14] : memref<128x128xbf16, #tpu.memory_space<vmem>>, vector<3x128xbf16>
    tpu.vector_store %arg6[%c24, %c0_14], %12 {strides = array<i32>} : memref<128x128xbf16, #tpu.memory_space<vmem>>, vector<3x128xbf16>,
    %c0_15 = arith.constant 0 : index
    %c0_16 = arith.constant 0 : index
    %c1024 = arith.constant 1024 : index
    %14 = vector.load %arg1[%c0_15, %c0_16, %c1024] : memref<1x3x2048xbf16, #tpu.memory_space<vmem>>, vector<1x3x128xbf16>
    %15 = vector.shape_cast %14 : vector<1x3x128xbf16> to vector<3x128xbf16>
    %c32 = arith.constant 32 : index
    %c0_17 = arith.constant 0 : index
    %16 = vector.load %arg6[%c32, %c0_17] : memref<128x128xbf16, #tpu.memory_space<vmem>>, vector<3x128xbf16>
    tpu.vector_store %arg6[%c32, %c0_17], %15 {strides = array<i32>} : memref<128x128xbf16, #tpu.memory_space<vmem>>, vector<3x128xbf16>,
    %c0_18 = arith.constant 0 : index
    %c0_19 = arith.constant 0 : index
    %c1536 = arith.constant 1536 : index
    %17 = vector.load %arg1[%c0_18, %c0_19, %c1536] : memref<1x3x2048xbf16, #tpu.memory_space<vmem>>, vector<1x3x128xbf16>
    %18 = vector.shape_cast %17 : vector<1x3x128xbf16> to vector<3x128xbf16>
    %c40 = arith.constant 40 : index
    %c0_20 = arith.constant 0 : index
    %19 = vector.load %arg6[%c40, %c0_20] : memref<128x128xbf16, #tpu.memory_space<vmem>>, vector<3x128xbf16>
    tpu.vector_store %arg6[%c40, %c0_20], %18 {strides = array<i32>} : memref<128x128xbf16, #tpu.memory_space<vmem>>, vector<3x128xbf16>,
    %c0_21 = arith.constant 0 : index
    %c0_22 = arith.constant 0 : index
    %c1025 = arith.constant 1025 : index
    %20 = vector.load %arg1[%c0_21, %c0_22, %c1025] : memref<1x3x2048xbf16, #tpu.memory_space<vmem>>, vector<1x3x128xbf16>
    %21 = vector.shape_cast %20 : vector<1x3x128xbf16> to vector<3x128xbf16>
    %c48 = arith.constant 48 : index
    %c0_23 = arith.constant 0 : index
    %22 = vector.load %arg6[%c48, %c0_23] : memref<128x128xbf16, #tpu.memory_space<vmem>>, vector<3x128xbf16>
    tpu.vector_store %arg6[%c48, %c0_23], %21 {strides = array<i32>} : memref<128x128xbf16, #tpu.memory_space<vmem>>, vector<3x128xbf16>,
    %c0_24 = arith.constant 0 : index
    %c0_25 = arith.constant 0 : index
    %c1537 = arith.constant 1537 : index
    %23 = vector.load %arg1[%c0_24, %c0_25, %c1537] : memref<1x3x2048xbf16, #tpu.memory_space<vmem>>, vector<1x3x128xbf16>
    %24 = vector.shape_cast %23 : vector<1x3x128xbf16> to vector<3x128xbf16>
    %c56 = arith.constant 56 : index
    %c0_26 = arith.constant 0 : index
    %25 = vector.load %arg6[%c56, %c0_26] : memref<128x128xbf16, #tpu.memory_space<vmem>>, vector<3x128xbf16>
    tpu.vector_store %arg6[%c56, %c0_26], %24 {strides = array<i32>} : memref<128x128xbf16, #tpu.memory_space<vmem>>, vector<3x128xbf16>,
    %c0_27 = arith.constant 0 : index
    %c0_28 = arith.constant 0 : index
    %c17 = arith.constant 17 : index
    %26 = vector.load %arg1[%c0_27, %c0_28, %c17] : memref<1x3x2048xbf16, #tpu.memory_space<vmem>>, vector<1x3x128xbf16>
    %27 = vector.shape_cast %26 : vector<1x3x128xbf16> to vector<3x128xbf16>
    %c64 = arith.constant 64 : index
    %c0_29 = arith.constant 0 : index
    %28 = vector.load %arg6[%c64, %c0_29] : memref<128x128xbf16, #tpu.memory_space<vmem>>, vector<3x128xbf16>
    tpu.vector_store %arg6[%c64, %c0_29], %27 {strides = array<i32>} : memref<128x128xbf16, #tpu.memory_space<vmem>>, vector<3x128xbf16>,
    %c0_30 = arith.constant 0 : index
    %c0_31 = arith.constant 0 : index
    %c529 = arith.constant 529 : index
    %29 = vector.load %arg1[%c0_30, %c0_31, %c529] : memref<1x3x2048xbf16, #tpu.memory_space<vmem>>, vector<1x3x128xbf16>
    %30 = vector.shape_cast %29 : vector<1x3x128xbf16> to vector<3x128xbf16>
    %c72 = arith.constant 72 : index
    %c0_32 = arith.constant 0 : index
    %31 = vector.load %arg6[%c72, %c0_32] : memref<128x128xbf16, #tpu.memory_space<vmem>>, vector<3x128xbf16>
    tpu.vector_store %arg6[%c72, %c0_32], %30 {strides = array<i32>} : memref<128x128xbf16, #tpu.memory_space<vmem>>, vector<3x128xbf16>,
    %c0_33 = arith.constant 0 : index
    %c0_34 = arith.constant 0 : index
    %c18 = arith.constant 18 : index
    %32 = vector.load %arg1[%c0_33, %c0_34, %c18] : memref<1x3x2048xbf16, #tpu.memory_space<vmem>>, vector<1x3x128xbf16>
    %33 = vector.shape_cast %32 : vector<1x3x128xbf16> to vector<3x128xbf16>
    %c80 = arith.constant 80 : index
    %c0_35 = arith.constant 0 : index
    %34 = vector.load %arg6[%c80, %c0_35] : memref<128x128xbf16, #tpu.memory_space<vmem>>, vector<3x128xbf16>
    tpu.vector_store %arg6[%c80, %c0_35], %33 {strides = array<i32>} : memref<128x128xbf16, #tpu.memory_space<vmem>>, vector<3x128xbf16>,
    %c0_36 = arith.constant 0 : index
    %c0_37 = arith.constant 0 : index
    %c530 = arith.constant 530 : index
    %35 = vector.load %arg1[%c0_36, %c0_37, %c530] : memref<1x3x2048xbf16, #tpu.memory_space<vmem>>, vector<1x3x128xbf16>
    %36 = vector.shape_cast %35 : vector<1x3x128xbf16> to vector<3x128xbf16>
    %c88 = arith.constant 88 : index
    %c0_38 = arith.constant 0 : index
    %37 = vector.load %arg6[%c88, %c0_38] : memref<128x128xbf16, #tpu.memory_space<vmem>>, vector<3x128xbf16>
    tpu.vector_store %arg6[%c88, %c0_38], %36 {strides = array<i32>} : memref<128x128xbf16, #tpu.memory_space<vmem>>, vector<3x128xbf16>,
    %c0_39 = arith.constant 0 : index
    %c0_40 = arith.constant 0 : index
    %c1041 = arith.constant 1041 : index
    %38 = vector.load %arg1[%c0_39, %c0_40, %c1041] : memref<1x3x2048xbf16, #tpu.memory_space<vmem>>, vector<1x3x128xbf16>
    %39 = vector.shape_cast %38 : vector<1x3x128xbf16> to vector<3x128xbf16>
    %c96 = arith.constant 96 : index
    %c0_41 = arith.constant 0 : index
    %40 = vector.load %arg6[%c96, %c0_41] : memref<128x128xbf16, #tpu.memory_space<vmem>>, vector<3x128xbf16>
    tpu.vector_store %arg6[%c96, %c0_41], %39 {strides = array<i32>} : memref<128x128xbf16, #tpu.memory_space<vmem>>, vector<3x128xbf16>,
    %c0_42 = arith.constant 0 : index
    %c0_43 = arith.constant 0 : index
    %c1553 = arith.constant 1553 : index
    %41 = vector.load %arg1[%c0_42, %c0_43, %c1553] : memref<1x3x2048xbf16, #tpu.memory_space<vmem>>, vector<1x3x128xbf16>
    %42 = vector.shape_cast %41 : vector<1x3x128xbf16> to vector<3x128xbf16>
    %c104 = arith.constant 104 : index
    %c0_44 = arith.constant 0 : index
    %43 = vector.load %arg6[%c104, %c0_44] : memref<128x128xbf16, #tpu.memory_space<vmem>>, vector<3x128xbf16>
    tpu.vector_store %arg6[%c104, %c0_44], %42 {strides = array<i32>} : memref<128x128xbf16, #tpu.memory_space<vmem>>, vector<3x128xbf16>,
    %c0_45 = arith.constant 0 : index
    %c0_46 = arith.constant 0 : index
    %c1042 = arith.constant 1042 : index
    %44 = vector.load %arg1[%c0_45, %c0_46, %c1042] : memref<1x3x2048xbf16, #tpu.memory_space<vmem>>, vector<1x3x128xbf16>
    %45 = vector.shape_cast %44 : vector<1x3x128xbf16> to vector<3x128xbf16>
    %c112 = arith.constant 112 : index
    %c0_47 = arith.constant 0 : index
    %46 = vector.load %arg6[%c112, %c0_47] : memref<128x128xbf16, #tpu.memory_space<vmem>>, vector<3x128xbf16>
    tpu.vector_store %arg6[%c112, %c0_47], %45 {strides = array<i32>} : memref<128x128xbf16, #tpu.memory_space<vmem>>, vector<3x128xbf16>,
    %c0_48 = arith.constant 0 : index
    %c0_49 = arith.constant 0 : index
    %c1554 = arith.constant 1554 : index
    %47 = vector.load %arg1[%c0_48, %c0_49, %c1554] : memref<1x3x2048xbf16, #tpu.memory_space<vmem>>, vector<1x3x128xbf16>
    %48 = vector.shape_cast %47 : vector<1x3x128xbf16> to vector<3x128xbf16>
    %c120 = arith.constant 120 : index
    %c0_50 = arith.constant 0 : index
    %49 = vector.load %arg6[%c120, %c0_50] : memref<128x128xbf16, #tpu.memory_space<vmem>>, vector<3x128xbf16>
    tpu.vector_store %arg6[%c120, %c0_50], %48 {strides = array<i32>} : memref<128x128xbf16, #tpu.memory_space<vmem>>, vector<3x128xbf16>,
    %c0_51 = arith.constant 0 : index
    %c0_52 = arith.constant 0 : index
    %50 = vector.load %arg2[%c0_51, %c0_52] : memref<8x128xbf16, #tpu.memory_space<vmem>>, vector<8x128xbf16>
    %c0_53 = arith.constant 0 : index
    %c0_54 = arith.constant 0 : index
    %51 = vector.load %arg6[%c0_53, %c0_54] : memref<128x128xbf16, #tpu.memory_space<vmem>>, vector<128x128xbf16>
    %cst_55 = arith.constant dense<0.000000e+00> : vector<8x128xf32>
    %52 = tpu.matmul %50, %51, %cst_55 {dimension_numbers = #tpu.dot_dimension_numbers<[1], [0], [0], [1], [0, 0, 1, 1], [], []>} : vector<8x128xbf16>, vector<128x128xbf16>, vector<8x128xf32> -> vector<8x128xf32>
    %c0_56 = arith.constant 0 : index
    %c0_57 = arith.constant 0 : index
    %53 = vector.load %arg3[%c0_56, %c0_57] : memref<8x1xf32, #tpu.memory_space<vmem>>, vector<8x1xf32>
    %54 = vector.broadcast %53 : vector<8x1xf32> to vector<8x128xf32>
    %55 = arith.addf %52, %54 : vector<8x128xf32>
    %cst_58 = arith.constant 0.000000e+00 : f32
    %56 = vector.broadcast %cst_58 : f32 to vector<8x128xf32>
    %57 = arith.cmpf oge, %55, %56 : vector<8x128xf32>
    %cst_59 = arith.constant 2.000000e-01 : f32
    %58 = vector.broadcast %cst_59 : f32 to vector<8x128xf32>
    %59 = arith.mulf %58, %55 : vector<8x128xf32>
    %60 = arith.select %57, %55, %59 : vector<8x128xi1>, vector<8x128xf32>
    %61 = arith.truncf %60 : vector<8x128xf32> to vector<8x128xbf16>
    %c0_60 = arith.constant 0 : index
    %c0_61 = arith.constant 0 : index
    %c0_62 = arith.constant 0 : index
    %62 = vector.load %arg5[%c0_60, %c0_61, %c0_62] : memref<1x8x384xbf16, #tpu.memory_space<vmem>>, vector<1x8x128xbf16>
    %63 = vector.shape_cast %62 : vector<1x8x128xbf16> to vector<8x128xbf16>
    %64 = vector.shape_cast %61 : vector<8x128xbf16> to vector<1x8x128xbf16>
    tpu.vector_store %arg5[%c0_60, %c0_61, %c0_62], %64 {strides = array<i32>} : memref<1x8x384xbf16, #tpu.memory_space<vmem>>, vector<1x8x128xbf16>,
    %c0_63 = arith.constant 0 : index
    %c0_64 = arith.constant 0 : index
    %c128 = arith.constant 128 : index
    %65 = vector.load %arg1[%c0_63, %c0_64, %c128] : memref<1x3x2048xbf16, #tpu.memory_space<vmem>>, vector<1x3x128xbf16>
    %66 = vector.shape_cast %65 : vector<1x3x128xbf16> to vector<3x128xbf16>
    %c0_65 = arith.constant 0 : index
    %c0_66 = arith.constant 0 : index
    %67 = vector.load %arg6[%c0_65, %c0_66] : memref<128x128xbf16, #tpu.memory_space<vmem>>, vector<3x128xbf16>
    tpu.vector_store %arg6[%c0_65, %c0_66], %66 {strides = array<i32>} : memref<128x128xbf16, #tpu.memory_space<vmem>>, vector<3x128xbf16>,
    %c0_67 = arith.constant 0 : index
    %c0_68 = arith.constant 0 : index
    %c640 = arith.constant 640 : index
    %68 = vector.load %arg1[%c0_67, %c0_68, %c640] : memref<1x3x2048xbf16, #tpu.memory_space<vmem>>, vector<1x3x128xbf16>
    %69 = vector.shape_cast %68 : vector<1x3x128xbf16> to vector<3x128xbf16>
    %c8_69 = arith.constant 8 : index
    %c0_70 = arith.constant 0 : index
    %70 = vector.load %arg6[%c8_69, %c0_70] : memref<128x128xbf16, #tpu.memory_space<vmem>>, vector<3x128xbf16>
    tpu.vector_store %arg6[%c8_69, %c0_70], %69 {strides = array<i32>} : memref<128x128xbf16, #tpu.memory_space<vmem>>, vector<3x128xbf16>,
    %c0_71 = arith.constant 0 : index
    %c0_72 = arith.constant 0 : index
    %c129 = arith.constant 129 : index
    %71 = vector.load %arg1[%c0_71, %c0_72, %c129] : memref<1x3x2048xbf16, #tpu.memory_space<vmem>>, vector<1x3x128xbf16>
    %72 = vector.shape_cast %71 : vector<1x3x128xbf16> to vector<3x128xbf16>
    %c16_73 = arith.constant 16 : index
    %c0_74 = arith.constant 0 : index
    %73 = vector.load %arg6[%c16_73, %c0_74] : memref<128x128xbf16, #tpu.memory_space<vmem>>, vector<3x128xbf16>
    tpu.vector_store %arg6[%c16_73, %c0_74], %72 {strides = array<i32>} : memref<128x128xbf16, #tpu.memory_space<vmem>>, vector<3x128xbf16>,
    %c0_75 = arith.constant 0 : index
    %c0_76 = arith.constant 0 : index
    %c641 = arith.constant 641 : index
    %74 = vector.load %arg1[%c0_75, %c0_76, %c641] : memref<1x3x2048xbf16, #tpu.memory_space<vmem>>, vector<1x3x128xbf16>
    %75 = vector.shape_cast %74 : vector<1x3x128xbf16> to vector<3x128xbf16>
    %c24_77 = arith.constant 24 : index
    %c0_78 = arith.constant 0 : index
    %76 = vector.load %arg6[%c24_77, %c0_78] : memref<128x128xbf16, #tpu.memory_space<vmem>>, vector<3x128xbf16>
    tpu.vector_store %arg6[%c24_77, %c0_78], %75 {strides = array<i32>} : memref<128x128xbf16, #tpu.memory_space<vmem>>, vector<3x128xbf16>,
    %c0_79 = arith.constant 0 : index
    %c0_80 = arith.constant 0 : index
    %c1152 = arith.constant 1152 : index
    %77 = vector.load %arg1[%c0_79, %c0_80, %c1152] : memref<1x3x2048xbf16, #tpu.memory_space<vmem>>, vector<1x3x128xbf16>
    %78 = vector.shape_cast %77 : vector<1x3x128xbf16> to vector<3x128xbf16>
    %c32_81 = arith.constant 32 : index
    %c0_82 = arith.constant 0 : index
    %79 = vector.load %arg6[%c32_81, %c0_82] : memref<128x128xbf16, #tpu.memory_space<vmem>>, vector<3x128xbf16>
    tpu.vector_store %arg6[%c32_81, %c0_82], %78 {strides = array<i32>} : memref<128x128xbf16, #tpu.memory_space<vmem>>, vector<3x128xbf16>,
    %c0_83 = arith.constant 0 : index
    %c0_84 = arith.constant 0 : index
    %c1664 = arith.constant 1664 : index
    %80 = vector.load %arg1[%c0_83, %c0_84, %c1664] : memref<1x3x2048xbf16, #tpu.memory_space<vmem>>, vector<1x3x128xbf16>
    %81 = vector.shape_cast %80 : vector<1x3x128xbf16> to vector<3x128xbf16>
    %c40_85 = arith.constant 40 : index
    %c0_86 = arith.constant 0 : index
    %82 = vector.load %arg6[%c40_85, %c0_86] : memref<128x128xbf16, #tpu.memory_space<vmem>>, vector<3x128xbf16>
    tpu.vector_store %arg6[%c40_85, %c0_86], %81 {strides = array<i32>} : memref<128x128xbf16, #tpu.memory_space<vmem>>, vector<3x128xbf16>,
    %c0_87 = arith.constant 0 : index
    %c0_88 = arith.constant 0 : index
    %c1153 = arith.constant 1153 : index
    %83 = vector.load %arg1[%c0_87, %c0_88, %c1153] : memref<1x3x2048xbf16, #tpu.memory_space<vmem>>, vector<1x3x128xbf16>
    %84 = vector.shape_cast %83 : vector<1x3x128xbf16> to vector<3x128xbf16>
    %c48_89 = arith.constant 48 : index
    %c0_90 = arith.constant 0 : index
    %85 = vector.load %arg6[%c48_89, %c0_90] : memref<128x128xbf16, #tpu.memory_space<vmem>>, vector<3x128xbf16>
    tpu.vector_store %arg6[%c48_89, %c0_90], %84 {strides = array<i32>} : memref<128x128xbf16, #tpu.memory_space<vmem>>, vector<3x128xbf16>,
    %c0_91 = arith.constant 0 : index
    %c0_92 = arith.constant 0 : index
    %c1665 = arith.constant 1665 : index
    %86 = vector.load %arg1[%c0_91, %c0_92, %c1665] : memref<1x3x2048xbf16, #tpu.memory_space<vmem>>, vector<1x3x128xbf16>
    %87 = vector.shape_cast %86 : vector<1x3x128xbf16> to vector<3x128xbf16>
    %c56_93 = arith.constant 56 : index
    %c0_94 = arith.constant 0 : index
    %88 = vector.load %arg6[%c56_93, %c0_94] : memref<128x128xbf16, #tpu.memory_space<vmem>>, vector<3x128xbf16>
    tpu.vector_store %arg6[%c56_93, %c0_94], %87 {strides = array<i32>} : memref<128x128xbf16, #tpu.memory_space<vmem>>, vector<3x128xbf16>,
    %c0_95 = arith.constant 0 : index
    %c0_96 = arith.constant 0 : index
    %c145 = arith.constant 145 : index
    %89 = vector.load %arg1[%c0_95, %c0_96, %c145] : memref<1x3x2048xbf16, #tpu.memory_space<vmem>>, vector<1x3x128xbf16>
    %90 = vector.shape_cast %89 : vector<1x3x128xbf16> to vector<3x128xbf16>
    %c64_97 = arith.constant 64 : index
    %c0_98 = arith.constant 0 : index
    %91 = vector.load %arg6[%c64_97, %c0_98] : memref<128x128xbf16, #tpu.memory_space<vmem>>, vector<3x128xbf16>
    tpu.vector_store %arg6[%c64_97, %c0_98], %90 {strides = array<i32>} : memref<128x128xbf16, #tpu.memory_space<vmem>>, vector<3x128xbf16>,
    %c0_99 = arith.constant 0 : index
    %c0_100 = arith.constant 0 : index
    %c657 = arith.constant 657 : index
    %92 = vector.load %arg1[%c0_99, %c0_100, %c657] : memref<1x3x2048xbf16, #tpu.memory_space<vmem>>, vector<1x3x128xbf16>
    %93 = vector.shape_cast %92 : vector<1x3x128xbf16> to vector<3x128xbf16>
    %c72_101 = arith.constant 72 : index
    %c0_102 = arith.constant 0 : index
    %94 = vector.load %arg6[%c72_101, %c0_102] : memref<128x128xbf16, #tpu.memory_space<vmem>>, vector<3x128xbf16>
    tpu.vector_store %arg6[%c72_101, %c0_102], %93 {strides = array<i32>} : memref<128x128xbf16, #tpu.memory_space<vmem>>, vector<3x128xbf16>,
    %c0_103 = arith.constant 0 : index
    %c0_104 = arith.constant 0 : index
    %c146 = arith.constant 146 : index
    %95 = vector.load %arg1[%c0_103, %c0_104, %c146] : memref<1x3x2048xbf16, #tpu.memory_space<vmem>>, vector<1x3x128xbf16>
    %96 = vector.shape_cast %95 : vector<1x3x128xbf16> to vector<3x128xbf16>
    %c80_105 = arith.constant 80 : index
    %c0_106 = arith.constant 0 : index
    %97 = vector.load %arg6[%c80_105, %c0_106] : memref<128x128xbf16, #tpu.memory_space<vmem>>, vector<3x128xbf16>
    tpu.vector_store %arg6[%c80_105, %c0_106], %96 {strides = array<i32>} : memref<128x128xbf16, #tpu.memory_space<vmem>>, vector<3x128xbf16>,
    %c0_107 = arith.constant 0 : index
    %c0_108 = arith.constant 0 : index
    %c658 = arith.constant 658 : index
    %98 = vector.load %arg1[%c0_107, %c0_108, %c658] : memref<1x3x2048xbf16, #tpu.memory_space<vmem>>, vector<1x3x128xbf16>
    %99 = vector.shape_cast %98 : vector<1x3x128xbf16> to vector<3x128xbf16>
    %c88_109 = arith.constant 88 : index
    %c0_110 = arith.constant 0 : index
    %100 = vector.load %arg6[%c88_109, %c0_110] : memref<128x128xbf16, #tpu.memory_space<vmem>>, vector<3x128xbf16>
    tpu.vector_store %arg6[%c88_109, %c0_110], %99 {strides = array<i32>} : memref<128x128xbf16, #tpu.memory_space<vmem>>, vector<3x128xbf16>,
    %c0_111 = arith.constant 0 : index
    %c0_112 = arith.constant 0 : index
    %c1169 = arith.constant 1169 : index
    %101 = vector.load %arg1[%c0_111, %c0_112, %c1169] : memref<1x3x2048xbf16, #tpu.memory_space<vmem>>, vector<1x3x128xbf16>
    %102 = vector.shape_cast %101 : vector<1x3x128xbf16> to vector<3x128xbf16>
    %c96_113 = arith.constant 96 : index
    %c0_114 = arith.constant 0 : index
    %103 = vector.load %arg6[%c96_113, %c0_114] : memref<128x128xbf16, #tpu.memory_space<vmem>>, vector<3x128xbf16>
    tpu.vector_store %arg6[%c96_113, %c0_114], %102 {strides = array<i32>} : memref<128x128xbf16, #tpu.memory_space<vmem>>, vector<3x128xbf16>,
    %c0_115 = arith.constant 0 : index
    %c0_116 = arith.constant 0 : index
    %c1681 = arith.constant 1681 : index
    %104 = vector.load %arg1[%c0_115, %c0_116, %c1681] : memref<1x3x2048xbf16, #tpu.memory_space<vmem>>, vector<1x3x128xbf16>
    %105 = vector.shape_cast %104 : vector<1x3x128xbf16> to vector<3x128xbf16>
    %c104_117 = arith.constant 104 : index
    %c0_118 = arith.constant 0 : index
    %106 = vector.load %arg6[%c104_117, %c0_118] : memref<128x128xbf16, #tpu.memory_space<vmem>>, vector<3x128xbf16>
    tpu.vector_store %arg6[%c104_117, %c0_118], %105 {strides = array<i32>} : memref<128x128xbf16, #tpu.memory_space<vmem>>, vector<3x128xbf16>,
    %c0_119 = arith.constant 0 : index
    %c0_120 = arith.constant 0 : index
    %c1170 = arith.constant 1170 : index
    %107 = vector.load %arg1[%c0_119, %c0_120, %c1170] : memref<1x3x2048xbf16, #tpu.memory_space<vmem>>, vector<1x3x128xbf16>
    %108 = vector.shape_cast %107 : vector<1x3x128xbf16> to vector<3x128xbf16>
    %c112_121 = arith.constant 112 : index
    %c0_122 = arith.constant 0 : index
    %109 = vector.load %arg6[%c112_121, %c0_122] : memref<128x128xbf16, #tpu.memory_space<vmem>>, vector<3x128xbf16>
    tpu.vector_store %arg6[%c112_121, %c0_122], %108 {strides = array<i32>} : memref<128x128xbf16, #tpu.memory_space<vmem>>, vector<3x128xbf16>,
    %c0_123 = arith.constant 0 : index
    %c0_124 = arith.constant 0 : index
    %c1682 = arith.constant 1682 : index
    %110 = vector.load %arg1[%c0_123, %c0_124, %c1682] : memref<1x3x2048xbf16, #tpu.memory_space<vmem>>, vector<1x3x128xbf16>
    %111 = vector.shape_cast %110 : vector<1x3x128xbf16> to vector<3x128xbf16>
    %c120_125 = arith.constant 120 : index
    %c0_126 = arith.constant 0 : index
    %112 = vector.load %arg6[%c120_125, %c0_126] : memref<128x128xbf16, #tpu.memory_space<vmem>>, vector<3x128xbf16>
    tpu.vector_store %arg6[%c120_125, %c0_126], %111 {strides = array<i32>} : memref<128x128xbf16, #tpu.memory_space<vmem>>, vector<3x128xbf16>,
    %c0_127 = arith.constant 0 : index
    %c0_128 = arith.constant 0 : index
    %113 = vector.load %arg2[%c0_127, %c0_128] : memref<8x128xbf16, #tpu.memory_space<vmem>>, vector<8x128xbf16>
    %c0_129 = arith.constant 0 : index
    %c0_130 = arith.constant 0 : index
    %114 = vector.load %arg6[%c0_129, %c0_130] : memref<128x128xbf16, #tpu.memory_space<vmem>>, vector<128x128xbf16>
    %cst_131 = arith.constant dense<0.000000e+00> : vector<8x128xf32>
    %115 = tpu.matmul %113, %114, %cst_131 {dimension_numbers = #tpu.dot_dimension_numbers<[1], [0], [0], [1], [0, 0, 1, 1], [], []>} : vector<8x128xbf16>, vector<128x128xbf16>, vector<8x128xf32> -> vector<8x128xf32>
    %c0_132 = arith.constant 0 : index
    %c0_133 = arith.constant 0 : index
    %116 = vector.load %arg3[%c0_132, %c0_133] : memref<8x1xf32, #tpu.memory_space<vmem>>, vector<8x1xf32>
    %117 = vector.broadcast %116 : vector<8x1xf32> to vector<8x128xf32>
    %118 = arith.addf %115, %117 : vector<8x128xf32>
    %cst_134 = arith.constant 0.000000e+00 : f32
    %119 = vector.broadcast %cst_134 : f32 to vector<8x128xf32>
    %120 = arith.cmpf oge, %118, %119 : vector<8x128xf32>
    %cst_135 = arith.constant 2.000000e-01 : f32
    %121 = vector.broadcast %cst_135 : f32 to vector<8x128xf32>
    %122 = arith.mulf %121, %118 : vector<8x128xf32>
    %123 = arith.select %120, %118, %122 : vector<8x128xi1>, vector<8x128xf32>
    %124 = arith.truncf %123 : vector<8x128xf32> to vector<8x128xbf16>
    %c0_136 = arith.constant 0 : index
    %c0_137 = arith.constant 0 : index
    %c128_138 = arith.constant 128 : index
    %125 = vector.load %arg5[%c0_136, %c0_137, %c128_138] : memref<1x8x384xbf16, #tpu.memory_space<vmem>>, vector<1x8x128xbf16>
    %126 = vector.shape_cast %125 : vector<1x8x128xbf16> to vector<8x128xbf16>
    %127 = vector.shape_cast %124 : vector<8x128xbf16> to vector<1x8x128xbf16>
    tpu.vector_store %arg5[%c0_136, %c0_137, %c128_138], %127 {strides = array<i32>} : memref<1x8x384xbf16, #tpu.memory_space<vmem>>, vector<1x8x128xbf16>,
    %c0_139 = arith.constant 0 : index
    %c0_140 = arith.constant 0 : index
    %c256 = arith.constant 256 : index
    %128 = vector.load %arg1[%c0_139, %c0_140, %c256] : memref<1x3x2048xbf16, #tpu.memory_space<vmem>>, vector<1x3x128xbf16>
    %129 = vector.shape_cast %128 : vector<1x3x128xbf16> to vector<3x128xbf16>
    %c0_141 = arith.constant 0 : index
    %c0_142 = arith.constant 0 : index
    %130 = vector.load %arg6[%c0_141, %c0_142] : memref<128x128xbf16, #tpu.memory_space<vmem>>, vector<3x128xbf16>
    tpu.vector_store %arg6[%c0_141, %c0_142], %129 {strides = array<i32>} : memref<128x128xbf16, #tpu.memory_space<vmem>>, vector<3x128xbf16>,
    %c0_143 = arith.constant 0 : index
    %c0_144 = arith.constant 0 : index
    %c768 = arith.constant 768 : index
    %131 = vector.load %arg1[%c0_143, %c0_144, %c768] : memref<1x3x2048xbf16, #tpu.memory_space<vmem>>, vector<1x3x128xbf16>
    %132 = vector.shape_cast %131 : vector<1x3x128xbf16> to vector<3x128xbf16>
    %c8_145 = arith.constant 8 : index
    %c0_146 = arith.constant 0 : index
    %133 = vector.load %arg6[%c8_145, %c0_146] : memref<128x128xbf16, #tpu.memory_space<vmem>>, vector<3x128xbf16>
    tpu.vector_store %arg6[%c8_145, %c0_146], %132 {strides = array<i32>} : memref<128x128xbf16, #tpu.memory_space<vmem>>, vector<3x128xbf16>,
    %c0_147 = arith.constant 0 : index
    %c0_148 = arith.constant 0 : index
    %c257 = arith.constant 257 : index
    %134 = vector.load %arg1[%c0_147, %c0_148, %c257] : memref<1x3x2048xbf16, #tpu.memory_space<vmem>>, vector<1x3x128xbf16>
    %135 = vector.shape_cast %134 : vector<1x3x128xbf16> to vector<3x128xbf16>
    %c16_149 = arith.constant 16 : index
    %c0_150 = arith.constant 0 : index
    %136 = vector.load %arg6[%c16_149, %c0_150] : memref<128x128xbf16, #tpu.memory_space<vmem>>, vector<3x128xbf16>
    tpu.vector_store %arg6[%c16_149, %c0_150], %135 {strides = array<i32>} : memref<128x128xbf16, #tpu.memory_space<vmem>>, vector<3x128xbf16>,
    %c0_151 = arith.constant 0 : index
    %c0_152 = arith.constant 0 : index
    %c769 = arith.constant 769 : index
    %137 = vector.load %arg1[%c0_151, %c0_152, %c769] : memref<1x3x2048xbf16, #tpu.memory_space<vmem>>, vector<1x3x128xbf16>
    %138 = vector.shape_cast %137 : vector<1x3x128xbf16> to vector<3x128xbf16>
    %c24_153 = arith.constant 24 : index
    %c0_154 = arith.constant 0 : index
    %139 = vector.load %arg6[%c24_153, %c0_154] : memref<128x128xbf16, #tpu.memory_space<vmem>>, vector<3x128xbf16>
    tpu.vector_store %arg6[%c24_153, %c0_154], %138 {strides = array<i32>} : memref<128x128xbf16, #tpu.memory_space<vmem>>, vector<3x128xbf16>,
    %c0_155 = arith.constant 0 : index
    %c0_156 = arith.constant 0 : index
    %c1280 = arith.constant 1280 : index
    %140 = vector.load %arg1[%c0_155, %c0_156, %c1280] : memref<1x3x2048xbf16, #tpu.memory_space<vmem>>, vector<1x3x128xbf16>
    %141 = vector.shape_cast %140 : vector<1x3x128xbf16> to vector<3x128xbf16>
    %c32_157 = arith.constant 32 : index
    %c0_158 = arith.constant 0 : index
    %142 = vector.load %arg6[%c32_157, %c0_158] : memref<128x128xbf16, #tpu.memory_space<vmem>>, vector<3x128xbf16>
    tpu.vector_store %arg6[%c32_157, %c0_158], %141 {strides = array<i32>} : memref<128x128xbf16, #tpu.memory_space<vmem>>, vector<3x128xbf16>,
    %c0_159 = arith.constant 0 : index
    %c0_160 = arith.constant 0 : index
    %c1792 = arith.constant 1792 : index
    %143 = vector.load %arg1[%c0_159, %c0_160, %c1792] : memref<1x3x2048xbf16, #tpu.memory_space<vmem>>, vector<1x3x128xbf16>
    %144 = vector.shape_cast %143 : vector<1x3x128xbf16> to vector<3x128xbf16>
    %c40_161 = arith.constant 40 : index
    %c0_162 = arith.constant 0 : index
    %145 = vector.load %arg6[%c40_161, %c0_162] : memref<128x128xbf16, #tpu.memory_space<vmem>>, vector<3x128xbf16>
    tpu.vector_store %arg6[%c40_161, %c0_162], %144 {strides = array<i32>} : memref<128x128xbf16, #tpu.memory_space<vmem>>, vector<3x128xbf16>,
    %c0_163 = arith.constant 0 : index
    %c0_164 = arith.constant 0 : index
    %c1281 = arith.constant 1281 : index
    %146 = vector.load %arg1[%c0_163, %c0_164, %c1281] : memref<1x3x2048xbf16, #tpu.memory_space<vmem>>, vector<1x3x128xbf16>
    %147 = vector.shape_cast %146 : vector<1x3x128xbf16> to vector<3x128xbf16>
    %c48_165 = arith.constant 48 : index
    %c0_166 = arith.constant 0 : index
    %148 = vector.load %arg6[%c48_165, %c0_166] : memref<128x128xbf16, #tpu.memory_space<vmem>>, vector<3x128xbf16>
    tpu.vector_store %arg6[%c48_165, %c0_166], %147 {strides = array<i32>} : memref<128x128xbf16, #tpu.memory_space<vmem>>, vector<3x128xbf16>,
    %c0_167 = arith.constant 0 : index
    %c0_168 = arith.constant 0 : index
    %c1793 = arith.constant 1793 : index
    %149 = vector.load %arg1[%c0_167, %c0_168, %c1793] : memref<1x3x2048xbf16, #tpu.memory_space<vmem>>, vector<1x3x128xbf16>
    %150 = vector.shape_cast %149 : vector<1x3x128xbf16> to vector<3x128xbf16>
    %c56_169 = arith.constant 56 : index
    %c0_170 = arith.constant 0 : index
    %151 = vector.load %arg6[%c56_169, %c0_170] : memref<128x128xbf16, #tpu.memory_space<vmem>>, vector<3x128xbf16>
    tpu.vector_store %arg6[%c56_169, %c0_170], %150 {strides = array<i32>} : memref<128x128xbf16, #tpu.memory_space<vmem>>, vector<3x128xbf16>,
    %c0_171 = arith.constant 0 : index
    %c0_172 = arith.constant 0 : index
    %c273 = arith.constant 273 : index
    %152 = vector.load %arg1[%c0_171, %c0_172, %c273] : memref<1x3x2048xbf16, #tpu.memory_space<vmem>>, vector<1x3x128xbf16>
    %153 = vector.shape_cast %152 : vector<1x3x128xbf16> to vector<3x128xbf16>
    %c64_173 = arith.constant 64 : index
    %c0_174 = arith.constant 0 : index
    %154 = vector.load %arg6[%c64_173, %c0_174] : memref<128x128xbf16, #tpu.memory_space<vmem>>, vector<3x128xbf16>
    tpu.vector_store %arg6[%c64_173, %c0_174], %153 {strides = array<i32>} : memref<128x128xbf16, #tpu.memory_space<vmem>>, vector<3x128xbf16>,
    %c0_175 = arith.constant 0 : index
    %c0_176 = arith.constant 0 : index
    %c785 = arith.constant 785 : index
    %155 = vector.load %arg1[%c0_175, %c0_176, %c785] : memref<1x3x2048xbf16, #tpu.memory_space<vmem>>, vector<1x3x128xbf16>
    %156 = vector.shape_cast %155 : vector<1x3x128xbf16> to vector<3x128xbf16>
    %c72_177 = arith.constant 72 : index
    %c0_178 = arith.constant 0 : index
    %157 = vector.load %arg6[%c72_177, %c0_178] : memref<128x128xbf16, #tpu.memory_space<vmem>>, vector<3x128xbf16>
    tpu.vector_store %arg6[%c72_177, %c0_178], %156 {strides = array<i32>} : memref<128x128xbf16, #tpu.memory_space<vmem>>, vector<3x128xbf16>,
    %c0_179 = arith.constant 0 : index
    %c0_180 = arith.constant 0 : index
    %c274 = arith.constant 274 : index
    %158 = vector.load %arg1[%c0_179, %c0_180, %c274] : memref<1x3x2048xbf16, #tpu.memory_space<vmem>>, vector<1x3x128xbf16>
    %159 = vector.shape_cast %158 : vector<1x3x128xbf16> to vector<3x128xbf16>
    %c80_181 = arith.constant 80 : index
    %c0_182 = arith.constant 0 : index
    %160 = vector.load %arg6[%c80_181, %c0_182] : memref<128x128xbf16, #tpu.memory_space<vmem>>, vector<3x128xbf16>
    tpu.vector_store %arg6[%c80_181, %c0_182], %159 {strides = array<i32>} : memref<128x128xbf16, #tpu.memory_space<vmem>>, vector<3x128xbf16>,
    %c0_183 = arith.constant 0 : index
    %c0_184 = arith.constant 0 : index
    %c786 = arith.constant 786 : index
    %161 = vector.load %arg1[%c0_183, %c0_184, %c786] : memref<1x3x2048xbf16, #tpu.memory_space<vmem>>, vector<1x3x128xbf16>
    %162 = vector.shape_cast %161 : vector<1x3x128xbf16> to vector<3x128xbf16>
    %c88_185 = arith.constant 88 : index
    %c0_186 = arith.constant 0 : index
    %163 = vector.load %arg6[%c88_185, %c0_186] : memref<128x128xbf16, #tpu.memory_space<vmem>>, vector<3x128xbf16>
    tpu.vector_store %arg6[%c88_185, %c0_186], %162 {strides = array<i32>} : memref<128x128xbf16, #tpu.memory_space<vmem>>, vector<3x128xbf16>,
    %c0_187 = arith.constant 0 : index
    %c0_188 = arith.constant 0 : index
    %c1297 = arith.constant 1297 : index
    %164 = vector.load %arg1[%c0_187, %c0_188, %c1297] : memref<1x3x2048xbf16, #tpu.memory_space<vmem>>, vector<1x3x128xbf16>
    %165 = vector.shape_cast %164 : vector<1x3x128xbf16> to vector<3x128xbf16>
    %c96_189 = arith.constant 96 : index
    %c0_190 = arith.constant 0 : index
    %166 = vector.load %arg6[%c96_189, %c0_190] : memref<128x128xbf16, #tpu.memory_space<vmem>>, vector<3x128xbf16>
    tpu.vector_store %arg6[%c96_189, %c0_190], %165 {strides = array<i32>} : memref<128x128xbf16, #tpu.memory_space<vmem>>, vector<3x128xbf16>,
    %c0_191 = arith.constant 0 : index
    %c0_192 = arith.constant 0 : index
    %c1809 = arith.constant 1809 : index
    %167 = vector.load %arg1[%c0_191, %c0_192, %c1809] : memref<1x3x2048xbf16, #tpu.memory_space<vmem>>, vector<1x3x128xbf16>
    %168 = vector.shape_cast %167 : vector<1x3x128xbf16> to vector<3x128xbf16>
    %c104_193 = arith.constant 104 : index
    %c0_194 = arith.constant 0 : index
    %169 = vector.load %arg6[%c104_193, %c0_194] : memref<128x128xbf16, #tpu.memory_space<vmem>>, vector<3x128xbf16>
    tpu.vector_store %arg6[%c104_193, %c0_194], %168 {strides = array<i32>} : memref<128x128xbf16, #tpu.memory_space<vmem>>, vector<3x128xbf16>,
    %c0_195 = arith.constant 0 : index
    %c0_196 = arith.constant 0 : index
    %c1298 = arith.constant 1298 : index
    %170 = vector.load %arg1[%c0_195, %c0_196, %c1298] : memref<1x3x2048xbf16, #tpu.memory_space<vmem>>, vector<1x3x128xbf16>
    %171 = vector.shape_cast %170 : vector<1x3x128xbf16> to vector<3x128xbf16>
    %c112_197 = arith.constant 112 : index
    %c0_198 = arith.constant 0 : index
    %172 = vector.load %arg6[%c112_197, %c0_198] : memref<128x128xbf16, #tpu.memory_space<vmem>>, vector<3x128xbf16>
    tpu.vector_store %arg6[%c112_197, %c0_198], %171 {strides = array<i32>} : memref<128x128xbf16, #tpu.memory_space<vmem>>, vector<3x128xbf16>,
    %c0_199 = arith.constant 0 : index
    %c0_200 = arith.constant 0 : index
    %c1810 = arith.constant 1810 : index
    %173 = vector.load %arg1[%c0_199, %c0_200, %c1810] : memref<1x3x2048xbf16, #tpu.memory_space<vmem>>, vector<1x3x128xbf16>
    %174 = vector.shape_cast %173 : vector<1x3x128xbf16> to vector<3x128xbf16>
    %c120_201 = arith.constant 120 : index
    %c0_202 = arith.constant 0 : index
    %175 = vector.load %arg6[%c120_201, %c0_202] : memref<128x128xbf16, #tpu.memory_space<vmem>>, vector<3x128xbf16>
    tpu.vector_store %arg6[%c120_201, %c0_202], %174 {strides = array<i32>} : memref<128x128xbf16, #tpu.memory_space<vmem>>, vector<3x128xbf16>,
    %c0_203 = arith.constant 0 : index
    %c0_204 = arith.constant 0 : index
    %176 = vector.load %arg2[%c0_203, %c0_204] : memref<8x128xbf16, #tpu.memory_space<vmem>>, vector<8x128xbf16>
    %c0_205 = arith.constant 0 : index
    %c0_206 = arith.constant 0 : index
    %177 = vector.load %arg6[%c0_205, %c0_206] : memref<128x128xbf16, #tpu.memory_space<vmem>>, vector<128x128xbf16>
    %cst_207 = arith.constant dense<0.000000e+00> : vector<8x128xf32>
    %178 = tpu.matmul %176, %177, %cst_207 {dimension_numbers = #tpu.dot_dimension_numbers<[1], [0], [0], [1], [0, 0, 1, 1], [], []>} : vector<8x128xbf16>, vector<128x128xbf16>, vector<8x128xf32> -> vector<8x128xf32>
    %c0_208 = arith.constant 0 : index
    %c0_209 = arith.constant 0 : index
    %179 = vector.load %arg3[%c0_208, %c0_209] : memref<8x1xf32, #tpu.memory_space<vmem>>, vector<8x1xf32>
    %180 = vector.broadcast %179 : vector<8x1xf32> to vector<8x128xf32>
    %181 = arith.addf %178, %180 : vector<8x128xf32>
    %cst_210 = arith.constant 0.000000e+00 : f32
    %182 = vector.broadcast %cst_210 : f32 to vector<8x128xf32>
    %183 = arith.cmpf oge, %181, %182 : vector<8x128xf32>
    %cst_211 = arith.constant 2.000000e-01 : f32
    %184 = vector.broadcast %cst_211 : f32 to vector<8x128xf32>
    %185 = arith.mulf %184, %181 : vector<8x128xf32>
    %186 = arith.select %183, %181, %185 : vector<8x128xi1>, vector<8x128xf32>
    %187 = arith.truncf %186 : vector<8x128xf32> to vector<8x128xbf16>
    %c0_212 = arith.constant 0 : index
    %c0_213 = arith.constant 0 : index
    %c256_214 = arith.constant 256 : index
    %188 = vector.load %arg5[%c0_212, %c0_213, %c256_214] : memref<1x8x384xbf16, #tpu.memory_space<vmem>>, vector<1x8x128xbf16>
    %189 = vector.shape_cast %188 : vector<1x8x128xbf16> to vector<8x128xbf16>
    %190 = vector.shape_cast %187 : vector<8x128xbf16> to vector<1x8x128xbf16>
    tpu.vector_store %arg5[%c0_212, %c0_213, %c256_214], %190 {strides = array<i32>} : memref<1x8x384xbf16, #tpu.memory_space<vmem>>, vector<1x8x128xbf16>,
    return
  }
  func.func @transform_0(%arg0: i32) -> (i32, i32, i32) {
    %c0_i32 = arith.constant 0 : i32
    %c0_i32_0 = arith.constant 0 : i32
    %c0_i32_1 = arith.constant 0 : i32
    return %arg0, %c0_i32, %c0_i32_0 : i32, i32, i32
  }
  func.func @transform_1(%arg0: i32) -> (i32, i32) {
    %c0_i32 = arith.constant 0 : i32
    %c0_i32_0 = arith.constant 0 : i32
    %c0_i32_1 = arith.constant 0 : i32
    return %c0_i32, %c0_i32_0 : i32, i32
  }
  func.func @transform_2(%arg0: i32) -> (i32, i32) {
    %c0_i32 = arith.constant 0 : i32
    %c0_i32_0 = arith.constant 0 : i32
    %c0_i32_1 = arith.constant 0 : i32
    return %c0_i32, %c0_i32_0 : i32, i32
  }
  func.func @transform_3(%arg0: i32) -> (i32, i32) {
    %c0_i32 = arith.constant 0 : i32
    %c0_i32_0 = arith.constant 0 : i32
    %c0_i32_1 = arith.constant 0 : i32
    return %c0_i32, %c0_i32_0 : i32, i32
  }
  func.func @transform_4(%arg0: i32) -> (i32, i32, i32) {
    %c0_i32 = arith.constant 0 : i32
    %c0_i32_0 = arith.constant 0 : i32
    %c0_i32_1 = arith.constant 0 : i32
    return %arg0, %c0_i32, %c0_i32_0 : i32, i32, i32
  }
}

module attributes {stable_mosaic.version = 11 : i64} {
  func.func @_disc_conv_kernel(%arg0: i32, %arg1: memref<1x8x1024xbf16, #tpu.memory_space<vmem>>, %arg2: memref<16x128xbf16, #tpu.memory_space<vmem>>, %arg3: memref<16x1xf32, #tpu.memory_space<vmem>>, %arg4: memref<1x128xf32, #tpu.memory_space<vmem>>, %arg5: memref<1x16x128xbf16, #tpu.memory_space<vmem>>, %arg6: memref<128x128xbf16, #tpu.memory_space<vmem>>, %arg7: memref<16x128xf32, #tpu.memory_space<vmem>>) attributes {dimension_semantics = [#tpu.dimension_semantics<parallel>], iteration_bounds = array<i64: 2>, scalar_prefetch = 0 : i64, scratch_operands = 2 : i64, tpu.core_type = #tpu.core_type<tc>, window_params = [{transform_indices = @transform_0, window_bounds = array<i64: 1, 8, 1024>}, {pipeline_mode = #tpu.pipeline_mode<synchronous>, transform_indices = @transform_1, window_bounds = array<i64: 16, 128>}, {pipeline_mode = #tpu.pipeline_mode<synchronous>, transform_indices = @transform_2, window_bounds = array<i64: 16, 1>}, {pipeline_mode = #tpu.pipeline_mode<synchronous>, transform_indices = @transform_3, window_bounds = array<i64: 1, 128>}, {transform_indices = @transform_4, window_bounds = array<i64: 1, 16, 128>}]} {
    %cst = arith.constant 0.000000e+00 : f32
    %0 = vector.broadcast %cst : f32 to vector<16x1xf32>
    %cst_0 = arith.constant 0.000000e+00 : f32
    %1 = vector.broadcast %cst_0 : f32 to vector<16x1xf32>
    %c0 = arith.constant 0 : index
    %c0_1 = arith.constant 0 : index
    %c0_2 = arith.constant 0 : index
    %2 = vector.load %arg1[%c0, %c0_1, %c0_2] : memref<1x8x1024xbf16, #tpu.memory_space<vmem>>, vector<1x8x128xbf16>
    %3 = vector.shape_cast %2 : vector<1x8x128xbf16> to vector<8x128xbf16>
    %c0_3 = arith.constant 0 : index
    %c0_4 = arith.constant 0 : index
    %4 = vector.load %arg6[%c0_3, %c0_4] : memref<128x128xbf16, #tpu.memory_space<vmem>>, vector<8x128xbf16>
    tpu.vector_store %arg6[%c0_3, %c0_4], %3 {strides = array<i32>} : memref<128x128xbf16, #tpu.memory_space<vmem>>, vector<8x128xbf16>,
    %c0_5 = arith.constant 0 : index
    %c0_6 = arith.constant 0 : index
    %c256 = arith.constant 256 : index
    %5 = vector.load %arg1[%c0_5, %c0_6, %c256] : memref<1x8x1024xbf16, #tpu.memory_space<vmem>>, vector<1x8x128xbf16>
    %6 = vector.shape_cast %5 : vector<1x8x128xbf16> to vector<8x128xbf16>
    %c8 = arith.constant 8 : index
    %c0_7 = arith.constant 0 : index
    %7 = vector.load %arg6[%c8, %c0_7] : memref<128x128xbf16, #tpu.memory_space<vmem>>, vector<8x128xbf16>
    tpu.vector_store %arg6[%c8, %c0_7], %6 {strides = array<i32>} : memref<128x128xbf16, #tpu.memory_space<vmem>>, vector<8x128xbf16>,
    %c0_8 = arith.constant 0 : index
    %c0_9 = arith.constant 0 : index
    %c1 = arith.constant 1 : index
    %8 = vector.load %arg1[%c0_8, %c0_9, %c1] : memref<1x8x1024xbf16, #tpu.memory_space<vmem>>, vector<1x8x128xbf16>
    %9 = vector.shape_cast %8 : vector<1x8x128xbf16> to vector<8x128xbf16>
    %c16 = arith.constant 16 : index
    %c0_10 = arith.constant 0 : index
    %10 = vector.load %arg6[%c16, %c0_10] : memref<128x128xbf16, #tpu.memory_space<vmem>>, vector<8x128xbf16>
    tpu.vector_store %arg6[%c16, %c0_10], %9 {strides = array<i32>} : memref<128x128xbf16, #tpu.memory_space<vmem>>, vector<8x128xbf16>,
    %c0_11 = arith.constant 0 : index
    %c0_12 = arith.constant 0 : index
    %c257 = arith.constant 257 : index
    %11 = vector.load %arg1[%c0_11, %c0_12, %c257] : memref<1x8x1024xbf16, #tpu.memory_space<vmem>>, vector<1x8x128xbf16>
    %12 = vector.shape_cast %11 : vector<1x8x128xbf16> to vector<8x128xbf16>
    %c24 = arith.constant 24 : index
    %c0_13 = arith.constant 0 : index
    %13 = vector.load %arg6[%c24, %c0_13] : memref<128x128xbf16, #tpu.memory_space<vmem>>, vector<8x128xbf16>
    tpu.vector_store %arg6[%c24, %c0_13], %12 {strides = array<i32>} : memref<128x128xbf16, #tpu.memory_space<vmem>>, vector<8x128xbf16>,
    %c0_14 = arith.constant 0 : index
    %c0_15 = arith.constant 0 : index
    %c512 = arith.constant 512 : index
    %14 = vector.load %arg1[%c0_14, %c0_15, %c512] : memref<1x8x1024xbf16, #tpu.memory_space<vmem>>, vector<1x8x128xbf16>
    %15 = vector.shape_cast %14 : vector<1x8x128xbf16> to vector<8x128xbf16>
    %c32 = arith.constant 32 : index
    %c0_16 = arith.constant 0 : index
    %16 = vector.load %arg6[%c32, %c0_16] : memref<128x128xbf16, #tpu.memory_space<vmem>>, vector<8x128xbf16>
    tpu.vector_store %arg6[%c32, %c0_16], %15 {strides = array<i32>} : memref<128x128xbf16, #tpu.memory_space<vmem>>, vector<8x128xbf16>,
    %c0_17 = arith.constant 0 : index
    %c0_18 = arith.constant 0 : index
    %c768 = arith.constant 768 : index
    %17 = vector.load %arg1[%c0_17, %c0_18, %c768] : memref<1x8x1024xbf16, #tpu.memory_space<vmem>>, vector<1x8x128xbf16>
    %18 = vector.shape_cast %17 : vector<1x8x128xbf16> to vector<8x128xbf16>
    %c40 = arith.constant 40 : index
    %c0_19 = arith.constant 0 : index
    %19 = vector.load %arg6[%c40, %c0_19] : memref<128x128xbf16, #tpu.memory_space<vmem>>, vector<8x128xbf16>
    tpu.vector_store %arg6[%c40, %c0_19], %18 {strides = array<i32>} : memref<128x128xbf16, #tpu.memory_space<vmem>>, vector<8x128xbf16>,
    %c0_20 = arith.constant 0 : index
    %c0_21 = arith.constant 0 : index
    %c513 = arith.constant 513 : index
    %20 = vector.load %arg1[%c0_20, %c0_21, %c513] : memref<1x8x1024xbf16, #tpu.memory_space<vmem>>, vector<1x8x128xbf16>
    %21 = vector.shape_cast %20 : vector<1x8x128xbf16> to vector<8x128xbf16>
    %c48 = arith.constant 48 : index
    %c0_22 = arith.constant 0 : index
    %22 = vector.load %arg6[%c48, %c0_22] : memref<128x128xbf16, #tpu.memory_space<vmem>>, vector<8x128xbf16>
    tpu.vector_store %arg6[%c48, %c0_22], %21 {strides = array<i32>} : memref<128x128xbf16, #tpu.memory_space<vmem>>, vector<8x128xbf16>,
    %c0_23 = arith.constant 0 : index
    %c0_24 = arith.constant 0 : index
    %c769 = arith.constant 769 : index
    %23 = vector.load %arg1[%c0_23, %c0_24, %c769] : memref<1x8x1024xbf16, #tpu.memory_space<vmem>>, vector<1x8x128xbf16>
    %24 = vector.shape_cast %23 : vector<1x8x128xbf16> to vector<8x128xbf16>
    %c56 = arith.constant 56 : index
    %c0_25 = arith.constant 0 : index
    %25 = vector.load %arg6[%c56, %c0_25] : memref<128x128xbf16, #tpu.memory_space<vmem>>, vector<8x128xbf16>
    tpu.vector_store %arg6[%c56, %c0_25], %24 {strides = array<i32>} : memref<128x128xbf16, #tpu.memory_space<vmem>>, vector<8x128xbf16>,
    %c0_26 = arith.constant 0 : index
    %c0_27 = arith.constant 0 : index
    %c9 = arith.constant 9 : index
    %26 = vector.load %arg1[%c0_26, %c0_27, %c9] : memref<1x8x1024xbf16, #tpu.memory_space<vmem>>, vector<1x8x128xbf16>
    %27 = vector.shape_cast %26 : vector<1x8x128xbf16> to vector<8x128xbf16>
    %c64 = arith.constant 64 : index
    %c0_28 = arith.constant 0 : index
    %28 = vector.load %arg6[%c64, %c0_28] : memref<128x128xbf16, #tpu.memory_space<vmem>>, vector<8x128xbf16>
    tpu.vector_store %arg6[%c64, %c0_28], %27 {strides = array<i32>} : memref<128x128xbf16, #tpu.memory_space<vmem>>, vector<8x128xbf16>,
    %c0_29 = arith.constant 0 : index
    %c0_30 = arith.constant 0 : index
    %c265 = arith.constant 265 : index
    %29 = vector.load %arg1[%c0_29, %c0_30, %c265] : memref<1x8x1024xbf16, #tpu.memory_space<vmem>>, vector<1x8x128xbf16>
    %30 = vector.shape_cast %29 : vector<1x8x128xbf16> to vector<8x128xbf16>
    %c72 = arith.constant 72 : index
    %c0_31 = arith.constant 0 : index
    %31 = vector.load %arg6[%c72, %c0_31] : memref<128x128xbf16, #tpu.memory_space<vmem>>, vector<8x128xbf16>
    tpu.vector_store %arg6[%c72, %c0_31], %30 {strides = array<i32>} : memref<128x128xbf16, #tpu.memory_space<vmem>>, vector<8x128xbf16>,
    %c0_32 = arith.constant 0 : index
    %c0_33 = arith.constant 0 : index
    %c10 = arith.constant 10 : index
    %32 = vector.load %arg1[%c0_32, %c0_33, %c10] : memref<1x8x1024xbf16, #tpu.memory_space<vmem>>, vector<1x8x128xbf16>
    %33 = vector.shape_cast %32 : vector<1x8x128xbf16> to vector<8x128xbf16>
    %c80 = arith.constant 80 : index
    %c0_34 = arith.constant 0 : index
    %34 = vector.load %arg6[%c80, %c0_34] : memref<128x128xbf16, #tpu.memory_space<vmem>>, vector<8x128xbf16>
    tpu.vector_store %arg6[%c80, %c0_34], %33 {strides = array<i32>} : memref<128x128xbf16, #tpu.memory_space<vmem>>, vector<8x128xbf16>,
    %c0_35 = arith.constant 0 : index
    %c0_36 = arith.constant 0 : index
    %c266 = arith.constant 266 : index
    %35 = vector.load %arg1[%c0_35, %c0_36, %c266] : memref<1x8x1024xbf16, #tpu.memory_space<vmem>>, vector<1x8x128xbf16>
    %36 = vector.shape_cast %35 : vector<1x8x128xbf16> to vector<8x128xbf16>
    %c88 = arith.constant 88 : index
    %c0_37 = arith.constant 0 : index
    %37 = vector.load %arg6[%c88, %c0_37] : memref<128x128xbf16, #tpu.memory_space<vmem>>, vector<8x128xbf16>
    tpu.vector_store %arg6[%c88, %c0_37], %36 {strides = array<i32>} : memref<128x128xbf16, #tpu.memory_space<vmem>>, vector<8x128xbf16>,
    %c0_38 = arith.constant 0 : index
    %c0_39 = arith.constant 0 : index
    %c521 = arith.constant 521 : index
    %38 = vector.load %arg1[%c0_38, %c0_39, %c521] : memref<1x8x1024xbf16, #tpu.memory_space<vmem>>, vector<1x8x128xbf16>
    %39 = vector.shape_cast %38 : vector<1x8x128xbf16> to vector<8x128xbf16>
    %c96 = arith.constant 96 : index
    %c0_40 = arith.constant 0 : index
    %40 = vector.load %arg6[%c96, %c0_40] : memref<128x128xbf16, #tpu.memory_space<vmem>>, vector<8x128xbf16>
    tpu.vector_store %arg6[%c96, %c0_40], %39 {strides = array<i32>} : memref<128x128xbf16, #tpu.memory_space<vmem>>, vector<8x128xbf16>,
    %c0_41 = arith.constant 0 : index
    %c0_42 = arith.constant 0 : index
    %c777 = arith.constant 777 : index
    %41 = vector.load %arg1[%c0_41, %c0_42, %c777] : memref<1x8x1024xbf16, #tpu.memory_space<vmem>>, vector<1x8x128xbf16>
    %42 = vector.shape_cast %41 : vector<1x8x128xbf16> to vector<8x128xbf16>
    %c104 = arith.constant 104 : index
    %c0_43 = arith.constant 0 : index
    %43 = vector.load %arg6[%c104, %c0_43] : memref<128x128xbf16, #tpu.memory_space<vmem>>, vector<8x128xbf16>
    tpu.vector_store %arg6[%c104, %c0_43], %42 {strides = array<i32>} : memref<128x128xbf16, #tpu.memory_space<vmem>>, vector<8x128xbf16>,
    %c0_44 = arith.constant 0 : index
    %c0_45 = arith.constant 0 : index
    %c522 = arith.constant 522 : index
    %44 = vector.load %arg1[%c0_44, %c0_45, %c522] : memref<1x8x1024xbf16, #tpu.memory_space<vmem>>, vector<1x8x128xbf16>
    %45 = vector.shape_cast %44 : vector<1x8x128xbf16> to vector<8x128xbf16>
    %c112 = arith.constant 112 : index
    %c0_46 = arith.constant 0 : index
    %46 = vector.load %arg6[%c112, %c0_46] : memref<128x128xbf16, #tpu.memory_space<vmem>>, vector<8x128xbf16>
    tpu.vector_store %arg6[%c112, %c0_46], %45 {strides = array<i32>} : memref<128x128xbf16, #tpu.memory_space<vmem>>, vector<8x128xbf16>,
    %c0_47 = arith.constant 0 : index
    %c0_48 = arith.constant 0 : index
    %c778 = arith.constant 778 : index
    %47 = vector.load %arg1[%c0_47, %c0_48, %c778] : memref<1x8x1024xbf16, #tpu.memory_space<vmem>>, vector<1x8x128xbf16>
    %48 = vector.shape_cast %47 : vector<1x8x128xbf16> to vector<8x128xbf16>
    %c120 = arith.constant 120 : index
    %c0_49 = arith.constant 0 : index
    %49 = vector.load %arg6[%c120, %c0_49] : memref<128x128xbf16, #tpu.memory_space<vmem>>, vector<8x128xbf16>
    tpu.vector_store %arg6[%c120, %c0_49], %48 {strides = array<i32>} : memref<128x128xbf16, #tpu.memory_space<vmem>>, vector<8x128xbf16>,
    %c0_50 = arith.constant 0 : index
    %c0_51 = arith.constant 0 : index
    %50 = vector.load %arg2[%c0_50, %c0_51] : memref<16x128xbf16, #tpu.memory_space<vmem>>, vector<16x128xbf16>
    %c0_52 = arith.constant 0 : index
    %c0_53 = arith.constant 0 : index
    %51 = vector.load %arg6[%c0_52, %c0_53] : memref<128x128xbf16, #tpu.memory_space<vmem>>, vector<128x128xbf16>
    %cst_54 = arith.constant dense<0.000000e+00> : vector<16x128xf32>
    %52 = tpu.matmul %50, %51, %cst_54 {dimension_numbers = #tpu.dot_dimension_numbers<[1], [0], [0], [1], [0, 0, 1, 1], [], []>} : vector<16x128xbf16>, vector<128x128xbf16>, vector<16x128xf32> -> vector<16x128xf32>
    %c0_55 = arith.constant 0 : index
    %c0_56 = arith.constant 0 : index
    %53 = vector.load %arg3[%c0_55, %c0_56] : memref<16x1xf32, #tpu.memory_space<vmem>>, vector<16x1xf32>
    %54 = vector.broadcast %53 : vector<16x1xf32> to vector<16x128xf32>
    %55 = arith.addf %52, %54 : vector<16x128xf32>
    %c0_57 = arith.constant 0 : index
    %c0_58 = arith.constant 0 : index
    %56 = vector.load %arg4[%c0_57, %c0_58] : memref<1x128xf32, #tpu.memory_space<vmem>>, vector<1x128xf32>
    %57 = vector.broadcast %56 : vector<1x128xf32> to vector<16x128xf32>
    %58 = arith.mulf %55, %57 : vector<16x128xf32>
    %cst_59 = arith.constant dense<0.000000e+00> : vector<16xf32>
    %59 = vector.multi_reduction <add>, %58, %cst_59 [1] : vector<16x128xf32> to vector<16xf32>
    %60 = vector.shape_cast %59 : vector<16xf32> to vector<16x1xf32>
    %61 = arith.addf %0, %60 : vector<16x1xf32>
    %62 = arith.mulf %58, %55 : vector<16x128xf32>
    %cst_60 = arith.constant dense<0.000000e+00> : vector<16xf32>
    %63 = vector.multi_reduction <add>, %62, %cst_60 [1] : vector<16x128xf32> to vector<16xf32>
    %64 = vector.shape_cast %63 : vector<16xf32> to vector<16x1xf32>
    %65 = arith.addf %1, %64 : vector<16x1xf32>
    %c0_61 = arith.constant 0 : index
    %c0_62 = arith.constant 0 : index
    %66 = vector.load %arg7[%c0_61, %c0_62] : memref<16x128xf32, #tpu.memory_space<vmem>>, vector<16x128xf32>
    tpu.vector_store %arg7[%c0_61, %c0_62], %55 {strides = array<i32>} : memref<16x128xf32, #tpu.memory_space<vmem>>, vector<16x128xf32>,
    %cst_63 = arith.constant 1.562500e-02 : f32
    %67 = vector.broadcast %cst_63 : f32 to vector<16x1xf32>
    %68 = arith.mulf %61, %67 : vector<16x1xf32>
    %cst_64 = arith.constant 1.562500e-02 : f32
    %69 = vector.broadcast %cst_64 : f32 to vector<16x1xf32>
    %70 = arith.mulf %65, %69 : vector<16x1xf32>
    %71 = arith.mulf %68, %68 : vector<16x1xf32>
    %72 = arith.subf %70, %71 : vector<16x1xf32>
    %cst_65 = arith.constant 0.000000e+00 : f32
    %73 = vector.broadcast %cst_65 : f32 to vector<16x1xf32>
    %74 = arith.maximumf %72, %73 : vector<16x1xf32>
    %cst_66 = arith.constant 9.99999974E-6 : f32
    %75 = vector.broadcast %cst_66 : f32 to vector<16x1xf32>
    %76 = arith.addf %74, %75 : vector<16x1xf32>
    %77 = math.rsqrt %76 : vector<16x1xf32>
    %c0_67 = arith.constant 0 : index
    %c0_68 = arith.constant 0 : index
    %78 = vector.load %arg7[%c0_67, %c0_68] : memref<16x128xf32, #tpu.memory_space<vmem>>, vector<16x128xf32>
    %79 = vector.broadcast %68 : vector<16x1xf32> to vector<16x128xf32>
    %80 = arith.subf %78, %79 : vector<16x128xf32>
    %81 = vector.broadcast %77 : vector<16x1xf32> to vector<16x128xf32>
    %82 = arith.mulf %80, %81 : vector<16x128xf32>
    %cst_69 = arith.constant 0.000000e+00 : f32
    %83 = vector.broadcast %cst_69 : f32 to vector<16x128xf32>
    %84 = arith.cmpf oge, %82, %83 : vector<16x128xf32>
    %cst_70 = arith.constant 2.000000e-01 : f32
    %85 = vector.broadcast %cst_70 : f32 to vector<16x128xf32>
    %86 = arith.mulf %85, %82 : vector<16x128xf32>
    %87 = arith.select %84, %82, %86 : vector<16x128xi1>, vector<16x128xf32>
    %88 = arith.truncf %87 : vector<16x128xf32> to vector<16x128xbf16>
    %c0_71 = arith.constant 0 : index
    %c0_72 = arith.constant 0 : index
    %c0_73 = arith.constant 0 : index
    %89 = vector.load %arg5[%c0_71, %c0_72, %c0_73] : memref<1x16x128xbf16, #tpu.memory_space<vmem>>, vector<1x16x128xbf16>
    %90 = vector.shape_cast %89 : vector<1x16x128xbf16> to vector<16x128xbf16>
    %91 = vector.shape_cast %88 : vector<16x128xbf16> to vector<1x16x128xbf16>
    tpu.vector_store %arg5[%c0_71, %c0_72, %c0_73], %91 {strides = array<i32>} : memref<1x16x128xbf16, #tpu.memory_space<vmem>>, vector<1x16x128xbf16>,
    return
  }
  func.func @transform_0(%arg0: i32) -> (i32, i32, i32) {
    %c0_i32 = arith.constant 0 : i32
    %c0_i32_0 = arith.constant 0 : i32
    %c0_i32_1 = arith.constant 0 : i32
    return %arg0, %c0_i32, %c0_i32_0 : i32, i32, i32
  }
  func.func @transform_1(%arg0: i32) -> (i32, i32) {
    %c0_i32 = arith.constant 0 : i32
    %c0_i32_0 = arith.constant 0 : i32
    %c0_i32_1 = arith.constant 0 : i32
    return %c0_i32, %c0_i32_0 : i32, i32
  }
  func.func @transform_2(%arg0: i32) -> (i32, i32) {
    %c0_i32 = arith.constant 0 : i32
    %c0_i32_0 = arith.constant 0 : i32
    %c0_i32_1 = arith.constant 0 : i32
    return %c0_i32, %c0_i32_0 : i32, i32
  }
  func.func @transform_3(%arg0: i32) -> (i32, i32) {
    %c0_i32 = arith.constant 0 : i32
    %c0_i32_0 = arith.constant 0 : i32
    %c0_i32_1 = arith.constant 0 : i32
    return %c0_i32, %c0_i32_0 : i32, i32
  }
  func.func @transform_4(%arg0: i32) -> (i32, i32, i32) {
    %c0_i32 = arith.constant 0 : i32
    %c0_i32_0 = arith.constant 0 : i32
    %c0_i32_1 = arith.constant 0 : i32
    return %arg0, %c0_i32, %c0_i32_0 : i32, i32, i32
  }
}

module attributes {stable_mosaic.version = 11 : i64} {
  func.func @_disc_conv_kernel(%arg0: i32, %arg1: memref<1x16x1024xbf16, #tpu.memory_space<vmem>>, %arg2: memref<32x256xbf16, #tpu.memory_space<vmem>>, %arg3: memref<32x1xf32, #tpu.memory_space<vmem>>, %arg4: memref<1x128xf32, #tpu.memory_space<vmem>>, %arg5: memref<1x32x128xbf16, #tpu.memory_space<vmem>>, %arg6: memref<256x128xbf16, #tpu.memory_space<vmem>>, %arg7: memref<32x128xf32, #tpu.memory_space<vmem>>) attributes {dimension_semantics = [#tpu.dimension_semantics<parallel>], iteration_bounds = array<i64: 2>, scalar_prefetch = 0 : i64, scratch_operands = 2 : i64, tpu.core_type = #tpu.core_type<tc>, window_params = [{transform_indices = @transform_0, window_bounds = array<i64: 1, 16, 1024>}, {pipeline_mode = #tpu.pipeline_mode<synchronous>, transform_indices = @transform_1, window_bounds = array<i64: 32, 256>}, {pipeline_mode = #tpu.pipeline_mode<synchronous>, transform_indices = @transform_2, window_bounds = array<i64: 32, 1>}, {pipeline_mode = #tpu.pipeline_mode<synchronous>, transform_indices = @transform_3, window_bounds = array<i64: 1, 128>}, {transform_indices = @transform_4, window_bounds = array<i64: 1, 32, 128>}]} {
    %cst = arith.constant 0.000000e+00 : f32
    %0 = vector.broadcast %cst : f32 to vector<32x1xf32>
    %cst_0 = arith.constant 0.000000e+00 : f32
    %1 = vector.broadcast %cst_0 : f32 to vector<32x1xf32>
    %c0 = arith.constant 0 : index
    %c0_1 = arith.constant 0 : index
    %c0_2 = arith.constant 0 : index
    %2 = vector.load %arg1[%c0, %c0_1, %c0_2] : memref<1x16x1024xbf16, #tpu.memory_space<vmem>>, vector<1x16x128xbf16>
    %3 = vector.shape_cast %2 : vector<1x16x128xbf16> to vector<16x128xbf16>
    %c0_3 = arith.constant 0 : index
    %c0_4 = arith.constant 0 : index
    %4 = vector.load %arg6[%c0_3, %c0_4] : memref<256x128xbf16, #tpu.memory_space<vmem>>, vector<16x128xbf16>
    tpu.vector_store %arg6[%c0_3, %c0_4], %3 {strides = array<i32>} : memref<256x128xbf16, #tpu.memory_space<vmem>>, vector<16x128xbf16>,
    %c0_5 = arith.constant 0 : index
    %c0_6 = arith.constant 0 : index
    %c256 = arith.constant 256 : index
    %5 = vector.load %arg1[%c0_5, %c0_6, %c256] : memref<1x16x1024xbf16, #tpu.memory_space<vmem>>, vector<1x16x128xbf16>
    %6 = vector.shape_cast %5 : vector<1x16x128xbf16> to vector<16x128xbf16>
    %c16 = arith.constant 16 : index
    %c0_7 = arith.constant 0 : index
    %7 = vector.load %arg6[%c16, %c0_7] : memref<256x128xbf16, #tpu.memory_space<vmem>>, vector<16x128xbf16>
    tpu.vector_store %arg6[%c16, %c0_7], %6 {strides = array<i32>} : memref<256x128xbf16, #tpu.memory_space<vmem>>, vector<16x128xbf16>,
    %c0_8 = arith.constant 0 : index
    %c0_9 = arith.constant 0 : index
    %c1 = arith.constant 1 : index
    %8 = vector.load %arg1[%c0_8, %c0_9, %c1] : memref<1x16x1024xbf16, #tpu.memory_space<vmem>>, vector<1x16x128xbf16>
    %9 = vector.shape_cast %8 : vector<1x16x128xbf16> to vector<16x128xbf16>
    %c32 = arith.constant 32 : index
    %c0_10 = arith.constant 0 : index
    %10 = vector.load %arg6[%c32, %c0_10] : memref<256x128xbf16, #tpu.memory_space<vmem>>, vector<16x128xbf16>
    tpu.vector_store %arg6[%c32, %c0_10], %9 {strides = array<i32>} : memref<256x128xbf16, #tpu.memory_space<vmem>>, vector<16x128xbf16>,
    %c0_11 = arith.constant 0 : index
    %c0_12 = arith.constant 0 : index
    %c257 = arith.constant 257 : index
    %11 = vector.load %arg1[%c0_11, %c0_12, %c257] : memref<1x16x1024xbf16, #tpu.memory_space<vmem>>, vector<1x16x128xbf16>
    %12 = vector.shape_cast %11 : vector<1x16x128xbf16> to vector<16x128xbf16>
    %c48 = arith.constant 48 : index
    %c0_13 = arith.constant 0 : index
    %13 = vector.load %arg6[%c48, %c0_13] : memref<256x128xbf16, #tpu.memory_space<vmem>>, vector<16x128xbf16>
    tpu.vector_store %arg6[%c48, %c0_13], %12 {strides = array<i32>} : memref<256x128xbf16, #tpu.memory_space<vmem>>, vector<16x128xbf16>,
    %c0_14 = arith.constant 0 : index
    %c0_15 = arith.constant 0 : index
    %c512 = arith.constant 512 : index
    %14 = vector.load %arg1[%c0_14, %c0_15, %c512] : memref<1x16x1024xbf16, #tpu.memory_space<vmem>>, vector<1x16x128xbf16>
    %15 = vector.shape_cast %14 : vector<1x16x128xbf16> to vector<16x128xbf16>
    %c64 = arith.constant 64 : index
    %c0_16 = arith.constant 0 : index
    %16 = vector.load %arg6[%c64, %c0_16] : memref<256x128xbf16, #tpu.memory_space<vmem>>, vector<16x128xbf16>
    tpu.vector_store %arg6[%c64, %c0_16], %15 {strides = array<i32>} : memref<256x128xbf16, #tpu.memory_space<vmem>>, vector<16x128xbf16>,
    %c0_17 = arith.constant 0 : index
    %c0_18 = arith.constant 0 : index
    %c768 = arith.constant 768 : index
    %17 = vector.load %arg1[%c0_17, %c0_18, %c768] : memref<1x16x1024xbf16, #tpu.memory_space<vmem>>, vector<1x16x128xbf16>
    %18 = vector.shape_cast %17 : vector<1x16x128xbf16> to vector<16x128xbf16>
    %c80 = arith.constant 80 : index
    %c0_19 = arith.constant 0 : index
    %19 = vector.load %arg6[%c80, %c0_19] : memref<256x128xbf16, #tpu.memory_space<vmem>>, vector<16x128xbf16>
    tpu.vector_store %arg6[%c80, %c0_19], %18 {strides = array<i32>} : memref<256x128xbf16, #tpu.memory_space<vmem>>, vector<16x128xbf16>,
    %c0_20 = arith.constant 0 : index
    %c0_21 = arith.constant 0 : index
    %c513 = arith.constant 513 : index
    %20 = vector.load %arg1[%c0_20, %c0_21, %c513] : memref<1x16x1024xbf16, #tpu.memory_space<vmem>>, vector<1x16x128xbf16>
    %21 = vector.shape_cast %20 : vector<1x16x128xbf16> to vector<16x128xbf16>
    %c96 = arith.constant 96 : index
    %c0_22 = arith.constant 0 : index
    %22 = vector.load %arg6[%c96, %c0_22] : memref<256x128xbf16, #tpu.memory_space<vmem>>, vector<16x128xbf16>
    tpu.vector_store %arg6[%c96, %c0_22], %21 {strides = array<i32>} : memref<256x128xbf16, #tpu.memory_space<vmem>>, vector<16x128xbf16>,
    %c0_23 = arith.constant 0 : index
    %c0_24 = arith.constant 0 : index
    %c769 = arith.constant 769 : index
    %23 = vector.load %arg1[%c0_23, %c0_24, %c769] : memref<1x16x1024xbf16, #tpu.memory_space<vmem>>, vector<1x16x128xbf16>
    %24 = vector.shape_cast %23 : vector<1x16x128xbf16> to vector<16x128xbf16>
    %c112 = arith.constant 112 : index
    %c0_25 = arith.constant 0 : index
    %25 = vector.load %arg6[%c112, %c0_25] : memref<256x128xbf16, #tpu.memory_space<vmem>>, vector<16x128xbf16>
    tpu.vector_store %arg6[%c112, %c0_25], %24 {strides = array<i32>} : memref<256x128xbf16, #tpu.memory_space<vmem>>, vector<16x128xbf16>,
    %c0_26 = arith.constant 0 : index
    %c0_27 = arith.constant 0 : index
    %c5 = arith.constant 5 : index
    %26 = vector.load %arg1[%c0_26, %c0_27, %c5] : memref<1x16x1024xbf16, #tpu.memory_space<vmem>>, vector<1x16x128xbf16>
    %27 = vector.shape_cast %26 : vector<1x16x128xbf16> to vector<16x128xbf16>
    %c128 = arith.constant 128 : index
    %c0_28 = arith.constant 0 : index
    %28 = vector.load %arg6[%c128, %c0_28] : memref<256x128xbf16, #tpu.memory_space<vmem>>, vector<16x128xbf16>
    tpu.vector_store %arg6[%c128, %c0_28], %27 {strides = array<i32>} : memref<256x128xbf16, #tpu.memory_space<vmem>>, vector<16x128xbf16>,
    %c0_29 = arith.constant 0 : index
    %c0_30 = arith.constant 0 : index
    %c261 = arith.constant 261 : index
    %29 = vector.load %arg1[%c0_29, %c0_30, %c261] : memref<1x16x1024xbf16, #tpu.memory_space<vmem>>, vector<1x16x128xbf16>
    %30 = vector.shape_cast %29 : vector<1x16x128xbf16> to vector<16x128xbf16>
    %c144 = arith.constant 144 : index
    %c0_31 = arith.constant 0 : index
    %31 = vector.load %arg6[%c144, %c0_31] : memref<256x128xbf16, #tpu.memory_space<vmem>>, vector<16x128xbf16>
    tpu.vector_store %arg6[%c144, %c0_31], %30 {strides = array<i32>} : memref<256x128xbf16, #tpu.memory_space<vmem>>, vector<16x128xbf16>,
    %c0_32 = arith.constant 0 : index
    %c0_33 = arith.constant 0 : index
    %c6 = arith.constant 6 : index
    %32 = vector.load %arg1[%c0_32, %c0_33, %c6] : memref<1x16x1024xbf16, #tpu.memory_space<vmem>>, vector<1x16x128xbf16>
    %33 = vector.shape_cast %32 : vector<1x16x128xbf16> to vector<16x128xbf16>
    %c160 = arith.constant 160 : index
    %c0_34 = arith.constant 0 : index
    %34 = vector.load %arg6[%c160, %c0_34] : memref<256x128xbf16, #tpu.memory_space<vmem>>, vector<16x128xbf16>
    tpu.vector_store %arg6[%c160, %c0_34], %33 {strides = array<i32>} : memref<256x128xbf16, #tpu.memory_space<vmem>>, vector<16x128xbf16>,
    %c0_35 = arith.constant 0 : index
    %c0_36 = arith.constant 0 : index
    %c262 = arith.constant 262 : index
    %35 = vector.load %arg1[%c0_35, %c0_36, %c262] : memref<1x16x1024xbf16, #tpu.memory_space<vmem>>, vector<1x16x128xbf16>
    %36 = vector.shape_cast %35 : vector<1x16x128xbf16> to vector<16x128xbf16>
    %c176 = arith.constant 176 : index
    %c0_37 = arith.constant 0 : index
    %37 = vector.load %arg6[%c176, %c0_37] : memref<256x128xbf16, #tpu.memory_space<vmem>>, vector<16x128xbf16>
    tpu.vector_store %arg6[%c176, %c0_37], %36 {strides = array<i32>} : memref<256x128xbf16, #tpu.memory_space<vmem>>, vector<16x128xbf16>,
    %c0_38 = arith.constant 0 : index
    %c0_39 = arith.constant 0 : index
    %c517 = arith.constant 517 : index
    %38 = vector.load %arg1[%c0_38, %c0_39, %c517] : memref<1x16x1024xbf16, #tpu.memory_space<vmem>>, vector<1x16x128xbf16>
    %39 = vector.shape_cast %38 : vector<1x16x128xbf16> to vector<16x128xbf16>
    %c192 = arith.constant 192 : index
    %c0_40 = arith.constant 0 : index
    %40 = vector.load %arg6[%c192, %c0_40] : memref<256x128xbf16, #tpu.memory_space<vmem>>, vector<16x128xbf16>
    tpu.vector_store %arg6[%c192, %c0_40], %39 {strides = array<i32>} : memref<256x128xbf16, #tpu.memory_space<vmem>>, vector<16x128xbf16>,
    %c0_41 = arith.constant 0 : index
    %c0_42 = arith.constant 0 : index
    %c773 = arith.constant 773 : index
    %41 = vector.load %arg1[%c0_41, %c0_42, %c773] : memref<1x16x1024xbf16, #tpu.memory_space<vmem>>, vector<1x16x128xbf16>
    %42 = vector.shape_cast %41 : vector<1x16x128xbf16> to vector<16x128xbf16>
    %c208 = arith.constant 208 : index
    %c0_43 = arith.constant 0 : index
    %43 = vector.load %arg6[%c208, %c0_43] : memref<256x128xbf16, #tpu.memory_space<vmem>>, vector<16x128xbf16>
    tpu.vector_store %arg6[%c208, %c0_43], %42 {strides = array<i32>} : memref<256x128xbf16, #tpu.memory_space<vmem>>, vector<16x128xbf16>,
    %c0_44 = arith.constant 0 : index
    %c0_45 = arith.constant 0 : index
    %c518 = arith.constant 518 : index
    %44 = vector.load %arg1[%c0_44, %c0_45, %c518] : memref<1x16x1024xbf16, #tpu.memory_space<vmem>>, vector<1x16x128xbf16>
    %45 = vector.shape_cast %44 : vector<1x16x128xbf16> to vector<16x128xbf16>
    %c224 = arith.constant 224 : index
    %c0_46 = arith.constant 0 : index
    %46 = vector.load %arg6[%c224, %c0_46] : memref<256x128xbf16, #tpu.memory_space<vmem>>, vector<16x128xbf16>
    tpu.vector_store %arg6[%c224, %c0_46], %45 {strides = array<i32>} : memref<256x128xbf16, #tpu.memory_space<vmem>>, vector<16x128xbf16>,
    %c0_47 = arith.constant 0 : index
    %c0_48 = arith.constant 0 : index
    %c774 = arith.constant 774 : index
    %47 = vector.load %arg1[%c0_47, %c0_48, %c774] : memref<1x16x1024xbf16, #tpu.memory_space<vmem>>, vector<1x16x128xbf16>
    %48 = vector.shape_cast %47 : vector<1x16x128xbf16> to vector<16x128xbf16>
    %c240 = arith.constant 240 : index
    %c0_49 = arith.constant 0 : index
    %49 = vector.load %arg6[%c240, %c0_49] : memref<256x128xbf16, #tpu.memory_space<vmem>>, vector<16x128xbf16>
    tpu.vector_store %arg6[%c240, %c0_49], %48 {strides = array<i32>} : memref<256x128xbf16, #tpu.memory_space<vmem>>, vector<16x128xbf16>,
    %c0_50 = arith.constant 0 : index
    %c0_51 = arith.constant 0 : index
    %50 = vector.load %arg2[%c0_50, %c0_51] : memref<32x256xbf16, #tpu.memory_space<vmem>>, vector<32x256xbf16>
    %c0_52 = arith.constant 0 : index
    %c0_53 = arith.constant 0 : index
    %51 = vector.load %arg6[%c0_52, %c0_53] : memref<256x128xbf16, #tpu.memory_space<vmem>>, vector<256x128xbf16>
    %cst_54 = arith.constant dense<0.000000e+00> : vector<32x128xf32>
    %52 = tpu.matmul %50, %51, %cst_54 {dimension_numbers = #tpu.dot_dimension_numbers<[1], [0], [0], [1], [0, 0, 1, 1], [], []>} : vector<32x256xbf16>, vector<256x128xbf16>, vector<32x128xf32> -> vector<32x128xf32>
    %c0_55 = arith.constant 0 : index
    %c0_56 = arith.constant 0 : index
    %53 = vector.load %arg3[%c0_55, %c0_56] : memref<32x1xf32, #tpu.memory_space<vmem>>, vector<32x1xf32>
    %54 = vector.broadcast %53 : vector<32x1xf32> to vector<32x128xf32>
    %55 = arith.addf %52, %54 : vector<32x128xf32>
    %c0_57 = arith.constant 0 : index
    %c0_58 = arith.constant 0 : index
    %56 = vector.load %arg4[%c0_57, %c0_58] : memref<1x128xf32, #tpu.memory_space<vmem>>, vector<1x128xf32>
    %57 = vector.broadcast %56 : vector<1x128xf32> to vector<32x128xf32>
    %58 = arith.mulf %55, %57 : vector<32x128xf32>
    %cst_59 = arith.constant dense<0.000000e+00> : vector<32xf32>
    %59 = vector.multi_reduction <add>, %58, %cst_59 [1] : vector<32x128xf32> to vector<32xf32>
    %60 = vector.shape_cast %59 : vector<32xf32> to vector<32x1xf32>
    %61 = arith.addf %0, %60 : vector<32x1xf32>
    %62 = arith.mulf %58, %55 : vector<32x128xf32>
    %cst_60 = arith.constant dense<0.000000e+00> : vector<32xf32>
    %63 = vector.multi_reduction <add>, %62, %cst_60 [1] : vector<32x128xf32> to vector<32xf32>
    %64 = vector.shape_cast %63 : vector<32xf32> to vector<32x1xf32>
    %65 = arith.addf %1, %64 : vector<32x1xf32>
    %c0_61 = arith.constant 0 : index
    %c0_62 = arith.constant 0 : index
    %66 = vector.load %arg7[%c0_61, %c0_62] : memref<32x128xf32, #tpu.memory_space<vmem>>, vector<32x128xf32>
    tpu.vector_store %arg7[%c0_61, %c0_62], %55 {strides = array<i32>} : memref<32x128xf32, #tpu.memory_space<vmem>>, vector<32x128xf32>,
    %cst_63 = arith.constant 6.250000e-02 : f32
    %67 = vector.broadcast %cst_63 : f32 to vector<32x1xf32>
    %68 = arith.mulf %61, %67 : vector<32x1xf32>
    %cst_64 = arith.constant 6.250000e-02 : f32
    %69 = vector.broadcast %cst_64 : f32 to vector<32x1xf32>
    %70 = arith.mulf %65, %69 : vector<32x1xf32>
    %71 = arith.mulf %68, %68 : vector<32x1xf32>
    %72 = arith.subf %70, %71 : vector<32x1xf32>
    %cst_65 = arith.constant 0.000000e+00 : f32
    %73 = vector.broadcast %cst_65 : f32 to vector<32x1xf32>
    %74 = arith.maximumf %72, %73 : vector<32x1xf32>
    %cst_66 = arith.constant 9.99999974E-6 : f32
    %75 = vector.broadcast %cst_66 : f32 to vector<32x1xf32>
    %76 = arith.addf %74, %75 : vector<32x1xf32>
    %77 = math.rsqrt %76 : vector<32x1xf32>
    %c0_67 = arith.constant 0 : index
    %c0_68 = arith.constant 0 : index
    %78 = vector.load %arg7[%c0_67, %c0_68] : memref<32x128xf32, #tpu.memory_space<vmem>>, vector<32x128xf32>
    %79 = vector.broadcast %68 : vector<32x1xf32> to vector<32x128xf32>
    %80 = arith.subf %78, %79 : vector<32x128xf32>
    %81 = vector.broadcast %77 : vector<32x1xf32> to vector<32x128xf32>
    %82 = arith.mulf %80, %81 : vector<32x128xf32>
    %cst_69 = arith.constant 0.000000e+00 : f32
    %83 = vector.broadcast %cst_69 : f32 to vector<32x128xf32>
    %84 = arith.cmpf oge, %82, %83 : vector<32x128xf32>
    %cst_70 = arith.constant 2.000000e-01 : f32
    %85 = vector.broadcast %cst_70 : f32 to vector<32x128xf32>
    %86 = arith.mulf %85, %82 : vector<32x128xf32>
    %87 = arith.select %84, %82, %86 : vector<32x128xi1>, vector<32x128xf32>
    %88 = arith.truncf %87 : vector<32x128xf32> to vector<32x128xbf16>
    %c0_71 = arith.constant 0 : index
    %c0_72 = arith.constant 0 : index
    %c0_73 = arith.constant 0 : index
    %89 = vector.load %arg5[%c0_71, %c0_72, %c0_73] : memref<1x32x128xbf16, #tpu.memory_space<vmem>>, vector<1x32x128xbf16>
    %90 = vector.shape_cast %89 : vector<1x32x128xbf16> to vector<32x128xbf16>
    %91 = vector.shape_cast %88 : vector<32x128xbf16> to vector<1x32x128xbf16>
    tpu.vector_store %arg5[%c0_71, %c0_72, %c0_73], %91 {strides = array<i32>} : memref<1x32x128xbf16, #tpu.memory_space<vmem>>, vector<1x32x128xbf16>,
    return
  }
  func.func @transform_0(%arg0: i32) -> (i32, i32, i32) {
    %c0_i32 = arith.constant 0 : i32
    %c0_i32_0 = arith.constant 0 : i32
    %c0_i32_1 = arith.constant 0 : i32
    return %arg0, %c0_i32, %c0_i32_0 : i32, i32, i32
  }
  func.func @transform_1(%arg0: i32) -> (i32, i32) {
    %c0_i32 = arith.constant 0 : i32
    %c0_i32_0 = arith.constant 0 : i32
    %c0_i32_1 = arith.constant 0 : i32
    return %c0_i32, %c0_i32_0 : i32, i32
  }
  func.func @transform_2(%arg0: i32) -> (i32, i32) {
    %c0_i32 = arith.constant 0 : i32
    %c0_i32_0 = arith.constant 0 : i32
    %c0_i32_1 = arith.constant 0 : i32
    return %c0_i32, %c0_i32_0 : i32, i32
  }
  func.func @transform_3(%arg0: i32) -> (i32, i32) {
    %c0_i32 = arith.constant 0 : i32
    %c0_i32_0 = arith.constant 0 : i32
    %c0_i32_1 = arith.constant 0 : i32
    return %c0_i32, %c0_i32_0 : i32, i32
  }
  func.func @transform_4(%arg0: i32) -> (i32, i32, i32) {
    %c0_i32 = arith.constant 0 : i32
    %c0_i32_0 = arith.constant 0 : i32
    %c0_i32_1 = arith.constant 0 : i32
    return %arg0, %c0_i32, %c0_i32_0 : i32, i32, i32
  }
}

module attributes {stable_mosaic.version = 11 : i64} {
  func.func @_disc_conv_kernel(%arg0: i32, %arg1: memref<1x32x256xbf16, #tpu.memory_space<vmem>>, %arg2: memref<64x512xbf16, #tpu.memory_space<vmem>>, %arg3: memref<64x1xf32, #tpu.memory_space<vmem>>, %arg4: memref<1x128xf32, #tpu.memory_space<vmem>>, %arg5: memref<1x64x128xbf16, #tpu.memory_space<vmem>>, %arg6: memref<512x128xbf16, #tpu.memory_space<vmem>>, %arg7: memref<64x128xf32, #tpu.memory_space<vmem>>) attributes {dimension_semantics = [#tpu.dimension_semantics<parallel>], iteration_bounds = array<i64: 2>, scalar_prefetch = 0 : i64, scratch_operands = 2 : i64, tpu.core_type = #tpu.core_type<tc>, window_params = [{transform_indices = @transform_0, window_bounds = array<i64: 1, 32, 256>}, {pipeline_mode = #tpu.pipeline_mode<synchronous>, transform_indices = @transform_1, window_bounds = array<i64: 64, 512>}, {pipeline_mode = #tpu.pipeline_mode<synchronous>, transform_indices = @transform_2, window_bounds = array<i64: 64, 1>}, {pipeline_mode = #tpu.pipeline_mode<synchronous>, transform_indices = @transform_3, window_bounds = array<i64: 1, 128>}, {transform_indices = @transform_4, window_bounds = array<i64: 1, 64, 128>}]} {
    %cst = arith.constant 0.000000e+00 : f32
    %0 = vector.broadcast %cst : f32 to vector<64x1xf32>
    %cst_0 = arith.constant 0.000000e+00 : f32
    %1 = vector.broadcast %cst_0 : f32 to vector<64x1xf32>
    %c0 = arith.constant 0 : index
    %c0_1 = arith.constant 0 : index
    %c0_2 = arith.constant 0 : index
    %2 = vector.load %arg1[%c0, %c0_1, %c0_2] : memref<1x32x256xbf16, #tpu.memory_space<vmem>>, vector<1x32x128xbf16>
    %3 = vector.shape_cast %2 : vector<1x32x128xbf16> to vector<32x128xbf16>
    %c0_3 = arith.constant 0 : index
    %c0_4 = arith.constant 0 : index
    %4 = vector.load %arg6[%c0_3, %c0_4] : memref<512x128xbf16, #tpu.memory_space<vmem>>, vector<32x128xbf16>
    tpu.vector_store %arg6[%c0_3, %c0_4], %3 {strides = array<i32>} : memref<512x128xbf16, #tpu.memory_space<vmem>>, vector<32x128xbf16>,
    %c0_5 = arith.constant 0 : index
    %c0_6 = arith.constant 0 : index
    %c1 = arith.constant 1 : index
    %5 = vector.load %arg1[%c0_5, %c0_6, %c1] : memref<1x32x256xbf16, #tpu.memory_space<vmem>>, vector<1x32x128xbf16>
    %6 = vector.shape_cast %5 : vector<1x32x128xbf16> to vector<32x128xbf16>
    %c32 = arith.constant 32 : index
    %c0_7 = arith.constant 0 : index
    %7 = vector.load %arg6[%c32, %c0_7] : memref<512x128xbf16, #tpu.memory_space<vmem>>, vector<32x128xbf16>
    tpu.vector_store %arg6[%c32, %c0_7], %6 {strides = array<i32>} : memref<512x128xbf16, #tpu.memory_space<vmem>>, vector<32x128xbf16>,
    %c0_8 = arith.constant 0 : index
    %c0_9 = arith.constant 0 : index
    %c2 = arith.constant 2 : index
    %8 = vector.load %arg1[%c0_8, %c0_9, %c2] : memref<1x32x256xbf16, #tpu.memory_space<vmem>>, vector<1x32x128xbf16>
    %9 = vector.shape_cast %8 : vector<1x32x128xbf16> to vector<32x128xbf16>
    %c64 = arith.constant 64 : index
    %c0_10 = arith.constant 0 : index
    %10 = vector.load %arg6[%c64, %c0_10] : memref<512x128xbf16, #tpu.memory_space<vmem>>, vector<32x128xbf16>
    tpu.vector_store %arg6[%c64, %c0_10], %9 {strides = array<i32>} : memref<512x128xbf16, #tpu.memory_space<vmem>>, vector<32x128xbf16>,
    %c0_11 = arith.constant 0 : index
    %c0_12 = arith.constant 0 : index
    %c3 = arith.constant 3 : index
    %11 = vector.load %arg1[%c0_11, %c0_12, %c3] : memref<1x32x256xbf16, #tpu.memory_space<vmem>>, vector<1x32x128xbf16>
    %12 = vector.shape_cast %11 : vector<1x32x128xbf16> to vector<32x128xbf16>
    %c96 = arith.constant 96 : index
    %c0_13 = arith.constant 0 : index
    %13 = vector.load %arg6[%c96, %c0_13] : memref<512x128xbf16, #tpu.memory_space<vmem>>, vector<32x128xbf16>
    tpu.vector_store %arg6[%c96, %c0_13], %12 {strides = array<i32>} : memref<512x128xbf16, #tpu.memory_space<vmem>>, vector<32x128xbf16>,
    %c0_14 = arith.constant 0 : index
    %c0_15 = arith.constant 0 : index
    %c6 = arith.constant 6 : index
    %14 = vector.load %arg1[%c0_14, %c0_15, %c6] : memref<1x32x256xbf16, #tpu.memory_space<vmem>>, vector<1x32x128xbf16>
    %15 = vector.shape_cast %14 : vector<1x32x128xbf16> to vector<32x128xbf16>
    %c128 = arith.constant 128 : index
    %c0_16 = arith.constant 0 : index
    %16 = vector.load %arg6[%c128, %c0_16] : memref<512x128xbf16, #tpu.memory_space<vmem>>, vector<32x128xbf16>
    tpu.vector_store %arg6[%c128, %c0_16], %15 {strides = array<i32>} : memref<512x128xbf16, #tpu.memory_space<vmem>>, vector<32x128xbf16>,
    %c0_17 = arith.constant 0 : index
    %c0_18 = arith.constant 0 : index
    %c7 = arith.constant 7 : index
    %17 = vector.load %arg1[%c0_17, %c0_18, %c7] : memref<1x32x256xbf16, #tpu.memory_space<vmem>>, vector<1x32x128xbf16>
    %18 = vector.shape_cast %17 : vector<1x32x128xbf16> to vector<32x128xbf16>
    %c160 = arith.constant 160 : index
    %c0_19 = arith.constant 0 : index
    %19 = vector.load %arg6[%c160, %c0_19] : memref<512x128xbf16, #tpu.memory_space<vmem>>, vector<32x128xbf16>
    tpu.vector_store %arg6[%c160, %c0_19], %18 {strides = array<i32>} : memref<512x128xbf16, #tpu.memory_space<vmem>>, vector<32x128xbf16>,
    %c0_20 = arith.constant 0 : index
    %c0_21 = arith.constant 0 : index
    %c8 = arith.constant 8 : index
    %20 = vector.load %arg1[%c0_20, %c0_21, %c8] : memref<1x32x256xbf16, #tpu.memory_space<vmem>>, vector<1x32x128xbf16>
    %21 = vector.shape_cast %20 : vector<1x32x128xbf16> to vector<32x128xbf16>
    %c192 = arith.constant 192 : index
    %c0_22 = arith.constant 0 : index
    %22 = vector.load %arg6[%c192, %c0_22] : memref<512x128xbf16, #tpu.memory_space<vmem>>, vector<32x128xbf16>
    tpu.vector_store %arg6[%c192, %c0_22], %21 {strides = array<i32>} : memref<512x128xbf16, #tpu.memory_space<vmem>>, vector<32x128xbf16>,
    %c0_23 = arith.constant 0 : index
    %c0_24 = arith.constant 0 : index
    %c9 = arith.constant 9 : index
    %23 = vector.load %arg1[%c0_23, %c0_24, %c9] : memref<1x32x256xbf16, #tpu.memory_space<vmem>>, vector<1x32x128xbf16>
    %24 = vector.shape_cast %23 : vector<1x32x128xbf16> to vector<32x128xbf16>
    %c224 = arith.constant 224 : index
    %c0_25 = arith.constant 0 : index
    %25 = vector.load %arg6[%c224, %c0_25] : memref<512x128xbf16, #tpu.memory_space<vmem>>, vector<32x128xbf16>
    tpu.vector_store %arg6[%c224, %c0_25], %24 {strides = array<i32>} : memref<512x128xbf16, #tpu.memory_space<vmem>>, vector<32x128xbf16>,
    %c0_26 = arith.constant 0 : index
    %c0_27 = arith.constant 0 : index
    %c12 = arith.constant 12 : index
    %26 = vector.load %arg1[%c0_26, %c0_27, %c12] : memref<1x32x256xbf16, #tpu.memory_space<vmem>>, vector<1x32x128xbf16>
    %27 = vector.shape_cast %26 : vector<1x32x128xbf16> to vector<32x128xbf16>
    %c256 = arith.constant 256 : index
    %c0_28 = arith.constant 0 : index
    %28 = vector.load %arg6[%c256, %c0_28] : memref<512x128xbf16, #tpu.memory_space<vmem>>, vector<32x128xbf16>
    tpu.vector_store %arg6[%c256, %c0_28], %27 {strides = array<i32>} : memref<512x128xbf16, #tpu.memory_space<vmem>>, vector<32x128xbf16>,
    %c0_29 = arith.constant 0 : index
    %c0_30 = arith.constant 0 : index
    %c13 = arith.constant 13 : index
    %29 = vector.load %arg1[%c0_29, %c0_30, %c13] : memref<1x32x256xbf16, #tpu.memory_space<vmem>>, vector<1x32x128xbf16>
    %30 = vector.shape_cast %29 : vector<1x32x128xbf16> to vector<32x128xbf16>
    %c288 = arith.constant 288 : index
    %c0_31 = arith.constant 0 : index
    %31 = vector.load %arg6[%c288, %c0_31] : memref<512x128xbf16, #tpu.memory_space<vmem>>, vector<32x128xbf16>
    tpu.vector_store %arg6[%c288, %c0_31], %30 {strides = array<i32>} : memref<512x128xbf16, #tpu.memory_space<vmem>>, vector<32x128xbf16>,
    %c0_32 = arith.constant 0 : index
    %c0_33 = arith.constant 0 : index
    %c14 = arith.constant 14 : index
    %32 = vector.load %arg1[%c0_32, %c0_33, %c14] : memref<1x32x256xbf16, #tpu.memory_space<vmem>>, vector<1x32x128xbf16>
    %33 = vector.shape_cast %32 : vector<1x32x128xbf16> to vector<32x128xbf16>
    %c320 = arith.constant 320 : index
    %c0_34 = arith.constant 0 : index
    %34 = vector.load %arg6[%c320, %c0_34] : memref<512x128xbf16, #tpu.memory_space<vmem>>, vector<32x128xbf16>
    tpu.vector_store %arg6[%c320, %c0_34], %33 {strides = array<i32>} : memref<512x128xbf16, #tpu.memory_space<vmem>>, vector<32x128xbf16>,
    %c0_35 = arith.constant 0 : index
    %c0_36 = arith.constant 0 : index
    %c15 = arith.constant 15 : index
    %35 = vector.load %arg1[%c0_35, %c0_36, %c15] : memref<1x32x256xbf16, #tpu.memory_space<vmem>>, vector<1x32x128xbf16>
    %36 = vector.shape_cast %35 : vector<1x32x128xbf16> to vector<32x128xbf16>
    %c352 = arith.constant 352 : index
    %c0_37 = arith.constant 0 : index
    %37 = vector.load %arg6[%c352, %c0_37] : memref<512x128xbf16, #tpu.memory_space<vmem>>, vector<32x128xbf16>
    tpu.vector_store %arg6[%c352, %c0_37], %36 {strides = array<i32>} : memref<512x128xbf16, #tpu.memory_space<vmem>>, vector<32x128xbf16>,
    %c0_38 = arith.constant 0 : index
    %c0_39 = arith.constant 0 : index
    %c18 = arith.constant 18 : index
    %38 = vector.load %arg1[%c0_38, %c0_39, %c18] : memref<1x32x256xbf16, #tpu.memory_space<vmem>>, vector<1x32x128xbf16>
    %39 = vector.shape_cast %38 : vector<1x32x128xbf16> to vector<32x128xbf16>
    %c384 = arith.constant 384 : index
    %c0_40 = arith.constant 0 : index
    %40 = vector.load %arg6[%c384, %c0_40] : memref<512x128xbf16, #tpu.memory_space<vmem>>, vector<32x128xbf16>
    tpu.vector_store %arg6[%c384, %c0_40], %39 {strides = array<i32>} : memref<512x128xbf16, #tpu.memory_space<vmem>>, vector<32x128xbf16>,
    %c0_41 = arith.constant 0 : index
    %c0_42 = arith.constant 0 : index
    %c19 = arith.constant 19 : index
    %41 = vector.load %arg1[%c0_41, %c0_42, %c19] : memref<1x32x256xbf16, #tpu.memory_space<vmem>>, vector<1x32x128xbf16>
    %42 = vector.shape_cast %41 : vector<1x32x128xbf16> to vector<32x128xbf16>
    %c416 = arith.constant 416 : index
    %c0_43 = arith.constant 0 : index
    %43 = vector.load %arg6[%c416, %c0_43] : memref<512x128xbf16, #tpu.memory_space<vmem>>, vector<32x128xbf16>
    tpu.vector_store %arg6[%c416, %c0_43], %42 {strides = array<i32>} : memref<512x128xbf16, #tpu.memory_space<vmem>>, vector<32x128xbf16>,
    %c0_44 = arith.constant 0 : index
    %c0_45 = arith.constant 0 : index
    %c20 = arith.constant 20 : index
    %44 = vector.load %arg1[%c0_44, %c0_45, %c20] : memref<1x32x256xbf16, #tpu.memory_space<vmem>>, vector<1x32x128xbf16>
    %45 = vector.shape_cast %44 : vector<1x32x128xbf16> to vector<32x128xbf16>
    %c448 = arith.constant 448 : index
    %c0_46 = arith.constant 0 : index
    %46 = vector.load %arg6[%c448, %c0_46] : memref<512x128xbf16, #tpu.memory_space<vmem>>, vector<32x128xbf16>
    tpu.vector_store %arg6[%c448, %c0_46], %45 {strides = array<i32>} : memref<512x128xbf16, #tpu.memory_space<vmem>>, vector<32x128xbf16>,
    %c0_47 = arith.constant 0 : index
    %c0_48 = arith.constant 0 : index
    %c21 = arith.constant 21 : index
    %47 = vector.load %arg1[%c0_47, %c0_48, %c21] : memref<1x32x256xbf16, #tpu.memory_space<vmem>>, vector<1x32x128xbf16>
    %48 = vector.shape_cast %47 : vector<1x32x128xbf16> to vector<32x128xbf16>
    %c480 = arith.constant 480 : index
    %c0_49 = arith.constant 0 : index
    %49 = vector.load %arg6[%c480, %c0_49] : memref<512x128xbf16, #tpu.memory_space<vmem>>, vector<32x128xbf16>
    tpu.vector_store %arg6[%c480, %c0_49], %48 {strides = array<i32>} : memref<512x128xbf16, #tpu.memory_space<vmem>>, vector<32x128xbf16>,
    %c0_50 = arith.constant 0 : index
    %c0_51 = arith.constant 0 : index
    %50 = vector.load %arg2[%c0_50, %c0_51] : memref<64x512xbf16, #tpu.memory_space<vmem>>, vector<64x512xbf16>
    %c0_52 = arith.constant 0 : index
    %c0_53 = arith.constant 0 : index
    %51 = vector.load %arg6[%c0_52, %c0_53] : memref<512x128xbf16, #tpu.memory_space<vmem>>, vector<512x128xbf16>
    %cst_54 = arith.constant dense<0.000000e+00> : vector<64x128xf32>
    %52 = tpu.matmul %50, %51, %cst_54 {dimension_numbers = #tpu.dot_dimension_numbers<[1], [0], [0], [1], [0, 0, 1, 1], [], []>} : vector<64x512xbf16>, vector<512x128xbf16>, vector<64x128xf32> -> vector<64x128xf32>
    %c0_55 = arith.constant 0 : index
    %c0_56 = arith.constant 0 : index
    %53 = vector.load %arg3[%c0_55, %c0_56] : memref<64x1xf32, #tpu.memory_space<vmem>>, vector<64x1xf32>
    %54 = vector.broadcast %53 : vector<64x1xf32> to vector<64x128xf32>
    %55 = arith.addf %52, %54 : vector<64x128xf32>
    %c0_57 = arith.constant 0 : index
    %c0_58 = arith.constant 0 : index
    %56 = vector.load %arg4[%c0_57, %c0_58] : memref<1x128xf32, #tpu.memory_space<vmem>>, vector<1x128xf32>
    %57 = vector.broadcast %56 : vector<1x128xf32> to vector<64x128xf32>
    %58 = arith.mulf %55, %57 : vector<64x128xf32>
    %cst_59 = arith.constant dense<0.000000e+00> : vector<64xf32>
    %59 = vector.multi_reduction <add>, %58, %cst_59 [1] : vector<64x128xf32> to vector<64xf32>
    %60 = vector.shape_cast %59 : vector<64xf32> to vector<64x1xf32>
    %61 = arith.addf %0, %60 : vector<64x1xf32>
    %62 = arith.mulf %58, %55 : vector<64x128xf32>
    %cst_60 = arith.constant dense<0.000000e+00> : vector<64xf32>
    %63 = vector.multi_reduction <add>, %62, %cst_60 [1] : vector<64x128xf32> to vector<64xf32>
    %64 = vector.shape_cast %63 : vector<64xf32> to vector<64x1xf32>
    %65 = arith.addf %1, %64 : vector<64x1xf32>
    %c0_61 = arith.constant 0 : index
    %c0_62 = arith.constant 0 : index
    %66 = vector.load %arg7[%c0_61, %c0_62] : memref<64x128xf32, #tpu.memory_space<vmem>>, vector<64x128xf32>
    tpu.vector_store %arg7[%c0_61, %c0_62], %55 {strides = array<i32>} : memref<64x128xf32, #tpu.memory_space<vmem>>, vector<64x128xf32>,
    %cst_63 = arith.constant 0.111111112 : f32
    %67 = vector.broadcast %cst_63 : f32 to vector<64x1xf32>
    %68 = arith.mulf %61, %67 : vector<64x1xf32>
    %cst_64 = arith.constant 0.111111112 : f32
    %69 = vector.broadcast %cst_64 : f32 to vector<64x1xf32>
    %70 = arith.mulf %65, %69 : vector<64x1xf32>
    %71 = arith.mulf %68, %68 : vector<64x1xf32>
    %72 = arith.subf %70, %71 : vector<64x1xf32>
    %cst_65 = arith.constant 0.000000e+00 : f32
    %73 = vector.broadcast %cst_65 : f32 to vector<64x1xf32>
    %74 = arith.maximumf %72, %73 : vector<64x1xf32>
    %cst_66 = arith.constant 9.99999974E-6 : f32
    %75 = vector.broadcast %cst_66 : f32 to vector<64x1xf32>
    %76 = arith.addf %74, %75 : vector<64x1xf32>
    %77 = math.rsqrt %76 : vector<64x1xf32>
    %c0_67 = arith.constant 0 : index
    %c0_68 = arith.constant 0 : index
    %78 = vector.load %arg7[%c0_67, %c0_68] : memref<64x128xf32, #tpu.memory_space<vmem>>, vector<64x128xf32>
    %79 = vector.broadcast %68 : vector<64x1xf32> to vector<64x128xf32>
    %80 = arith.subf %78, %79 : vector<64x128xf32>
    %81 = vector.broadcast %77 : vector<64x1xf32> to vector<64x128xf32>
    %82 = arith.mulf %80, %81 : vector<64x128xf32>
    %cst_69 = arith.constant 0.000000e+00 : f32
    %83 = vector.broadcast %cst_69 : f32 to vector<64x128xf32>
    %84 = arith.cmpf oge, %82, %83 : vector<64x128xf32>
    %cst_70 = arith.constant 2.000000e-01 : f32
    %85 = vector.broadcast %cst_70 : f32 to vector<64x128xf32>
    %86 = arith.mulf %85, %82 : vector<64x128xf32>
    %87 = arith.select %84, %82, %86 : vector<64x128xi1>, vector<64x128xf32>
    %88 = arith.truncf %87 : vector<64x128xf32> to vector<64x128xbf16>
    %c0_71 = arith.constant 0 : index
    %c0_72 = arith.constant 0 : index
    %c0_73 = arith.constant 0 : index
    %89 = vector.load %arg5[%c0_71, %c0_72, %c0_73] : memref<1x64x128xbf16, #tpu.memory_space<vmem>>, vector<1x64x128xbf16>
    %90 = vector.shape_cast %89 : vector<1x64x128xbf16> to vector<64x128xbf16>
    %91 = vector.shape_cast %88 : vector<64x128xbf16> to vector<1x64x128xbf16>
    tpu.vector_store %arg5[%c0_71, %c0_72, %c0_73], %91 {strides = array<i32>} : memref<1x64x128xbf16, #tpu.memory_space<vmem>>, vector<1x64x128xbf16>,
    return
  }
  func.func @transform_0(%arg0: i32) -> (i32, i32, i32) {
    %c0_i32 = arith.constant 0 : i32
    %c0_i32_0 = arith.constant 0 : i32
    %c0_i32_1 = arith.constant 0 : i32
    return %arg0, %c0_i32, %c0_i32_0 : i32, i32, i32
  }
  func.func @transform_1(%arg0: i32) -> (i32, i32) {
    %c0_i32 = arith.constant 0 : i32
    %c0_i32_0 = arith.constant 0 : i32
    %c0_i32_1 = arith.constant 0 : i32
    return %c0_i32, %c0_i32_0 : i32, i32
  }
  func.func @transform_2(%arg0: i32) -> (i32, i32) {
    %c0_i32 = arith.constant 0 : i32
    %c0_i32_0 = arith.constant 0 : i32
    %c0_i32_1 = arith.constant 0 : i32
    return %c0_i32, %c0_i32_0 : i32, i32
  }
  func.func @transform_3(%arg0: i32) -> (i32, i32) {
    %c0_i32 = arith.constant 0 : i32
    %c0_i32_0 = arith.constant 0 : i32
    %c0_i32_1 = arith.constant 0 : i32
    return %c0_i32, %c0_i32_0 : i32, i32
  }
  func.func @transform_4(%arg0: i32) -> (i32, i32, i32) {
    %c0_i32 = arith.constant 0 : i32
    %c0_i32_0 = arith.constant 0 : i32
    %c0_i32_1 = arith.constant 0 : i32
    return %arg0, %c0_i32, %c0_i32_0 : i32, i32, i32
  }
}

module attributes {stable_mosaic.version = 11 : i64} {
  func.func @_disc_conv_kernel(%arg0: i32, %arg1: memref<1x64x256xbf16, #tpu.memory_space<vmem>>, %arg2: memref<8x1024xbf16, #tpu.memory_space<vmem>>, %arg3: memref<8x1xf32, #tpu.memory_space<vmem>>, %arg4: memref<1x128xf32, #tpu.memory_space<vmem>>, %arg5: memref<1x1x128xf32, #tpu.memory_space<vmem>>, %arg6: memref<1024x128xbf16, #tpu.memory_space<vmem>>) attributes {dimension_semantics = [#tpu.dimension_semantics<parallel>], iteration_bounds = array<i64: 2>, scalar_prefetch = 0 : i64, scratch_operands = 1 : i64, tpu.core_type = #tpu.core_type<tc>, window_params = [{transform_indices = @transform_0, window_bounds = array<i64: 1, 64, 256>}, {pipeline_mode = #tpu.pipeline_mode<synchronous>, transform_indices = @transform_1, window_bounds = array<i64: 8, 1024>}, {pipeline_mode = #tpu.pipeline_mode<synchronous>, transform_indices = @transform_2, window_bounds = array<i64: 8, 1>}, {pipeline_mode = #tpu.pipeline_mode<synchronous>, transform_indices = @transform_3, window_bounds = array<i64: 1, 128>}, {transform_indices = @transform_4, window_bounds = array<i64: 1, 1, 128>}]} {
    %c0 = arith.constant 0 : index
    %c0_0 = arith.constant 0 : index
    %c0_1 = arith.constant 0 : index
    %0 = vector.load %arg1[%c0, %c0_0, %c0_1] : memref<1x64x256xbf16, #tpu.memory_space<vmem>>, vector<1x64x128xbf16>
    %1 = vector.shape_cast %0 : vector<1x64x128xbf16> to vector<64x128xbf16>
    %c0_2 = arith.constant 0 : index
    %c0_3 = arith.constant 0 : index
    %2 = vector.load %arg6[%c0_2, %c0_3] : memref<1024x128xbf16, #tpu.memory_space<vmem>>, vector<64x128xbf16>
    tpu.vector_store %arg6[%c0_2, %c0_3], %1 {strides = array<i32>} : memref<1024x128xbf16, #tpu.memory_space<vmem>>, vector<64x128xbf16>,
    %c0_4 = arith.constant 0 : index
    %c0_5 = arith.constant 0 : index
    %c1 = arith.constant 1 : index
    %3 = vector.load %arg1[%c0_4, %c0_5, %c1] : memref<1x64x256xbf16, #tpu.memory_space<vmem>>, vector<1x64x128xbf16>
    %4 = vector.shape_cast %3 : vector<1x64x128xbf16> to vector<64x128xbf16>
    %c64 = arith.constant 64 : index
    %c0_6 = arith.constant 0 : index
    %5 = vector.load %arg6[%c64, %c0_6] : memref<1024x128xbf16, #tpu.memory_space<vmem>>, vector<64x128xbf16>
    tpu.vector_store %arg6[%c64, %c0_6], %4 {strides = array<i32>} : memref<1024x128xbf16, #tpu.memory_space<vmem>>, vector<64x128xbf16>,
    %c0_7 = arith.constant 0 : index
    %c0_8 = arith.constant 0 : index
    %c2 = arith.constant 2 : index
    %6 = vector.load %arg1[%c0_7, %c0_8, %c2] : memref<1x64x256xbf16, #tpu.memory_space<vmem>>, vector<1x64x128xbf16>
    %7 = vector.shape_cast %6 : vector<1x64x128xbf16> to vector<64x128xbf16>
    %c128 = arith.constant 128 : index
    %c0_9 = arith.constant 0 : index
    %8 = vector.load %arg6[%c128, %c0_9] : memref<1024x128xbf16, #tpu.memory_space<vmem>>, vector<64x128xbf16>
    tpu.vector_store %arg6[%c128, %c0_9], %7 {strides = array<i32>} : memref<1024x128xbf16, #tpu.memory_space<vmem>>, vector<64x128xbf16>,
    %c0_10 = arith.constant 0 : index
    %c0_11 = arith.constant 0 : index
    %c3 = arith.constant 3 : index
    %9 = vector.load %arg1[%c0_10, %c0_11, %c3] : memref<1x64x256xbf16, #tpu.memory_space<vmem>>, vector<1x64x128xbf16>
    %10 = vector.shape_cast %9 : vector<1x64x128xbf16> to vector<64x128xbf16>
    %c192 = arith.constant 192 : index
    %c0_12 = arith.constant 0 : index
    %11 = vector.load %arg6[%c192, %c0_12] : memref<1024x128xbf16, #tpu.memory_space<vmem>>, vector<64x128xbf16>
    tpu.vector_store %arg6[%c192, %c0_12], %10 {strides = array<i32>} : memref<1024x128xbf16, #tpu.memory_space<vmem>>, vector<64x128xbf16>,
    %c0_13 = arith.constant 0 : index
    %c0_14 = arith.constant 0 : index
    %c5 = arith.constant 5 : index
    %12 = vector.load %arg1[%c0_13, %c0_14, %c5] : memref<1x64x256xbf16, #tpu.memory_space<vmem>>, vector<1x64x128xbf16>
    %13 = vector.shape_cast %12 : vector<1x64x128xbf16> to vector<64x128xbf16>
    %c256 = arith.constant 256 : index
    %c0_15 = arith.constant 0 : index
    %14 = vector.load %arg6[%c256, %c0_15] : memref<1024x128xbf16, #tpu.memory_space<vmem>>, vector<64x128xbf16>
    tpu.vector_store %arg6[%c256, %c0_15], %13 {strides = array<i32>} : memref<1024x128xbf16, #tpu.memory_space<vmem>>, vector<64x128xbf16>,
    %c0_16 = arith.constant 0 : index
    %c0_17 = arith.constant 0 : index
    %c6 = arith.constant 6 : index
    %15 = vector.load %arg1[%c0_16, %c0_17, %c6] : memref<1x64x256xbf16, #tpu.memory_space<vmem>>, vector<1x64x128xbf16>
    %16 = vector.shape_cast %15 : vector<1x64x128xbf16> to vector<64x128xbf16>
    %c320 = arith.constant 320 : index
    %c0_18 = arith.constant 0 : index
    %17 = vector.load %arg6[%c320, %c0_18] : memref<1024x128xbf16, #tpu.memory_space<vmem>>, vector<64x128xbf16>
    tpu.vector_store %arg6[%c320, %c0_18], %16 {strides = array<i32>} : memref<1024x128xbf16, #tpu.memory_space<vmem>>, vector<64x128xbf16>,
    %c0_19 = arith.constant 0 : index
    %c0_20 = arith.constant 0 : index
    %c7 = arith.constant 7 : index
    %18 = vector.load %arg1[%c0_19, %c0_20, %c7] : memref<1x64x256xbf16, #tpu.memory_space<vmem>>, vector<1x64x128xbf16>
    %19 = vector.shape_cast %18 : vector<1x64x128xbf16> to vector<64x128xbf16>
    %c384 = arith.constant 384 : index
    %c0_21 = arith.constant 0 : index
    %20 = vector.load %arg6[%c384, %c0_21] : memref<1024x128xbf16, #tpu.memory_space<vmem>>, vector<64x128xbf16>
    tpu.vector_store %arg6[%c384, %c0_21], %19 {strides = array<i32>} : memref<1024x128xbf16, #tpu.memory_space<vmem>>, vector<64x128xbf16>,
    %c0_22 = arith.constant 0 : index
    %c0_23 = arith.constant 0 : index
    %c8 = arith.constant 8 : index
    %21 = vector.load %arg1[%c0_22, %c0_23, %c8] : memref<1x64x256xbf16, #tpu.memory_space<vmem>>, vector<1x64x128xbf16>
    %22 = vector.shape_cast %21 : vector<1x64x128xbf16> to vector<64x128xbf16>
    %c448 = arith.constant 448 : index
    %c0_24 = arith.constant 0 : index
    %23 = vector.load %arg6[%c448, %c0_24] : memref<1024x128xbf16, #tpu.memory_space<vmem>>, vector<64x128xbf16>
    tpu.vector_store %arg6[%c448, %c0_24], %22 {strides = array<i32>} : memref<1024x128xbf16, #tpu.memory_space<vmem>>, vector<64x128xbf16>,
    %c0_25 = arith.constant 0 : index
    %c0_26 = arith.constant 0 : index
    %c10 = arith.constant 10 : index
    %24 = vector.load %arg1[%c0_25, %c0_26, %c10] : memref<1x64x256xbf16, #tpu.memory_space<vmem>>, vector<1x64x128xbf16>
    %25 = vector.shape_cast %24 : vector<1x64x128xbf16> to vector<64x128xbf16>
    %c512 = arith.constant 512 : index
    %c0_27 = arith.constant 0 : index
    %26 = vector.load %arg6[%c512, %c0_27] : memref<1024x128xbf16, #tpu.memory_space<vmem>>, vector<64x128xbf16>
    tpu.vector_store %arg6[%c512, %c0_27], %25 {strides = array<i32>} : memref<1024x128xbf16, #tpu.memory_space<vmem>>, vector<64x128xbf16>,
    %c0_28 = arith.constant 0 : index
    %c0_29 = arith.constant 0 : index
    %c11 = arith.constant 11 : index
    %27 = vector.load %arg1[%c0_28, %c0_29, %c11] : memref<1x64x256xbf16, #tpu.memory_space<vmem>>, vector<1x64x128xbf16>
    %28 = vector.shape_cast %27 : vector<1x64x128xbf16> to vector<64x128xbf16>
    %c576 = arith.constant 576 : index
    %c0_30 = arith.constant 0 : index
    %29 = vector.load %arg6[%c576, %c0_30] : memref<1024x128xbf16, #tpu.memory_space<vmem>>, vector<64x128xbf16>
    tpu.vector_store %arg6[%c576, %c0_30], %28 {strides = array<i32>} : memref<1024x128xbf16, #tpu.memory_space<vmem>>, vector<64x128xbf16>,
    %c0_31 = arith.constant 0 : index
    %c0_32 = arith.constant 0 : index
    %c12 = arith.constant 12 : index
    %30 = vector.load %arg1[%c0_31, %c0_32, %c12] : memref<1x64x256xbf16, #tpu.memory_space<vmem>>, vector<1x64x128xbf16>
    %31 = vector.shape_cast %30 : vector<1x64x128xbf16> to vector<64x128xbf16>
    %c640 = arith.constant 640 : index
    %c0_33 = arith.constant 0 : index
    %32 = vector.load %arg6[%c640, %c0_33] : memref<1024x128xbf16, #tpu.memory_space<vmem>>, vector<64x128xbf16>
    tpu.vector_store %arg6[%c640, %c0_33], %31 {strides = array<i32>} : memref<1024x128xbf16, #tpu.memory_space<vmem>>, vector<64x128xbf16>,
    %c0_34 = arith.constant 0 : index
    %c0_35 = arith.constant 0 : index
    %c13 = arith.constant 13 : index
    %33 = vector.load %arg1[%c0_34, %c0_35, %c13] : memref<1x64x256xbf16, #tpu.memory_space<vmem>>, vector<1x64x128xbf16>
    %34 = vector.shape_cast %33 : vector<1x64x128xbf16> to vector<64x128xbf16>
    %c704 = arith.constant 704 : index
    %c0_36 = arith.constant 0 : index
    %35 = vector.load %arg6[%c704, %c0_36] : memref<1024x128xbf16, #tpu.memory_space<vmem>>, vector<64x128xbf16>
    tpu.vector_store %arg6[%c704, %c0_36], %34 {strides = array<i32>} : memref<1024x128xbf16, #tpu.memory_space<vmem>>, vector<64x128xbf16>,
    %c0_37 = arith.constant 0 : index
    %c0_38 = arith.constant 0 : index
    %c15 = arith.constant 15 : index
    %36 = vector.load %arg1[%c0_37, %c0_38, %c15] : memref<1x64x256xbf16, #tpu.memory_space<vmem>>, vector<1x64x128xbf16>
    %37 = vector.shape_cast %36 : vector<1x64x128xbf16> to vector<64x128xbf16>
    %c768 = arith.constant 768 : index
    %c0_39 = arith.constant 0 : index
    %38 = vector.load %arg6[%c768, %c0_39] : memref<1024x128xbf16, #tpu.memory_space<vmem>>, vector<64x128xbf16>
    tpu.vector_store %arg6[%c768, %c0_39], %37 {strides = array<i32>} : memref<1024x128xbf16, #tpu.memory_space<vmem>>, vector<64x128xbf16>,
    %c0_40 = arith.constant 0 : index
    %c0_41 = arith.constant 0 : index
    %c16 = arith.constant 16 : index
    %39 = vector.load %arg1[%c0_40, %c0_41, %c16] : memref<1x64x256xbf16, #tpu.memory_space<vmem>>, vector<1x64x128xbf16>
    %40 = vector.shape_cast %39 : vector<1x64x128xbf16> to vector<64x128xbf16>
    %c832 = arith.constant 832 : index
    %c0_42 = arith.constant 0 : index
    %41 = vector.load %arg6[%c832, %c0_42] : memref<1024x128xbf16, #tpu.memory_space<vmem>>, vector<64x128xbf16>
    tpu.vector_store %arg6[%c832, %c0_42], %40 {strides = array<i32>} : memref<1024x128xbf16, #tpu.memory_space<vmem>>, vector<64x128xbf16>,
    %c0_43 = arith.constant 0 : index
    %c0_44 = arith.constant 0 : index
    %c17 = arith.constant 17 : index
    %42 = vector.load %arg1[%c0_43, %c0_44, %c17] : memref<1x64x256xbf16, #tpu.memory_space<vmem>>, vector<1x64x128xbf16>
    %43 = vector.shape_cast %42 : vector<1x64x128xbf16> to vector<64x128xbf16>
    %c896 = arith.constant 896 : index
    %c0_45 = arith.constant 0 : index
    %44 = vector.load %arg6[%c896, %c0_45] : memref<1024x128xbf16, #tpu.memory_space<vmem>>, vector<64x128xbf16>
    tpu.vector_store %arg6[%c896, %c0_45], %43 {strides = array<i32>} : memref<1024x128xbf16, #tpu.memory_space<vmem>>, vector<64x128xbf16>,
    %c0_46 = arith.constant 0 : index
    %c0_47 = arith.constant 0 : index
    %c18 = arith.constant 18 : index
    %45 = vector.load %arg1[%c0_46, %c0_47, %c18] : memref<1x64x256xbf16, #tpu.memory_space<vmem>>, vector<1x64x128xbf16>
    %46 = vector.shape_cast %45 : vector<1x64x128xbf16> to vector<64x128xbf16>
    %c960 = arith.constant 960 : index
    %c0_48 = arith.constant 0 : index
    %47 = vector.load %arg6[%c960, %c0_48] : memref<1024x128xbf16, #tpu.memory_space<vmem>>, vector<64x128xbf16>
    tpu.vector_store %arg6[%c960, %c0_48], %46 {strides = array<i32>} : memref<1024x128xbf16, #tpu.memory_space<vmem>>, vector<64x128xbf16>,
    %c0_49 = arith.constant 0 : index
    %c0_50 = arith.constant 0 : index
    %48 = vector.load %arg2[%c0_49, %c0_50] : memref<8x1024xbf16, #tpu.memory_space<vmem>>, vector<8x1024xbf16>
    %c0_51 = arith.constant 0 : index
    %c0_52 = arith.constant 0 : index
    %49 = vector.load %arg6[%c0_51, %c0_52] : memref<1024x128xbf16, #tpu.memory_space<vmem>>, vector<1024x128xbf16>
    %cst = arith.constant dense<0.000000e+00> : vector<8x128xf32>
    %50 = tpu.matmul %48, %49, %cst {dimension_numbers = #tpu.dot_dimension_numbers<[1], [0], [0], [1], [0, 0, 1, 1], [], []>} : vector<8x1024xbf16>, vector<1024x128xbf16>, vector<8x128xf32> -> vector<8x128xf32>
    %c0_53 = arith.constant 0 : index
    %c0_54 = arith.constant 0 : index
    %51 = vector.load %arg3[%c0_53, %c0_54] : memref<8x1xf32, #tpu.memory_space<vmem>>, vector<8x1xf32>
    %52 = vector.broadcast %51 : vector<8x1xf32> to vector<8x128xf32>
    %53 = arith.addf %50, %52 : vector<8x128xf32>
    %cst_55 = arith.constant 5.000000e-01 : f32
    %54 = vector.broadcast %cst_55 : f32 to vector<8x128xf32>
    %55 = arith.mulf %54, %53 : vector<8x128xf32>
    %56 = math.tanh %55 : vector<8x128xf32>
    %cst_56 = arith.constant 1.000000e+00 : f32
    %57 = vector.broadcast %cst_56 : f32 to vector<8x128xf32>
    %58 = arith.addf %56, %57 : vector<8x128xf32>
    %cst_57 = arith.constant 5.000000e-01 : f32
    %59 = vector.broadcast %cst_57 : f32 to vector<8x128xf32>
    %60 = arith.mulf %59, %58 : vector<8x128xf32>
    %61 = vector.extract_strided_slice %60 {offsets = [0, 0], sizes = [1, 128], strides = [1, 1]} : vector<8x128xf32> to vector<1x128xf32>
    %c0_58 = arith.constant 0 : index
    %c0_59 = arith.constant 0 : index
    %c0_60 = arith.constant 0 : index
    %62 = vector.load %arg5[%c0_58, %c0_59, %c0_60] : memref<1x1x128xf32, #tpu.memory_space<vmem>>, vector<1x1x128xf32>
    %63 = vector.shape_cast %62 : vector<1x1x128xf32> to vector<1x128xf32>
    %64 = vector.shape_cast %61 : vector<1x128xf32> to vector<1x1x128xf32>
    tpu.vector_store %arg5[%c0_58, %c0_59, %c0_60], %64 {strides = array<i32>} : memref<1x1x128xf32, #tpu.memory_space<vmem>>, vector<1x1x128xf32>,
    return
  }
  func.func @transform_0(%arg0: i32) -> (i32, i32, i32) {
    %c0_i32 = arith.constant 0 : i32
    %c0_i32_0 = arith.constant 0 : i32
    %c0_i32_1 = arith.constant 0 : i32
    return %arg0, %c0_i32, %c0_i32_0 : i32, i32, i32
  }
  func.func @transform_1(%arg0: i32) -> (i32, i32) {
    %c0_i32 = arith.constant 0 : i32
    %c0_i32_0 = arith.constant 0 : i32
    %c0_i32_1 = arith.constant 0 : i32
    return %c0_i32, %c0_i32_0 : i32, i32
  }
  func.func @transform_2(%arg0: i32) -> (i32, i32) {
    %c0_i32 = arith.constant 0 : i32
    %c0_i32_0 = arith.constant 0 : i32
    %c0_i32_1 = arith.constant 0 : i32
    return %c0_i32, %c0_i32_0 : i32, i32
  }
  func.func @transform_3(%arg0: i32) -> (i32, i32) {
    %c0_i32 = arith.constant 0 : i32
    %c0_i32_0 = arith.constant 0 : i32
    %c0_i32_1 = arith.constant 0 : i32
    return %c0_i32, %c0_i32_0 : i32, i32
  }
  func.func @transform_4(%arg0: i32) -> (i32, i32, i32) {
    %c0_i32 = arith.constant 0 : i32
    %c0_i32_0 = arith.constant 0 : i32
    %c0_i32_1 = arith.constant 0 : i32
    return %arg0, %c0_i32, %c0_i32_0 : i32, i32, i32
  }
}

</mosaic_0001>

<llo_original>
// kernel: discriminator_forward.5
$region0: #{discriminator_forward.5}
  #allocation0 [shape = 'u32[]', space=smem, size = 0x4, offset = 0x4, fixed_abs, tag = 'smem constant byte address 0x4 - core index']
  #allocation1 [shape = 'u32[144,128]{1,0:T(1,128)}', space=vmem, size = 0x12000, scoped, tag = 'internal scratch']
  #allocation2 [shape = 'bf16[128,128]{1,0:T(16,128)(2,1)}', space=vmem, size = 0x8000, scoped, tag = 'scratch operand']
  %s0 = inlined_call_operand.vmem [shape: bf16[2,3,2048], index: 0, kind: input, shape index: {}]
  %s1 = inlined_call_operand.vmem [shape: bf16[8,128], index: 1, kind: input, shape index: {}]
  %s2 = inlined_call_operand.vmem [shape: f32[8,1], index: 2, kind: input, shape index: {}]
  %s3 = inlined_call_operand.vmem [shape: f32[1,384], index: 3, kind: input, shape index: {}]
  %s4 = inlined_call_operand.vmem [shape: bf16[2,8,384], index: 4, kind: output, shape index: {}]
  %s5 = sld [smem:[#allocation0]]
  $region49: #{discriminator_forward.5} parent=0
    _
  %s7 = ssub.s32 1, %s5
  %s8 = scalar_select 0, %s7, %s5
  loop: start=0, step=1, limit=4
  $region2: #{discriminator_forward.5} parent=0 // loop_pre_header
    _
  $region3: #{discriminator_forward.5} parent=0 // loop_header
    %s10 = sphi 0, %s14
    %p11 = scmp.ge.s32.totalorder %s10, 4
    %s20 = sphi 0, %s22
    %s23 = sphi 0, %s20
    %s24 = sphi 0, %s23
    %s40 = sphi 0, %s24
    %s44 = sphi 0, %s44
    %s46 = sphi 0, %s44
    %s47 = sphi 0, %s46
    %s61 = sphi 0, %s47
    %s65 = sphi 0, %s65
    %s67 = sphi 0, %s65
    %s68 = sphi 0, %s67
    %s82 = sphi 0, %s68
    %s86 = sphi 0, %s86
    %s88 = sphi 0, %s86
    %s89 = sphi 0, %s88
    %s103 = sphi 0, %s89
    %s109 = sphi 0, %s111
    %s112 = sphi 0, %s109
    %s113 = sphi 0, %s112
    %s129 = sphi 0, %s113
  $region4: #{discriminator_forward.5} parent=0 // loop_header_branch
    %13 = sbr.rel (%p11) target = $region8
  $region5: #{discriminator_forward.5} parent=0 // loop_body
    %s15 = ssub.s32 %s10, 1
    %s16 = ssub.s32 %s10, 2
    %s17 = sadd.s32 %s10, 1
    %s18 = ssub.s32 %s10, %s17
    %p19 = scmp.eq.s32.totalorder %s18, 0
    %s21 = sadd.s32 %s20, 1
    %s22 = scalar_select %p19, %s20, %s21
    %p25 = pneg %p19
    %p26 = scmp.eq.s32.totalorder %s10, 1
    %p27 = por %p25, %p26
    %p28 = scmp.ne.s32.totalorder %s20, %s23
    %p29 = scmp.eq.s32.totalorder %s10, 0
    %p30 = por %p28, %p29
    %p31 = scmp.ne.s32.totalorder %s20, %s23
    %p32 = scmp.eq.s32.totalorder %s15, 1
    %p33 = por %p31, %p32
    %p34 = scmp.ne.s32.totalorder %s23, %s24
    %p35 = scmp.eq.s32.totalorder %s15, 0
    %p36 = por %p34, %p35
    %p37 = scmp.ne.s32.totalorder %s23, %s24
    %p38 = scmp.eq.s32.totalorder %s16, 1
    %p39 = por %p37, %p38
    %p41 = scmp.ne.s32.totalorder %s24, %s40
    %p42 = scmp.eq.s32.totalorder %s16, 0
    %p43 = por %p41, %p42
    %s45 = sadd.s32 %s44, 1
    %p48 = scmp.eq.s32.totalorder %s10, 1
    %p49 = scmp.ne.s32.totalorder %s44, %s46
    %p50 = scmp.eq.s32.totalorder %s10, 0
    %p51 = por %p49, %p50
    %p52 = scmp.ne.s32.totalorder %s44, %s46
    %p53 = scmp.eq.s32.totalorder %s15, 1
    %p54 = por %p52, %p53
    %p55 = scmp.ne.s32.totalorder %s46, %s47
    %p56 = scmp.eq.s32.totalorder %s15, 0
    %p57 = por %p55, %p56
    %p58 = scmp.ne.s32.totalorder %s46, %s47
    %p59 = scmp.eq.s32.totalorder %s16, 1
    %p60 = por %p58, %p59
    %p62 = scmp.ne.s32.totalorder %s47, %s61
    %p63 = scmp.eq.s32.totalorder %s16, 0
    %p64 = por %p62, %p63
    %s66 = sadd.s32 %s65, 1
    %p69 = scmp.eq.s32.totalorder %s10, 1
    %p70 = scmp.ne.s32.totalorder %s65, %s67
    %p71 = scmp.eq.s32.totalorder %s10, 0
    %p72 = por %p70, %p71
    %p73 = scmp.ne.s32.totalorder %s65, %s67
    %p74 = scmp.eq.s32.totalorder %s15, 1
    %p75 = por %p73, %p74
    %p76 = scmp.ne.s32.totalorder %s67, %s68
    %p77 = scmp.eq.s32.totalorder %s15, 0
    %p78 = por %p76, %p77
    %p79 = scmp.ne.s32.totalorder %s67, %s68
    %p80 = scmp.eq.s32.totalorder %s16, 1
    %p81 = por %p79, %p80
    %p83 = scmp.ne.s32.totalorder %s68, %s82
    %p84 = scmp.eq.s32.totalorder %s16, 0
    %p85 = por %p83, %p84
    %s87 = sadd.s32 %s86, 1
    %p90 = scmp.eq.s32.totalorder %s10, 1
    %p91 = scmp.ne.s32.totalorder %s86, %s88
    %p92 = scmp.eq.s32.totalorder %s10, 0
    %p93 = por %p91, %p92
    %p94 = scmp.ne.s32.totalorder %s86, %s88
    %p95 = scmp.eq.s32.totalorder %s15, 1
    %p96 = por %p94, %p95
    %p97 = scmp.ne.s32.totalorder %s88, %s89
    %p98 = scmp.eq.s32.totalorder %s15, 0
    %p99 = por %p97, %p98
    %p100 = scmp.ne.s32.totalorder %s88, %s89
    %p101 = scmp.eq.s32.totalorder %s16, 1
    %p102 = por %p100, %p101
    %p104 = scmp.ne.s32.totalorder %s89, %s103
    %p105 = scmp.eq.s32.totalorder %s16, 0
    %p106 = por %p104, %p105
    %s107 = ssub.s32 %s10, %s17
    %p108 = scmp.eq.s32.totalorder %s107, 0
    %s110 = sadd.s32 %s109, 1
    %s111 = scalar_select %p108, %s109, %s110
    %p114 = pneg %p108
    %p115 = scmp.eq.s32.totalorder %s10, 1
    %p116 = por %p114, %p115
    %p117 = scmp.ne.s32.totalorder %s109, %s112
    %p118 = scmp.eq.s32.totalorder %s10, 0
    %p119 = por %p117, %p118
    %p120 = scmp.ne.s32.totalorder %s109, %s112
    %p121 = scmp.eq.s32.totalorder %s15, 1
    %p122 = por %p120, %p121
    %p123 = scmp.ne.s32.totalorder %s112, %s113
    %p124 = scmp.eq.s32.totalorder %s15, 0
    %p125 = por %p123, %p124
    %p126 = scmp.ne.s32.totalorder %s112, %s113
    %p127 = scmp.eq.s32.totalorder %s16, 1
    %p128 = por %p126, %p127
    %p130 = scmp.ne.s32.totalorder %s113, %s129
    %p131 = scmp.eq.s32.totalorder %s16, 0
    %p132 = por %p130, %p131
    %p133 = scmp.le.s32.totalorder 1, %s10
    %p134 = scmp.lt.s32.totalorder %s10, 3
    %p135 = pnand %p133, %p134
    %p136 = pneg %p135
    // Predicated region
    $region9: #{discriminator_forward.5} parent=5 // pred_check
      _
    $region10: #{discriminator_forward.5} parent=5 // pred_check_branch
      %138 = sbr.rel (%p135) target = $region12
    $region11: #{discriminator_forward.5} parent=5 // pred_region
      %s139 = ssub.s32 %s10, 1
      // Predicated region
      $region13: #{discriminator_forward.5} parent=11 // pred_check
        %p140 = pneg %p57
      $region14: #{discriminator_forward.5} parent=11 // pred_check_branch
        %142 = sbr.rel (%p140) target = $region16
      $region15: #{discriminator_forward.5} parent=11 // pred_region
        _
      $region16: #{discriminator_forward.5} parent=11 // pred_fallthru
        _
      // Predicated region
      $region17: #{discriminator_forward.5} parent=11 // pred_check
        %p143 = pneg %p78
      $region18: #{discriminator_forward.5} parent=11 // pred_check_branch
        %145 = sbr.rel (%p143) target = $region20
      $region19: #{discriminator_forward.5} parent=11 // pred_region
        _
      $region20: #{discriminator_forward.5} parent=11 // pred_fallthru
        _
      // Predicated region
      $region21: #{discriminator_forward.5} parent=11 // pred_check
        %p146 = pneg %p99
      $region22: #{discriminator_forward.5} parent=11 // pred_check_branch
        %148 = sbr.rel (%p146) target = $region24
      $region23: #{discriminator_forward.5} parent=11 // pred_region
        _
      $region24: #{discriminator_forward.5} parent=11 // pred_fallthru
        _
    $region12: #{discriminator_forward.5} parent=5 // pred_fallthru
      _
    %p149 = scmp.lt.s32.totalorder %s10, 2
    // Predicated region
    $region25: #{discriminator_forward.5} parent=5 // pred_check
      %p150 = pneg %p149
    $region26: #{discriminator_forward.5} parent=5 // pred_check_branch
      %152 = sbr.rel (%p150) target = $region28
    $region27: #{discriminator_forward.5} parent=5 // pred_region
      // Predicated region
      $region29: #{discriminator_forward.5} parent=27 // pred_check
        %p153 = pneg %p30
      $region30: #{discriminator_forward.5} parent=27 // pred_check_branch
        %155 = sbr.rel (%p153) target = $region32
      $region31: #{discriminator_forward.5} parent=27 // pred_region
        %p156 = scmp.lt.s32.totalorder %s10, 1
        %s157 = scalar_select %p156, %s10, 1
        %s158 = smul.addr %s157, 16
        %s159 = smul.addr %s158, 2
        %s160 = scalar_lea.vmem %s0, %s159
      $region32: #{discriminator_forward.5} parent=27 // pred_fallthru
        _
    $region28: #{discriminator_forward.5} parent=5 // pred_fallthru
      _
    %p161 = scmp.le.s32.totalorder 1, %s10
    %p162 = scmp.lt.s32.totalorder %s10, 3
    %p163 = pnand %p161, %p162
    %p164 = pneg %p163
    // Predicated region
    $region33: #{discriminator_forward.5} parent=5 // pred_check
      _
    $region34: #{discriminator_forward.5} parent=5 // pred_check_branch
      %166 = sbr.rel (%p163) target = $region36
    $region35: #{discriminator_forward.5} parent=5 // pred_region
      %s167 = ssub.s32 %s10, 1
      %p168 = scmp.lt.s32.totalorder %s15, 1
      %s169 = scalar_select %p168, %s15, 1
      %s170 = smul.addr %s169, 16
      %s171 = smul.addr %s170, 2
      %s172 = scalar_lea.vmem %s0, %s171
      %p173 = pneg %p36
      %p174 = pneg %p33
      %p175 = pneg %p57
      %p176 = pneg %p54
      %p177 = pneg %p78
      %p178 = pneg %p75
      %p179 = pneg %p99
      %p180 = pneg %p96
      %p181 = pneg %p125
      %p182 = pneg %p122
      %p183 = scmp.lt.s32.totalorder %s15, 1
      %s184 = scalar_select %p183, %s15, 1
      %s185 = smul.addr %s184, 3
      %s186 = smul.addr %s185, 4
      %s187 = scalar_lea.vmem %s4, %s186
      %p188 = scmp.lt.s32.totalorder %s15, 1
      %s189 = scalar_select %p188, %s15, 1
      %s190 = smul.addr %s189, 16
      %s191 = smul.addr %s190, 2
      %s192 = scalar_lea.vmem %s0, %s191
      %p193 = scmp.lt.s32.totalorder %s15, 1
      %s194 = scalar_select %p193, %s15, 1
      %s195 = smul.addr %s194, 3
      %s196 = smul.addr %s195, 4
      %s197 = scalar_lea.vmem %s4, %s196
      %199 = vst [vmem:[#allocation2] sm:$0xff] 0
      %200 = vst [vmem:[#allocation2 + $0x8] sm:$0xff] 0
      %201 = vst [vmem:[#allocation2 + $0x10] sm:$0xff] 0
      %202 = vst [vmem:[#allocation2 + $0x18] sm:$0xff] 0
      %203 = vst [vmem:[#allocation2 + $0x20] sm:$0xff] 0
      %204 = vst [vmem:[#allocation2 + $0x28] sm:$0xff] 0
      %205 = vst [vmem:[#allocation2 + $0x30] sm:$0xff] 0
      %206 = vst [vmem:[#allocation2 + $0x38] sm:$0xff] 0
      %v207 = vld [vmem:[%s192] sm:$0x3]
      %vm208 = vcmask 1041408
      %vm209 = vsmask.f32 1280
      %vm210 = vmand %vm208, %vm209
      %v211 = vld [vmem:[#allocation2] sm:$0x3]
      %v212 = vsel %vm210, %v207, %v211
      %213 = vst [vmem:[#allocation2] sm:$0x3] %v212
      %v214 = vld [vmem:[%s192 + $0x8] sm:$0x3]
      %v217 = vunpack.c.l.s4 1983009808
      %v218 = vunpack.c.0.s8 %v217
      %v219 = vlaneseq
      %v220 = vshrl.u32 %v219, 7
      %v221 = vsub.s32 %v218, %v220
      %v222 = vrot.slane %v214, %v221
      %v223 = vcombine.low %v222, %v222
      %vm225 = vcmask 1045508
      %vm226 = vsmask.f32 5376
      %vm227 = vmand %vm225, %vm226
      %v228 = vld [vmem:[#allocation2] sm:$0x30]
      %v229 = vsel %vm227, %v223, %v228
      %230 = vst [vmem:[#allocation2] sm:$0x30] %v229
      %v231 = vld [vmem:[%s192] sm:$0xf]
      %v234 = vunpack.c.l.s4 1983009808
      %v235 = vunpack.c.0.s8 %v234
      %v236 = vlaneseq
      %v237 = vshrl.u32 %v236, 7
      %v238 = vsub.s32 %v235, %v237
      %v239 = vrot.slane %v231, %v238
      %v240 = vcombine.high %v239, %v239
      %241 = vrot.lane.b32.xlu0 %v239, 127
      %v242 = vpop.permute.xlu0 %241
      %243 = vrot.lane.b32.xlu0 %v240, 127
      %v244 = vpop.permute.xlu0 %243
      %vm245 = vcmask 1039360
      %v246 = vsel %vm245, %v242, %v244
      %v248 = vld [vmem:[#allocation2 + $0x8] sm:$0x3]
      %v249 = vsel %vm210, %v246, %v248
      %250 = vst [vmem:[#allocation2 + $0x8] sm:$0x3] %v249
      %v251 = vld [vmem:[%s192 + $0x8] sm:$0xf]
      %v254 = vunpack.c.l.s4 1983009808
      %v255 = vunpack.c.0.s8 %v254
      %v256 = vlaneseq
      %v257 = vshrl.u32 %v256, 7
      %v258 = vsub.s32 %v255, %v257
      %v259 = vrot.slane %v251, %v258
      %v260 = vcombine.low %v259, %v259
      %261 = vrot.lane.b32.xlu0 %v260, 127
      %v262 = vpop.permute.xlu0 %261
      %263 = vrot.lane.b32.xlu0 %v259, 127
      %v264 = vpop.permute.xlu0 %263
      %v265 = vsel %vm245, %v262, %v264
      %v267 = vld [vmem:[#allocation2 + $0x8] sm:$0x30]
      %v268 = vsel %vm227, %v265, %v267
      %269 = vst [vmem:[#allocation2 + $0x8] sm:$0x30] %v268
      %v270 = vld [vmem:[%s192 + $0x10] sm:$0x3]
      %v271 = vld [vmem:[#allocation2 + $0x10] sm:$0x3]
      %v272 = vsel %vm210, %v270, %v271
      %273 = vst [vmem:[#allocation2 + $0x10] sm:$0x3] %v272
      %v274 = vld [vmem:[%s192 + $0x18] sm:$0x3]
      %v277 = vunpack.c.l.s4 1983009808
      %v278 = vunpack.c.0.s8 %v277
      %v279 = vlaneseq
      %v280 = vshrl.u32 %v279, 7
      %v281 = vsub.s32 %v278, %v280
      %v282 = vrot.slane %v274, %v281
      %v283 = vcombine.low %v282, %v282
      %v285 = vld [vmem:[#allocation2 + $0x10] sm:$0x30]
      %v286 = vsel %vm227, %v283, %v285
      %287 = vst [vmem:[#allocation2 + $0x10] sm:$0x30] %v286
      %v288 = vld [vmem:[%s192 + $0x10] sm:$0xf]
      %v291 = vunpack.c.l.s4 1983009808
      %v292 = vunpack.c.0.s8 %v291
      %v293 = vlaneseq
      %v294 = vshrl.u32 %v293, 7
      %v295 = vsub.s32 %v292, %v294
      %v296 = vrot.slane %v288, %v295
      %v297 = vcombine.high %v296, %v296
      %298 = vrot.lane.b32.xlu0 %v296, 127
      %v299 = vpop.permute.xlu0 %298
      %300 = vrot.lane.b32.xlu0 %v297, 127
      %v301 = vpop.permute.xlu0 %300
      %v302 = vsel %vm245, %v299, %v301
      %v304 = vld [vmem:[#allocation2 + $0x18] sm:$0x3]
      %v305 = vsel %vm210, %v302, %v304
      %306 = vst [vmem:[#allocation2 + $0x18] sm:$0x3] %v305
      %v307 = vld [vmem:[%s192 + $0x18] sm:$0xf]
      %v310 = vunpack.c.l.s4 1983009808
      %v311 = vunpack.c.0.s8 %v310
      %v312 = vlaneseq
      %v313 = vshrl.u32 %v312, 7
      %v314 = vsub.s32 %v311, %v313
      %v315 = vrot.slane %v307, %v314
      %v316 = vcombine.low %v315, %v315
      %317 = vrot.lane.b32.xlu0 %v316, 127
      %v318 = vpop.permute.xlu0 %317
      %319 = vrot.lane.b32.xlu0 %v315, 127
      %v320 = vpop.permute.xlu0 %319
      %v321 = vsel %vm245, %v318, %v320
      %v323 = vld [vmem:[#allocation2 + $0x18] sm:$0x30]
      %v324 = vsel %vm227, %v321, %v323
      %325 = vst [vmem:[#allocation2 + $0x18] sm:$0x30] %v324
      %v326 = vld [vmem:[%s192] sm:$0xf]
      %v329 = vunpack.c.l.s4 1983009808
      %v330 = vunpack.c.0.s8 %v329
      %v331 = vlaneseq
      %v332 = vshrl.u32 %v331, 7
      %v333 = vsub.s32 %v330, %v332
      %v334 = vrot.slane %v326, %v333
      %v335 = vcombine.high %v334, %v334
      %336 = vrot.lane.b32.xlu0 %v334, 111
      %v337 = vpop.permute.xlu0 %336
      %338 = vrot.lane.b32.xlu0 %v335, 111
      %v339 = vpop.permute.xlu0 %338
      %vm340 = vcmask 908288
      %v341 = vsel %vm340, %v337, %v339
      %v343 = vld [vmem:[#allocation2 + $0x20] sm:$0x3]
      %v344 = vsel %vm210, %v341, %v343
      %345 = vst [vmem:[#allocation2 + $0x20] sm:$0x3] %v344
      %v346 = vld [vmem:[%s192 + $0x8] sm:$0xf]
      %v349 = vunpack.c.l.s4 1983009808
      %v350 = vunpack.c.0.s8 %v349
      %v351 = vlaneseq
      %v352 = vshrl.u32 %v351, 7
      %v353 = vsub.s32 %v350, %v352
      %v354 = vrot.slane %v346, %v353
      %v355 = vcombine.low %v354, %v354
      %356 = vrot.lane.b32.xlu0 %v355, 111
      %v357 = vpop.permute.xlu0 %356
      %358 = vrot.lane.b32.xlu0 %v354, 111
      %v359 = vpop.permute.xlu0 %358
      %v360 = vsel %vm340, %v357, %v359
      %v362 = vld [vmem:[#allocation2 + $0x20] sm:$0x30]
      %v363 = vsel %vm227, %v360, %v362
      %364 = vst [vmem:[#allocation2 + $0x20] sm:$0x30] %v363
      %v365 = vld [vmem:[%s192] sm:$0xf]
      %v368 = vunpack.c.l.s4 1983009808
      %v369 = vunpack.c.0.s8 %v368
      %v370 = vlaneseq
      %v371 = vshrl.u32 %v370, 7
      %v372 = vsub.s32 %v369, %v371
      %v373 = vrot.slane %v365, %v372
      %v374 = vcombine.high %v373, %v373
      %375 = vrot.lane.b32.xlu0 %v373, 110
      %v376 = vpop.permute.xlu0 %375
      %377 = vrot.lane.b32.xlu0 %v374, 110
      %v378 = vpop.permute.xlu0 %377
      %vm379 = vcmask 900096
      %v380 = vsel %vm379, %v376, %v378
      %v382 = vld [vmem:[#allocation2 + $0x28] sm:$0x3]
      %v383 = vsel %vm210, %v380, %v382
      %384 = vst [vmem:[#allocation2 + $0x28] sm:$0x3] %v383
      %v385 = vld [vmem:[%s192 + $0x8] sm:$0xf]
      %v388 = vunpack.c.l.s4 1983009808
      %v389 = vunpack.c.0.s8 %v388
      %v390 = vlaneseq
      %v391 = vshrl.u32 %v390, 7
      %v392 = vsub.s32 %v389, %v391
      %v393 = vrot.slane %v385, %v392
      %v394 = vcombine.low %v393, %v393
      %395 = vrot.lane.b32.xlu0 %v394, 110
      %v396 = vpop.permute.xlu0 %395
      %397 = vrot.lane.b32.xlu0 %v393, 110
      %v398 = vpop.permute.xlu0 %397
      %v399 = vsel %vm379, %v396, %v398
      %v401 = vld [vmem:[#allocation2 + $0x28] sm:$0x30]
      %v402 = vsel %vm227, %v399, %v401
      %403 = vst [vmem:[#allocation2 + $0x28] sm:$0x30] %v402
      %v404 = vld [vmem:[%s192 + $0x10] sm:$0xf]
      %v407 = vunpack.c.l.s4 1983009808
      %v408 = vunpack.c.0.s8 %v407
      %v409 = vlaneseq
      %v410 = vshrl.u32 %v409, 7
      %v411 = vsub.s32 %v408, %v410
      %v412 = vrot.slane %v404, %v411
      %v413 = vcombine.high %v412, %v412
      %414 = vrot.lane.b32.xlu0 %v412, 111
      %v415 = vpop.permute.xlu0 %414
      %416 = vrot.lane.b32.xlu0 %v413, 111
      %v417 = vpop.permute.xlu0 %416
      %v418 = vsel %vm340, %v415, %v417
      %v420 = vld [vmem:[#allocation2 + $0x30] sm:$0x3]
      %v421 = vsel %vm210, %v418, %v420
      %422 = vst [vmem:[#allocation2 + $0x30] sm:$0x3] %v421
      %v423 = vld [vmem:[%s192 + $0x18] sm:$0xf]
      %v426 = vunpack.c.l.s4 1983009808
      %v427 = vunpack.c.0.s8 %v426
      %v428 = vlaneseq
      %v429 = vshrl.u32 %v428, 7
      %v430 = vsub.s32 %v427, %v429
      %v431 = vrot.slane %v423, %v430
      %v432 = vcombine.low %v431, %v431
      %433 = vrot.lane.b32.xlu0 %v432, 111
      %v434 = vpop.permute.xlu0 %433
      %435 = vrot.lane.b32.xlu0 %v431, 111
      %v436 = vpop.permute.xlu0 %435
      %v437 = vsel %vm340, %v434, %v436
      %v439 = vld [vmem:[#allocation2 + $0x30] sm:$0x30]
      %v440 = vsel %vm227, %v437, %v439
      %441 = vst [vmem:[#allocation2 + $0x30] sm:$0x30] %v440
      %v442 = vld [vmem:[%s192 + $0x10] sm:$0xf]
      %v445 = vunpack.c.l.s4 1983009808
      %v446 = vunpack.c.0.s8 %v445
      %v447 = vlaneseq
      %v448 = vshrl.u32 %v447, 7
      %v449 = vsub.s32 %v446, %v448
      %v450 = vrot.slane %v442, %v449
      %v451 = vcombine.high %v450, %v450
      %452 = vrot.lane.b32.xlu0 %v450, 110
      %v453 = vpop.permute.xlu0 %452
      %454 = vrot.lane.b32.xlu0 %v451, 110
      %v455 = vpop.permute.xlu0 %454
      %v456 = vsel %vm379, %v453, %v455
      %v458 = vld [vmem:[#allocation2 + $0x38] sm:$0x3]
      %v459 = vsel %vm210, %v456, %v458
      %460 = vst [vmem:[#allocation2 + $0x38] sm:$0x3] %v459
      %v461 = vld [vmem:[%s192 + $0x18] sm:$0xf]
      %v464 = vunpack.c.l.s4 1983009808
      %v465 = vunpack.c.0.s8 %v464
      %v466 = vlaneseq
      %v467 = vshrl.u32 %v466, 7
      %v468 = vsub.s32 %v465, %v467
      %v469 = vrot.slane %v461, %v468
      %v470 = vcombine.low %v469, %v469
      %471 = vrot.lane.b32.xlu0 %v470, 110
      %v472 = vpop.permute.xlu0 %471
      %473 = vrot.lane.b32.xlu0 %v469, 110
      %v474 = vpop.permute.xlu0 %473
      %v475 = vsel %vm379, %v472, %v474
      %v477 = vld [vmem:[#allocation2 + $0x38] sm:$0x30]
      %v478 = vsel %vm227, %v475, %v477
      %479 = vst [vmem:[#allocation2 + $0x38] sm:$0x30] %v478
      %v480 = vld [vmem:[%s1] sm:$0xf]
      %v481 = vld [vmem:[#allocation2] sm:$0xff]
      %v482 = vld [vmem:[#allocation2 + $0x8] sm:$0xff]
      %v483 = vld [vmem:[#allocation2 + $0x10] sm:$0xff]
      %v484 = vld [vmem:[#allocation2 + $0x18] sm:$0xff]
      %v485 = vld [vmem:[#allocation2 + $0x20] sm:$0xff]
      %v486 = vld [vmem:[#allocation2 + $0x28] sm:$0xff]
      %v487 = vld [vmem:[#allocation2 + $0x30] sm:$0xff]
      %v488 = vld [vmem:[#allocation2 + $0x38] sm:$0xff]
      %v489 = vld [vmem:[%s2] sm:$0xff]
      %491 = vset.pattern.permute.xlu0 0
      %492 = vperm.xlu0 %491, %v489
      %v493 = vpop.permute.xlu0 %492
      %495 = vmatprep.subr.bf16.mxu0 0
      %496 = vmatpush1.bf16.msra.mxu0 %v481
      %497 = vmatprep.subr.bf16.mxu0 0
      %498 = vmatpush1.bf16.msra.mxu0 %v482
      %499 = vmatprep.subr.bf16.mxu0 0
      %500 = vmatpush1.bf16.msra.mxu0 %v483
      %501 = vmatprep.subr.bf16.mxu0 0
      %502 = vmatpush1.bf16.msra.mxu0 %v484
      %503 = vmatprep.subr.bf16.mxu0 0
      %504 = vmatpush1.bf16.msra.mxu0 %v485
      %505 = vmatprep.subr.bf16.mxu0 0
      %506 = vmatpush1.bf16.msra.mxu0 %v486
      %507 = vmatprep.subr.bf16.mxu0 0
      %508 = vmatpush1.bf16.msra.mxu0 %v487
      %509 = vmatprep.subr.bf16.mxu0 0
      %510 = vmatpush1.bf16.msra.mxu0 %v488
      %511 = vmatprep.subr.bf16.mxu0 0
      %512 = vmatpush1.bf16.msra.mxu0 0
      %513 = vmatprep.subr.bf16.mxu0 0
      %514 = vmatpush1.bf16.msra.mxu0 0
      %515 = vmatprep.subr.bf16.mxu0 0
      %516 = vmatpush1.bf16.msra.mxu0 0
      %517 = vmatprep.subr.bf16.mxu0 0
      %518 = vmatpush1.bf16.msra.mxu0 0
      %519 = vmatprep.subr.bf16.mxu0 0
      %520 = vmatpush1.bf16.msra.mxu0 0
      %521 = vmatprep.subr.bf16.mxu0 0
      %522 = vmatpush1.bf16.msra.mxu0 0
      %523 = vmatprep.subr.bf16.mxu0 0
      %524 = vmatpush1.bf16.msra.mxu0 0
      %525 = vmatprep.subr.bf16.mxu0 0
      %526 = vmatpush1.bf16.msra.mxu0 0
      %527 = vmatprep.mubr.bf16.mxu0 0
      %528 = vmatmul.mubr.bf16.gmra.mrb[0].mxu0 %v480
      %v529 = vpop.f32.mrb[0].mxu0
      %v530 = vadd.f32 %v493, %v529
      %v531 = vpop.f32.mrb[0].mxu0
      %v532 = vpop.f32.mrb[0].mxu0
      %v533 = vpop.f32.mrb[0].mxu0
      %534 = vdwg.mxu0
      %vm535 = vcmp.ge.f32.partialorder %v530, 0.0
      %v536 = vmul.f32 %v530, 0.2
      %v537 = vsel %vm535, %v530, %v536
      %v538 = vpack.c.bf16 %v537, %v537
      %539 = vst [vmem:[%s197] sm:$0xf] %v538
      %v540 = vld [vmem:[%s192 + $0x2] sm:$0x3]
      %v541 = vld [vmem:[#allocation2] sm:$0x3]
      %v542 = vsel %vm210, %v540, %v541
      %543 = vst [vmem:[#allocation2] sm:$0x3] %v542
      %v544 = vld [vmem:[%s192 + $0xa] sm:$0x3]
      %v547 = vunpack.c.l.s4 1983009808
      %v548 = vunpack.c.0.s8 %v547
      %v549 = vlaneseq
      %v550 = vshrl.u32 %v549, 7
      %v551 = vsub.s32 %v548, %v550
      %v552 = vrot.slane %v544, %v551
      %v553 = vcombine.low %v552, %v552
      %v555 = vld [vmem:[#allocation2] sm:$0x30]
      %v556 = vsel %vm227, %v553, %v555
      %557 = vst [vmem:[#allocation2] sm:$0x30] %v556
      %v558 = vld [vmem:[%s192 + $0x2] sm:$0xf]
      %v561 = vunpack.c.l.s4 1983009808
      %v562 = vunpack.c.0.s8 %v561
      %v563 = vlaneseq
      %v564 = vshrl.u32 %v563, 7
      %v565 = vsub.s32 %v562, %v564
      %v566 = vrot.slane %v558, %v565
      %v567 = vcombine.high %v566, %v566
      %568 = vrot.lane.b32.xlu0 %v566, 127
      %v569 = vpop.permute.xlu0 %568
      %570 = vrot.lane.b32.xlu0 %v567, 127
      %v571 = vpop.permute.xlu0 %570
      %v572 = vsel %vm245, %v569, %v571
      %v574 = vld [vmem:[#allocation2 + $0x8] sm:$0x3]
      %v575 = vsel %vm210, %v572, %v574
      %576 = vst [vmem:[#allocation2 + $0x8] sm:$0x3] %v575
      %v577 = vld [vmem:[%s192 + $0xa] sm:$0xf]
      %v580 = vunpack.c.l.s4 1983009808
      %v581 = vunpack.c.0.s8 %v580
      %v582 = vlaneseq
      %v583 = vshrl.u32 %v582, 7
      %v584 = vsub.s32 %v581, %v583
      %v585 = vrot.slane %v577, %v584
      %v586 = vcombine.low %v585, %v585
      %587 = vrot.lane.b32.xlu0 %v586, 127
      %v588 = vpop.permute.xlu0 %587
      %589 = vrot.lane.b32.xlu0 %v585, 127
      %v590 = vpop.permute.xlu0 %589
      %v591 = vsel %vm245, %v588, %v590
      %v593 = vld [vmem:[#allocation2 + $0x8] sm:$0x30]
      %v594 = vsel %vm227, %v591, %v593
      %595 = vst [vmem:[#allocation2 + $0x8] sm:$0x30] %v594
      %v596 = vld [vmem:[%s192 + $0x12] sm:$0x3]
      %v597 = vld [vmem:[#allocation2 + $0x10] sm:$0x3]
      %v598 = vsel %vm210, %v596, %v597
      %599 = vst [vmem:[#allocation2 + $0x10] sm:$0x3] %v598
      %v600 = vld [vmem:[%s192 + $0x1a] sm:$0x3]
      %v603 = vunpack.c.l.s4 1983009808
      %v604 = vunpack.c.0.s8 %v603
      %v605 = vlaneseq
      %v606 = vshrl.u32 %v605, 7
      %v607 = vsub.s32 %v604, %v606
      %v608 = vrot.slane %v600, %v607
      %v609 = vcombine.low %v608, %v608
      %v611 = vld [vmem:[#allocation2 + $0x10] sm:$0x30]
      %v612 = vsel %vm227, %v609, %v611
      %613 = vst [vmem:[#allocation2 + $0x10] sm:$0x30] %v612
      %v614 = vld [vmem:[%s192 + $0x12] sm:$0xf]
      %v617 = vunpack.c.l.s4 1983009808
      %v618 = vunpack.c.0.s8 %v617
      %v619 = vlaneseq
      %v620 = vshrl.u32 %v619, 7
      %v621 = vsub.s32 %v618, %v620
      %v622 = vrot.slane %v614, %v621
      %v623 = vcombine.high %v622, %v622
      %624 = vrot.lane.b32.xlu0 %v622, 127
      %v625 = vpop.permute.xlu0 %624
      %626 = vrot.lane.b32.xlu0 %v623, 127
      %v627 = vpop.permute.xlu0 %626
      %v628 = vsel %vm245, %v625, %v627
      %v630 = vld [vmem:[#allocation2 + $0x18] sm:$0x3]
      %v631 = vsel %vm210, %v628, %v630
      %632 = vst [vmem:[#allocation2 + $0x18] sm:$0x3] %v631
      %v633 = vld [vmem:[%s192 + $0x1a] sm:$0xf]
      %v636 = vunpack.c.l.s4 1983009808
      %v637 = vunpack.c.0.s8 %v636
      %v638 = vlaneseq
      %v639 = vshrl.u32 %v638, 7
      %v640 = vsub.s32 %v637, %v639
      %v641 = vrot.slane %v633, %v640
      %v642 = vcombine.low %v641, %v641
      %643 = vrot.lane.b32.xlu0 %v642, 127
      %v644 = vpop.permute.xlu0 %643
      %645 = vrot.lane.b32.xlu0 %v641, 127
      %v646 = vpop.permute.xlu0 %645
      %v647 = vsel %vm245, %v644, %v646
      %v649 = vld [vmem:[#allocation2 + $0x18] sm:$0x30]
      %v650 = vsel %vm227, %v647, %v649
      %651 = vst [vmem:[#allocation2 + $0x18] sm:$0x30] %v650
      %v652 = vld [vmem:[%s192 + $0x2] sm:$0xf]
      %v655 = vunpack.c.l.s4 1983009808
      %v656 = vunpack.c.0.s8 %v655
      %v657 = vlaneseq
      %v658 = vshrl.u32 %v657, 7
      %v659 = vsub.s32 %v656, %v658
      %v660 = vrot.slane %v652, %v659
      %v661 = vcombine.high %v660, %v660
      %662 = vrot.lane.b32.xlu0 %v660, 111
      %v663 = vpop.permute.xlu0 %662
      %664 = vrot.lane.b32.xlu0 %v661, 111
      %v665 = vpop.permute.xlu0 %664
      %v666 = vsel %vm340, %v663, %v665
      %v668 = vld [vmem:[#allocation2 + $0x20] sm:$0x3]
      %v669 = vsel %vm210, %v666, %v668
      %670 = vst [vmem:[#allocation2 + $0x20] sm:$0x3] %v669
      %v671 = vld [vmem:[%s192 + $0xa] sm:$0xf]
      %v674 = vunpack.c.l.s4 1983009808
      %v675 = vunpack.c.0.s8 %v674
      %v676 = vlaneseq
      %v677 = vshrl.u32 %v676, 7
      %v678 = vsub.s32 %v675, %v677
      %v679 = vrot.slane %v671, %v678
      %v680 = vcombine.low %v679, %v679
      %681 = vrot.lane.b32.xlu0 %v680, 111
      %v682 = vpop.permute.xlu0 %681
      %683 = vrot.lane.b32.xlu0 %v679, 111
      %v684 = vpop.permute.xlu0 %683
      %v685 = vsel %vm340, %v682, %v684
      %v687 = vld [vmem:[#allocation2 + $0x20] sm:$0x30]
      %v688 = vsel %vm227, %v685, %v687
      %689 = vst [vmem:[#allocation2 + $0x20] sm:$0x30] %v688
      %v690 = vld [vmem:[%s192 + $0x2] sm:$0xf]
      %v693 = vunpack.c.l.s4 1983009808
      %v694 = vunpack.c.0.s8 %v693
      %v695 = vlaneseq
      %v696 = vshrl.u32 %v695, 7
      %v697 = vsub.s32 %v694, %v696
      %v698 = vrot.slane %v690, %v697
      %v699 = vcombine.high %v698, %v698
      %700 = vrot.lane.b32.xlu0 %v698, 110
      %v701 = vpop.permute.xlu0 %700
      %702 = vrot.lane.b32.xlu0 %v699, 110
      %v703 = vpop.permute.xlu0 %702
      %v704 = vsel %vm379, %v701, %v703
      %v706 = vld [vmem:[#allocation2 + $0x28] sm:$0x3]
      %v707 = vsel %vm210, %v704, %v706
      %708 = vst [vmem:[#allocation2 + $0x28] sm:$0x3] %v707
      %v709 = vld [vmem:[%s192 + $0xa] sm:$0xf]
      %v712 = vunpack.c.l.s4 1983009808
      %v713 = vunpack.c.0.s8 %v712
      %v714 = vlaneseq
      %v715 = vshrl.u32 %v714, 7
      %v716 = vsub.s32 %v713, %v715
      %v717 = vrot.slane %v709, %v716
      %v718 = vcombine.low %v717, %v717
      %719 = vrot.lane.b32.xlu0 %v718, 110
      %v720 = vpop.permute.xlu0 %719
      %721 = vrot.lane.b32.xlu0 %v717, 110
      %v722 = vpop.permute.xlu0 %721
      %v723 = vsel %vm379, %v720, %v722
      %v725 = vld [vmem:[#allocation2 + $0x28] sm:$0x30]
      %v726 = vsel %vm227, %v723, %v725
      %727 = vst [vmem:[#allocation2 + $0x28] sm:$0x30] %v726
      %v728 = vld [vmem:[%s192 + $0x12] sm:$0xf]
      %v731 = vunpack.c.l.s4 1983009808
      %v732 = vunpack.c.0.s8 %v731
      %v733 = vlaneseq
      %v734 = vshrl.u32 %v733, 7
      %v735 = vsub.s32 %v732, %v734
      %v736 = vrot.slane %v728, %v735
      %v737 = vcombine.high %v736, %v736
      %738 = vrot.lane.b32.xlu0 %v736, 111
      %v739 = vpop.permute.xlu0 %738
      %740 = vrot.lane.b32.xlu0 %v737, 111
      %v741 = vpop.permute.xlu0 %740
      %v742 = vsel %vm340, %v739, %v741
      %v744 = vld [vmem:[#allocation2 + $0x30] sm:$0x3]
      %v745 = vsel %vm210, %v742, %v744
      %746 = vst [vmem:[#allocation2 + $0x30] sm:$0x3] %v745
      %v747 = vld [vmem:[%s192 + $0x1a] sm:$0xf]
      %v750 = vunpack.c.l.s4 1983009808
      %v751 = vunpack.c.0.s8 %v750
      %v752 = vlaneseq
      %v753 = vshrl.u32 %v752, 7
      %v754 = vsub.s32 %v751, %v753
      %v755 = vrot.slane %v747, %v754
      %v756 = vcombine.low %v755, %v755
      %757 = vrot.lane.b32.xlu0 %v756, 111
      %v758 = vpop.permute.xlu0 %757
      %759 = vrot.lane.b32.xlu0 %v755, 111
      %v760 = vpop.permute.xlu0 %759
      %v761 = vsel %vm340, %v758, %v760
      %v763 = vld [vmem:[#allocation2 + $0x30] sm:$0x30]
      %v764 = vsel %vm227, %v761, %v763
      %765 = vst [vmem:[#allocation2 + $0x30] sm:$0x30] %v764
      %v766 = vld [vmem:[%s192 + $0x12] sm:$0xf]
      %v769 = vunpack.c.l.s4 1983009808
      %v770 = vunpack.c.0.s8 %v769
      %v771 = vlaneseq
      %v772 = vshrl.u32 %v771, 7
      %v773 = vsub.s32 %v770, %v772
      %v774 = vrot.slane %v766, %v773
      %v775 = vcombine.high %v774, %v774
      %776 = vrot.lane.b32.xlu0 %v774, 110
      %v777 = vpop.permute.xlu0 %776
      %778 = vrot.lane.b32.xlu0 %v775, 110
      %v779 = vpop.permute.xlu0 %778
      %v780 = vsel %vm379, %v777, %v779
      %v782 = vld [vmem:[#allocation2 + $0x38] sm:$0x3]
      %v783 = vsel %vm210, %v780, %v782
      %784 = vst [vmem:[#allocation2 + $0x38] sm:$0x3] %v783
      %v785 = vld [vmem:[%s192 + $0x1a] sm:$0xf]
      %v788 = vunpack.c.l.s4 1983009808
      %v789 = vunpack.c.0.s8 %v788
      %v790 = vlaneseq
      %v791 = vshrl.u32 %v790, 7
      %v792 = vsub.s32 %v789, %v791
      %v793 = vrot.slane %v785, %v792
      %v794 = vcombine.low %v793, %v793
      %795 = vrot.lane.b32.xlu0 %v794, 110
      %v796 = vpop.permute.xlu0 %795
      %797 = vrot.lane.b32.xlu0 %v793, 110
      %v798 = vpop.permute.xlu0 %797
      %v799 = vsel %vm379, %v796, %v798
      %v801 = vld [vmem:[#allocation2 + $0x38] sm:$0x30]
      %v802 = vsel %vm227, %v799, %v801
      %803 = vst [vmem:[#allocation2 + $0x38] sm:$0x30] %v802
      %v804 = vld [vmem:[%s1] sm:$0xf]
      %v805 = vld [vmem:[#allocation2] sm:$0xff]
      %v806 = vld [vmem:[#allocation2 + $0x8] sm:$0xff]
      %v807 = vld [vmem:[#allocation2 + $0x10] sm:$0xff]
      %v808 = vld [vmem:[#allocation2 + $0x18] sm:$0xff]
      %v809 = vld [vmem:[#allocation2 + $0x20] sm:$0xff]
      %v810 = vld [vmem:[#allocation2 + $0x28] sm:$0xff]
      %v811 = vld [vmem:[#allocation2 + $0x30] sm:$0xff]
      %v812 = vld [vmem:[#allocation2 + $0x38] sm:$0xff]
      %v813 = vld [vmem:[%s2] sm:$0xff]
      %815 = vset.pattern.permute.xlu0 0
      %816 = vperm.xlu0 %815, %v813
      %v817 = vpop.permute.xlu0 %816
      %819 = vmatprep.subr.bf16.mxu0 0
      %820 = vmatpush1.bf16.msra.mxu0 %v805
      %821 = vmatprep.subr.bf16.mxu0 0
      %822 = vmatpush1.bf16.msra.mxu0 %v806
      %823 = vmatprep.subr.bf16.mxu0 0
      %824 = vmatpush1.bf16.msra.mxu0 %v807
      %825 = vmatprep.subr.bf16.mxu0 0
      %826 = vmatpush1.bf16.msra.mxu0 %v808
      %827 = vmatprep.subr.bf16.mxu0 0
      %828 = vmatpush1.bf16.msra.mxu0 %v809
      %829 = vmatprep.subr.bf16.mxu0 0
      %830 = vmatpush1.bf16.msra.mxu0 %v810
      %831 = vmatprep.subr.bf16.mxu0 0
      %832 = vmatpush1.bf16.msra.mxu0 %v811
      %833 = vmatprep.subr.bf16.mxu0 0
      %834 = vmatpush1.bf16.msra.mxu0 %v812
      %835 = vmatprep.subr.bf16.mxu0 0
      %836 = vmatpush1.bf16.msra.mxu0 0
      %837 = vmatprep.subr.bf16.mxu0 0
      %838 = vmatpush1.bf16.msra.mxu0 0
      %839 = vmatprep.subr.bf16.mxu0 0
      %840 = vmatpush1.bf16.msra.mxu0 0
      %841 = vmatprep.subr.bf16.mxu0 0
      %842 = vmatpush1.bf16.msra.mxu0 0
      %843 = vmatprep.subr.bf16.mxu0 0
      %844 = vmatpush1.bf16.msra.mxu0 0
      %845 = vmatprep.subr.bf16.mxu0 0
      %846 = vmatpush1.bf16.msra.mxu0 0
      %847 = vmatprep.subr.bf16.mxu0 0
      %848 = vmatpush1.bf16.msra.mxu0 0
      %849 = vmatprep.subr.bf16.mxu0 0
      %850 = vmatpush1.bf16.msra.mxu0 0
      %851 = vmatprep.mubr.bf16.mxu0 0
      %852 = vmatmul.mubr.bf16.gmra.mrb[0].mxu0 %v804
      %v853 = vpop.f32.mrb[0].mxu0
      %v854 = vadd.f32 %v817, %v853
      %v855 = vpop.f32.mrb[0].mxu0
      %v856 = vpop.f32.mrb[0].mxu0
      %v857 = vpop.f32.mrb[0].mxu0
      %858 = vdwg.mxu0
      %vm859 = vcmp.ge.f32.partialorder %v854, 0.0
      %v860 = vmul.f32 %v854, 0.2
      %v861 = vsel %vm859, %v854, %v860
      %v862 = vpack.c.bf16 %v861, %v861
      %863 = vst [vmem:[%s197 + $0x4] sm:$0xf] %v862
      %v864 = vld [vmem:[%s192 + $0x4] sm:$0x3]
      %v865 = vld [vmem:[#allocation2] sm:$0x3]
      %v866 = vsel %vm210, %v864, %v865
      %867 = vst [vmem:[#allocation2] sm:$0x3] %v866
      %v868 = vld [vmem:[%s192 + $0xc] sm:$0x3]
      %v871 = vunpack.c.l.s4 1983009808
      %v872 = vunpack.c.0.s8 %v871
      %v873 = vlaneseq
      %v874 = vshrl.u32 %v873, 7
      %v875 = vsub.s32 %v872, %v874
      %v876 = vrot.slane %v868, %v875
      %v877 = vcombine.low %v876, %v876
      %v879 = vld [vmem:[#allocation2] sm:$0x30]
      %v880 = vsel %vm227, %v877, %v879
      %881 = vst [vmem:[#allocation2] sm:$0x30] %v880
      %v882 = vld [vmem:[%s192 + $0x4] sm:$0xf]
      %v885 = vunpack.c.l.s4 1983009808
      %v886 = vunpack.c.0.s8 %v885
      %v887 = vlaneseq
      %v888 = vshrl.u32 %v887, 7
      %v889 = vsub.s32 %v886, %v888
      %v890 = vrot.slane %v882, %v889
      %v891 = vcombine.high %v890, %v890
      %892 = vrot.lane.b32.xlu0 %v890, 127
      %v893 = vpop.permute.xlu0 %892
      %894 = vrot.lane.b32.xlu0 %v891, 127
      %v895 = vpop.permute.xlu0 %894
      %v896 = vsel %vm245, %v893, %v895
      %v898 = vld [vmem:[#allocation2 + $0x8] sm:$0x3]
      %v899 = vsel %vm210, %v896, %v898
      %900 = vst [vmem:[#allocation2 + $0x8] sm:$0x3] %v899
      %v901 = vld [vmem:[%s192 + $0xc] sm:$0xf]
      %v904 = vunpack.c.l.s4 1983009808
      %v905 = vunpack.c.0.s8 %v904
      %v906 = vlaneseq
      %v907 = vshrl.u32 %v906, 7
      %v908 = vsub.s32 %v905, %v907
      %v909 = vrot.slane %v901, %v908
      %v910 = vcombine.low %v909, %v909
      %911 = vrot.lane.b32.xlu0 %v910, 127
      %v912 = vpop.permute.xlu0 %911
      %913 = vrot.lane.b32.xlu0 %v909, 127
      %v914 = vpop.permute.xlu0 %913
      %v915 = vsel %vm245, %v912, %v914
      %v917 = vld [vmem:[#allocation2 + $0x8] sm:$0x30]
      %v918 = vsel %vm227, %v915, %v917
      %919 = vst [vmem:[#allocation2 + $0x8] sm:$0x30] %v918
      %v920 = vld [vmem:[%s192 + $0x14] sm:$0x3]
      %v921 = vld [vmem:[#allocation2 + $0x10] sm:$0x3]
      %v922 = vsel %vm210, %v920, %v921
      %923 = vst [vmem:[#allocation2 + $0x10] sm:$0x3] %v922
      %v924 = vld [vmem:[%s192 + $0x1c] sm:$0x3]
      %v927 = vunpack.c.l.s4 1983009808
      %v928 = vunpack.c.0.s8 %v927
      %v929 = vlaneseq
      %v930 = vshrl.u32 %v929, 7
      %v931 = vsub.s32 %v928, %v930
      %v932 = vrot.slane %v924, %v931
      %v933 = vcombine.low %v932, %v932
      %v935 = vld [vmem:[#allocation2 + $0x10] sm:$0x30]
      %v936 = vsel %vm227, %v933, %v935
      %937 = vst [vmem:[#allocation2 + $0x10] sm:$0x30] %v936
      %v938 = vld [vmem:[%s192 + $0x14] sm:$0xf]
      %v941 = vunpack.c.l.s4 1983009808
      %v942 = vunpack.c.0.s8 %v941
      %v943 = vlaneseq
      %v944 = vshrl.u32 %v943, 7
      %v945 = vsub.s32 %v942, %v944
      %v946 = vrot.slane %v938, %v945
      %v947 = vcombine.high %v946, %v946
      %948 = vrot.lane.b32.xlu0 %v946, 127
      %v949 = vpop.permute.xlu0 %948
      %950 = vrot.lane.b32.xlu0 %v947, 127
      %v951 = vpop.permute.xlu0 %950
      %v952 = vsel %vm245, %v949, %v951
      %v954 = vld [vmem:[#allocation2 + $0x18] sm:$0x3]
      %v955 = vsel %vm210, %v952, %v954
      %956 = vst [vmem:[#allocation2 + $0x18] sm:$0x3] %v955
      %v957 = vld [vmem:[%s192 + $0x1c] sm:$0xf]
      %v960 = vunpack.c.l.s4 1983009808
      %v961 = vunpack.c.0.s8 %v960
      %v962 = vlaneseq
      %v963 = vshrl.u32 %v962, 7
      %v964 = vsub.s32 %v961, %v963
      %v965 = vrot.slane %v957, %v964
      %v966 = vcombine.low %v965, %v965
      %967 = vrot.lane.b32.xlu0 %v966, 127
      %v968 = vpop.permute.xlu0 %967
      %969 = vrot.lane.b32.xlu0 %v965, 127
      %v970 = vpop.permute.xlu0 %969
      %v971 = vsel %vm245, %v968, %v970
      %v973 = vld [vmem:[#allocation2 + $0x18] sm:$0x30]
      %v974 = vsel %vm227, %v971, %v973
      %975 = vst [vmem:[#allocation2 + $0x18] sm:$0x30] %v974
      %v976 = vld [vmem:[%s192 + $0x4] sm:$0xf]
      %v979 = vunpack.c.l.s4 1983009808
      %v980 = vunpack.c.0.s8 %v979
      %v981 = vlaneseq
      %v982 = vshrl.u32 %v981, 7
      %v983 = vsub.s32 %v980, %v982
      %v984 = vrot.slane %v976, %v983
      %v985 = vcombine.high %v984, %v984
      %986 = vrot.lane.b32.xlu0 %v984, 111
      %v987 = vpop.permute.xlu0 %986
      %988 = vrot.lane.b32.xlu0 %v985, 111
      %v989 = vpop.permute.xlu0 %988
      %v990 = vsel %vm340, %v987, %v989
      %v992 = vld [vmem:[#allocation2 + $0x20] sm:$0x3]
      %v993 = vsel %vm210, %v990, %v992
      %994 = vst [vmem:[#allocation2 + $0x20] sm:$0x3] %v993
      %v995 = vld [vmem:[%s192 + $0xc] sm:$0xf]
      %v998 = vunpack.c.l.s4 1983009808
      %v999 = vunpack.c.0.s8 %v998
      %v1000 = vlaneseq
      %v1001 = vshrl.u32 %v1000, 7
      %v1002 = vsub.s32 %v999, %v1001
      %v1003 = vrot.slane %v995, %v1002
      %v1004 = vcombine.low %v1003, %v1003
      %1005 = vrot.lane.b32.xlu0 %v1004, 111
      %v1006 = vpop.permute.xlu0 %1005
      %1007 = vrot.lane.b32.xlu0 %v1003, 111
      %v1008 = vpop.permute.xlu0 %1007
      %v1009 = vsel %vm340, %v1006, %v1008
      %v1011 = vld [vmem:[#allocation2 + $0x20] sm:$0x30]
      %v1012 = vsel %vm227, %v1009, %v1011
      %1013 = vst [vmem:[#allocation2 + $0x20] sm:$0x30] %v1012
      %v1014 = vld [vmem:[%s192 + $0x4] sm:$0xf]
      %v1017 = vunpack.c.l.s4 1983009808
      %v1018 = vunpack.c.0.s8 %v1017
      %v1019 = vlaneseq
      %v1020 = vshrl.u32 %v1019, 7
      %v1021 = vsub.s32 %v1018, %v1020
      %v1022 = vrot.slane %v1014, %v1021
      %v1023 = vcombine.high %v1022, %v1022
      %1024 = vrot.lane.b32.xlu0 %v1022, 110
      %v1025 = vpop.permute.xlu0 %1024
      %1026 = vrot.lane.b32.xlu0 %v1023, 110
      %v1027 = vpop.permute.xlu0 %1026
      %v1028 = vsel %vm379, %v1025, %v1027
      %v1030 = vld [vmem:[#allocation2 + $0x28] sm:$0x3]
      %v1031 = vsel %vm210, %v1028, %v1030
      %1032 = vst [vmem:[#allocation2 + $0x28] sm:$0x3] %v1031
      %v1033 = vld [vmem:[%s192 + $0xc] sm:$0xf]
      %v1036 = vunpack.c.l.s4 1983009808
      %v1037 = vunpack.c.0.s8 %v1036
      %v1038 = vlaneseq
      %v1039 = vshrl.u32 %v1038, 7
      %v1040 = vsub.s32 %v1037, %v1039
      %v1041 = vrot.slane %v1033, %v1040
      %v1042 = vcombine.low %v1041, %v1041
      %1043 = vrot.lane.b32.xlu0 %v1042, 110
      %v1044 = vpop.permute.xlu0 %1043
      %1045 = vrot.lane.b32.xlu0 %v1041, 110
      %v1046 = vpop.permute.xlu0 %1045
      %v1047 = vsel %vm379, %v1044, %v1046
      %v1049 = vld [vmem:[#allocation2 + $0x28] sm:$0x30]
      %v1050 = vsel %vm227, %v1047, %v1049
      %1051 = vst [vmem:[#allocation2 + $0x28] sm:$0x30] %v1050
      %v1052 = vld [vmem:[%s192 + $0x14] sm:$0xf]
      %v1055 = vunpack.c.l.s4 1983009808
      %v1056 = vunpack.c.0.s8 %v1055
      %v1057 = vlaneseq
      %v1058 = vshrl.u32 %v1057, 7
      %v1059 = vsub.s32 %v1056, %v1058
      %v1060 = vrot.slane %v1052, %v1059
      %v1061 = vcombine.high %v1060, %v1060
      %1062 = vrot.lane.b32.xlu0 %v1060, 111
      %v1063 = vpop.permute.xlu0 %1062
      %1064 = vrot.lane.b32.xlu0 %v1061, 111
      %v1065 = vpop.permute.xlu0 %1064
      %v1066 = vsel %vm340, %v1063, %v1065
      %v1068 = vld [vmem:[#allocation2 + $0x30] sm:$0x3]
      %v1069 = vsel %vm210, %v1066, %v1068
      %1070 = vst [vmem:[#allocation2 + $0x30] sm:$0x3] %v1069
      %v1071 = vld [vmem:[%s192 + $0x1c] sm:$0xf]
      %v1074 = vunpack.c.l.s4 1983009808
      %v1075 = vunpack.c.0.s8 %v1074
      %v1076 = vlaneseq
      %v1077 = vshrl.u32 %v1076, 7
      %v1078 = vsub.s32 %v1075, %v1077
      %v1079 = vrot.slane %v1071, %v1078
      %v1080 = vcombine.low %v1079, %v1079
      %1081 = vrot.lane.b32.xlu0 %v1080, 111
      %v1082 = vpop.permute.xlu0 %1081
      %1083 = vrot.lane.b32.xlu0 %v1079, 111
      %v1084 = vpop.permute.xlu0 %1083
      %v1085 = vsel %vm340, %v1082, %v1084
      %v1087 = vld [vmem:[#allocation2 + $0x30] sm:$0x30]
      %v1088 = vsel %vm227, %v1085, %v1087
      %1089 = vst [vmem:[#allocation2 + $0x30] sm:$0x30] %v1088
      %v1090 = vld [vmem:[%s192 + $0x14] sm:$0xf]
      %v1093 = vunpack.c.l.s4 1983009808
      %v1094 = vunpack.c.0.s8 %v1093
      %v1095 = vlaneseq
      %v1096 = vshrl.u32 %v1095, 7
      %v1097 = vsub.s32 %v1094, %v1096
      %v1098 = vrot.slane %v1090, %v1097
      %v1099 = vcombine.high %v1098, %v1098
      %1100 = vrot.lane.b32.xlu0 %v1098, 110
      %v1101 = vpop.permute.xlu0 %1100
      %1102 = vrot.lane.b32.xlu0 %v1099, 110
      %v1103 = vpop.permute.xlu0 %1102
      %v1104 = vsel %vm379, %v1101, %v1103
      %v1106 = vld [vmem:[#allocation2 + $0x38] sm:$0x3]
      %v1107 = vsel %vm210, %v1104, %v1106
      %1108 = vst [vmem:[#allocation2 + $0x38] sm:$0x3] %v1107
      %v1109 = vld [vmem:[%s192 + $0x1c] sm:$0xf]
      %v1112 = vunpack.c.l.s4 1983009808
      %v1113 = vunpack.c.0.s8 %v1112
      %v1114 = vlaneseq
      %v1115 = vshrl.u32 %v1114, 7
      %v1116 = vsub.s32 %v1113, %v1115
      %v1117 = vrot.slane %v1109, %v1116
      %v1118 = vcombine.low %v1117, %v1117
      %1119 = vrot.lane.b32.xlu0 %v1118, 110
      %v1120 = vpop.permute.xlu0 %1119
      %1121 = vrot.lane.b32.xlu0 %v1117, 110
      %v1122 = vpop.permute.xlu0 %1121
      %v1123 = vsel %vm379, %v1120, %v1122
      %v1125 = vld [vmem:[#allocation2 + $0x38] sm:$0x30]
      %v1126 = vsel %vm227, %v1123, %v1125
      %1127 = vst [vmem:[#allocation2 + $0x38] sm:$0x30] %v1126
      %v1128 = vld [vmem:[%s1] sm:$0xf]
      %v1129 = vld [vmem:[#allocation2] sm:$0xff]
      %v1130 = vld [vmem:[#allocation2 + $0x8] sm:$0xff]
      %v1131 = vld [vmem:[#allocation2 + $0x10] sm:$0xff]
      %v1132 = vld [vmem:[#allocation2 + $0x18] sm:$0xff]
      %v1133 = vld [vmem:[#allocation2 + $0x20] sm:$0xff]
      %v1134 = vld [vmem:[#allocation2 + $0x28] sm:$0xff]
      %v1135 = vld [vmem:[#allocation2 + $0x30] sm:$0xff]
      %v1136 = vld [vmem:[#allocation2 + $0x38] sm:$0xff]
      %v1137 = vld [vmem:[%s2] sm:$0xff]
      %1139 = vset.pattern.permute.xlu0 0
      %1140 = vperm.xlu0 %1139, %v1137
      %v1141 = vpop.permute.xlu0 %1140
      %1143 = vmatprep.subr.bf16.mxu0 0
      %1144 = vmatpush1.bf16.msra.mxu0 %v1129
      %1145 = vmatprep.subr.bf16.mxu0 0
      %1146 = vmatpush1.bf16.msra.mxu0 %v1130
      %1147 = vmatprep.subr.bf16.mxu0 0
      %1148 = vmatpush1.bf16.msra.mxu0 %v1131
      %1149 = vmatprep.subr.bf16.mxu0 0
      %1150 = vmatpush1.bf16.msra.mxu0 %v1132
      %1151 = vmatprep.subr.bf16.mxu0 0
      %1152 = vmatpush1.bf16.msra.mxu0 %v1133
      %1153 = vmatprep.subr.bf16.mxu0 0
      %1154 = vmatpush1.bf16.msra.mxu0 %v1134
      %1155 = vmatprep.subr.bf16.mxu0 0
      %1156 = vmatpush1.bf16.msra.mxu0 %v1135
      %1157 = vmatprep.subr.bf16.mxu0 0
      %1158 = vmatpush1.bf16.msra.mxu0 %v1136
      %1159 = vmatprep.subr.bf16.mxu0 0
      %1160 = vmatpush1.bf16.msra.mxu0 0
      %1161 = vmatprep.subr.bf16.mxu0 0
      %1162 = vmatpush1.bf16.msra.mxu0 0
      %1163 = vmatprep.subr.bf16.mxu0 0
      %1164 = vmatpush1.bf16.msra.mxu0 0
      %1165 = vmatprep.subr.bf16.mxu0 0
      %1166 = vmatpush1.bf16.msra.mxu0 0
      %1167 = vmatprep.subr.bf16.mxu0 0
      %1168 = vmatpush1.bf16.msra.mxu0 0
      %1169 = vmatprep.subr.bf16.mxu0 0
      %1170 = vmatpush1.bf16.msra.mxu0 0
      %1171 = vmatprep.subr.bf16.mxu0 0
      %1172 = vmatpush1.bf16.msra.mxu0 0
      %1173 = vmatprep.subr.bf16.mxu0 0
      %1174 = vmatpush1.bf16.msra.mxu0 0
      %1175 = vmatprep.mubr.bf16.mxu0 0
      %1176 = vmatmul.mubr.bf16.gmra.mrb[0].mxu0 %v1128
      %v1177 = vpop.f32.mrb[0].mxu0
      %v1178 = vadd.f32 %v1141, %v1177
      %v1179 = vpop.f32.mrb[0].mxu0
      %v1180 = vpop.f32.mrb[0].mxu0
      %v1181 = vpop.f32.mrb[0].mxu0
      %1182 = vdwg.mxu0
      %vm1183 = vcmp.ge.f32.partialorder %v1178, 0.0
      %v1184 = vmul.f32 %v1178, 0.2
      %v1185 = vsel %vm1183, %v1178, %v1184
      %v1186 = vpack.c.bf16 %v1185, %v1185
      %1187 = vst [vmem:[%s197 + $0x8] sm:$0xf] %v1186
      %p1188 = scmp.lt.s32.totalorder %s15, 1
      %s1189 = scalar_select %p1188, %s15, 1
      %s1190 = smul.addr %s1189, 3
      %s1191 = smul.addr %s1190, 4
      %s1192 = scalar_lea.vmem %s4, %s1191
      // Predicated region
      $region37: #{discriminator_forward.5} parent=35 // pred_check
        %p1193 = pneg %p122
      $region38: #{discriminator_forward.5} parent=35 // pred_check_branch
        %1195 = sbr.rel (%p1193) target = $region40
      $region39: #{discriminator_forward.5} parent=35 // pred_region
        _
      $region40: #{discriminator_forward.5} parent=35 // pred_fallthru
        _
    $region36: #{discriminator_forward.5} parent=5 // pred_fallthru
      _
    %p1196 = scmp.le.s32.totalorder 2, %s10
    // Predicated region
    $region41: #{discriminator_forward.5} parent=5 // pred_check
      %p1197 = pneg %p1196
    $region42: #{discriminator_forward.5} parent=5 // pred_check_branch
      %1199 = sbr.rel (%p1197) target = $region44
    $region43: #{discriminator_forward.5} parent=5 // pred_region
      %s1200 = ssub.s32 %s10, 2
      // Predicated region
      $region45: #{discriminator_forward.5} parent=43 // pred_check
        %p1201 = pneg %p128
      $region46: #{discriminator_forward.5} parent=43 // pred_check_branch
        %1203 = sbr.rel (%p1201) target = $region48
      $region47: #{discriminator_forward.5} parent=43 // pred_region
        %p1204 = scmp.lt.s32.totalorder %s16, 1
        %s1205 = scalar_select %p1204, %s16, 1
        %s1206 = smul.addr %s1205, 3
        %s1207 = smul.addr %s1206, 4
        %s1208 = scalar_lea.vmem %s4, %s1207
      $region48: #{discriminator_forward.5} parent=43 // pred_fallthru
        _
    $region44: #{discriminator_forward.5} parent=5 // pred_fallthru
      _
  $region6: #{discriminator_forward.5} parent=0 // loop_footer
    %s14 = sadd.s32 1, %s10
  $region7: #{discriminator_forward.5} parent=0 // loop_footer_branch
    %9 = sbr.rel target = $region3
  $region8: #{discriminator_forward.5} parent=0 // loop_exit
    _

// kernel: discriminator_forward.6
$region0: #{discriminator_forward.6}
  #allocation0 [shape = 'u32[]', space=smem, size = 0x4, offset = 0x4, fixed_abs, tag = 'smem constant byte address 0x4 - core index']
  #allocation1 [shape = 'u32[144,128]{1,0:T(1,128)}', space=vmem, size = 0x12000, scoped, tag = 'internal scratch']
  #allocation2 [shape = 'bf16[128,128]{1,0:T(16,128)(2,1)}', space=vmem, size = 0x8000, scoped, tag = 'scratch operand']
  #allocation3 [shape = 'f32[16,128]{1,0:T(8,128)}', space=vmem, size = 0x2000, scoped, tag = 'scratch operand']
  %s0 = inlined_call_operand.vmem [shape: bf16[2,8,1024], index: 0, kind: input, shape index: {}]
  %s1 = inlined_call_operand.vmem [shape: bf16[16,128], index: 1, kind: input, shape index: {}]
  %s2 = inlined_call_operand.vmem [shape: f32[16,1], index: 2, kind: input, shape index: {}]
  %s3 = inlined_call_operand.vmem [shape: f32[1,128], index: 3, kind: input, shape index: {}]
  %s4 = inlined_call_operand.vmem [shape: bf16[2,16,128], index: 4, kind: output, shape index: {}]
  %s5 = sld [smem:[#allocation0]]
  $region49: #{discriminator_forward.6} parent=0
    _
  %s7 = ssub.s32 1, %s5
  %s8 = scalar_select 0, %s7, %s5
  loop: start=0, step=1, limit=4
  $region2: #{discriminator_forward.6} parent=0 // loop_pre_header
    _
  $region3: #{discriminator_forward.6} parent=0 // loop_header
    %s10 = sphi 0, %s14
    %p11 = scmp.ge.s32.totalorder %s10, 4
    %s20 = sphi 0, %s22
    %s23 = sphi 0, %s20
    %s24 = sphi 0, %s23
    %s40 = sphi 0, %s24
    %s44 = sphi 0, %s44
    %s46 = sphi 0, %s44
    %s47 = sphi 0, %s46
    %s61 = sphi 0, %s47
    %s65 = sphi 0, %s65
    %s67 = sphi 0, %s65
    %s68 = sphi 0, %s67
    %s82 = sphi 0, %s68
    %s86 = sphi 0, %s86
    %s88 = sphi 0, %s86
    %s89 = sphi 0, %s88
    %s103 = sphi 0, %s89
    %s109 = sphi 0, %s111
    %s112 = sphi 0, %s109
    %s113 = sphi 0, %s112
    %s129 = sphi 0, %s113
  $region4: #{discriminator_forward.6} parent=0 // loop_header_branch
    %13 = sbr.rel (%p11) target = $region8
  $region5: #{discriminator_forward.6} parent=0 // loop_body
    %s15 = ssub.s32 %s10, 1
    %s16 = ssub.s32 %s10, 2
    %s17 = sadd.s32 %s10, 1
    %s18 = ssub.s32 %s10, %s17
    %p19 = scmp.eq.s32.totalorder %s18, 0
    %s21 = sadd.s32 %s20, 1
    %s22 = scalar_select %p19, %s20, %s21
    %p25 = pneg %p19
    %p26 = scmp.eq.s32.totalorder %s10, 1
    %p27 = por %p25, %p26
    %p28 = scmp.ne.s32.totalorder %s20, %s23
    %p29 = scmp.eq.s32.totalorder %s10, 0
    %p30 = por %p28, %p29
    %p31 = scmp.ne.s32.totalorder %s20, %s23
    %p32 = scmp.eq.s32.totalorder %s15, 1
    %p33 = por %p31, %p32
    %p34 = scmp.ne.s32.totalorder %s23, %s24
    %p35 = scmp.eq.s32.totalorder %s15, 0
    %p36 = por %p34, %p35
    %p37 = scmp.ne.s32.totalorder %s23, %s24
    %p38 = scmp.eq.s32.totalorder %s16, 1
    %p39 = por %p37, %p38
    %p41 = scmp.ne.s32.totalorder %s24, %s40
    %p42 = scmp.eq.s32.totalorder %s16, 0
    %p43 = por %p41, %p42
    %s45 = sadd.s32 %s44, 1
    %p48 = scmp.eq.s32.totalorder %s10, 1
    %p49 = scmp.ne.s32.totalorder %s44, %s46
    %p50 = scmp.eq.s32.totalorder %s10, 0
    %p51 = por %p49, %p50
    %p52 = scmp.ne.s32.totalorder %s44, %s46
    %p53 = scmp.eq.s32.totalorder %s15, 1
    %p54 = por %p52, %p53
    %p55 = scmp.ne.s32.totalorder %s46, %s47
    %p56 = scmp.eq.s32.totalorder %s15, 0
    %p57 = por %p55, %p56
    %p58 = scmp.ne.s32.totalorder %s46, %s47
    %p59 = scmp.eq.s32.totalorder %s16, 1
    %p60 = por %p58, %p59
    %p62 = scmp.ne.s32.totalorder %s47, %s61
    %p63 = scmp.eq.s32.totalorder %s16, 0
    %p64 = por %p62, %p63
    %s66 = sadd.s32 %s65, 1
    %p69 = scmp.eq.s32.totalorder %s10, 1
    %p70 = scmp.ne.s32.totalorder %s65, %s67
    %p71 = scmp.eq.s32.totalorder %s10, 0
    %p72 = por %p70, %p71
    %p73 = scmp.ne.s32.totalorder %s65, %s67
    %p74 = scmp.eq.s32.totalorder %s15, 1
    %p75 = por %p73, %p74
    %p76 = scmp.ne.s32.totalorder %s67, %s68
    %p77 = scmp.eq.s32.totalorder %s15, 0
    %p78 = por %p76, %p77
    %p79 = scmp.ne.s32.totalorder %s67, %s68
    %p80 = scmp.eq.s32.totalorder %s16, 1
    %p81 = por %p79, %p80
    %p83 = scmp.ne.s32.totalorder %s68, %s82
    %p84 = scmp.eq.s32.totalorder %s16, 0
    %p85 = por %p83, %p84
    %s87 = sadd.s32 %s86, 1
    %p90 = scmp.eq.s32.totalorder %s10, 1
    %p91 = scmp.ne.s32.totalorder %s86, %s88
    %p92 = scmp.eq.s32.totalorder %s10, 0
    %p93 = por %p91, %p92
    %p94 = scmp.ne.s32.totalorder %s86, %s88
    %p95 = scmp.eq.s32.totalorder %s15, 1
    %p96 = por %p94, %p95
    %p97 = scmp.ne.s32.totalorder %s88, %s89
    %p98 = scmp.eq.s32.totalorder %s15, 0
    %p99 = por %p97, %p98
    %p100 = scmp.ne.s32.totalorder %s88, %s89
    %p101 = scmp.eq.s32.totalorder %s16, 1
    %p102 = por %p100, %p101
    %p104 = scmp.ne.s32.totalorder %s89, %s103
    %p105 = scmp.eq.s32.totalorder %s16, 0
    %p106 = por %p104, %p105
    %s107 = ssub.s32 %s10, %s17
    %p108 = scmp.eq.s32.totalorder %s107, 0
    %s110 = sadd.s32 %s109, 1
    %s111 = scalar_select %p108, %s109, %s110
    %p114 = pneg %p108
    %p115 = scmp.eq.s32.totalorder %s10, 1
    %p116 = por %p114, %p115
    %p117 = scmp.ne.s32.totalorder %s109, %s112
    %p118 = scmp.eq.s32.totalorder %s10, 0
    %p119 = por %p117, %p118
    %p120 = scmp.ne.s32.totalorder %s109, %s112
    %p121 = scmp.eq.s32.totalorder %s15, 1
    %p122 = por %p120, %p121
    %p123 = scmp.ne.s32.totalorder %s112, %s113
    %p124 = scmp.eq.s32.totalorder %s15, 0
    %p125 = por %p123, %p124
    %p126 = scmp.ne.s32.totalorder %s112, %s113
    %p127 = scmp.eq.s32.totalorder %s16, 1
    %p128 = por %p126, %p127
    %p130 = scmp.ne.s32.totalorder %s113, %s129
    %p131 = scmp.eq.s32.totalorder %s16, 0
    %p132 = por %p130, %p131
    %p133 = scmp.le.s32.totalorder 1, %s10
    %p134 = scmp.lt.s32.totalorder %s10, 3
    %p135 = pnand %p133, %p134
    %p136 = pneg %p135
    // Predicated region
    $region9: #{discriminator_forward.6} parent=5 // pred_check
      _
    $region10: #{discriminator_forward.6} parent=5 // pred_check_branch
      %138 = sbr.rel (%p135) target = $region12
    $region11: #{discriminator_forward.6} parent=5 // pred_region
      %s139 = ssub.s32 %s10, 1
      // Predicated region
      $region13: #{discriminator_forward.6} parent=11 // pred_check
        %p140 = pneg %p57
      $region14: #{discriminator_forward.6} parent=11 // pred_check_branch
        %142 = sbr.rel (%p140) target = $region16
      $region15: #{discriminator_forward.6} parent=11 // pred_region
        _
      $region16: #{discriminator_forward.6} parent=11 // pred_fallthru
        _
      // Predicated region
      $region17: #{discriminator_forward.6} parent=11 // pred_check
        %p143 = pneg %p78
      $region18: #{discriminator_forward.6} parent=11 // pred_check_branch
        %145 = sbr.rel (%p143) target = $region20
      $region19: #{discriminator_forward.6} parent=11 // pred_region
        _
      $region20: #{discriminator_forward.6} parent=11 // pred_fallthru
        _
      // Predicated region
      $region21: #{discriminator_forward.6} parent=11 // pred_check
        %p146 = pneg %p99
      $region22: #{discriminator_forward.6} parent=11 // pred_check_branch
        %148 = sbr.rel (%p146) target = $region24
      $region23: #{discriminator_forward.6} parent=11 // pred_region
        _
      $region24: #{discriminator_forward.6} parent=11 // pred_fallthru
        _
    $region12: #{discriminator_forward.6} parent=5 // pred_fallthru
      _
    %p149 = scmp.lt.s32.totalorder %s10, 2
    // Predicated region
    $region25: #{discriminator_forward.6} parent=5 // pred_check
      %p150 = pneg %p149
    $region26: #{discriminator_forward.6} parent=5 // pred_check_branch
      %152 = sbr.rel (%p150) target = $region28
    $region27: #{discriminator_forward.6} parent=5 // pred_region
      // Predicated region
      $region29: #{discriminator_forward.6} parent=27 // pred_check
        %p153 = pneg %p30
      $region30: #{discriminator_forward.6} parent=27 // pred_check_branch
        %155 = sbr.rel (%p153) target = $region32
      $region31: #{discriminator_forward.6} parent=27 // pred_region
        %p156 = scmp.lt.s32.totalorder %s10, 1
        %s157 = scalar_select %p156, %s10, 1
        %s158 = smul.addr %s157, 8
        %s159 = smul.addr %s158, 4
        %s160 = scalar_lea.vmem %s0, %s159
      $region32: #{discriminator_forward.6} parent=27 // pred_fallthru
        _
    $region28: #{discriminator_forward.6} parent=5 // pred_fallthru
      _
    %p161 = scmp.le.s32.totalorder 1, %s10
    %p162 = scmp.lt.s32.totalorder %s10, 3
    %p163 = pnand %p161, %p162
    %p164 = pneg %p163
    // Predicated region
    $region33: #{discriminator_forward.6} parent=5 // pred_check
      _
    $region34: #{discriminator_forward.6} parent=5 // pred_check_branch
      %166 = sbr.rel (%p163) target = $region36
    $region35: #{discriminator_forward.6} parent=5 // pred_region
      %s167 = ssub.s32 %s10, 1
      %p168 = scmp.lt.s32.totalorder %s15, 1
      %s169 = scalar_select %p168, %s15, 1
      %s170 = smul.addr %s169, 8
      %s171 = smul.addr %s170, 4
      %s172 = scalar_lea.vmem %s0, %s171
      %p173 = pneg %p36
      %p174 = pneg %p33
      %p175 = pneg %p57
      %p176 = pneg %p54
      %p177 = pneg %p78
      %p178 = pneg %p75
      %p179 = pneg %p99
      %p180 = pneg %p96
      %p181 = pneg %p125
      %p182 = pneg %p122
      %p183 = scmp.lt.s32.totalorder %s15, 1
      %s184 = scalar_select %p183, %s15, 1
      %s185 = smul.addr %s184, 2
      %s186 = smul.addr %s185, 4
      %s187 = scalar_lea.vmem %s4, %s186
      %p188 = scmp.lt.s32.totalorder %s15, 1
      %s189 = scalar_select %p188, %s15, 1
      %s190 = smul.addr %s189, 8
      %s191 = smul.addr %s190, 4
      %s192 = scalar_lea.vmem %s0, %s191
      %p193 = scmp.lt.s32.totalorder %s15, 1
      %s194 = scalar_select %p193, %s15, 1
      %s195 = smul.addr %s194, 2
      %s196 = smul.addr %s195, 4
      %s197 = scalar_lea.vmem %s4, %s196
      %v199 = vld [vmem:[%s192] sm:$0xf]
      %200 = vst [vmem:[#allocation2] sm:$0xf] %v199
      %v201 = vld [vmem:[%s192 + $0x8] sm:$0xf]
      %v203 = vunpack.c.l.b16 %v201
      %v204 = vpack.c.b16 %v203, %v203
      %206 = vst [vmem:[#allocation2] sm:$0xf0] %v204
      %v207 = vld [vmem:[%s192] sm:$0xff]
      %v209 = vunpack.c.l.b16 %v207
      %v210 = vunpack.c.h.b16 %v207
      %v211 = vpack.c.b16 %v209, %v209
      %v212 = vpack.c.b16 %v210, %v210
      %213 = vrot.lane.b32.xlu0 %v211, 127
      %v214 = vpop.permute.xlu0 %213
      %215 = vrot.lane.b32.xlu0 %v212, 127
      %v216 = vpop.permute.xlu0 %215
      %vm217 = vcmask 1039360
      %v218 = vsel %vm217, %v214, %v216
      %220 = vst [vmem:[#allocation2 + $0x8] sm:$0xf] %v218
      %v221 = vld [vmem:[%s192 + $0x8] sm:$0xff]
      %v223 = vunpack.c.l.b16 %v221
      %v224 = vunpack.c.h.b16 %v221
      %v225 = vpack.c.b16 %v223, %v223
      %v226 = vpack.c.b16 %v224, %v224
      %227 = vrot.lane.b32.xlu0 %v225, 127
      %v228 = vpop.permute.xlu0 %227
      %229 = vrot.lane.b32.xlu0 %v226, 127
      %v230 = vpop.permute.xlu0 %229
      %v231 = vsel %vm217, %v228, %v230
      %233 = vst [vmem:[#allocation2 + $0x8] sm:$0xf0] %v231
      %v234 = vld [vmem:[%s192 + $0x10] sm:$0xf]
      %235 = vst [vmem:[#allocation2 + $0x10] sm:$0xf] %v234
      %v236 = vld [vmem:[%s192 + $0x18] sm:$0xf]
      %v238 = vunpack.c.l.b16 %v236
      %v239 = vpack.c.b16 %v238, %v238
      %241 = vst [vmem:[#allocation2 + $0x10] sm:$0xf0] %v239
      %v242 = vld [vmem:[%s192 + $0x10] sm:$0xff]
      %v244 = vunpack.c.l.b16 %v242
      %v245 = vunpack.c.h.b16 %v242
      %v246 = vpack.c.b16 %v244, %v244
      %v247 = vpack.c.b16 %v245, %v245
      %248 = vrot.lane.b32.xlu0 %v246, 127
      %v249 = vpop.permute.xlu0 %248
      %250 = vrot.lane.b32.xlu0 %v247, 127
      %v251 = vpop.permute.xlu0 %250
      %v252 = vsel %vm217, %v249, %v251
      %254 = vst [vmem:[#allocation2 + $0x18] sm:$0xf] %v252
      %v255 = vld [vmem:[%s192 + $0x18] sm:$0xff]
      %v257 = vunpack.c.l.b16 %v255
      %v258 = vunpack.c.h.b16 %v255
      %v259 = vpack.c.b16 %v257, %v257
      %v260 = vpack.c.b16 %v258, %v258
      %261 = vrot.lane.b32.xlu0 %v259, 127
      %v262 = vpop.permute.xlu0 %261
      %263 = vrot.lane.b32.xlu0 %v260, 127
      %v264 = vpop.permute.xlu0 %263
      %v265 = vsel %vm217, %v262, %v264
      %267 = vst [vmem:[#allocation2 + $0x18] sm:$0xf0] %v265
      %v268 = vld [vmem:[%s192] sm:$0xff]
      %v270 = vunpack.c.l.b16 %v268
      %v271 = vunpack.c.h.b16 %v268
      %v272 = vpack.c.b16 %v270, %v270
      %v273 = vpack.c.b16 %v271, %v271
      %274 = vrot.lane.b32.xlu0 %v272, 119
      %v275 = vpop.permute.xlu0 %274
      %276 = vrot.lane.b32.xlu0 %v273, 119
      %v277 = vpop.permute.xlu0 %276
      %vm278 = vcmask 973824
      %v279 = vsel %vm278, %v275, %v277
      %281 = vst [vmem:[#allocation2 + $0x20] sm:$0xf] %v279
      %v282 = vld [vmem:[%s192 + $0x8] sm:$0xff]
      %v284 = vunpack.c.l.b16 %v282
      %v285 = vunpack.c.h.b16 %v282
      %v286 = vpack.c.b16 %v284, %v284
      %v287 = vpack.c.b16 %v285, %v285
      %288 = vrot.lane.b32.xlu0 %v286, 119
      %v289 = vpop.permute.xlu0 %288
      %290 = vrot.lane.b32.xlu0 %v287, 119
      %v291 = vpop.permute.xlu0 %290
      %v292 = vsel %vm278, %v289, %v291
      %294 = vst [vmem:[#allocation2 + $0x20] sm:$0xf0] %v292
      %v295 = vld [vmem:[%s192] sm:$0xff]
      %v297 = vunpack.c.l.b16 %v295
      %v298 = vunpack.c.h.b16 %v295
      %v299 = vpack.c.b16 %v297, %v297
      %v300 = vpack.c.b16 %v298, %v298
      %301 = vrot.lane.b32.xlu0 %v299, 118
      %v302 = vpop.permute.xlu0 %301
      %303 = vrot.lane.b32.xlu0 %v300, 118
      %v304 = vpop.permute.xlu0 %303
      %vm305 = vcmask 965632
      %v306 = vsel %vm305, %v302, %v304
      %308 = vst [vmem:[#allocation2 + $0x28] sm:$0xf] %v306
      %v309 = vld [vmem:[%s192 + $0x8] sm:$0xff]
      %v311 = vunpack.c.l.b16 %v309
      %v312 = vunpack.c.h.b16 %v309
      %v313 = vpack.c.b16 %v311, %v311
      %v314 = vpack.c.b16 %v312, %v312
      %315 = vrot.lane.b32.xlu0 %v313, 118
      %v316 = vpop.permute.xlu0 %315
      %317 = vrot.lane.b32.xlu0 %v314, 118
      %v318 = vpop.permute.xlu0 %317
      %v319 = vsel %vm305, %v316, %v318
      %321 = vst [vmem:[#allocation2 + $0x28] sm:$0xf0] %v319
      %v322 = vld [vmem:[%s192 + $0x10] sm:$0xff]
      %v324 = vunpack.c.l.b16 %v322
      %v325 = vunpack.c.h.b16 %v322
      %v326 = vpack.c.b16 %v324, %v324
      %v327 = vpack.c.b16 %v325, %v325
      %328 = vrot.lane.b32.xlu0 %v326, 119
      %v329 = vpop.permute.xlu0 %328
      %330 = vrot.lane.b32.xlu0 %v327, 119
      %v331 = vpop.permute.xlu0 %330
      %v332 = vsel %vm278, %v329, %v331
      %334 = vst [vmem:[#allocation2 + $0x30] sm:$0xf] %v332
      %v335 = vld [vmem:[%s192 + $0x18] sm:$0xff]
      %v337 = vunpack.c.l.b16 %v335
      %v338 = vunpack.c.h.b16 %v335
      %v339 = vpack.c.b16 %v337, %v337
      %v340 = vpack.c.b16 %v338, %v338
      %341 = vrot.lane.b32.xlu0 %v339, 119
      %v342 = vpop.permute.xlu0 %341
      %343 = vrot.lane.b32.xlu0 %v340, 119
      %v344 = vpop.permute.xlu0 %343
      %v345 = vsel %vm278, %v342, %v344
      %347 = vst [vmem:[#allocation2 + $0x30] sm:$0xf0] %v345
      %v348 = vld [vmem:[%s192 + $0x10] sm:$0xff]
      %v350 = vunpack.c.l.b16 %v348
      %v351 = vunpack.c.h.b16 %v348
      %v352 = vpack.c.b16 %v350, %v350
      %v353 = vpack.c.b16 %v351, %v351
      %354 = vrot.lane.b32.xlu0 %v352, 118
      %v355 = vpop.permute.xlu0 %354
      %356 = vrot.lane.b32.xlu0 %v353, 118
      %v357 = vpop.permute.xlu0 %356
      %v358 = vsel %vm305, %v355, %v357
      %360 = vst [vmem:[#allocation2 + $0x38] sm:$0xf] %v358
      %v361 = vld [vmem:[%s192 + $0x18] sm:$0xff]
      %v363 = vunpack.c.l.b16 %v361
      %v364 = vunpack.c.h.b16 %v361
      %v365 = vpack.c.b16 %v363, %v363
      %v366 = vpack.c.b16 %v364, %v364
      %367 = vrot.lane.b32.xlu0 %v365, 118
      %v368 = vpop.permute.xlu0 %367
      %369 = vrot.lane.b32.xlu0 %v366, 118
      %v370 = vpop.permute.xlu0 %369
      %v371 = vsel %vm305, %v368, %v370
      %373 = vst [vmem:[#allocation2 + $0x38] sm:$0xf0] %v371
      %v374 = vld [vmem:[%s1] sm:$0xf]
      %v375 = vld [vmem:[%s1 + $0x4] sm:$0xf]
      %v376 = vld [vmem:[#allocation2] sm:$0xff]
      %v377 = vld [vmem:[#allocation2 + $0x8] sm:$0xff]
      %v378 = vld [vmem:[#allocation2 + $0x10] sm:$0xff]
      %v379 = vld [vmem:[#allocation2 + $0x18] sm:$0xff]
      %v380 = vld [vmem:[#allocation2 + $0x20] sm:$0xff]
      %v381 = vld [vmem:[#allocation2 + $0x28] sm:$0xff]
      %v382 = vld [vmem:[#allocation2 + $0x30] sm:$0xff]
      %v383 = vld [vmem:[#allocation2 + $0x38] sm:$0xff]
      %v384 = vld [vmem:[%s2] sm:$0xff]
      %v385 = vld [vmem:[%s2 + $0x8] sm:$0xff]
      %387 = vset.pattern.permute.xlu0 0
      %388 = vperm.xlu0 %387, %v384
      %v389 = vpop.permute.xlu0 %388
      %392 = vset.pattern.permute.xlu0 0
      %393 = vperm.xlu0 %392, %v385
      %v394 = vpop.permute.xlu0 %393
      %v398 = vunpack.c.l.b16 %v374
      %v399 = vunpack.c.l.b16 %v375
      %v400 = vpack.c.b16 %v399, %v398
      %402 = vmatprep.subr.bf16.mxu0 0
      %403 = vmatpush1.bf16.msra.mxu0 %v376
      %404 = vmatprep.subr.bf16.mxu0 0
      %405 = vmatpush1.bf16.msra.mxu0 %v377
      %406 = vmatprep.subr.bf16.mxu0 0
      %407 = vmatpush1.bf16.msra.mxu0 %v378
      %408 = vmatprep.subr.bf16.mxu0 0
      %409 = vmatpush1.bf16.msra.mxu0 %v379
      %410 = vmatprep.subr.bf16.mxu0 0
      %411 = vmatpush1.bf16.msra.mxu0 %v380
      %412 = vmatprep.subr.bf16.mxu0 0
      %413 = vmatpush1.bf16.msra.mxu0 %v381
      %414 = vmatprep.subr.bf16.mxu0 0
      %415 = vmatpush1.bf16.msra.mxu0 %v382
      %416 = vmatprep.subr.bf16.mxu0 0
      %417 = vmatpush1.bf16.msra.mxu0 %v383
      %418 = vmatprep.subr.bf16.mxu0 0
      %419 = vmatpush1.bf16.msra.mxu0 0
      %420 = vmatprep.subr.bf16.mxu0 0
      %421 = vmatpush1.bf16.msra.mxu0 0
      %422 = vmatprep.subr.bf16.mxu0 0
      %423 = vmatpush1.bf16.msra.mxu0 0
      %424 = vmatprep.subr.bf16.mxu0 0
      %425 = vmatpush1.bf16.msra.mxu0 0
      %426 = vmatprep.subr.bf16.mxu0 0
      %427 = vmatpush1.bf16.msra.mxu0 0
      %428 = vmatprep.subr.bf16.mxu0 0
      %429 = vmatpush1.bf16.msra.mxu0 0
      %430 = vmatprep.subr.bf16.mxu0 0
      %431 = vmatpush1.bf16.msra.mxu0 0
      %432 = vmatprep.subr.bf16.mxu0 0
      %433 = vmatpush1.bf16.msra.mxu0 0
      %434 = vmatprep.mubr.bf16.mxu0 0
      %435 = vmatmul.mubr.bf16.gmra.mrb[0].mxu0 %v400
      %v436 = vpop.f32.mrb[0].mxu0
      %v437 = vadd.f32 %v389, %v436
      %v438 = vpop.f32.mrb[0].mxu0
      %v439 = vpop.f32.mrb[0].mxu0
      %v440 = vadd.f32 %v394, %v439
      %v441 = vpop.f32.mrb[0].mxu0
      %442 = vdwg.mxu0
      %v443 = vld [vmem:[%s3] sm:$0x1]
      %v445 = vlaneseq
      %v446 = vshrl.u32 %v445, 7
      %v447 = vsub.s32 0, %v446
      %v448 = vrot.slane %v443, %v447
      %v450 = vmul.f32 %v437, %v448
      %v451 = vmul.f32 %v440, %v448
      %452 = vadd.xlane.f32.xlu0 %v450
      %v453 = vpop.xlane.xlu0 %452
      %454 = vadd.xlane.f32.xlu0 %v451
      %v455 = vpop.xlane.xlu0 %454
      %v456 = vadd.f32 %v453, 0.0
      %v457 = vadd.f32 %v455, 0.0
      %v458 = vmul.f32 %v450, %v437
      %v459 = vmul.f32 %v451, %v440
      %460 = vadd.xlane.f32.xlu0 %v458
      %v461 = vpop.xlane.xlu0 %460
      %462 = vadd.xlane.f32.xlu0 %v459
      %v463 = vpop.xlane.xlu0 %462
      %v464 = vadd.f32 %v461, 0.0
      %v465 = vadd.f32 %v463, 0.0
      %466 = vst [vmem:[#allocation3] sm:$0xff] %v437
      %467 = vst [vmem:[#allocation3 + $0x8] sm:$0xff] %v440
      %v468 = vmul.f32 %v456, 0.015625
      %v469 = vmul.f32 %v457, 0.015625
      %v470 = vmul.f32 %v464, 0.015625
      %v471 = vmul.f32 %v465, 0.015625
      %v472 = vmul.f32 %v468, %v468
      %v473 = vmul.f32 %v469, %v469
      %v474 = vsub.f32 %v470, %v472
      %v475 = vsub.f32 %v471, %v473
      %v476 = vmax.f32 %v474, 0.0
      %v477 = vmax.f32 %v475, 0.0
      %v478 = vadd.f32 %v476, 1e-05
      %v479 = vadd.f32 %v477, 1e-05
      %v480 = vrsqrt.pop %v478
      %v481 = vrsqrt.pop %v479
      %v482 = vld [vmem:[#allocation3] sm:$0xff]
      %v483 = vld [vmem:[#allocation3 + $0x8] sm:$0xff]
      %v484 = vsub.f32 %v482, %v468
      %v485 = vsub.f32 %v483, %v469
      %v486 = vmul.f32 %v484, %v480
      %v487 = vmul.f32 %v485, %v481
      %vm488 = vcmp.ge.f32.partialorder %v486, 0.0
      %vm489 = vcmp.ge.f32.partialorder %v487, 0.0
      %v490 = vmul.f32 %v486, 0.2
      %v491 = vmul.f32 %v487, 0.2
      %v492 = vsel %vm488, %v486, %v490
      %v493 = vsel %vm489, %v487, %v491
      %v494 = vpack.c.bf16 %v493, %v492
      %v496 = vunpack.c.l.b16 %v494
      %v497 = vunpack.c.h.b16 %v494
      %v498 = vpack.c.b16 %v496, %v496
      %v499 = vpack.c.b16 %v497, %v497
      %502 = vst [vmem:[%s197] sm:$0xf] %v498
      %503 = vst [vmem:[%s197 + $0x4] sm:$0xf] %v499
      %p504 = scmp.lt.s32.totalorder %s15, 1
      %s505 = scalar_select %p504, %s15, 1
      %s506 = smul.addr %s505, 2
      %s507 = smul.addr %s506, 4
      %s508 = scalar_lea.vmem %s4, %s507
      // Predicated region
      $region37: #{discriminator_forward.6} parent=35 // pred_check
        %p509 = pneg %p122
      $region38: #{discriminator_forward.6} parent=35 // pred_check_branch
        %511 = sbr.rel (%p509) target = $region40
      $region39: #{discriminator_forward.6} parent=35 // pred_region
        _
      $region40: #{discriminator_forward.6} parent=35 // pred_fallthru
        _
    $region36: #{discriminator_forward.6} parent=5 // pred_fallthru
      _
    %p512 = scmp.le.s32.totalorder 2, %s10
    // Predicated region
    $region41: #{discriminator_forward.6} parent=5 // pred_check
      %p513 = pneg %p512
    $region42: #{discriminator_forward.6} parent=5 // pred_check_branch
      %515 = sbr.rel (%p513) target = $region44
    $region43: #{discriminator_forward.6} parent=5 // pred_region
      %s516 = ssub.s32 %s10, 2
      // Predicated region
      $region45: #{discriminator_forward.6} parent=43 // pred_check
        %p517 = pneg %p128
      $region46: #{discriminator_forward.6} parent=43 // pred_check_branch
        %519 = sbr.rel (%p517) target = $region48
      $region47: #{discriminator_forward.6} parent=43 // pred_region
        %p520 = scmp.lt.s32.totalorder %s16, 1
        %s521 = scalar_select %p520, %s16, 1
        %s522 = smul.addr %s521, 2
        %s523 = smul.addr %s522, 4
        %s524 = scalar_lea.vmem %s4, %s523
      $region48: #{discriminator_forward.6} parent=43 // pred_fallthru
        _
    $region44: #{discriminator_forward.6} parent=5 // pred_fallthru
      _
  $region6: #{discriminator_forward.6} parent=0 // loop_footer
    %s14 = sadd.s32 1, %s10
  $region7: #{discriminator_forward.6} parent=0 // loop_footer_branch
    %9 = sbr.rel target = $region3
  $region8: #{discriminator_forward.6} parent=0 // loop_exit
    _

// kernel: discriminator_forward.7
$region0: #{discriminator_forward.7}
  #allocation0 [shape = 'u32[]', space=smem, size = 0x4, offset = 0x4, fixed_abs, tag = 'smem constant byte address 0x4 - core index']
  #allocation1 [shape = 'u32[144,128]{1,0:T(1,128)}', space=vmem, size = 0x12000, scoped, tag = 'internal scratch']
  #allocation2 [shape = 'bf16[256,128]{1,0:T(16,128)(2,1)}', space=vmem, size = 0x10000, scoped, tag = 'scratch operand']
  #allocation3 [shape = 'f32[32,128]{1,0:T(8,128)}', space=vmem, size = 0x4000, scoped, tag = 'scratch operand']
  %s0 = inlined_call_operand.vmem [shape: bf16[2,16,1024], index: 0, kind: input, shape index: {}]
  %s1 = inlined_call_operand.vmem [shape: bf16[32,256], index: 1, kind: input, shape index: {}]
  %s2 = inlined_call_operand.vmem [shape: f32[32,1], index: 2, kind: input, shape index: {}]
  %s3 = inlined_call_operand.vmem [shape: f32[1,128], index: 3, kind: input, shape index: {}]
  %s4 = inlined_call_operand.vmem [shape: bf16[2,32,128], index: 4, kind: output, shape index: {}]
  %s5 = sld [smem:[#allocation0]]
  $region49: #{discriminator_forward.7} parent=0
    _
  %s7 = ssub.s32 1, %s5
  %s8 = scalar_select 0, %s7, %s5
  loop: start=0, step=1, limit=4
  $region2: #{discriminator_forward.7} parent=0 // loop_pre_header
    _
  $region3: #{discriminator_forward.7} parent=0 // loop_header
    %s10 = sphi 0, %s14
    %p11 = scmp.ge.s32.totalorder %s10, 4
    %s20 = sphi 0, %s22
    %s23 = sphi 0, %s20
    %s24 = sphi 0, %s23
    %s40 = sphi 0, %s24
    %s44 = sphi 0, %s44
    %s46 = sphi 0, %s44
    %s47 = sphi 0, %s46
    %s61 = sphi 0, %s47
    %s65 = sphi 0, %s65
    %s67 = sphi 0, %s65
    %s68 = sphi 0, %s67
    %s82 = sphi 0, %s68
    %s86 = sphi 0, %s86
    %s88 = sphi 0, %s86
    %s89 = sphi 0, %s88
    %s103 = sphi 0, %s89
    %s109 = sphi 0, %s111
    %s112 = sphi 0, %s109
    %s113 = sphi 0, %s112
    %s129 = sphi 0, %s113
  $region4: #{discriminator_forward.7} parent=0 // loop_header_branch
    %13 = sbr.rel (%p11) target = $region8
  $region5: #{discriminator_forward.7} parent=0 // loop_body
    %s15 = ssub.s32 %s10, 1
    %s16 = ssub.s32 %s10, 2
    %s17 = sadd.s32 %s10, 1
    %s18 = ssub.s32 %s10, %s17
    %p19 = scmp.eq.s32.totalorder %s18, 0
    %s21 = sadd.s32 %s20, 1
    %s22 = scalar_select %p19, %s20, %s21
    %p25 = pneg %p19
    %p26 = scmp.eq.s32.totalorder %s10, 1
    %p27 = por %p25, %p26
    %p28 = scmp.ne.s32.totalorder %s20, %s23
    %p29 = scmp.eq.s32.totalorder %s10, 0
    %p30 = por %p28, %p29
    %p31 = scmp.ne.s32.totalorder %s20, %s23
    %p32 = scmp.eq.s32.totalorder %s15, 1
    %p33 = por %p31, %p32
    %p34 = scmp.ne.s32.totalorder %s23, %s24
    %p35 = scmp.eq.s32.totalorder %s15, 0
    %p36 = por %p34, %p35
    %p37 = scmp.ne.s32.totalorder %s23, %s24
    %p38 = scmp.eq.s32.totalorder %s16, 1
    %p39 = por %p37, %p38
    %p41 = scmp.ne.s32.totalorder %s24, %s40
    %p42 = scmp.eq.s32.totalorder %s16, 0
    %p43 = por %p41, %p42
    %s45 = sadd.s32 %s44, 1
    %p48 = scmp.eq.s32.totalorder %s10, 1
    %p49 = scmp.ne.s32.totalorder %s44, %s46
    %p50 = scmp.eq.s32.totalorder %s10, 0
    %p51 = por %p49, %p50
    %p52 = scmp.ne.s32.totalorder %s44, %s46
    %p53 = scmp.eq.s32.totalorder %s15, 1
    %p54 = por %p52, %p53
    %p55 = scmp.ne.s32.totalorder %s46, %s47
    %p56 = scmp.eq.s32.totalorder %s15, 0
    %p57 = por %p55, %p56
    %p58 = scmp.ne.s32.totalorder %s46, %s47
    %p59 = scmp.eq.s32.totalorder %s16, 1
    %p60 = por %p58, %p59
    %p62 = scmp.ne.s32.totalorder %s47, %s61
    %p63 = scmp.eq.s32.totalorder %s16, 0
    %p64 = por %p62, %p63
    %s66 = sadd.s32 %s65, 1
    %p69 = scmp.eq.s32.totalorder %s10, 1
    %p70 = scmp.ne.s32.totalorder %s65, %s67
    %p71 = scmp.eq.s32.totalorder %s10, 0
    %p72 = por %p70, %p71
    %p73 = scmp.ne.s32.totalorder %s65, %s67
    %p74 = scmp.eq.s32.totalorder %s15, 1
    %p75 = por %p73, %p74
    %p76 = scmp.ne.s32.totalorder %s67, %s68
    %p77 = scmp.eq.s32.totalorder %s15, 0
    %p78 = por %p76, %p77
    %p79 = scmp.ne.s32.totalorder %s67, %s68
    %p80 = scmp.eq.s32.totalorder %s16, 1
    %p81 = por %p79, %p80
    %p83 = scmp.ne.s32.totalorder %s68, %s82
    %p84 = scmp.eq.s32.totalorder %s16, 0
    %p85 = por %p83, %p84
    %s87 = sadd.s32 %s86, 1
    %p90 = scmp.eq.s32.totalorder %s10, 1
    %p91 = scmp.ne.s32.totalorder %s86, %s88
    %p92 = scmp.eq.s32.totalorder %s10, 0
    %p93 = por %p91, %p92
    %p94 = scmp.ne.s32.totalorder %s86, %s88
    %p95 = scmp.eq.s32.totalorder %s15, 1
    %p96 = por %p94, %p95
    %p97 = scmp.ne.s32.totalorder %s88, %s89
    %p98 = scmp.eq.s32.totalorder %s15, 0
    %p99 = por %p97, %p98
    %p100 = scmp.ne.s32.totalorder %s88, %s89
    %p101 = scmp.eq.s32.totalorder %s16, 1
    %p102 = por %p100, %p101
    %p104 = scmp.ne.s32.totalorder %s89, %s103
    %p105 = scmp.eq.s32.totalorder %s16, 0
    %p106 = por %p104, %p105
    %s107 = ssub.s32 %s10, %s17
    %p108 = scmp.eq.s32.totalorder %s107, 0
    %s110 = sadd.s32 %s109, 1
    %s111 = scalar_select %p108, %s109, %s110
    %p114 = pneg %p108
    %p115 = scmp.eq.s32.totalorder %s10, 1
    %p116 = por %p114, %p115
    %p117 = scmp.ne.s32.totalorder %s109, %s112
    %p118 = scmp.eq.s32.totalorder %s10, 0
    %p119 = por %p117, %p118
    %p120 = scmp.ne.s32.totalorder %s109, %s112
    %p121 = scmp.eq.s32.totalorder %s15, 1
    %p122 = por %p120, %p121
    %p123 = scmp.ne.s32.totalorder %s112, %s113
    %p124 = scmp.eq.s32.totalorder %s15, 0
    %p125 = por %p123, %p124
    %p126 = scmp.ne.s32.totalorder %s112, %s113
    %p127 = scmp.eq.s32.totalorder %s16, 1
    %p128 = por %p126, %p127
    %p130 = scmp.ne.s32.totalorder %s113, %s129
    %p131 = scmp.eq.s32.totalorder %s16, 0
    %p132 = por %p130, %p131
    %p133 = scmp.le.s32.totalorder 1, %s10
    %p134 = scmp.lt.s32.totalorder %s10, 3
    %p135 = pnand %p133, %p134
    %p136 = pneg %p135
    // Predicated region
    $region9: #{discriminator_forward.7} parent=5 // pred_check
      _
    $region10: #{discriminator_forward.7} parent=5 // pred_check_branch
      %138 = sbr.rel (%p135) target = $region12
    $region11: #{discriminator_forward.7} parent=5 // pred_region
      %s139 = ssub.s32 %s10, 1
      // Predicated region
      $region13: #{discriminator_forward.7} parent=11 // pred_check
        %p140 = pneg %p57
      $region14: #{discriminator_forward.7} parent=11 // pred_check_branch
        %142 = sbr.rel (%p140) target = $region16
      $region15: #{discriminator_forward.7} parent=11 // pred_region
        _
      $region16: #{discriminator_forward.7} parent=11 // pred_fallthru
        _
      // Predicated region
      $region17: #{discriminator_forward.7} parent=11 // pred_check
        %p143 = pneg %p78
      $region18: #{discriminator_forward.7} parent=11 // pred_check_branch
        %145 = sbr.rel (%p143) target = $region20
      $region19: #{discriminator_forward.7} parent=11 // pred_region
        _
      $region20: #{discriminator_forward.7} parent=11 // pred_fallthru
        _
      // Predicated region
      $region21: #{discriminator_forward.7} parent=11 // pred_check
        %p146 = pneg %p99
      $region22: #{discriminator_forward.7} parent=11 // pred_check_branch
        %148 = sbr.rel (%p146) target = $region24
      $region23: #{discriminator_forward.7} parent=11 // pred_region
        _
      $region24: #{discriminator_forward.7} parent=11 // pred_fallthru
        _
    $region12: #{discriminator_forward.7} parent=5 // pred_fallthru
      _
    %p149 = scmp.lt.s32.totalorder %s10, 2
    // Predicated region
    $region25: #{discriminator_forward.7} parent=5 // pred_check
      %p150 = pneg %p149
    $region26: #{discriminator_forward.7} parent=5 // pred_check_branch
      %152 = sbr.rel (%p150) target = $region28
    $region27: #{discriminator_forward.7} parent=5 // pred_region
      // Predicated region
      $region29: #{discriminator_forward.7} parent=27 // pred_check
        %p153 = pneg %p30
      $region30: #{discriminator_forward.7} parent=27 // pred_check_branch
        %155 = sbr.rel (%p153) target = $region32
      $region31: #{discriminator_forward.7} parent=27 // pred_region
        %p156 = scmp.lt.s32.totalorder %s10, 1
        %s157 = scalar_select %p156, %s10, 1
        %s158 = smul.addr %s157, 16
        %s159 = smul.addr %s158, 4
        %s160 = scalar_lea.vmem %s0, %s159
      $region32: #{discriminator_forward.7} parent=27 // pred_fallthru
        _
    $region28: #{discriminator_forward.7} parent=5 // pred_fallthru
      _
    %p161 = scmp.le.s32.totalorder 1, %s10
    %p162 = scmp.lt.s32.totalorder %s10, 3
    %p163 = pnand %p161, %p162
    %p164 = pneg %p163
    // Predicated region
    $region33: #{discriminator_forward.7} parent=5 // pred_check
      _
    $region34: #{discriminator_forward.7} parent=5 // pred_check_branch
      %166 = sbr.rel (%p163) target = $region36
    $region35: #{discriminator_forward.7} parent=5 // pred_region
      %s167 = ssub.s32 %s10, 1
      %p168 = scmp.lt.s32.totalorder %s15, 1
      %s169 = scalar_select %p168, %s15, 1
      %s170 = smul.addr %s169, 16
      %s171 = smul.addr %s170, 4
      %s172 = scalar_lea.vmem %s0, %s171
      %p173 = pneg %p36
      %p174 = pneg %p33
      %p175 = pneg %p57
      %p176 = pneg %p54
      %p177 = pneg %p78
      %p178 = pneg %p75
      %p179 = pneg %p99
      %p180 = pneg %p96
      %p181 = pneg %p125
      %p182 = pneg %p122
      %p183 = scmp.lt.s32.totalorder %s15, 1
      %s184 = scalar_select %p183, %s15, 1
      %s185 = smul.addr %s184, 4
      %s186 = smul.addr %s185, 4
      %s187 = scalar_lea.vmem %s4, %s186
      %p188 = scmp.lt.s32.totalorder %s15, 1
      %s189 = scalar_select %p188, %s15, 1
      %s190 = smul.addr %s189, 16
      %s191 = smul.addr %s190, 4
      %s192 = scalar_lea.vmem %s0, %s191
      %p193 = scmp.lt.s32.totalorder %s15, 1
      %s194 = scalar_select %p193, %s15, 1
      %s195 = smul.addr %s194, 4
      %s196 = smul.addr %s195, 4
      %s197 = scalar_lea.vmem %s4, %s196
      %v199 = vld [vmem:[%s192] sm:$0xf]
      %v200 = vld [vmem:[%s192 + $0x20] sm:$0xf]
      %v203 = vunpack.c.l.b16 %v199
      %v204 = vunpack.c.l.b16 %v200
      %v205 = vpack.c.b16 %v204, %v203
      %207 = vst [vmem:[#allocation2] sm:$0xff] %v205
      %v208 = vld [vmem:[%s192 + $0x8] sm:$0xf]
      %v209 = vld [vmem:[%s192 + $0x28] sm:$0xf]
      %v212 = vunpack.c.l.b16 %v208
      %v213 = vunpack.c.l.b16 %v209
      %v214 = vpack.c.b16 %v213, %v212
      %216 = vst [vmem:[#allocation2 + $0x8] sm:$0xff] %v214
      %v217 = vld [vmem:[%s192] sm:$0xff]
      %v218 = vld [vmem:[%s192 + $0x20] sm:$0xff]
      %v221 = vunpack.c.l.b16 %v217
      %v222 = vunpack.c.h.b16 %v217
      %v223 = vunpack.c.l.b16 %v218
      %v224 = vunpack.c.h.b16 %v218
      %v225 = vpack.c.b16 %v223, %v221
      %v226 = vpack.c.b16 %v224, %v222
      %227 = vrot.lane.b32.xlu0 %v225, 127
      %v228 = vpop.permute.xlu0 %227
      %229 = vrot.lane.b32.xlu0 %v226, 127
      %v230 = vpop.permute.xlu0 %229
      %vm231 = vcmask 1039360
      %v232 = vsel %vm231, %v228, %v230
      %234 = vst [vmem:[#allocation2 + $0x10] sm:$0xff] %v232
      %v235 = vld [vmem:[%s192 + $0x8] sm:$0xff]
      %v236 = vld [vmem:[%s192 + $0x28] sm:$0xff]
      %v239 = vunpack.c.l.b16 %v235
      %v240 = vunpack.c.h.b16 %v235
      %v241 = vunpack.c.l.b16 %v236
      %v242 = vunpack.c.h.b16 %v236
      %v243 = vpack.c.b16 %v241, %v239
      %v244 = vpack.c.b16 %v242, %v240
      %245 = vrot.lane.b32.xlu0 %v243, 127
      %v246 = vpop.permute.xlu0 %245
      %247 = vrot.lane.b32.xlu0 %v244, 127
      %v248 = vpop.permute.xlu0 %247
      %v249 = vsel %vm231, %v246, %v248
      %251 = vst [vmem:[#allocation2 + $0x18] sm:$0xff] %v249
      %v252 = vld [vmem:[%s192 + $0x10] sm:$0xf]
      %v253 = vld [vmem:[%s192 + $0x30] sm:$0xf]
      %v256 = vunpack.c.l.b16 %v252
      %v257 = vunpack.c.l.b16 %v253
      %v258 = vpack.c.b16 %v257, %v256
      %260 = vst [vmem:[#allocation2 + $0x20] sm:$0xff] %v258
      %v261 = vld [vmem:[%s192 + $0x18] sm:$0xf]
      %v262 = vld [vmem:[%s192 + $0x38] sm:$0xf]
      %v265 = vunpack.c.l.b16 %v261
      %v266 = vunpack.c.l.b16 %v262
      %v267 = vpack.c.b16 %v266, %v265
      %269 = vst [vmem:[#allocation2 + $0x28] sm:$0xff] %v267
      %v270 = vld [vmem:[%s192 + $0x10] sm:$0xff]
      %v271 = vld [vmem:[%s192 + $0x30] sm:$0xff]
      %v274 = vunpack.c.l.b16 %v270
      %v275 = vunpack.c.h.b16 %v270
      %v276 = vunpack.c.l.b16 %v271
      %v277 = vunpack.c.h.b16 %v271
      %v278 = vpack.c.b16 %v276, %v274
      %v279 = vpack.c.b16 %v277, %v275
      %280 = vrot.lane.b32.xlu0 %v278, 127
      %v281 = vpop.permute.xlu0 %280
      %282 = vrot.lane.b32.xlu0 %v279, 127
      %v283 = vpop.permute.xlu0 %282
      %v284 = vsel %vm231, %v281, %v283
      %286 = vst [vmem:[#allocation2 + $0x30] sm:$0xff] %v284
      %v287 = vld [vmem:[%s192 + $0x18] sm:$0xff]
      %v288 = vld [vmem:[%s192 + $0x38] sm:$0xff]
      %v291 = vunpack.c.l.b16 %v287
      %v292 = vunpack.c.h.b16 %v287
      %v293 = vunpack.c.l.b16 %v288
      %v294 = vunpack.c.h.b16 %v288
      %v295 = vpack.c.b16 %v293, %v291
      %v296 = vpack.c.b16 %v294, %v292
      %297 = vrot.lane.b32.xlu0 %v295, 127
      %v298 = vpop.permute.xlu0 %297
      %299 = vrot.lane.b32.xlu0 %v296, 127
      %v300 = vpop.permute.xlu0 %299
      %v301 = vsel %vm231, %v298, %v300
      %303 = vst [vmem:[#allocation2 + $0x38] sm:$0xff] %v301
      %v304 = vld [vmem:[%s192] sm:$0xff]
      %v305 = vld [vmem:[%s192 + $0x20] sm:$0xff]
      %v308 = vunpack.c.l.b16 %v304
      %v309 = vunpack.c.h.b16 %v304
      %v310 = vunpack.c.l.b16 %v305
      %v311 = vunpack.c.h.b16 %v305
      %v312 = vpack.c.b16 %v310, %v308
      %v313 = vpack.c.b16 %v311, %v309
      %314 = vrot.lane.b32.xlu0 %v312, 123
      %v315 = vpop.permute.xlu0 %314
      %316 = vrot.lane.b32.xlu0 %v313, 123
      %v317 = vpop.permute.xlu0 %316
      %vm318 = vcmask 1006592
      %v319 = vsel %vm318, %v315, %v317
      %321 = vst [vmem:[#allocation2 + $0x40] sm:$0xff] %v319
      %v322 = vld [vmem:[%s192 + $0x8] sm:$0xff]
      %v323 = vld [vmem:[%s192 + $0x28] sm:$0xff]
      %v326 = vunpack.c.l.b16 %v322
      %v327 = vunpack.c.h.b16 %v322
      %v328 = vunpack.c.l.b16 %v323
      %v329 = vunpack.c.h.b16 %v323
      %v330 = vpack.c.b16 %v328, %v326
      %v331 = vpack.c.b16 %v329, %v327
      %332 = vrot.lane.b32.xlu0 %v330, 123
      %v333 = vpop.permute.xlu0 %332
      %334 = vrot.lane.b32.xlu0 %v331, 123
      %v335 = vpop.permute.xlu0 %334
      %v336 = vsel %vm318, %v333, %v335
      %338 = vst [vmem:[#allocation2 + $0x48] sm:$0xff] %v336
      %v339 = vld [vmem:[%s192] sm:$0xff]
      %v340 = vld [vmem:[%s192 + $0x20] sm:$0xff]
      %v343 = vunpack.c.l.b16 %v339
      %v344 = vunpack.c.h.b16 %v339
      %v345 = vunpack.c.l.b16 %v340
      %v346 = vunpack.c.h.b16 %v340
      %v347 = vpack.c.b16 %v345, %v343
      %v348 = vpack.c.b16 %v346, %v344
      %349 = vrot.lane.b32.xlu0 %v347, 122
      %v350 = vpop.permute.xlu0 %349
      %351 = vrot.lane.b32.xlu0 %v348, 122
      %v352 = vpop.permute.xlu0 %351
      %vm353 = vcmask 998400
      %v354 = vsel %vm353, %v350, %v352
      %356 = vst [vmem:[#allocation2 + $0x50] sm:$0xff] %v354
      %v357 = vld [vmem:[%s192 + $0x8] sm:$0xff]
      %v358 = vld [vmem:[%s192 + $0x28] sm:$0xff]
      %v361 = vunpack.c.l.b16 %v357
      %v362 = vunpack.c.h.b16 %v357
      %v363 = vunpack.c.l.b16 %v358
      %v364 = vunpack.c.h.b16 %v358
      %v365 = vpack.c.b16 %v363, %v361
      %v366 = vpack.c.b16 %v364, %v362
      %367 = vrot.lane.b32.xlu0 %v365, 122
      %v368 = vpop.permute.xlu0 %367
      %369 = vrot.lane.b32.xlu0 %v366, 122
      %v370 = vpop.permute.xlu0 %369
      %v371 = vsel %vm353, %v368, %v370
      %373 = vst [vmem:[#allocation2 + $0x58] sm:$0xff] %v371
      %v374 = vld [vmem:[%s192 + $0x10] sm:$0xff]
      %v375 = vld [vmem:[%s192 + $0x30] sm:$0xff]
      %v378 = vunpack.c.l.b16 %v374
      %v379 = vunpack.c.h.b16 %v374
      %v380 = vunpack.c.l.b16 %v375
      %v381 = vunpack.c.h.b16 %v375
      %v382 = vpack.c.b16 %v380, %v378
      %v383 = vpack.c.b16 %v381, %v379
      %384 = vrot.lane.b32.xlu0 %v382, 123
      %v385 = vpop.permute.xlu0 %384
      %386 = vrot.lane.b32.xlu0 %v383, 123
      %v387 = vpop.permute.xlu0 %386
      %v388 = vsel %vm318, %v385, %v387
      %390 = vst [vmem:[#allocation2 + $0x60] sm:$0xff] %v388
      %v391 = vld [vmem:[%s192 + $0x18] sm:$0xff]
      %v392 = vld [vmem:[%s192 + $0x38] sm:$0xff]
      %v395 = vunpack.c.l.b16 %v391
      %v396 = vunpack.c.h.b16 %v391
      %v397 = vunpack.c.l.b16 %v392
      %v398 = vunpack.c.h.b16 %v392
      %v399 = vpack.c.b16 %v397, %v395
      %v400 = vpack.c.b16 %v398, %v396
      %401 = vrot.lane.b32.xlu0 %v399, 123
      %v402 = vpop.permute.xlu0 %401
      %403 = vrot.lane.b32.xlu0 %v400, 123
      %v404 = vpop.permute.xlu0 %403
      %v405 = vsel %vm318, %v402, %v404
      %407 = vst [vmem:[#allocation2 + $0x68] sm:$0xff] %v405
      %v408 = vld [vmem:[%s192 + $0x10] sm:$0xff]
      %v409 = vld [vmem:[%s192 + $0x30] sm:$0xff]
      %v412 = vunpack.c.l.b16 %v408
      %v413 = vunpack.c.h.b16 %v408
      %v414 = vunpack.c.l.b16 %v409
      %v415 = vunpack.c.h.b16 %v409
      %v416 = vpack.c.b16 %v414, %v412
      %v417 = vpack.c.b16 %v415, %v413
      %418 = vrot.lane.b32.xlu0 %v416, 122
      %v419 = vpop.permute.xlu0 %418
      %420 = vrot.lane.b32.xlu0 %v417, 122
      %v421 = vpop.permute.xlu0 %420
      %v422 = vsel %vm353, %v419, %v421
      %424 = vst [vmem:[#allocation2 + $0x70] sm:$0xff] %v422
      %v425 = vld [vmem:[%s192 + $0x18] sm:$0xff]
      %v426 = vld [vmem:[%s192 + $0x38] sm:$0xff]
      %v429 = vunpack.c.l.b16 %v425
      %v430 = vunpack.c.h.b16 %v425
      %v431 = vunpack.c.l.b16 %v426
      %v432 = vunpack.c.h.b16 %v426
      %v433 = vpack.c.b16 %v431, %v429
      %v434 = vpack.c.b16 %v432, %v430
      %435 = vrot.lane.b32.xlu0 %v433, 122
      %v436 = vpop.permute.xlu0 %435
      %437 = vrot.lane.b32.xlu0 %v434, 122
      %v438 = vpop.permute.xlu0 %437
      %v439 = vsel %vm353, %v436, %v438
      %441 = vst [vmem:[#allocation2 + $0x78] sm:$0xff] %v439
      %v442 = vld [vmem:[%s1] sm:$0xff]
      %v443 = vld [vmem:[%s1 + $0x8] sm:$0xff]
      %v444 = vld [vmem:[%s1 + $0x10] sm:$0xff]
      %v445 = vld [vmem:[%s1 + $0x18] sm:$0xff]
      %v446 = vld [vmem:[#allocation2] sm:$0xff]
      %v447 = vld [vmem:[#allocation2 + $0x8] sm:$0xff]
      %v448 = vld [vmem:[#allocation2 + $0x10] sm:$0xff]
      %v449 = vld [vmem:[#allocation2 + $0x18] sm:$0xff]
      %v450 = vld [vmem:[#allocation2 + $0x20] sm:$0xff]
      %v451 = vld [vmem:[#allocation2 + $0x28] sm:$0xff]
      %v452 = vld [vmem:[#allocation2 + $0x30] sm:$0xff]
      %v453 = vld [vmem:[#allocation2 + $0x38] sm:$0xff]
      %v454 = vld [vmem:[#allocation2 + $0x40] sm:$0xff]
      %v455 = vld [vmem:[#allocation2 + $0x48] sm:$0xff]
      %v456 = vld [vmem:[#allocation2 + $0x50] sm:$0xff]
      %v457 = vld [vmem:[#allocation2 + $0x58] sm:$0xff]
      %v458 = vld [vmem:[#allocation2 + $0x60] sm:$0xff]
      %v459 = vld [vmem:[#allocation2 + $0x68] sm:$0xff]
      %v460 = vld [vmem:[#allocation2 + $0x70] sm:$0xff]
      %v461 = vld [vmem:[#allocation2 + $0x78] sm:$0xff]
      %v462 = vld [vmem:[%s2] sm:$0xff]
      %v463 = vld [vmem:[%s2 + $0x8] sm:$0xff]
      %v464 = vld [vmem:[%s2 + $0x10] sm:$0xff]
      %v465 = vld [vmem:[%s2 + $0x18] sm:$0xff]
      %467 = vset.pattern.permute.xlu0 0
      %468 = vperm.xlu0 %467, %v462
      %v469 = vpop.permute.xlu0 %468
      %472 = vset.pattern.permute.xlu0 0
      %473 = vperm.xlu0 %472, %v463
      %v474 = vpop.permute.xlu0 %473
      %477 = vset.pattern.permute.xlu0 0
      %478 = vperm.xlu0 %477, %v464
      %v479 = vpop.permute.xlu0 %478
      %482 = vset.pattern.permute.xlu0 0
      %483 = vperm.xlu0 %482, %v465
      %v484 = vpop.permute.xlu0 %483
      %v490 = vunpack.c.l.b16 %v442
      %v491 = vunpack.c.h.b16 %v442
      %v492 = vunpack.c.l.b16 %v443
      %v493 = vunpack.c.h.b16 %v443
      %v494 = vunpack.c.l.b16 %v444
      %v495 = vunpack.c.h.b16 %v444
      %v496 = vunpack.c.l.b16 %v445
      %v497 = vunpack.c.h.b16 %v445
      %v498 = vpack.c.b16 %v492, %v490
      %v499 = vpack.c.b16 %v493, %v491
      %v500 = vpack.c.b16 %v496, %v494
      %v501 = vpack.c.b16 %v497, %v495
      %506 = vmatprep.subr.bf16.mxu0 0
      %507 = vmatpush1.bf16.msra.mxu0 %v446
      %508 = vmatprep.subr.bf16.mxu0 0
      %509 = vmatpush1.bf16.msra.mxu0 %v447
      %510 = vmatprep.subr.bf16.mxu0 0
      %511 = vmatpush1.bf16.msra.mxu0 %v448
      %512 = vmatprep.subr.bf16.mxu0 0
      %513 = vmatpush1.bf16.msra.mxu0 %v449
      %514 = vmatprep.subr.bf16.mxu0 0
      %515 = vmatpush1.bf16.msra.mxu0 %v450
      %516 = vmatprep.subr.bf16.mxu0 0
      %517 = vmatpush1.bf16.msra.mxu0 %v451
      %518 = vmatprep.subr.bf16.mxu0 0
      %519 = vmatpush1.bf16.msra.mxu0 %v452
      %520 = vmatprep.subr.bf16.mxu0 0
      %521 = vmatpush1.bf16.msra.mxu0 %v453
      %522 = vmatprep.subr.bf16.mxu0 0
      %523 = vmatpush1.bf16.msra.mxu0 %v454
      %524 = vmatprep.subr.bf16.mxu0 0
      %525 = vmatpush1.bf16.msra.mxu0 %v455
      %526 = vmatprep.subr.bf16.mxu0 0
      %527 = vmatpush1.bf16.msra.mxu0 %v456
      %528 = vmatprep.subr.bf16.mxu0 0
      %529 = vmatpush1.bf16.msra.mxu0 %v457
      %530 = vmatprep.subr.bf16.mxu0 0
      %531 = vmatpush1.bf16.msra.mxu0 %v458
      %532 = vmatprep.subr.bf16.mxu0 0
      %533 = vmatpush1.bf16.msra.mxu0 %v459
      %534 = vmatprep.subr.bf16.mxu0 0
      %535 = vmatpush1.bf16.msra.mxu0 %v460
      %536 = vmatprep.subr.bf16.mxu0 0
      %537 = vmatpush1.bf16.msra.mxu0 %v461
      %538 = vmatprep.mubr.bf16.mxu0 %v499
      %539 = vmatmul.mubr.bf16.gmra.mrb[0].mxu0 %v498
      %v540 = vpop.f32.mrb[0].mxu0
      %v541 = vadd.f32 %v469, %v540
      %v542 = vpop.f32.mrb[0].mxu0
      %v543 = vpop.f32.mrb[0].mxu0
      %v544 = vadd.f32 %v474, %v543
      %v545 = vpop.f32.mrb[0].mxu0
      %546 = vmatprep.mubr.bf16.mxu0 %v501
      %547 = vmatmul.mubr.bf16.gmra.mrb[0].mxu0 %v500
      %v548 = vpop.f32.mrb[0].mxu0
      %v549 = vadd.f32 %v479, %v548
      %v550 = vpop.f32.mrb[0].mxu0
      %v551 = vpop.f32.mrb[0].mxu0
      %v552 = vadd.f32 %v484, %v551
      %v553 = vpop.f32.mrb[0].mxu0
      %554 = vdwg.mxu0
      %v555 = vld [vmem:[%s3] sm:$0x1]
      %v557 = vlaneseq
      %v558 = vshrl.u32 %v557, 7
      %v559 = vsub.s32 0, %v558
      %v560 = vrot.slane %v555, %v559
      %v562 = vmul.f32 %v541, %v560
      %v563 = vmul.f32 %v544, %v560
      %v564 = vmul.f32 %v549, %v560
      %v565 = vmul.f32 %v552, %v560
      %566 = vadd.xlane.f32.xlu0 %v562
      %v567 = vpop.xlane.xlu0 %566
      %568 = vadd.xlane.f32.xlu0 %v563
      %v569 = vpop.xlane.xlu0 %568
      %570 = vadd.xlane.f32.xlu0 %v564
      %v571 = vpop.xlane.xlu0 %570
      %572 = vadd.xlane.f32.xlu0 %v565
      %v573 = vpop.xlane.xlu0 %572
      %v574 = vadd.f32 %v567, 0.0
      %v575 = vadd.f32 %v569, 0.0
      %v576 = vadd.f32 %v571, 0.0
      %v577 = vadd.f32 %v573, 0.0
      %v578 = vmul.f32 %v562, %v541
      %v579 = vmul.f32 %v563, %v544
      %v580 = vmul.f32 %v564, %v549
      %v581 = vmul.f32 %v565, %v552
      %582 = vadd.xlane.f32.xlu0 %v578
      %v583 = vpop.xlane.xlu0 %582
      %584 = vadd.xlane.f32.xlu0 %v579
      %v585 = vpop.xlane.xlu0 %584
      %586 = vadd.xlane.f32.xlu0 %v580
      %v587 = vpop.xlane.xlu0 %586
      %588 = vadd.xlane.f32.xlu0 %v581
      %v589 = vpop.xlane.xlu0 %588
      %v590 = vadd.f32 %v583, 0.0
      %v591 = vadd.f32 %v585, 0.0
      %v592 = vadd.f32 %v587, 0.0
      %v593 = vadd.f32 %v589, 0.0
      %594 = vst [vmem:[#allocation3] sm:$0xff] %v541
      %595 = vst [vmem:[#allocation3 + $0x8] sm:$0xff] %v544
      %596 = vst [vmem:[#allocation3 + $0x10] sm:$0xff] %v549
      %597 = vst [vmem:[#allocation3 + $0x18] sm:$0xff] %v552
      %v598 = vmul.f32 %v574, 0.0625
      %v599 = vmul.f32 %v575, 0.0625
      %v600 = vmul.f32 %v576, 0.0625
      %v601 = vmul.f32 %v577, 0.0625
      %v602 = vmul.f32 %v590, 0.0625
      %v603 = vmul.f32 %v591, 0.0625
      %v604 = vmul.f32 %v592, 0.0625
      %v605 = vmul.f32 %v593, 0.0625
      %v606 = vmul.f32 %v598, %v598
      %v607 = vmul.f32 %v599, %v599
      %v608 = vmul.f32 %v600, %v600
      %v609 = vmul.f32 %v601, %v601
      %v610 = vsub.f32 %v602, %v606
      %v611 = vsub.f32 %v603, %v607
      %v612 = vsub.f32 %v604, %v608
      %v613 = vsub.f32 %v605, %v609
      %v614 = vmax.f32 %v610, 0.0
      %v615 = vmax.f32 %v611, 0.0
      %v616 = vmax.f32 %v612, 0.0
      %v617 = vmax.f32 %v613, 0.0
      %v618 = vadd.f32 %v614, 1e-05
      %v619 = vadd.f32 %v615, 1e-05
      %v620 = vadd.f32 %v616, 1e-05
      %v621 = vadd.f32 %v617, 1e-05
      %v622 = vrsqrt.pop %v618
      %v623 = vrsqrt.pop %v619
      %v624 = vrsqrt.pop %v620
      %v625 = vrsqrt.pop %v621
      %v626 = vld [vmem:[#allocation3] sm:$0xff]
      %v627 = vld [vmem:[#allocation3 + $0x8] sm:$0xff]
      %v628 = vld [vmem:[#allocation3 + $0x10] sm:$0xff]
      %v629 = vld [vmem:[#allocation3 + $0x18] sm:$0xff]
      %v630 = vsub.f32 %v626, %v598
      %v631 = vsub.f32 %v627, %v599
      %v632 = vsub.f32 %v628, %v600
      %v633 = vsub.f32 %v629, %v601
      %v634 = vmul.f32 %v630, %v622
      %v635 = vmul.f32 %v631, %v623
      %v636 = vmul.f32 %v632, %v624
      %v637 = vmul.f32 %v633, %v625
      %vm638 = vcmp.ge.f32.partialorder %v634, 0.0
      %vm639 = vcmp.ge.f32.partialorder %v635, 0.0
      %vm640 = vcmp.ge.f32.partialorder %v636, 0.0
      %vm641 = vcmp.ge.f32.partialorder %v637, 0.0
      %v642 = vmul.f32 %v634, 0.2
      %v643 = vmul.f32 %v635, 0.2
      %v644 = vmul.f32 %v636, 0.2
      %v645 = vmul.f32 %v637, 0.2
      %v646 = vsel %vm638, %v634, %v642
      %v647 = vsel %vm639, %v635, %v643
      %v648 = vsel %vm640, %v636, %v644
      %v649 = vsel %vm641, %v637, %v645
      %v650 = vpack.c.bf16 %v647, %v646
      %v651 = vpack.c.bf16 %v649, %v648
      %v654 = vunpack.c.l.b16 %v650
      %v655 = vunpack.c.h.b16 %v650
      %v656 = vunpack.c.l.b16 %v651
      %v657 = vunpack.c.h.b16 %v651
      %v658 = vpack.c.b16 %v654, %v654
      %v659 = vpack.c.b16 %v655, %v655
      %v660 = vpack.c.b16 %v656, %v656
      %v661 = vpack.c.b16 %v657, %v657
      %666 = vst [vmem:[%s197] sm:$0xf] %v658
      %667 = vst [vmem:[%s197 + $0x4] sm:$0xf] %v659
      %668 = vst [vmem:[%s197 + $0x8] sm:$0xf] %v660
      %669 = vst [vmem:[%s197 + $0xc] sm:$0xf] %v661
      %p670 = scmp.lt.s32.totalorder %s15, 1
      %s671 = scalar_select %p670, %s15, 1
      %s672 = smul.addr %s671, 4
      %s673 = smul.addr %s672, 4
      %s674 = scalar_lea.vmem %s4, %s673
      // Predicated region
      $region37: #{discriminator_forward.7} parent=35 // pred_check
        %p675 = pneg %p122
      $region38: #{discriminator_forward.7} parent=35 // pred_check_branch
        %677 = sbr.rel (%p675) target = $region40
      $region39: #{discriminator_forward.7} parent=35 // pred_region
        _
      $region40: #{discriminator_forward.7} parent=35 // pred_fallthru
        _
    $region36: #{discriminator_forward.7} parent=5 // pred_fallthru
      _
    %p678 = scmp.le.s32.totalorder 2, %s10
    // Predicated region
    $region41: #{discriminator_forward.7} parent=5 // pred_check
      %p679 = pneg %p678
    $region42: #{discriminator_forward.7} parent=5 // pred_check_branch
      %681 = sbr.rel (%p679) target = $region44
    $region43: #{discriminator_forward.7} parent=5 // pred_region
      %s682 = ssub.s32 %s10, 2
      // Predicated region
      $region45: #{discriminator_forward.7} parent=43 // pred_check
        %p683 = pneg %p128
      $region46: #{discriminator_forward.7} parent=43 // pred_check_branch
        %685 = sbr.rel (%p683) target = $region48
      $region47: #{discriminator_forward.7} parent=43 // pred_region
        %p686 = scmp.lt.s32.totalorder %s16, 1
        %s687 = scalar_select %p686, %s16, 1
        %s688 = smul.addr %s687, 4
        %s689 = smul.addr %s688, 4
        %s690 = scalar_lea.vmem %s4, %s689
      $region48: #{discriminator_forward.7} parent=43 // pred_fallthru
        _
    $region44: #{discriminator_forward.7} parent=5 // pred_fallthru
      _
  $region6: #{discriminator_forward.7} parent=0 // loop_footer
    %s14 = sadd.s32 1, %s10
  $region7: #{discriminator_forward.7} parent=0 // loop_footer_branch
    %9 = sbr.rel target = $region3
  $region8: #{discriminator_forward.7} parent=0 // loop_exit
    _

// kernel: discriminator_forward.8
$region0: #{discriminator_forward.8}
  #allocation0 [shape = 'u32[]', space=smem, size = 0x4, offset = 0x4, fixed_abs, tag = 'smem constant byte address 0x4 - core index']
  #allocation1 [shape = 'u32[144,128]{1,0:T(1,128)}', space=vmem, size = 0x12000, scoped, tag = 'internal scratch']
  #allocation2 [shape = 'bf16[512,128]{1,0:T(16,128)(2,1)}', space=vmem, size = 0x20000, scoped, tag = 'scratch operand']
  #allocation3 [shape = 'f32[64,128]{1,0:T(8,128)}', space=vmem, size = 0x8000, scoped, tag = 'scratch operand']
  %s0 = inlined_call_operand.vmem [shape: bf16[2,32,256], index: 0, kind: input, shape index: {}]
  %s1 = inlined_call_operand.vmem [shape: bf16[64,512], index: 1, kind: input, shape index: {}]
  %s2 = inlined_call_operand.vmem [shape: f32[64,1], index: 2, kind: input, shape index: {}]
  %s3 = inlined_call_operand.vmem [shape: f32[1,128], index: 3, kind: input, shape index: {}]
  %s4 = inlined_call_operand.vmem [shape: bf16[2,64,128], index: 4, kind: output, shape index: {}]
  %s5 = sld [smem:[#allocation0]]
  $region49: #{discriminator_forward.8} parent=0
    _
  %s7 = ssub.s32 1, %s5
  %s8 = scalar_select 0, %s7, %s5
  loop: start=0, step=1, limit=4
  $region2: #{discriminator_forward.8} parent=0 // loop_pre_header
    _
  $region3: #{discriminator_forward.8} parent=0 // loop_header
    %s10 = sphi 0, %s14
    %p11 = scmp.ge.s32.totalorder %s10, 4
    %s20 = sphi 0, %s22
    %s23 = sphi 0, %s20
    %s24 = sphi 0, %s23
    %s40 = sphi 0, %s24
    %s44 = sphi 0, %s44
    %s46 = sphi 0, %s44
    %s47 = sphi 0, %s46
    %s61 = sphi 0, %s47
    %s65 = sphi 0, %s65
    %s67 = sphi 0, %s65
    %s68 = sphi 0, %s67
    %s82 = sphi 0, %s68
    %s86 = sphi 0, %s86
    %s88 = sphi 0, %s86
    %s89 = sphi 0, %s88
    %s103 = sphi 0, %s89
    %s109 = sphi 0, %s111
    %s112 = sphi 0, %s109
    %s113 = sphi 0, %s112
    %s129 = sphi 0, %s113
  $region4: #{discriminator_forward.8} parent=0 // loop_header_branch
    %13 = sbr.rel (%p11) target = $region8
  $region5: #{discriminator_forward.8} parent=0 // loop_body
    %s15 = ssub.s32 %s10, 1
    %s16 = ssub.s32 %s10, 2
    %s17 = sadd.s32 %s10, 1
    %s18 = ssub.s32 %s10, %s17
    %p19 = scmp.eq.s32.totalorder %s18, 0
    %s21 = sadd.s32 %s20, 1
    %s22 = scalar_select %p19, %s20, %s21
    %p25 = pneg %p19
    %p26 = scmp.eq.s32.totalorder %s10, 1
    %p27 = por %p25, %p26
    %p28 = scmp.ne.s32.totalorder %s20, %s23
    %p29 = scmp.eq.s32.totalorder %s10, 0
    %p30 = por %p28, %p29
    %p31 = scmp.ne.s32.totalorder %s20, %s23
    %p32 = scmp.eq.s32.totalorder %s15, 1
    %p33 = por %p31, %p32
    %p34 = scmp.ne.s32.totalorder %s23, %s24
    %p35 = scmp.eq.s32.totalorder %s15, 0
    %p36 = por %p34, %p35
    %p37 = scmp.ne.s32.totalorder %s23, %s24
    %p38 = scmp.eq.s32.totalorder %s16, 1
    %p39 = por %p37, %p38
    %p41 = scmp.ne.s32.totalorder %s24, %s40
    %p42 = scmp.eq.s32.totalorder %s16, 0
    %p43 = por %p41, %p42
    %s45 = sadd.s32 %s44, 1
    %p48 = scmp.eq.s32.totalorder %s10, 1
    %p49 = scmp.ne.s32.totalorder %s44, %s46
    %p50 = scmp.eq.s32.totalorder %s10, 0
    %p51 = por %p49, %p50
    %p52 = scmp.ne.s32.totalorder %s44, %s46
    %p53 = scmp.eq.s32.totalorder %s15, 1
    %p54 = por %p52, %p53
    %p55 = scmp.ne.s32.totalorder %s46, %s47
    %p56 = scmp.eq.s32.totalorder %s15, 0
    %p57 = por %p55, %p56
    %p58 = scmp.ne.s32.totalorder %s46, %s47
    %p59 = scmp.eq.s32.totalorder %s16, 1
    %p60 = por %p58, %p59
    %p62 = scmp.ne.s32.totalorder %s47, %s61
    %p63 = scmp.eq.s32.totalorder %s16, 0
    %p64 = por %p62, %p63
    %s66 = sadd.s32 %s65, 1
    %p69 = scmp.eq.s32.totalorder %s10, 1
    %p70 = scmp.ne.s32.totalorder %s65, %s67
    %p71 = scmp.eq.s32.totalorder %s10, 0
    %p72 = por %p70, %p71
    %p73 = scmp.ne.s32.totalorder %s65, %s67
    %p74 = scmp.eq.s32.totalorder %s15, 1
    %p75 = por %p73, %p74
    %p76 = scmp.ne.s32.totalorder %s67, %s68
    %p77 = scmp.eq.s32.totalorder %s15, 0
    %p78 = por %p76, %p77
    %p79 = scmp.ne.s32.totalorder %s67, %s68
    %p80 = scmp.eq.s32.totalorder %s16, 1
    %p81 = por %p79, %p80
    %p83 = scmp.ne.s32.totalorder %s68, %s82
    %p84 = scmp.eq.s32.totalorder %s16, 0
    %p85 = por %p83, %p84
    %s87 = sadd.s32 %s86, 1
    %p90 = scmp.eq.s32.totalorder %s10, 1
    %p91 = scmp.ne.s32.totalorder %s86, %s88
    %p92 = scmp.eq.s32.totalorder %s10, 0
    %p93 = por %p91, %p92
    %p94 = scmp.ne.s32.totalorder %s86, %s88
    %p95 = scmp.eq.s32.totalorder %s15, 1
    %p96 = por %p94, %p95
    %p97 = scmp.ne.s32.totalorder %s88, %s89
    %p98 = scmp.eq.s32.totalorder %s15, 0
    %p99 = por %p97, %p98
    %p100 = scmp.ne.s32.totalorder %s88, %s89
    %p101 = scmp.eq.s32.totalorder %s16, 1
    %p102 = por %p100, %p101
    %p104 = scmp.ne.s32.totalorder %s89, %s103
    %p105 = scmp.eq.s32.totalorder %s16, 0
    %p106 = por %p104, %p105
    %s107 = ssub.s32 %s10, %s17
    %p108 = scmp.eq.s32.totalorder %s107, 0
    %s110 = sadd.s32 %s109, 1
    %s111 = scalar_select %p108, %s109, %s110
    %p114 = pneg %p108
    %p115 = scmp.eq.s32.totalorder %s10, 1
    %p116 = por %p114, %p115
    %p117 = scmp.ne.s32.totalorder %s109, %s112
    %p118 = scmp.eq.s32.totalorder %s10, 0
    %p119 = por %p117, %p118
    %p120 = scmp.ne.s32.totalorder %s109, %s112
    %p121 = scmp.eq.s32.totalorder %s15, 1
    %p122 = por %p120, %p121
    %p123 = scmp.ne.s32.totalorder %s112, %s113
    %p124 = scmp.eq.s32.totalorder %s15, 0
    %p125 = por %p123, %p124
    %p126 = scmp.ne.s32.totalorder %s112, %s113
    %p127 = scmp.eq.s32.totalorder %s16, 1
    %p128 = por %p126, %p127
    %p130 = scmp.ne.s32.totalorder %s113, %s129
    %p131 = scmp.eq.s32.totalorder %s16, 0
    %p132 = por %p130, %p131
    %p133 = scmp.le.s32.totalorder 1, %s10
    %p134 = scmp.lt.s32.totalorder %s10, 3
    %p135 = pnand %p133, %p134
    %p136 = pneg %p135
    // Predicated region
    $region9: #{discriminator_forward.8} parent=5 // pred_check
      _
    $region10: #{discriminator_forward.8} parent=5 // pred_check_branch
      %138 = sbr.rel (%p135) target = $region12
    $region11: #{discriminator_forward.8} parent=5 // pred_region
      %s139 = ssub.s32 %s10, 1
      // Predicated region
      $region13: #{discriminator_forward.8} parent=11 // pred_check
        %p140 = pneg %p57
      $region14: #{discriminator_forward.8} parent=11 // pred_check_branch
        %142 = sbr.rel (%p140) target = $region16
      $region15: #{discriminator_forward.8} parent=11 // pred_region
        _
      $region16: #{discriminator_forward.8} parent=11 // pred_fallthru
        _
      // Predicated region
      $region17: #{discriminator_forward.8} parent=11 // pred_check
        %p143 = pneg %p78
      $region18: #{discriminator_forward.8} parent=11 // pred_check_branch
        %145 = sbr.rel (%p143) target = $region20
      $region19: #{discriminator_forward.8} parent=11 // pred_region
        _
      $region20: #{discriminator_forward.8} parent=11 // pred_fallthru
        _
      // Predicated region
      $region21: #{discriminator_forward.8} parent=11 // pred_check
        %p146 = pneg %p99
      $region22: #{discriminator_forward.8} parent=11 // pred_check_branch
        %148 = sbr.rel (%p146) target = $region24
      $region23: #{discriminator_forward.8} parent=11 // pred_region
        _
      $region24: #{discriminator_forward.8} parent=11 // pred_fallthru
        _
    $region12: #{discriminator_forward.8} parent=5 // pred_fallthru
      _
    %p149 = scmp.lt.s32.totalorder %s10, 2
    // Predicated region
    $region25: #{discriminator_forward.8} parent=5 // pred_check
      %p150 = pneg %p149
    $region26: #{discriminator_forward.8} parent=5 // pred_check_branch
      %152 = sbr.rel (%p150) target = $region28
    $region27: #{discriminator_forward.8} parent=5 // pred_region
      // Predicated region
      $region29: #{discriminator_forward.8} parent=27 // pred_check
        %p153 = pneg %p30
      $region30: #{discriminator_forward.8} parent=27 // pred_check_branch
        %155 = sbr.rel (%p153) target = $region32
      $region31: #{discriminator_forward.8} parent=27 // pred_region
        %p156 = scmp.lt.s32.totalorder %s10, 1
        %s157 = scalar_select %p156, %s10, 1
        %s158 = smul.addr %s157, 8
        %s159 = smul.addr %s158, 4
        %s160 = scalar_lea.vmem %s0, %s159
      $region32: #{discriminator_forward.8} parent=27 // pred_fallthru
        _
    $region28: #{discriminator_forward.8} parent=5 // pred_fallthru
      _
    %p161 = scmp.le.s32.totalorder 1, %s10
    %p162 = scmp.lt.s32.totalorder %s10, 3
    %p163 = pnand %p161, %p162
    %p164 = pneg %p163
    // Predicated region
    $region33: #{discriminator_forward.8} parent=5 // pred_check
      _
    $region34: #{discriminator_forward.8} parent=5 // pred_check_branch
      %166 = sbr.rel (%p163) target = $region36
    $region35: #{discriminator_forward.8} parent=5 // pred_region
      %s167 = ssub.s32 %s10, 1
      %p168 = scmp.lt.s32.totalorder %s15, 1
      %s169 = scalar_select %p168, %s15, 1
      %s170 = smul.addr %s169, 8
      %s171 = smul.addr %s170, 4
      %s172 = scalar_lea.vmem %s0, %s171
      %p173 = pneg %p36
      %p174 = pneg %p33
      %p175 = pneg %p57
      %p176 = pneg %p54
      %p177 = pneg %p78
      %p178 = pneg %p75
      %p179 = pneg %p99
      %p180 = pneg %p96
      %p181 = pneg %p125
      %p182 = pneg %p122
      %p183 = scmp.lt.s32.totalorder %s15, 1
      %s184 = scalar_select %p183, %s15, 1
      %s185 = smul.addr %s184, 8
      %s186 = smul.addr %s185, 4
      %s187 = scalar_lea.vmem %s4, %s186
      %p188 = scmp.lt.s32.totalorder %s15, 1
      %s189 = scalar_select %p188, %s15, 1
      %s190 = smul.addr %s189, 8
      %s191 = smul.addr %s190, 4
      %s192 = scalar_lea.vmem %s0, %s191
      %p193 = scmp.lt.s32.totalorder %s15, 1
      %s194 = scalar_select %p193, %s15, 1
      %s195 = smul.addr %s194, 8
      %s196 = smul.addr %s195, 4
      %s197 = scalar_lea.vmem %s4, %s196
      %v199 = vld [vmem:[%s192] sm:$0xf]
      %v200 = vld [vmem:[%s192 + $0x8] sm:$0xf]
      %v201 = vld [vmem:[%s192 + $0x10] sm:$0xf]
      %v202 = vld [vmem:[%s192 + $0x18] sm:$0xf]
      %v207 = vunpack.c.l.b16 %v199
      %v208 = vunpack.c.l.b16 %v200
      %v209 = vunpack.c.l.b16 %v201
      %v210 = vunpack.c.l.b16 %v202
      %v211 = vpack.c.b16 %v208, %v207
      %v212 = vpack.c.b16 %v210, %v209
      %215 = vst [vmem:[#allocation2] sm:$0xff] %v211
      %216 = vst [vmem:[#allocation2 + $0x8] sm:$0xff] %v212
      %v217 = vld [vmem:[%s192] sm:$0xff]
      %v218 = vld [vmem:[%s192 + $0x8] sm:$0xff]
      %v219 = vld [vmem:[%s192 + $0x10] sm:$0xff]
      %v220 = vld [vmem:[%s192 + $0x18] sm:$0xff]
      %v225 = vunpack.c.l.b16 %v217
      %v226 = vunpack.c.h.b16 %v217
      %v227 = vunpack.c.l.b16 %v218
      %v228 = vunpack.c.h.b16 %v218
      %v229 = vunpack.c.l.b16 %v219
      %v230 = vunpack.c.h.b16 %v219
      %v231 = vunpack.c.l.b16 %v220
      %v232 = vunpack.c.h.b16 %v220
      %v233 = vpack.c.b16 %v227, %v225
      %v234 = vpack.c.b16 %v228, %v226
      %v235 = vpack.c.b16 %v231, %v229
      %v236 = vpack.c.b16 %v232, %v230
      %237 = vrot.lane.b32.xlu0 %v233, 127
      %v238 = vpop.permute.xlu0 %237
      %239 = vrot.lane.b32.xlu0 %v234, 127
      %v240 = vpop.permute.xlu0 %239
      %241 = vrot.lane.b32.xlu0 %v235, 127
      %v242 = vpop.permute.xlu0 %241
      %243 = vrot.lane.b32.xlu0 %v236, 127
      %v244 = vpop.permute.xlu0 %243
      %vm245 = vcmask 1039360
      %v246 = vsel %vm245, %v238, %v240
      %v247 = vsel %vm245, %v242, %v244
      %250 = vst [vmem:[#allocation2 + $0x10] sm:$0xff] %v246
      %251 = vst [vmem:[#allocation2 + $0x18] sm:$0xff] %v247
      %v252 = vld [vmem:[%s192] sm:$0xff]
      %v253 = vld [vmem:[%s192 + $0x8] sm:$0xff]
      %v254 = vld [vmem:[%s192 + $0x10] sm:$0xff]
      %v255 = vld [vmem:[%s192 + $0x18] sm:$0xff]
      %v260 = vunpack.c.l.b16 %v252
      %v261 = vunpack.c.h.b16 %v252
      %v262 = vunpack.c.l.b16 %v253
      %v263 = vunpack.c.h.b16 %v253
      %v264 = vunpack.c.l.b16 %v254
      %v265 = vunpack.c.h.b16 %v254
      %v266 = vunpack.c.l.b16 %v255
      %v267 = vunpack.c.h.b16 %v255
      %v268 = vpack.c.b16 %v262, %v260
      %v269 = vpack.c.b16 %v263, %v261
      %v270 = vpack.c.b16 %v266, %v264
      %v271 = vpack.c.b16 %v267, %v265
      %272 = vrot.lane.b32.xlu0 %v268, 126
      %v273 = vpop.permute.xlu0 %272
      %274 = vrot.lane.b32.xlu0 %v269, 126
      %v275 = vpop.permute.xlu0 %274
      %276 = vrot.lane.b32.xlu0 %v270, 126
      %v277 = vpop.permute.xlu0 %276
      %278 = vrot.lane.b32.xlu0 %v271, 126
      %v279 = vpop.permute.xlu0 %278
      %vm280 = vcmask 1031168
      %v281 = vsel %vm280, %v273, %v275
      %v282 = vsel %vm280, %v277, %v279
      %285 = vst [vmem:[#allocation2 + $0x20] sm:$0xff] %v281
      %286 = vst [vmem:[#allocation2 + $0x28] sm:$0xff] %v282
      %v287 = vld [vmem:[%s192] sm:$0xff]
      %v288 = vld [vmem:[%s192 + $0x8] sm:$0xff]
      %v289 = vld [vmem:[%s192 + $0x10] sm:$0xff]
      %v290 = vld [vmem:[%s192 + $0x18] sm:$0xff]
      %v295 = vunpack.c.l.b16 %v287
      %v296 = vunpack.c.h.b16 %v287
      %v297 = vunpack.c.l.b16 %v288
      %v298 = vunpack.c.h.b16 %v288
      %v299 = vunpack.c.l.b16 %v289
      %v300 = vunpack.c.h.b16 %v289
      %v301 = vunpack.c.l.b16 %v290
      %v302 = vunpack.c.h.b16 %v290
      %v303 = vpack.c.b16 %v297, %v295
      %v304 = vpack.c.b16 %v298, %v296
      %v305 = vpack.c.b16 %v301, %v299
      %v306 = vpack.c.b16 %v302, %v300
      %307 = vrot.lane.b32.xlu0 %v303, 125
      %v308 = vpop.permute.xlu0 %307
      %309 = vrot.lane.b32.xlu0 %v304, 125
      %v310 = vpop.permute.xlu0 %309
      %311 = vrot.lane.b32.xlu0 %v305, 125
      %v312 = vpop.permute.xlu0 %311
      %313 = vrot.lane.b32.xlu0 %v306, 125
      %v314 = vpop.permute.xlu0 %313
      %vm315 = vcmask 1022976
      %v316 = vsel %vm315, %v308, %v310
      %v317 = vsel %vm315, %v312, %v314
      %320 = vst [vmem:[#allocation2 + $0x30] sm:$0xff] %v316
      %321 = vst [vmem:[#allocation2 + $0x38] sm:$0xff] %v317
      %v322 = vld [vmem:[%s192] sm:$0xff]
      %v323 = vld [vmem:[%s192 + $0x8] sm:$0xff]
      %v324 = vld [vmem:[%s192 + $0x10] sm:$0xff]
      %v325 = vld [vmem:[%s192 + $0x18] sm:$0xff]
      %v330 = vunpack.c.l.b16 %v322
      %v331 = vunpack.c.h.b16 %v322
      %v332 = vunpack.c.l.b16 %v323
      %v333 = vunpack.c.h.b16 %v323
      %v334 = vunpack.c.l.b16 %v324
      %v335 = vunpack.c.h.b16 %v324
      %v336 = vunpack.c.l.b16 %v325
      %v337 = vunpack.c.h.b16 %v325
      %v338 = vpack.c.b16 %v332, %v330
      %v339 = vpack.c.b16 %v333, %v331
      %v340 = vpack.c.b16 %v336, %v334
      %v341 = vpack.c.b16 %v337, %v335
      %342 = vrot.lane.b32.xlu0 %v338, 122
      %v343 = vpop.permute.xlu0 %342
      %344 = vrot.lane.b32.xlu0 %v339, 122
      %v345 = vpop.permute.xlu0 %344
      %346 = vrot.lane.b32.xlu0 %v340, 122
      %v347 = vpop.permute.xlu0 %346
      %348 = vrot.lane.b32.xlu0 %v341, 122
      %v349 = vpop.permute.xlu0 %348
      %vm350 = vcmask 998400
      %v351 = vsel %vm350, %v343, %v345
      %v352 = vsel %vm350, %v347, %v349
      %355 = vst [vmem:[#allocation2 + $0x40] sm:$0xff] %v351
      %356 = vst [vmem:[#allocation2 + $0x48] sm:$0xff] %v352
      %v357 = vld [vmem:[%s192] sm:$0xff]
      %v358 = vld [vmem:[%s192 + $0x8] sm:$0xff]
      %v359 = vld [vmem:[%s192 + $0x10] sm:$0xff]
      %v360 = vld [vmem:[%s192 + $0x18] sm:$0xff]
      %v365 = vunpack.c.l.b16 %v357
      %v366 = vunpack.c.h.b16 %v357
      %v367 = vunpack.c.l.b16 %v358
      %v368 = vunpack.c.h.b16 %v358
      %v369 = vunpack.c.l.b16 %v359
      %v370 = vunpack.c.h.b16 %v359
      %v371 = vunpack.c.l.b16 %v360
      %v372 = vunpack.c.h.b16 %v360
      %v373 = vpack.c.b16 %v367, %v365
      %v374 = vpack.c.b16 %v368, %v366
      %v375 = vpack.c.b16 %v371, %v369
      %v376 = vpack.c.b16 %v372, %v370
      %377 = vrot.lane.b32.xlu0 %v373, 121
      %v378 = vpop.permute.xlu0 %377
      %379 = vrot.lane.b32.xlu0 %v374, 121
      %v380 = vpop.permute.xlu0 %379
      %381 = vrot.lane.b32.xlu0 %v375, 121
      %v382 = vpop.permute.xlu0 %381
      %383 = vrot.lane.b32.xlu0 %v376, 121
      %v384 = vpop.permute.xlu0 %383
      %vm385 = vcmask 990208
      %v386 = vsel %vm385, %v378, %v380
      %v387 = vsel %vm385, %v382, %v384
      %390 = vst [vmem:[#allocation2 + $0x50] sm:$0xff] %v386
      %391 = vst [vmem:[#allocation2 + $0x58] sm:$0xff] %v387
      %v392 = vld [vmem:[%s192] sm:$0xff]
      %v393 = vld [vmem:[%s192 + $0x8] sm:$0xff]
      %v394 = vld [vmem:[%s192 + $0x10] sm:$0xff]
      %v395 = vld [vmem:[%s192 + $0x18] sm:$0xff]
      %v400 = vunpack.c.l.b16 %v392
      %v401 = vunpack.c.h.b16 %v392
      %v402 = vunpack.c.l.b16 %v393
      %v403 = vunpack.c.h.b16 %v393
      %v404 = vunpack.c.l.b16 %v394
      %v405 = vunpack.c.h.b16 %v394
      %v406 = vunpack.c.l.b16 %v395
      %v407 = vunpack.c.h.b16 %v395
      %v408 = vpack.c.b16 %v402, %v400
      %v409 = vpack.c.b16 %v403, %v401
      %v410 = vpack.c.b16 %v406, %v404
      %v411 = vpack.c.b16 %v407, %v405
      %412 = vrot.lane.b32.xlu0 %v408, 120
      %v413 = vpop.permute.xlu0 %412
      %414 = vrot.lane.b32.xlu0 %v409, 120
      %v415 = vpop.permute.xlu0 %414
      %416 = vrot.lane.b32.xlu0 %v410, 120
      %v417 = vpop.permute.xlu0 %416
      %418 = vrot.lane.b32.xlu0 %v411, 120
      %v419 = vpop.permute.xlu0 %418
      %vm420 = vcmask 982016
      %v421 = vsel %vm420, %v413, %v415
      %v422 = vsel %vm420, %v417, %v419
      %425 = vst [vmem:[#allocation2 + $0x60] sm:$0xff] %v421
      %426 = vst [vmem:[#allocation2 + $0x68] sm:$0xff] %v422
      %v427 = vld [vmem:[%s192] sm:$0xff]
      %v428 = vld [vmem:[%s192 + $0x8] sm:$0xff]
      %v429 = vld [vmem:[%s192 + $0x10] sm:$0xff]
      %v430 = vld [vmem:[%s192 + $0x18] sm:$0xff]
      %v435 = vunpack.c.l.b16 %v427
      %v436 = vunpack.c.h.b16 %v427
      %v437 = vunpack.c.l.b16 %v428
      %v438 = vunpack.c.h.b16 %v428
      %v439 = vunpack.c.l.b16 %v429
      %v440 = vunpack.c.h.b16 %v429
      %v441 = vunpack.c.l.b16 %v430
      %v442 = vunpack.c.h.b16 %v430
      %v443 = vpack.c.b16 %v437, %v435
      %v444 = vpack.c.b16 %v438, %v436
      %v445 = vpack.c.b16 %v441, %v439
      %v446 = vpack.c.b16 %v442, %v440
      %447 = vrot.lane.b32.xlu0 %v443, 119
      %v448 = vpop.permute.xlu0 %447
      %449 = vrot.lane.b32.xlu0 %v444, 119
      %v450 = vpop.permute.xlu0 %449
      %451 = vrot.lane.b32.xlu0 %v445, 119
      %v452 = vpop.permute.xlu0 %451
      %453 = vrot.lane.b32.xlu0 %v446, 119
      %v454 = vpop.permute.xlu0 %453
      %vm455 = vcmask 973824
      %v456 = vsel %vm455, %v448, %v450
      %v457 = vsel %vm455, %v452, %v454
      %460 = vst [vmem:[#allocation2 + $0x70] sm:$0xff] %v456
      %461 = vst [vmem:[#allocation2 + $0x78] sm:$0xff] %v457
      %v462 = vld [vmem:[%s192] sm:$0xff]
      %v463 = vld [vmem:[%s192 + $0x8] sm:$0xff]
      %v464 = vld [vmem:[%s192 + $0x10] sm:$0xff]
      %v465 = vld [vmem:[%s192 + $0x18] sm:$0xff]
      %v470 = vunpack.c.l.b16 %v462
      %v471 = vunpack.c.h.b16 %v462
      %v472 = vunpack.c.l.b16 %v463
      %v473 = vunpack.c.h.b16 %v463
      %v474 = vunpack.c.l.b16 %v464
      %v475 = vunpack.c.h.b16 %v464
      %v476 = vunpack.c.l.b16 %v465
      %v477 = vunpack.c.h.b16 %v465
      %v478 = vpack.c.b16 %v472, %v470
      %v479 = vpack.c.b16 %v473, %v471
      %v480 = vpack.c.b16 %v476, %v474
      %v481 = vpack.c.b16 %v477, %v475
      %482 = vrot.lane.b32.xlu0 %v478, 116
      %v483 = vpop.permute.xlu0 %482
      %484 = vrot.lane.b32.xlu0 %v479, 116
      %v485 = vpop.permute.xlu0 %484
      %486 = vrot.lane.b32.xlu0 %v480, 116
      %v487 = vpop.permute.xlu0 %486
      %488 = vrot.lane.b32.xlu0 %v481, 116
      %v489 = vpop.permute.xlu0 %488
      %vm490 = vcmask 949248
      %v491 = vsel %vm490, %v483, %v485
      %v492 = vsel %vm490, %v487, %v489
      %495 = vst [vmem:[#allocation2 + $0x80] sm:$0xff] %v491
      %496 = vst [vmem:[#allocation2 + $0x88] sm:$0xff] %v492
      %v497 = vld [vmem:[%s192] sm:$0xff]
      %v498 = vld [vmem:[%s192 + $0x8] sm:$0xff]
      %v499 = vld [vmem:[%s192 + $0x10] sm:$0xff]
      %v500 = vld [vmem:[%s192 + $0x18] sm:$0xff]
      %v505 = vunpack.c.l.b16 %v497
      %v506 = vunpack.c.h.b16 %v497
      %v507 = vunpack.c.l.b16 %v498
      %v508 = vunpack.c.h.b16 %v498
      %v509 = vunpack.c.l.b16 %v499
      %v510 = vunpack.c.h.b16 %v499
      %v511 = vunpack.c.l.b16 %v500
      %v512 = vunpack.c.h.b16 %v500
      %v513 = vpack.c.b16 %v507, %v505
      %v514 = vpack.c.b16 %v508, %v506
      %v515 = vpack.c.b16 %v511, %v509
      %v516 = vpack.c.b16 %v512, %v510
      %517 = vrot.lane.b32.xlu0 %v513, 115
      %v518 = vpop.permute.xlu0 %517
      %519 = vrot.lane.b32.xlu0 %v514, 115
      %v520 = vpop.permute.xlu0 %519
      %521 = vrot.lane.b32.xlu0 %v515, 115
      %v522 = vpop.permute.xlu0 %521
      %523 = vrot.lane.b32.xlu0 %v516, 115
      %v524 = vpop.permute.xlu0 %523
      %vm525 = vcmask 941056
      %v526 = vsel %vm525, %v518, %v520
      %v527 = vsel %vm525, %v522, %v524
      %530 = vst [vmem:[#allocation2 + $0x90] sm:$0xff] %v526
      %531 = vst [vmem:[#allocation2 + $0x98] sm:$0xff] %v527
      %v532 = vld [vmem:[%s192] sm:$0xff]
      %v533 = vld [vmem:[%s192 + $0x8] sm:$0xff]
      %v534 = vld [vmem:[%s192 + $0x10] sm:$0xff]
      %v535 = vld [vmem:[%s192 + $0x18] sm:$0xff]
      %v540 = vunpack.c.l.b16 %v532
      %v541 = vunpack.c.h.b16 %v532
      %v542 = vunpack.c.l.b16 %v533
      %v543 = vunpack.c.h.b16 %v533
      %v544 = vunpack.c.l.b16 %v534
      %v545 = vunpack.c.h.b16 %v534
      %v546 = vunpack.c.l.b16 %v535
      %v547 = vunpack.c.h.b16 %v535
      %v548 = vpack.c.b16 %v542, %v540
      %v549 = vpack.c.b16 %v543, %v541
      %v550 = vpack.c.b16 %v546, %v544
      %v551 = vpack.c.b16 %v547, %v545
      %552 = vrot.lane.b32.xlu0 %v548, 114
      %v553 = vpop.permute.xlu0 %552
      %554 = vrot.lane.b32.xlu0 %v549, 114
      %v555 = vpop.permute.xlu0 %554
      %556 = vrot.lane.b32.xlu0 %v550, 114
      %v557 = vpop.permute.xlu0 %556
      %558 = vrot.lane.b32.xlu0 %v551, 114
      %v559 = vpop.permute.xlu0 %558
      %vm560 = vcmask 932864
      %v561 = vsel %vm560, %v553, %v555
      %v562 = vsel %vm560, %v557, %v559
      %565 = vst [vmem:[#allocation2 + $0xa0] sm:$0xff] %v561
      %566 = vst [vmem:[#allocation2 + $0xa8] sm:$0xff] %v562
      %v567 = vld [vmem:[%s192] sm:$0xff]
      %v568 = vld [vmem:[%s192 + $0x8] sm:$0xff]
      %v569 = vld [vmem:[%s192 + $0x10] sm:$0xff]
      %v570 = vld [vmem:[%s192 + $0x18] sm:$0xff]
      %v575 = vunpack.c.l.b16 %v567
      %v576 = vunpack.c.h.b16 %v567
      %v577 = vunpack.c.l.b16 %v568
      %v578 = vunpack.c.h.b16 %v568
      %v579 = vunpack.c.l.b16 %v569
      %v580 = vunpack.c.h.b16 %v569
      %v581 = vunpack.c.l.b16 %v570
      %v582 = vunpack.c.h.b16 %v570
      %v583 = vpack.c.b16 %v577, %v575
      %v584 = vpack.c.b16 %v578, %v576
      %v585 = vpack.c.b16 %v581, %v579
      %v586 = vpack.c.b16 %v582, %v580
      %587 = vrot.lane.b32.xlu0 %v583, 113
      %v588 = vpop.permute.xlu0 %587
      %589 = vrot.lane.b32.xlu0 %v584, 113
      %v590 = vpop.permute.xlu0 %589
      %591 = vrot.lane.b32.xlu0 %v585, 113
      %v592 = vpop.permute.xlu0 %591
      %593 = vrot.lane.b32.xlu0 %v586, 113
      %v594 = vpop.permute.xlu0 %593
      %vm595 = vcmask 924672
      %v596 = vsel %vm595, %v588, %v590
      %v597 = vsel %vm595, %v592, %v594
      %600 = vst [vmem:[#allocation2 + $0xb0] sm:$0xff] %v596
      %601 = vst [vmem:[#allocation2 + $0xb8] sm:$0xff] %v597
      %v602 = vld [vmem:[%s192] sm:$0xff]
      %v603 = vld [vmem:[%s192 + $0x8] sm:$0xff]
      %v604 = vld [vmem:[%s192 + $0x10] sm:$0xff]
      %v605 = vld [vmem:[%s192 + $0x18] sm:$0xff]
      %v610 = vunpack.c.l.b16 %v602
      %v611 = vunpack.c.h.b16 %v602
      %v612 = vunpack.c.l.b16 %v603
      %v613 = vunpack.c.h.b16 %v603
      %v614 = vunpack.c.l.b16 %v604
      %v615 = vunpack.c.h.b16 %v604
      %v616 = vunpack.c.l.b16 %v605
      %v617 = vunpack.c.h.b16 %v605
      %v618 = vpack.c.b16 %v612, %v610
      %v619 = vpack.c.b16 %v613, %v611
      %v620 = vpack.c.b16 %v616, %v614
      %v621 = vpack.c.b16 %v617, %v615
      %622 = vrot.lane.b32.xlu0 %v618, 110
      %v623 = vpop.permute.xlu0 %622
      %624 = vrot.lane.b32.xlu0 %v619, 110
      %v625 = vpop.permute.xlu0 %624
      %626 = vrot.lane.b32.xlu0 %v620, 110
      %v627 = vpop.permute.xlu0 %626
      %628 = vrot.lane.b32.xlu0 %v621, 110
      %v629 = vpop.permute.xlu0 %628
      %vm630 = vcmask 900096
      %v631 = vsel %vm630, %v623, %v625
      %v632 = vsel %vm630, %v627, %v629
      %635 = vst [vmem:[#allocation2 + $0xc0] sm:$0xff] %v631
      %636 = vst [vmem:[#allocation2 + $0xc8] sm:$0xff] %v632
      %v637 = vld [vmem:[%s192] sm:$0xff]
      %v638 = vld [vmem:[%s192 + $0x8] sm:$0xff]
      %v639 = vld [vmem:[%s192 + $0x10] sm:$0xff]
      %v640 = vld [vmem:[%s192 + $0x18] sm:$0xff]
      %v645 = vunpack.c.l.b16 %v637
      %v646 = vunpack.c.h.b16 %v637
      %v647 = vunpack.c.l.b16 %v638
      %v648 = vunpack.c.h.b16 %v638
      %v649 = vunpack.c.l.b16 %v639
      %v650 = vunpack.c.h.b16 %v639
      %v651 = vunpack.c.l.b16 %v640
      %v652 = vunpack.c.h.b16 %v640
      %v653 = vpack.c.b16 %v647, %v645
      %v654 = vpack.c.b16 %v648, %v646
      %v655 = vpack.c.b16 %v651, %v649
      %v656 = vpack.c.b16 %v652, %v650
      %657 = vrot.lane.b32.xlu0 %v653, 109
      %v658 = vpop.permute.xlu0 %657
      %659 = vrot.lane.b32.xlu0 %v654, 109
      %v660 = vpop.permute.xlu0 %659
      %661 = vrot.lane.b32.xlu0 %v655, 109
      %v662 = vpop.permute.xlu0 %661
      %663 = vrot.lane.b32.xlu0 %v656, 109
      %v664 = vpop.permute.xlu0 %663
      %vm665 = vcmask 891904
      %v666 = vsel %vm665, %v658, %v660
      %v667 = vsel %vm665, %v662, %v664
      %670 = vst [vmem:[#allocation2 + $0xd0] sm:$0xff] %v666
      %671 = vst [vmem:[#allocation2 + $0xd8] sm:$0xff] %v667
      %v672 = vld [vmem:[%s192] sm:$0xff]
      %v673 = vld [vmem:[%s192 + $0x8] sm:$0xff]
      %v674 = vld [vmem:[%s192 + $0x10] sm:$0xff]
      %v675 = vld [vmem:[%s192 + $0x18] sm:$0xff]
      %v680 = vunpack.c.l.b16 %v672
      %v681 = vunpack.c.h.b16 %v672
      %v682 = vunpack.c.l.b16 %v673
      %v683 = vunpack.c.h.b16 %v673
      %v684 = vunpack.c.l.b16 %v674
      %v685 = vunpack.c.h.b16 %v674
      %v686 = vunpack.c.l.b16 %v675
      %v687 = vunpack.c.h.b16 %v675
      %v688 = vpack.c.b16 %v682, %v680
      %v689 = vpack.c.b16 %v683, %v681
      %v690 = vpack.c.b16 %v686, %v684
      %v691 = vpack.c.b16 %v687, %v685
      %692 = vrot.lane.b32.xlu0 %v688, 108
      %v693 = vpop.permute.xlu0 %692
      %694 = vrot.lane.b32.xlu0 %v689, 108
      %v695 = vpop.permute.xlu0 %694
      %696 = vrot.lane.b32.xlu0 %v690, 108
      %v697 = vpop.permute.xlu0 %696
      %698 = vrot.lane.b32.xlu0 %v691, 108
      %v699 = vpop.permute.xlu0 %698
      %vm700 = vcmask 883712
      %v701 = vsel %vm700, %v693, %v695
      %v702 = vsel %vm700, %v697, %v699
      %705 = vst [vmem:[#allocation2 + $0xe0] sm:$0xff] %v701
      %706 = vst [vmem:[#allocation2 + $0xe8] sm:$0xff] %v702
      %v707 = vld [vmem:[%s192] sm:$0xff]
      %v708 = vld [vmem:[%s192 + $0x8] sm:$0xff]
      %v709 = vld [vmem:[%s192 + $0x10] sm:$0xff]
      %v710 = vld [vmem:[%s192 + $0x18] sm:$0xff]
      %v715 = vunpack.c.l.b16 %v707
      %v716 = vunpack.c.h.b16 %v707
      %v717 = vunpack.c.l.b16 %v708
      %v718 = vunpack.c.h.b16 %v708
      %v719 = vunpack.c.l.b16 %v709
      %v720 = vunpack.c.h.b16 %v709
      %v721 = vunpack.c.l.b16 %v710
      %v722 = vunpack.c.h.b16 %v710
      %v723 = vpack.c.b16 %v717, %v715
      %v724 = vpack.c.b16 %v718, %v716
      %v725 = vpack.c.b16 %v721, %v719
      %v726 = vpack.c.b16 %v722, %v720
      %727 = vrot.lane.b32.xlu0 %v723, 107
      %v728 = vpop.permute.xlu0 %727
      %729 = vrot.lane.b32.xlu0 %v724, 107
      %v730 = vpop.permute.xlu0 %729
      %731 = vrot.lane.b32.xlu0 %v725, 107
      %v732 = vpop.permute.xlu0 %731
      %733 = vrot.lane.b32.xlu0 %v726, 107
      %v734 = vpop.permute.xlu0 %733
      %vm735 = vcmask 875520
      %v736 = vsel %vm735, %v728, %v730
      %v737 = vsel %vm735, %v732, %v734
      %740 = vst [vmem:[#allocation2 + $0xf0] sm:$0xff] %v736
      %741 = vst [vmem:[#allocation2 + $0xf8] sm:$0xff] %v737
      %v742 = vld [vmem:[%s1] sm:$0xff]
      %v743 = vld [vmem:[%s1 + $0x8] sm:$0xff]
      %v744 = vld [vmem:[%s1 + $0x10] sm:$0xff]
      %v745 = vld [vmem:[%s1 + $0x18] sm:$0xff]
      %v746 = vld [vmem:[%s1 + $0x20] sm:$0xff]
      %v747 = vld [vmem:[%s1 + $0x28] sm:$0xff]
      %v748 = vld [vmem:[%s1 + $0x30] sm:$0xff]
      %v749 = vld [vmem:[%s1 + $0x38] sm:$0xff]
      %v750 = vld [vmem:[%s1 + $0x40] sm:$0xff]
      %v751 = vld [vmem:[%s1 + $0x48] sm:$0xff]
      %v752 = vld [vmem:[%s1 + $0x50] sm:$0xff]
      %v753 = vld [vmem:[%s1 + $0x58] sm:$0xff]
      %v754 = vld [vmem:[%s1 + $0x60] sm:$0xff]
      %v755 = vld [vmem:[%s1 + $0x68] sm:$0xff]
      %v756 = vld [vmem:[%s1 + $0x70] sm:$0xff]
      %v757 = vld [vmem:[%s1 + $0x78] sm:$0xff]
      %v758 = vld [vmem:[#allocation2] sm:$0xff]
      %v759 = vld [vmem:[#allocation2 + $0x8] sm:$0xff]
      %v760 = vld [vmem:[#allocation2 + $0x10] sm:$0xff]
      %v761 = vld [vmem:[#allocation2 + $0x18] sm:$0xff]
      %v762 = vld [vmem:[#allocation2 + $0x20] sm:$0xff]
      %v763 = vld [vmem:[#allocation2 + $0x28] sm:$0xff]
      %v764 = vld [vmem:[#allocation2 + $0x30] sm:$0xff]
      %v765 = vld [vmem:[#allocation2 + $0x38] sm:$0xff]
      %v766 = vld [vmem:[#allocation2 + $0x40] sm:$0xff]
      %v767 = vld [vmem:[#allocation2 + $0x48] sm:$0xff]
      %v768 = vld [vmem:[#allocation2 + $0x50] sm:$0xff]
      %v769 = vld [vmem:[#allocation2 + $0x58] sm:$0xff]
      %v770 = vld [vmem:[#allocation2 + $0x60] sm:$0xff]
      %v771 = vld [vmem:[#allocation2 + $0x68] sm:$0xff]
      %v772 = vld [vmem:[#allocation2 + $0x70] sm:$0xff]
      %v773 = vld [vmem:[#allocation2 + $0x78] sm:$0xff]
      %v774 = vld [vmem:[#allocation2 + $0x80] sm:$0xff]
      %v775 = vld [vmem:[#allocation2 + $0x88] sm:$0xff]
      %v776 = vld [vmem:[#allocation2 + $0x90] sm:$0xff]
      %v777 = vld [vmem:[#allocation2 + $0x98] sm:$0xff]
      %v778 = vld [vmem:[#allocation2 + $0xa0] sm:$0xff]
      %v779 = vld [vmem:[#allocation2 + $0xa8] sm:$0xff]
      %v780 = vld [vmem:[#allocation2 + $0xb0] sm:$0xff]
      %v781 = vld [vmem:[#allocation2 + $0xb8] sm:$0xff]
      %v782 = vld [vmem:[#allocation2 + $0xc0] sm:$0xff]
      %v783 = vld [vmem:[#allocation2 + $0xc8] sm:$0xff]
      %v784 = vld [vmem:[#allocation2 + $0xd0] sm:$0xff]
      %v785 = vld [vmem:[#allocation2 + $0xd8] sm:$0xff]
      %v786 = vld [vmem:[#allocation2 + $0xe0] sm:$0xff]
      %v787 = vld [vmem:[#allocation2 + $0xe8] sm:$0xff]
      %v788 = vld [vmem:[#allocation2 + $0xf0] sm:$0xff]
      %v789 = vld [vmem:[#allocation2 + $0xf8] sm:$0xff]
      %v790 = vld [vmem:[%s2] sm:$0xff]
      %v791 = vld [vmem:[%s2 + $0x8] sm:$0xff]
      %v792 = vld [vmem:[%s2 + $0x10] sm:$0xff]
      %v793 = vld [vmem:[%s2 + $0x18] sm:$0xff]
      %v794 = vld [vmem:[%s2 + $0x20] sm:$0xff]
      %v795 = vld [vmem:[%s2 + $0x28] sm:$0xff]
      %v796 = vld [vmem:[%s2 + $0x30] sm:$0xff]
      %v797 = vld [vmem:[%s2 + $0x38] sm:$0xff]
      %799 = vset.pattern.permute.xlu0 0
      %800 = vperm.xlu0 %799, %v790
      %v801 = vpop.permute.xlu0 %800
      %804 = vset.pattern.permute.xlu0 0
      %805 = vperm.xlu0 %804, %v791
      %v806 = vpop.permute.xlu0 %805
      %809 = vset.pattern.permute.xlu0 0
      %810 = vperm.xlu0 %809, %v792
      %v811 = vpop.permute.xlu0 %810
      %814 = vset.pattern.permute.xlu0 0
      %815 = vperm.xlu0 %814, %v793
      %v816 = vpop.permute.xlu0 %815
      %819 = vset.pattern.permute.xlu0 0
      %820 = vperm.xlu0 %819, %v794
      %v821 = vpop.permute.xlu0 %820
      %824 = vset.pattern.permute.xlu0 0
      %825 = vperm.xlu0 %824, %v795
      %v826 = vpop.permute.xlu0 %825
      %829 = vset.pattern.permute.xlu0 0
      %830 = vperm.xlu0 %829, %v796
      %v831 = vpop.permute.xlu0 %830
      %834 = vset.pattern.permute.xlu0 0
      %835 = vperm.xlu0 %834, %v797
      %v836 = vpop.permute.xlu0 %835
      %v854 = vunpack.c.l.b16 %v742
      %v855 = vunpack.c.h.b16 %v742
      %v856 = vunpack.c.l.b16 %v743
      %v857 = vunpack.c.h.b16 %v743
      %v858 = vunpack.c.l.b16 %v744
      %v859 = vunpack.c.h.b16 %v744
      %v860 = vunpack.c.l.b16 %v745
      %v861 = vunpack.c.h.b16 %v745
      %v862 = vunpack.c.l.b16 %v746
      %v863 = vunpack.c.h.b16 %v746
      %v864 = vunpack.c.l.b16 %v747
      %v865 = vunpack.c.h.b16 %v747
      %v866 = vunpack.c.l.b16 %v748
      %v867 = vunpack.c.h.b16 %v748
      %v868 = vunpack.c.l.b16 %v749
      %v869 = vunpack.c.h.b16 %v749
      %v870 = vunpack.c.l.b16 %v750
      %v871 = vunpack.c.h.b16 %v750
      %v872 = vunpack.c.l.b16 %v751
      %v873 = vunpack.c.h.b16 %v751
      %v874 = vunpack.c.l.b16 %v752
      %v875 = vunpack.c.h.b16 %v752
      %v876 = vunpack.c.l.b16 %v753
      %v877 = vunpack.c.h.b16 %v753
      %v878 = vunpack.c.l.b16 %v754
      %v879 = vunpack.c.h.b16 %v754
      %v880 = vunpack.c.l.b16 %v755
      %v881 = vunpack.c.h.b16 %v755
      %v882 = vunpack.c.l.b16 %v756
      %v883 = vunpack.c.h.b16 %v756
      %v884 = vunpack.c.l.b16 %v757
      %v885 = vunpack.c.h.b16 %v757
      %v886 = vpack.c.b16 %v858, %v854
      %v887 = vpack.c.b16 %v859, %v855
      %v888 = vpack.c.b16 %v860, %v856
      %v889 = vpack.c.b16 %v861, %v857
      %v890 = vpack.c.b16 %v866, %v862
      %v891 = vpack.c.b16 %v867, %v863
      %v892 = vpack.c.b16 %v868, %v864
      %v893 = vpack.c.b16 %v869, %v865
      %v894 = vpack.c.b16 %v874, %v870
      %v895 = vpack.c.b16 %v875, %v871
      %v896 = vpack.c.b16 %v876, %v872
      %v897 = vpack.c.b16 %v877, %v873
      %v898 = vpack.c.b16 %v882, %v878
      %v899 = vpack.c.b16 %v883, %v879
      %v900 = vpack.c.b16 %v884, %v880
      %v901 = vpack.c.b16 %v885, %v881
      %918 = vmatprep.subr.bf16.mxu0 0
      %919 = vmatpush1.bf16.msra.mxu0 %v758
      %920 = vmatprep.subr.bf16.mxu0 0
      %921 = vmatpush1.bf16.msra.mxu0 %v759
      %922 = vmatprep.subr.bf16.mxu0 0
      %923 = vmatpush1.bf16.msra.mxu0 %v760
      %924 = vmatprep.subr.bf16.mxu0 0
      %925 = vmatpush1.bf16.msra.mxu0 %v761
      %926 = vmatprep.subr.bf16.mxu0 0
      %927 = vmatpush1.bf16.msra.mxu0 %v762
      %928 = vmatprep.subr.bf16.mxu0 0
      %929 = vmatpush1.bf16.msra.mxu0 %v763
      %930 = vmatprep.subr.bf16.mxu0 0
      %931 = vmatpush1.bf16.msra.mxu0 %v764
      %932 = vmatprep.subr.bf16.mxu0 0
      %933 = vmatpush1.bf16.msra.mxu0 %v765
      %934 = vmatprep.subr.bf16.mxu0 0
      %935 = vmatpush1.bf16.msra.mxu0 %v766
      %936 = vmatprep.subr.bf16.mxu0 0
      %937 = vmatpush1.bf16.msra.mxu0 %v767
      %938 = vmatprep.subr.bf16.mxu0 0
      %939 = vmatpush1.bf16.msra.mxu0 %v768
      %940 = vmatprep.subr.bf16.mxu0 0
      %941 = vmatpush1.bf16.msra.mxu0 %v769
      %942 = vmatprep.subr.bf16.mxu0 0
      %943 = vmatpush1.bf16.msra.mxu0 %v770
      %944 = vmatprep.subr.bf16.mxu0 0
      %945 = vmatpush1.bf16.msra.mxu0 %v771
      %946 = vmatprep.subr.bf16.mxu0 0
      %947 = vmatpush1.bf16.msra.mxu0 %v772
      %948 = vmatprep.subr.bf16.mxu0 0
      %949 = vmatpush1.bf16.msra.mxu0 %v773
      %950 = vmatprep.mubr.bf16.mxu0 %v887
      %951 = vmatmul.mubr.bf16.gmra.mrb[0].mxu0 %v886
      %v952 = vpop.f32.mrb[0].mxu0
      %v953 = vadd.f32 %v801, %v952
      %v954 = vpop.f32.mrb[0].mxu0
      %v955 = vpop.f32.mrb[0].mxu0
      %v956 = vadd.f32 %v806, %v955
      %v957 = vpop.f32.mrb[0].mxu0
      %958 = vmatprep.mubr.bf16.mxu0 %v891
      %959 = vmatmul.mubr.bf16.gmra.mrb[0].mxu0 %v890
      %v960 = vpop.f32.mrb[0].mxu0
      %v961 = vadd.f32 %v811, %v960
      %v962 = vpop.f32.mrb[0].mxu0
      %v963 = vpop.f32.mrb[0].mxu0
      %v964 = vadd.f32 %v816, %v963
      %v965 = vpop.f32.mrb[0].mxu0
      %966 = vmatprep.mubr.bf16.mxu0 %v895
      %967 = vmatmul.mubr.bf16.gmra.mrb[0].mxu0 %v894
      %v968 = vpop.f32.mrb[0].mxu0
      %v969 = vadd.f32 %v821, %v968
      %v970 = vpop.f32.mrb[0].mxu0
      %v971 = vpop.f32.mrb[0].mxu0
      %v972 = vadd.f32 %v826, %v971
      %v973 = vpop.f32.mrb[0].mxu0
      %974 = vmatprep.mubr.bf16.mxu0 %v899
      %975 = vmatmul.mubr.bf16.gmra.mrb[0].mxu0 %v898
      %v976 = vpop.f32.mrb[0].mxu0
      %v977 = vadd.f32 %v831, %v976
      %v978 = vpop.f32.mrb[0].mxu0
      %v979 = vpop.f32.mrb[0].mxu0
      %v980 = vadd.f32 %v836, %v979
      %v981 = vpop.f32.mrb[0].mxu0
      %982 = vdwg.mxu0
      %983 = vmatprep.subr.bf16.mxu0 0
      %984 = vmatpush1.bf16.msra.mxu0 %v774
      %985 = vmatprep.subr.bf16.mxu0 0
      %986 = vmatpush1.bf16.msra.mxu0 %v775
      %987 = vmatprep.subr.bf16.mxu0 0
      %988 = vmatpush1.bf16.msra.mxu0 %v776
      %989 = vmatprep.subr.bf16.mxu0 0
      %990 = vmatpush1.bf16.msra.mxu0 %v777
      %991 = vmatprep.subr.bf16.mxu0 0
      %992 = vmatpush1.bf16.msra.mxu0 %v778
      %993 = vmatprep.subr.bf16.mxu0 0
      %994 = vmatpush1.bf16.msra.mxu0 %v779
      %995 = vmatprep.subr.bf16.mxu0 0
      %996 = vmatpush1.bf16.msra.mxu0 %v780
      %997 = vmatprep.subr.bf16.mxu0 0
      %998 = vmatpush1.bf16.msra.mxu0 %v781
      %999 = vmatprep.subr.bf16.mxu0 0
      %1000 = vmatpush1.bf16.msra.mxu0 %v782
      %1001 = vmatprep.subr.bf16.mxu0 0
      %1002 = vmatpush1.bf16.msra.mxu0 %v783
      %1003 = vmatprep.subr.bf16.mxu0 0
      %1004 = vmatpush1.bf16.msra.mxu0 %v784
      %1005 = vmatprep.subr.bf16.mxu0 0
      %1006 = vmatpush1.bf16.msra.mxu0 %v785
      %1007 = vmatprep.subr.bf16.mxu0 0
      %1008 = vmatpush1.bf16.msra.mxu0 %v786
      %1009 = vmatprep.subr.bf16.mxu0 0
      %1010 = vmatpush1.bf16.msra.mxu0 %v787
      %1011 = vmatprep.subr.bf16.mxu0 0
      %1012 = vmatpush1.bf16.msra.mxu0 %v788
      %1013 = vmatprep.subr.bf16.mxu0 0
      %1014 = vmatpush1.bf16.msra.mxu0 %v789
      %1015 = vmatprep.mubr.bf16.mxu0 %v889
      %1016 = vmatmul.mubr.bf16.gmra.mrb[0].mxu0 %v888
      %v1017 = vpop.f32.mrb[0].mxu0
      %v1018 = vadd.f32 %v953, %v1017
      %v1019 = vpop.f32.mrb[0].mxu0
      %v1020 = vpop.f32.mrb[0].mxu0
      %v1021 = vadd.f32 %v956, %v1020
      %v1022 = vpop.f32.mrb[0].mxu0
      %1023 = vmatprep.mubr.bf16.mxu0 %v893
      %1024 = vmatmul.mubr.bf16.gmra.mrb[0].mxu0 %v892
      %v1025 = vpop.f32.mrb[0].mxu0
      %v1026 = vadd.f32 %v961, %v1025
      %v1027 = vpop.f32.mrb[0].mxu0
      %v1028 = vpop.f32.mrb[0].mxu0
      %v1029 = vadd.f32 %v964, %v1028
      %v1030 = vpop.f32.mrb[0].mxu0
      %1031 = vmatprep.mubr.bf16.mxu0 %v897
      %1032 = vmatmul.mubr.bf16.gmra.mrb[0].mxu0 %v896
      %v1033 = vpop.f32.mrb[0].mxu0
      %v1034 = vadd.f32 %v969, %v1033
      %v1035 = vpop.f32.mrb[0].mxu0
      %v1036 = vpop.f32.mrb[0].mxu0
      %v1037 = vadd.f32 %v972, %v1036
      %v1038 = vpop.f32.mrb[0].mxu0
      %1039 = vmatprep.mubr.bf16.mxu0 %v901
      %1040 = vmatmul.mubr.bf16.gmra.mrb[0].mxu0 %v900
      %v1041 = vpop.f32.mrb[0].mxu0
      %v1042 = vadd.f32 %v977, %v1041
      %v1043 = vpop.f32.mrb[0].mxu0
      %v1044 = vpop.f32.mrb[0].mxu0
      %v1045 = vadd.f32 %v980, %v1044
      %v1046 = vpop.f32.mrb[0].mxu0
      %1047 = vdwg.mxu0
      %v1048 = vld [vmem:[%s3] sm:$0x1]
      %v1050 = vlaneseq
      %v1051 = vshrl.u32 %v1050, 7
      %v1052 = vsub.s32 0, %v1051
      %v1053 = vrot.slane %v1048, %v1052
      %v1055 = vmul.f32 %v1018, %v1053
      %v1056 = vmul.f32 %v1021, %v1053
      %v1057 = vmul.f32 %v1026, %v1053
      %v1058 = vmul.f32 %v1029, %v1053
      %v1059 = vmul.f32 %v1034, %v1053
      %v1060 = vmul.f32 %v1037, %v1053
      %v1061 = vmul.f32 %v1042, %v1053
      %v1062 = vmul.f32 %v1045, %v1053
      %1063 = vadd.xlane.f32.xlu0 %v1055
      %v1064 = vpop.xlane.xlu0 %1063
      %1065 = vadd.xlane.f32.xlu0 %v1056
      %v1066 = vpop.xlane.xlu0 %1065
      %1067 = vadd.xlane.f32.xlu0 %v1057
      %v1068 = vpop.xlane.xlu0 %1067
      %1069 = vadd.xlane.f32.xlu0 %v1058
      %v1070 = vpop.xlane.xlu0 %1069
      %1071 = vadd.xlane.f32.xlu0 %v1059
      %v1072 = vpop.xlane.xlu0 %1071
      %1073 = vadd.xlane.f32.xlu0 %v1060
      %v1074 = vpop.xlane.xlu0 %1073
      %1075 = vadd.xlane.f32.xlu0 %v1061
      %v1076 = vpop.xlane.xlu0 %1075
      %1077 = vadd.xlane.f32.xlu0 %v1062
      %v1078 = vpop.xlane.xlu0 %1077
      %v1079 = vadd.f32 %v1064, 0.0
      %v1080 = vadd.f32 %v1066, 0.0
      %v1081 = vadd.f32 %v1068, 0.0
      %v1082 = vadd.f32 %v1070, 0.0
      %v1083 = vadd.f32 %v1072, 0.0
      %v1084 = vadd.f32 %v1074, 0.0
      %v1085 = vadd.f32 %v1076, 0.0
      %v1086 = vadd.f32 %v1078, 0.0
      %v1087 = vmul.f32 %v1055, %v1018
      %v1088 = vmul.f32 %v1056, %v1021
      %v1089 = vmul.f32 %v1057, %v1026
      %v1090 = vmul.f32 %v1058, %v1029
      %v1091 = vmul.f32 %v1059, %v1034
      %v1092 = vmul.f32 %v1060, %v1037
      %v1093 = vmul.f32 %v1061, %v1042
      %v1094 = vmul.f32 %v1062, %v1045
      %1095 = vadd.xlane.f32.xlu0 %v1087
      %v1096 = vpop.xlane.xlu0 %1095
      %1097 = vadd.xlane.f32.xlu0 %v1088
      %v1098 = vpop.xlane.xlu0 %1097
      %1099 = vadd.xlane.f32.xlu0 %v1089
      %v1100 = vpop.xlane.xlu0 %1099
      %1101 = vadd.xlane.f32.xlu0 %v1090
      %v1102 = vpop.xlane.xlu0 %1101
      %1103 = vadd.xlane.f32.xlu0 %v1091
      %v1104 = vpop.xlane.xlu0 %1103
      %1105 = vadd.xlane.f32.xlu0 %v1092
      %v1106 = vpop.xlane.xlu0 %1105
      %1107 = vadd.xlane.f32.xlu0 %v1093
      %v1108 = vpop.xlane.xlu0 %1107
      %1109 = vadd.xlane.f32.xlu0 %v1094
      %v1110 = vpop.xlane.xlu0 %1109
      %v1111 = vadd.f32 %v1096, 0.0
      %v1112 = vadd.f32 %v1098, 0.0
      %v1113 = vadd.f32 %v1100, 0.0
      %v1114 = vadd.f32 %v1102, 0.0
      %v1115 = vadd.f32 %v1104, 0.0
      %v1116 = vadd.f32 %v1106, 0.0
      %v1117 = vadd.f32 %v1108, 0.0
      %v1118 = vadd.f32 %v1110, 0.0
      %1119 = vst [vmem:[#allocation3] sm:$0xff] %v1018
      %1120 = vst [vmem:[#allocation3 + $0x8] sm:$0xff] %v1021
      %1121 = vst [vmem:[#allocation3 + $0x10] sm:$0xff] %v1026
      %1122 = vst [vmem:[#allocation3 + $0x18] sm:$0xff] %v1029
      %1123 = vst [vmem:[#allocation3 + $0x20] sm:$0xff] %v1034
      %1124 = vst [vmem:[#allocation3 + $0x28] sm:$0xff] %v1037
      %1125 = vst [vmem:[#allocation3 + $0x30] sm:$0xff] %v1042
      %1126 = vst [vmem:[#allocation3 + $0x38] sm:$0xff] %v1045
      %v1127 = vmul.f32 %v1079, 0.11111111
      %v1128 = vmul.f32 %v1080, 0.11111111
      %v1129 = vmul.f32 %v1081, 0.11111111
      %v1130 = vmul.f32 %v1082, 0.11111111
      %v1131 = vmul.f32 %v1083, 0.11111111
      %v1132 = vmul.f32 %v1084, 0.11111111
      %v1133 = vmul.f32 %v1085, 0.11111111
      %v1134 = vmul.f32 %v1086, 0.11111111
      %v1135 = vmul.f32 %v1111, 0.11111111
      %v1136 = vmul.f32 %v1112, 0.11111111
      %v1137 = vmul.f32 %v1113, 0.11111111
      %v1138 = vmul.f32 %v1114, 0.11111111
      %v1139 = vmul.f32 %v1115, 0.11111111
      %v1140 = vmul.f32 %v1116, 0.11111111
      %v1141 = vmul.f32 %v1117, 0.11111111
      %v1142 = vmul.f32 %v1118, 0.11111111
      %v1143 = vmul.f32 %v1127, %v1127
      %v1144 = vmul.f32 %v1128, %v1128
      %v1145 = vmul.f32 %v1129, %v1129
      %v1146 = vmul.f32 %v1130, %v1130
      %v1147 = vmul.f32 %v1131, %v1131
      %v1148 = vmul.f32 %v1132, %v1132
      %v1149 = vmul.f32 %v1133, %v1133
      %v1150 = vmul.f32 %v1134, %v1134
      %v1151 = vsub.f32 %v1135, %v1143
      %v1152 = vsub.f32 %v1136, %v1144
      %v1153 = vsub.f32 %v1137, %v1145
      %v1154 = vsub.f32 %v1138, %v1146
      %v1155 = vsub.f32 %v1139, %v1147
      %v1156 = vsub.f32 %v1140, %v1148
      %v1157 = vsub.f32 %v1141, %v1149
      %v1158 = vsub.f32 %v1142, %v1150
      %v1159 = vmax.f32 %v1151, 0.0
      %v1160 = vmax.f32 %v1152, 0.0
      %v1161 = vmax.f32 %v1153, 0.0
      %v1162 = vmax.f32 %v1154, 0.0
      %v1163 = vmax.f32 %v1155, 0.0
      %v1164 = vmax.f32 %v1156, 0.0
      %v1165 = vmax.f32 %v1157, 0.0
      %v1166 = vmax.f32 %v1158, 0.0
      %v1167 = vadd.f32 %v1159, 1e-05
      %v1168 = vadd.f32 %v1160, 1e-05
      %v1169 = vadd.f32 %v1161, 1e-05
      %v1170 = vadd.f32 %v1162, 1e-05
      %v1171 = vadd.f32 %v1163, 1e-05
      %v1172 = vadd.f32 %v1164, 1e-05
      %v1173 = vadd.f32 %v1165, 1e-05
      %v1174 = vadd.f32 %v1166, 1e-05
      %v1175 = vrsqrt.pop %v1167
      %v1176 = vrsqrt.pop %v1168
      %v1177 = vrsqrt.pop %v1169
      %v1178 = vrsqrt.pop %v1170
      %v1179 = vrsqrt.pop %v1171
      %v1180 = vrsqrt.pop %v1172
      %v1181 = vrsqrt.pop %v1173
      %v1182 = vrsqrt.pop %v1174
      %v1183 = vld [vmem:[#allocation3] sm:$0xff]
      %v1184 = vld [vmem:[#allocation3 + $0x8] sm:$0xff]
      %v1185 = vld [vmem:[#allocation3 + $0x10] sm:$0xff]
      %v1186 = vld [vmem:[#allocation3 + $0x18] sm:$0xff]
      %v1187 = vld [vmem:[#allocation3 + $0x20] sm:$0xff]
      %v1188 = vld [vmem:[#allocation3 + $0x28] sm:$0xff]
      %v1189 = vld [vmem:[#allocation3 + $0x30] sm:$0xff]
      %v1190 = vld [vmem:[#allocation3 + $0x38] sm:$0xff]
      %v1191 = vsub.f32 %v1183, %v1127
      %v1192 = vsub.f32 %v1184, %v1128
      %v1193 = vsub.f32 %v1185, %v1129
      %v1194 = vsub.f32 %v1186, %v1130
      %v1195 = vsub.f32 %v1187, %v1131
      %v1196 = vsub.f32 %v1188, %v1132
      %v1197 = vsub.f32 %v1189, %v1133
      %v1198 = vsub.f32 %v1190, %v1134
      %v1199 = vmul.f32 %v1191, %v1175
      %v1200 = vmul.f32 %v1192, %v1176
      %v1201 = vmul.f32 %v1193, %v1177
      %v1202 = vmul.f32 %v1194, %v1178
      %v1203 = vmul.f32 %v1195, %v1179
      %v1204 = vmul.f32 %v1196, %v1180
      %v1205 = vmul.f32 %v1197, %v1181
      %v1206 = vmul.f32 %v1198, %v1182
      %vm1207 = vcmp.ge.f32.partialorder %v1199, 0.0
      %vm1208 = vcmp.ge.f32.partialorder %v1200, 0.0
      %vm1209 = vcmp.ge.f32.partialorder %v1201, 0.0
      %vm1210 = vcmp.ge.f32.partialorder %v1202, 0.0
      %vm1211 = vcmp.ge.f32.partialorder %v1203, 0.0
      %vm1212 = vcmp.ge.f32.partialorder %v1204, 0.0
      %vm1213 = vcmp.ge.f32.partialorder %v1205, 0.0
      %vm1214 = vcmp.ge.f32.partialorder %v1206, 0.0
      %v1215 = vmul.f32 %v1199, 0.2
      %v1216 = vmul.f32 %v1200, 0.2
      %v1217 = vmul.f32 %v1201, 0.2
      %v1218 = vmul.f32 %v1202, 0.2
      %v1219 = vmul.f32 %v1203, 0.2
      %v1220 = vmul.f32 %v1204, 0.2
      %v1221 = vmul.f32 %v1205, 0.2
      %v1222 = vmul.f32 %v1206, 0.2
      %v1223 = vsel %vm1207, %v1199, %v1215
      %v1224 = vsel %vm1208, %v1200, %v1216
      %v1225 = vsel %vm1209, %v1201, %v1217
      %v1226 = vsel %vm1210, %v1202, %v1218
      %v1227 = vsel %vm1211, %v1203, %v1219
      %v1228 = vsel %vm1212, %v1204, %v1220
      %v1229 = vsel %vm1213, %v1205, %v1221
      %v1230 = vsel %vm1214, %v1206, %v1222
      %v1231 = vpack.c.bf16 %v1224, %v1223
      %v1232 = vpack.c.bf16 %v1226, %v1225
      %v1233 = vpack.c.bf16 %v1228, %v1227
      %v1234 = vpack.c.bf16 %v1230, %v1229
      %v1239 = vunpack.c.l.b16 %v1231
      %v1240 = vunpack.c.h.b16 %v1231
      %v1241 = vunpack.c.l.b16 %v1232
      %v1242 = vunpack.c.h.b16 %v1232
      %v1243 = vunpack.c.l.b16 %v1233
      %v1244 = vunpack.c.h.b16 %v1233
      %v1245 = vunpack.c.l.b16 %v1234
      %v1246 = vunpack.c.h.b16 %v1234
      %v1247 = vpack.c.b16 %v1239, %v1239
      %v1248 = vpack.c.b16 %v1240, %v1240
      %v1249 = vpack.c.b16 %v1241, %v1241
      %v1250 = vpack.c.b16 %v1242, %v1242
      %v1251 = vpack.c.b16 %v1243, %v1243
      %v1252 = vpack.c.b16 %v1244, %v1244
      %v1253 = vpack.c.b16 %v1245, %v1245
      %v1254 = vpack.c.b16 %v1246, %v1246
      %1263 = vst [vmem:[%s197] sm:$0xf] %v1247
      %1264 = vst [vmem:[%s197 + $0x4] sm:$0xf] %v1248
      %1265 = vst [vmem:[%s197 + $0x8] sm:$0xf] %v1249
      %1266 = vst [vmem:[%s197 + $0xc] sm:$0xf] %v1250
      %1267 = vst [vmem:[%s197 + $0x10] sm:$0xf] %v1251
      %1268 = vst [vmem:[%s197 + $0x14] sm:$0xf] %v1252
      %1269 = vst [vmem:[%s197 + $0x18] sm:$0xf] %v1253
      %1270 = vst [vmem:[%s197 + $0x1c] sm:$0xf] %v1254
      %p1271 = scmp.lt.s32.totalorder %s15, 1
      %s1272 = scalar_select %p1271, %s15, 1
      %s1273 = smul.addr %s1272, 8
      %s1274 = smul.addr %s1273, 4
      %s1275 = scalar_lea.vmem %s4, %s1274
      // Predicated region
      $region37: #{discriminator_forward.8} parent=35 // pred_check
        %p1276 = pneg %p122
      $region38: #{discriminator_forward.8} parent=35 // pred_check_branch
        %1278 = sbr.rel (%p1276) target = $region40
      $region39: #{discriminator_forward.8} parent=35 // pred_region
        _
      $region40: #{discriminator_forward.8} parent=35 // pred_fallthru
        _
    $region36: #{discriminator_forward.8} parent=5 // pred_fallthru
      _
    %p1279 = scmp.le.s32.totalorder 2, %s10
    // Predicated region
    $region41: #{discriminator_forward.8} parent=5 // pred_check
      %p1280 = pneg %p1279
    $region42: #{discriminator_forward.8} parent=5 // pred_check_branch
      %1282 = sbr.rel (%p1280) target = $region44
    $region43: #{discriminator_forward.8} parent=5 // pred_region
      %s1283 = ssub.s32 %s10, 2
      // Predicated region
      $region45: #{discriminator_forward.8} parent=43 // pred_check
        %p1284 = pneg %p128
      $region46: #{discriminator_forward.8} parent=43 // pred_check_branch
        %1286 = sbr.rel (%p1284) target = $region48
      $region47: #{discriminator_forward.8} parent=43 // pred_region
        %p1287 = scmp.lt.s32.totalorder %s16, 1
        %s1288 = scalar_select %p1287, %s16, 1
        %s1289 = smul.addr %s1288, 8
        %s1290 = smul.addr %s1289, 4
        %s1291 = scalar_lea.vmem %s4, %s1290
      $region48: #{discriminator_forward.8} parent=43 // pred_fallthru
        _
    $region44: #{discriminator_forward.8} parent=5 // pred_fallthru
      _
  $region6: #{discriminator_forward.8} parent=0 // loop_footer
    %s14 = sadd.s32 1, %s10
  $region7: #{discriminator_forward.8} parent=0 // loop_footer_branch
    %9 = sbr.rel target = $region3
  $region8: #{discriminator_forward.8} parent=0 // loop_exit
    _

// kernel: discriminator_forward.9
$region0: #{discriminator_forward.9}
  #allocation0 [shape = 'u32[]', space=smem, size = 0x4, offset = 0x4, fixed_abs, tag = 'smem constant byte address 0x4 - core index']
  #allocation1 [shape = 'u32[144,128]{1,0:T(1,128)}', space=vmem, size = 0x12000, scoped, tag = 'internal scratch']
  #allocation2 [shape = 'bf16[1024,128]{1,0:T(16,128)(2,1)}', space=vmem, size = 0x40000, scoped, tag = 'scratch operand']
  %s0 = inlined_call_operand.vmem [shape: bf16[2,64,256], index: 0, kind: input, shape index: {}]
  %s1 = inlined_call_operand.vmem [shape: bf16[8,1024], index: 1, kind: input, shape index: {}]
  %s2 = inlined_call_operand.vmem [shape: f32[8,1], index: 2, kind: input, shape index: {}]
  %s3 = inlined_call_operand.vmem [shape: f32[1,128], index: 3, kind: input, shape index: {}]
  %s4 = inlined_call_operand.vmem [shape: f32[2,1,128], index: 4, kind: output, shape index: {}]
  %s5 = sld [smem:[#allocation0]]
  $region49: #{discriminator_forward.9} parent=0
    _
  %s7 = ssub.s32 1, %s5
  %s8 = scalar_select 0, %s7, %s5
  loop: start=0, step=1, limit=4
  $region2: #{discriminator_forward.9} parent=0 // loop_pre_header
    _
  $region3: #{discriminator_forward.9} parent=0 // loop_header
    %s10 = sphi 0, %s14
    %p11 = scmp.ge.s32.totalorder %s10, 4
    %s20 = sphi 0, %s22
    %s23 = sphi 0, %s20
    %s24 = sphi 0, %s23
    %s40 = sphi 0, %s24
    %s44 = sphi 0, %s44
    %s46 = sphi 0, %s44
    %s47 = sphi 0, %s46
    %s61 = sphi 0, %s47
    %s65 = sphi 0, %s65
    %s67 = sphi 0, %s65
    %s68 = sphi 0, %s67
    %s82 = sphi 0, %s68
    %s86 = sphi 0, %s86
    %s88 = sphi 0, %s86
    %s89 = sphi 0, %s88
    %s103 = sphi 0, %s89
    %s109 = sphi 0, %s111
    %s112 = sphi 0, %s109
    %s113 = sphi 0, %s112
    %s129 = sphi 0, %s113
  $region4: #{discriminator_forward.9} parent=0 // loop_header_branch
    %13 = sbr.rel (%p11) target = $region8
  $region5: #{discriminator_forward.9} parent=0 // loop_body
    %s15 = ssub.s32 %s10, 1
    %s16 = ssub.s32 %s10, 2
    %s17 = sadd.s32 %s10, 1
    %s18 = ssub.s32 %s10, %s17
    %p19 = scmp.eq.s32.totalorder %s18, 0
    %s21 = sadd.s32 %s20, 1
    %s22 = scalar_select %p19, %s20, %s21
    %p25 = pneg %p19
    %p26 = scmp.eq.s32.totalorder %s10, 1
    %p27 = por %p25, %p26
    %p28 = scmp.ne.s32.totalorder %s20, %s23
    %p29 = scmp.eq.s32.totalorder %s10, 0
    %p30 = por %p28, %p29
    %p31 = scmp.ne.s32.totalorder %s20, %s23
    %p32 = scmp.eq.s32.totalorder %s15, 1
    %p33 = por %p31, %p32
    %p34 = scmp.ne.s32.totalorder %s23, %s24
    %p35 = scmp.eq.s32.totalorder %s15, 0
    %p36 = por %p34, %p35
    %p37 = scmp.ne.s32.totalorder %s23, %s24
    %p38 = scmp.eq.s32.totalorder %s16, 1
    %p39 = por %p37, %p38
    %p41 = scmp.ne.s32.totalorder %s24, %s40
    %p42 = scmp.eq.s32.totalorder %s16, 0
    %p43 = por %p41, %p42
    %s45 = sadd.s32 %s44, 1
    %p48 = scmp.eq.s32.totalorder %s10, 1
    %p49 = scmp.ne.s32.totalorder %s44, %s46
    %p50 = scmp.eq.s32.totalorder %s10, 0
    %p51 = por %p49, %p50
    %p52 = scmp.ne.s32.totalorder %s44, %s46
    %p53 = scmp.eq.s32.totalorder %s15, 1
    %p54 = por %p52, %p53
    %p55 = scmp.ne.s32.totalorder %s46, %s47
    %p56 = scmp.eq.s32.totalorder %s15, 0
    %p57 = por %p55, %p56
    %p58 = scmp.ne.s32.totalorder %s46, %s47
    %p59 = scmp.eq.s32.totalorder %s16, 1
    %p60 = por %p58, %p59
    %p62 = scmp.ne.s32.totalorder %s47, %s61
    %p63 = scmp.eq.s32.totalorder %s16, 0
    %p64 = por %p62, %p63
    %s66 = sadd.s32 %s65, 1
    %p69 = scmp.eq.s32.totalorder %s10, 1
    %p70 = scmp.ne.s32.totalorder %s65, %s67
    %p71 = scmp.eq.s32.totalorder %s10, 0
    %p72 = por %p70, %p71
    %p73 = scmp.ne.s32.totalorder %s65, %s67
    %p74 = scmp.eq.s32.totalorder %s15, 1
    %p75 = por %p73, %p74
    %p76 = scmp.ne.s32.totalorder %s67, %s68
    %p77 = scmp.eq.s32.totalorder %s15, 0
    %p78 = por %p76, %p77
    %p79 = scmp.ne.s32.totalorder %s67, %s68
    %p80 = scmp.eq.s32.totalorder %s16, 1
    %p81 = por %p79, %p80
    %p83 = scmp.ne.s32.totalorder %s68, %s82
    %p84 = scmp.eq.s32.totalorder %s16, 0
    %p85 = por %p83, %p84
    %s87 = sadd.s32 %s86, 1
    %p90 = scmp.eq.s32.totalorder %s10, 1
    %p91 = scmp.ne.s32.totalorder %s86, %s88
    %p92 = scmp.eq.s32.totalorder %s10, 0
    %p93 = por %p91, %p92
    %p94 = scmp.ne.s32.totalorder %s86, %s88
    %p95 = scmp.eq.s32.totalorder %s15, 1
    %p96 = por %p94, %p95
    %p97 = scmp.ne.s32.totalorder %s88, %s89
    %p98 = scmp.eq.s32.totalorder %s15, 0
    %p99 = por %p97, %p98
    %p100 = scmp.ne.s32.totalorder %s88, %s89
    %p101 = scmp.eq.s32.totalorder %s16, 1
    %p102 = por %p100, %p101
    %p104 = scmp.ne.s32.totalorder %s89, %s103
    %p105 = scmp.eq.s32.totalorder %s16, 0
    %p106 = por %p104, %p105
    %s107 = ssub.s32 %s10, %s17
    %p108 = scmp.eq.s32.totalorder %s107, 0
    %s110 = sadd.s32 %s109, 1
    %s111 = scalar_select %p108, %s109, %s110
    %p114 = pneg %p108
    %p115 = scmp.eq.s32.totalorder %s10, 1
    %p116 = por %p114, %p115
    %p117 = scmp.ne.s32.totalorder %s109, %s112
    %p118 = scmp.eq.s32.totalorder %s10, 0
    %p119 = por %p117, %p118
    %p120 = scmp.ne.s32.totalorder %s109, %s112
    %p121 = scmp.eq.s32.totalorder %s15, 1
    %p122 = por %p120, %p121
    %p123 = scmp.ne.s32.totalorder %s112, %s113
    %p124 = scmp.eq.s32.totalorder %s15, 0
    %p125 = por %p123, %p124
    %p126 = scmp.ne.s32.totalorder %s112, %s113
    %p127 = scmp.eq.s32.totalorder %s16, 1
    %p128 = por %p126, %p127
    %p130 = scmp.ne.s32.totalorder %s113, %s129
    %p131 = scmp.eq.s32.totalorder %s16, 0
    %p132 = por %p130, %p131
    %p133 = scmp.le.s32.totalorder 1, %s10
    %p134 = scmp.lt.s32.totalorder %s10, 3
    %p135 = pnand %p133, %p134
    %p136 = pneg %p135
    // Predicated region
    $region9: #{discriminator_forward.9} parent=5 // pred_check
      _
    $region10: #{discriminator_forward.9} parent=5 // pred_check_branch
      %138 = sbr.rel (%p135) target = $region12
    $region11: #{discriminator_forward.9} parent=5 // pred_region
      %s139 = ssub.s32 %s10, 1
      // Predicated region
      $region13: #{discriminator_forward.9} parent=11 // pred_check
        %p140 = pneg %p57
      $region14: #{discriminator_forward.9} parent=11 // pred_check_branch
        %142 = sbr.rel (%p140) target = $region16
      $region15: #{discriminator_forward.9} parent=11 // pred_region
        _
      $region16: #{discriminator_forward.9} parent=11 // pred_fallthru
        _
      // Predicated region
      $region17: #{discriminator_forward.9} parent=11 // pred_check
        %p143 = pneg %p78
      $region18: #{discriminator_forward.9} parent=11 // pred_check_branch
        %145 = sbr.rel (%p143) target = $region20
      $region19: #{discriminator_forward.9} parent=11 // pred_region
        _
      $region20: #{discriminator_forward.9} parent=11 // pred_fallthru
        _
      // Predicated region
      $region21: #{discriminator_forward.9} parent=11 // pred_check
        %p146 = pneg %p99
      $region22: #{discriminator_forward.9} parent=11 // pred_check_branch
        %148 = sbr.rel (%p146) target = $region24
      $region23: #{discriminator_forward.9} parent=11 // pred_region
        _
      $region24: #{discriminator_forward.9} parent=11 // pred_fallthru
        _
    $region12: #{discriminator_forward.9} parent=5 // pred_fallthru
      _
    %p149 = scmp.lt.s32.totalorder %s10, 2
    // Predicated region
    $region25: #{discriminator_forward.9} parent=5 // pred_check
      %p150 = pneg %p149
    $region26: #{discriminator_forward.9} parent=5 // pred_check_branch
      %152 = sbr.rel (%p150) target = $region28
    $region27: #{discriminator_forward.9} parent=5 // pred_region
      // Predicated region
      $region29: #{discriminator_forward.9} parent=27 // pred_check
        %p153 = pneg %p30
      $region30: #{discriminator_forward.9} parent=27 // pred_check_branch
        %155 = sbr.rel (%p153) target = $region32
      $region31: #{discriminator_forward.9} parent=27 // pred_region
        %p156 = scmp.lt.s32.totalorder %s10, 1
        %s157 = scalar_select %p156, %s10, 1
        %s158 = smul.addr %s157, 16
        %s159 = smul.addr %s158, 4
        %s160 = scalar_lea.vmem %s0, %s159
      $region32: #{discriminator_forward.9} parent=27 // pred_fallthru
        _
    $region28: #{discriminator_forward.9} parent=5 // pred_fallthru
      _
    %p161 = scmp.le.s32.totalorder 1, %s10
    %p162 = scmp.lt.s32.totalorder %s10, 3
    %p163 = pnand %p161, %p162
    %p164 = pneg %p163
    // Predicated region
    $region33: #{discriminator_forward.9} parent=5 // pred_check
      _
    $region34: #{discriminator_forward.9} parent=5 // pred_check_branch
      %166 = sbr.rel (%p163) target = $region36
    $region35: #{discriminator_forward.9} parent=5 // pred_region
      %s167 = ssub.s32 %s10, 1
      %p168 = scmp.lt.s32.totalorder %s15, 1
      %s169 = scalar_select %p168, %s15, 1
      %s170 = smul.addr %s169, 16
      %s171 = smul.addr %s170, 4
      %s172 = scalar_lea.vmem %s0, %s171
      %p173 = pneg %p36
      %p174 = pneg %p33
      %p175 = pneg %p57
      %p176 = pneg %p54
      %p177 = pneg %p78
      %p178 = pneg %p75
      %p179 = pneg %p99
      %p180 = pneg %p96
      %p181 = pneg %p125
      %p182 = pneg %p122
      %p183 = scmp.lt.s32.totalorder %s15, 1
      %s184 = scalar_select %p183, %s15, 1
      %s185 = scalar_lea.vmem %s4, %s184
      %p186 = scmp.lt.s32.totalorder %s15, 1
      %s187 = scalar_select %p186, %s15, 1
      %s188 = smul.addr %s187, 16
      %s189 = smul.addr %s188, 4
      %s190 = scalar_lea.vmem %s0, %s189
      %p191 = scmp.lt.s32.totalorder %s15, 1
      %s192 = scalar_select %p191, %s15, 1
      %s193 = scalar_lea.vmem %s4, %s192
      %v195 = vld [vmem:[%s190] sm:$0xf]
      %v196 = vld [vmem:[%s190 + $0x8] sm:$0xf]
      %v197 = vld [vmem:[%s190 + $0x10] sm:$0xf]
      %v198 = vld [vmem:[%s190 + $0x18] sm:$0xf]
      %v199 = vld [vmem:[%s190 + $0x20] sm:$0xf]
      %v200 = vld [vmem:[%s190 + $0x28] sm:$0xf]
      %v201 = vld [vmem:[%s190 + $0x30] sm:$0xf]
      %v202 = vld [vmem:[%s190 + $0x38] sm:$0xf]
      %v211 = vunpack.c.l.b16 %v195
      %v212 = vunpack.c.l.b16 %v196
      %v213 = vunpack.c.l.b16 %v197
      %v214 = vunpack.c.l.b16 %v198
      %v215 = vunpack.c.l.b16 %v199
      %v216 = vunpack.c.l.b16 %v200
      %v217 = vunpack.c.l.b16 %v201
      %v218 = vunpack.c.l.b16 %v202
      %v219 = vpack.c.b16 %v212, %v211
      %v220 = vpack.c.b16 %v214, %v213
      %v221 = vpack.c.b16 %v216, %v215
      %v222 = vpack.c.b16 %v218, %v217
      %227 = vst [vmem:[#allocation2] sm:$0xff] %v219
      %228 = vst [vmem:[#allocation2 + $0x8] sm:$0xff] %v220
      %229 = vst [vmem:[#allocation2 + $0x10] sm:$0xff] %v221
      %230 = vst [vmem:[#allocation2 + $0x18] sm:$0xff] %v222
      %v231 = vld [vmem:[%s190] sm:$0xff]
      %v232 = vld [vmem:[%s190 + $0x8] sm:$0xff]
      %v233 = vld [vmem:[%s190 + $0x10] sm:$0xff]
      %v234 = vld [vmem:[%s190 + $0x18] sm:$0xff]
      %v235 = vld [vmem:[%s190 + $0x20] sm:$0xff]
      %v236 = vld [vmem:[%s190 + $0x28] sm:$0xff]
      %v237 = vld [vmem:[%s190 + $0x30] sm:$0xff]
      %v238 = vld [vmem:[%s190 + $0x38] sm:$0xff]
      %v247 = vunpack.c.l.b16 %v231
      %v248 = vunpack.c.h.b16 %v231
      %v249 = vunpack.c.l.b16 %v232
      %v250 = vunpack.c.h.b16 %v232
      %v251 = vunpack.c.l.b16 %v233
      %v252 = vunpack.c.h.b16 %v233
      %v253 = vunpack.c.l.b16 %v234
      %v254 = vunpack.c.h.b16 %v234
      %v255 = vunpack.c.l.b16 %v235
      %v256 = vunpack.c.h.b16 %v235
      %v257 = vunpack.c.l.b16 %v236
      %v258 = vunpack.c.h.b16 %v236
      %v259 = vunpack.c.l.b16 %v237
      %v260 = vunpack.c.h.b16 %v237
      %v261 = vunpack.c.l.b16 %v238
      %v262 = vunpack.c.h.b16 %v238
      %v263 = vpack.c.b16 %v249, %v247
      %v264 = vpack.c.b16 %v250, %v248
      %v265 = vpack.c.b16 %v253, %v251
      %v266 = vpack.c.b16 %v254, %v252
      %v267 = vpack.c.b16 %v257, %v255
      %v268 = vpack.c.b16 %v258, %v256
      %v269 = vpack.c.b16 %v261, %v259
      %v270 = vpack.c.b16 %v262, %v260
      %271 = vrot.lane.b32.xlu0 %v263, 127
      %v272 = vpop.permute.xlu0 %271
      %273 = vrot.lane.b32.xlu0 %v264, 127
      %v274 = vpop.permute.xlu0 %273
      %275 = vrot.lane.b32.xlu0 %v265, 127
      %v276 = vpop.permute.xlu0 %275
      %277 = vrot.lane.b32.xlu0 %v266, 127
      %v278 = vpop.permute.xlu0 %277
      %279 = vrot.lane.b32.xlu0 %v267, 127
      %v280 = vpop.permute.xlu0 %279
      %281 = vrot.lane.b32.xlu0 %v268, 127
      %v282 = vpop.permute.xlu0 %281
      %283 = vrot.lane.b32.xlu0 %v269, 127
      %v284 = vpop.permute.xlu0 %283
      %285 = vrot.lane.b32.xlu0 %v270, 127
      %v286 = vpop.permute.xlu0 %285
      %vm287 = vcmask 1039360
      %v288 = vsel %vm287, %v272, %v274
      %v289 = vsel %vm287, %v276, %v278
      %v290 = vsel %vm287, %v280, %v282
      %v291 = vsel %vm287, %v284, %v286
      %296 = vst [vmem:[#allocation2 + $0x20] sm:$0xff] %v288
      %297 = vst [vmem:[#allocation2 + $0x28] sm:$0xff] %v289
      %298 = vst [vmem:[#allocation2 + $0x30] sm:$0xff] %v290
      %299 = vst [vmem:[#allocation2 + $0x38] sm:$0xff] %v291
      %v300 = vld [vmem:[%s190] sm:$0xff]
      %v301 = vld [vmem:[%s190 + $0x8] sm:$0xff]
      %v302 = vld [vmem:[%s190 + $0x10] sm:$0xff]
      %v303 = vld [vmem:[%s190 + $0x18] sm:$0xff]
      %v304 = vld [vmem:[%s190 + $0x20] sm:$0xff]
      %v305 = vld [vmem:[%s190 + $0x28] sm:$0xff]
      %v306 = vld [vmem:[%s190 + $0x30] sm:$0xff]
      %v307 = vld [vmem:[%s190 + $0x38] sm:$0xff]
      %v316 = vunpack.c.l.b16 %v300
      %v317 = vunpack.c.h.b16 %v300
      %v318 = vunpack.c.l.b16 %v301
      %v319 = vunpack.c.h.b16 %v301
      %v320 = vunpack.c.l.b16 %v302
      %v321 = vunpack.c.h.b16 %v302
      %v322 = vunpack.c.l.b16 %v303
      %v323 = vunpack.c.h.b16 %v303
      %v324 = vunpack.c.l.b16 %v304
      %v325 = vunpack.c.h.b16 %v304
      %v326 = vunpack.c.l.b16 %v305
      %v327 = vunpack.c.h.b16 %v305
      %v328 = vunpack.c.l.b16 %v306
      %v329 = vunpack.c.h.b16 %v306
      %v330 = vunpack.c.l.b16 %v307
      %v331 = vunpack.c.h.b16 %v307
      %v332 = vpack.c.b16 %v318, %v316
      %v333 = vpack.c.b16 %v319, %v317
      %v334 = vpack.c.b16 %v322, %v320
      %v335 = vpack.c.b16 %v323, %v321
      %v336 = vpack.c.b16 %v326, %v324
      %v337 = vpack.c.b16 %v327, %v325
      %v338 = vpack.c.b16 %v330, %v328
      %v339 = vpack.c.b16 %v331, %v329
      %340 = vrot.lane.b32.xlu0 %v332, 126
      %v341 = vpop.permute.xlu0 %340
      %342 = vrot.lane.b32.xlu0 %v333, 126
      %v343 = vpop.permute.xlu0 %342
      %344 = vrot.lane.b32.xlu0 %v334, 126
      %v345 = vpop.permute.xlu0 %344
      %346 = vrot.lane.b32.xlu0 %v335, 126
      %v347 = vpop.permute.xlu0 %346
      %348 = vrot.lane.b32.xlu0 %v336, 126
      %v349 = vpop.permute.xlu0 %348
      %350 = vrot.lane.b32.xlu0 %v337, 126
      %v351 = vpop.permute.xlu0 %350
      %352 = vrot.lane.b32.xlu0 %v338, 126
      %v353 = vpop.permute.xlu0 %352
      %354 = vrot.lane.b32.xlu0 %v339, 126
      %v355 = vpop.permute.xlu0 %354
      %vm356 = vcmask 1031168
      %v357 = vsel %vm356, %v341, %v343
      %v358 = vsel %vm356, %v345, %v347
      %v359 = vsel %vm356, %v349, %v351
      %v360 = vsel %vm356, %v353, %v355
      %365 = vst [vmem:[#allocation2 + $0x40] sm:$0xff] %v357
      %366 = vst [vmem:[#allocation2 + $0x48] sm:$0xff] %v358
      %367 = vst [vmem:[#allocation2 + $0x50] sm:$0xff] %v359
      %368 = vst [vmem:[#allocation2 + $0x58] sm:$0xff] %v360
      %v369 = vld [vmem:[%s190] sm:$0xff]
      %v370 = vld [vmem:[%s190 + $0x8] sm:$0xff]
      %v371 = vld [vmem:[%s190 + $0x10] sm:$0xff]
      %v372 = vld [vmem:[%s190 + $0x18] sm:$0xff]
      %v373 = vld [vmem:[%s190 + $0x20] sm:$0xff]
      %v374 = vld [vmem:[%s190 + $0x28] sm:$0xff]
      %v375 = vld [vmem:[%s190 + $0x30] sm:$0xff]
      %v376 = vld [vmem:[%s190 + $0x38] sm:$0xff]
      %v385 = vunpack.c.l.b16 %v369
      %v386 = vunpack.c.h.b16 %v369
      %v387 = vunpack.c.l.b16 %v370
      %v388 = vunpack.c.h.b16 %v370
      %v389 = vunpack.c.l.b16 %v371
      %v390 = vunpack.c.h.b16 %v371
      %v391 = vunpack.c.l.b16 %v372
      %v392 = vunpack.c.h.b16 %v372
      %v393 = vunpack.c.l.b16 %v373
      %v394 = vunpack.c.h.b16 %v373
      %v395 = vunpack.c.l.b16 %v374
      %v396 = vunpack.c.h.b16 %v374
      %v397 = vunpack.c.l.b16 %v375
      %v398 = vunpack.c.h.b16 %v375
      %v399 = vunpack.c.l.b16 %v376
      %v400 = vunpack.c.h.b16 %v376
      %v401 = vpack.c.b16 %v387, %v385
      %v402 = vpack.c.b16 %v388, %v386
      %v403 = vpack.c.b16 %v391, %v389
      %v404 = vpack.c.b16 %v392, %v390
      %v405 = vpack.c.b16 %v395, %v393
      %v406 = vpack.c.b16 %v396, %v394
      %v407 = vpack.c.b16 %v399, %v397
      %v408 = vpack.c.b16 %v400, %v398
      %409 = vrot.lane.b32.xlu0 %v401, 125
      %v410 = vpop.permute.xlu0 %409
      %411 = vrot.lane.b32.xlu0 %v402, 125
      %v412 = vpop.permute.xlu0 %411
      %413 = vrot.lane.b32.xlu0 %v403, 125
      %v414 = vpop.permute.xlu0 %413
      %415 = vrot.lane.b32.xlu0 %v404, 125
      %v416 = vpop.permute.xlu0 %415
      %417 = vrot.lane.b32.xlu0 %v405, 125
      %v418 = vpop.permute.xlu0 %417
      %419 = vrot.lane.b32.xlu0 %v406, 125
      %v420 = vpop.permute.xlu0 %419
      %421 = vrot.lane.b32.xlu0 %v407, 125
      %v422 = vpop.permute.xlu0 %421
      %423 = vrot.lane.b32.xlu0 %v408, 125
      %v424 = vpop.permute.xlu0 %423
      %vm425 = vcmask 1022976
      %v426 = vsel %vm425, %v410, %v412
      %v427 = vsel %vm425, %v414, %v416
      %v428 = vsel %vm425, %v418, %v420
      %v429 = vsel %vm425, %v422, %v424
      %434 = vst [vmem:[#allocation2 + $0x60] sm:$0xff] %v426
      %435 = vst [vmem:[#allocation2 + $0x68] sm:$0xff] %v427
      %436 = vst [vmem:[#allocation2 + $0x70] sm:$0xff] %v428
      %437 = vst [vmem:[#allocation2 + $0x78] sm:$0xff] %v429
      %v438 = vld [vmem:[%s190] sm:$0xff]
      %v439 = vld [vmem:[%s190 + $0x8] sm:$0xff]
      %v440 = vld [vmem:[%s190 + $0x10] sm:$0xff]
      %v441 = vld [vmem:[%s190 + $0x18] sm:$0xff]
      %v442 = vld [vmem:[%s190 + $0x20] sm:$0xff]
      %v443 = vld [vmem:[%s190 + $0x28] sm:$0xff]
      %v444 = vld [vmem:[%s190 + $0x30] sm:$0xff]
      %v445 = vld [vmem:[%s190 + $0x38] sm:$0xff]
      %v454 = vunpack.c.l.b16 %v438
      %v455 = vunpack.c.h.b16 %v438
      %v456 = vunpack.c.l.b16 %v439
      %v457 = vunpack.c.h.b16 %v439
      %v458 = vunpack.c.l.b16 %v440
      %v459 = vunpack.c.h.b16 %v440
      %v460 = vunpack.c.l.b16 %v441
      %v461 = vunpack.c.h.b16 %v441
      %v462 = vunpack.c.l.b16 %v442
      %v463 = vunpack.c.h.b16 %v442
      %v464 = vunpack.c.l.b16 %v443
      %v465 = vunpack.c.h.b16 %v443
      %v466 = vunpack.c.l.b16 %v444
      %v467 = vunpack.c.h.b16 %v444
      %v468 = vunpack.c.l.b16 %v445
      %v469 = vunpack.c.h.b16 %v445
      %v470 = vpack.c.b16 %v456, %v454
      %v471 = vpack.c.b16 %v457, %v455
      %v472 = vpack.c.b16 %v460, %v458
      %v473 = vpack.c.b16 %v461, %v459
      %v474 = vpack.c.b16 %v464, %v462
      %v475 = vpack.c.b16 %v465, %v463
      %v476 = vpack.c.b16 %v468, %v466
      %v477 = vpack.c.b16 %v469, %v467
      %478 = vrot.lane.b32.xlu0 %v470, 123
      %v479 = vpop.permute.xlu0 %478
      %480 = vrot.lane.b32.xlu0 %v471, 123
      %v481 = vpop.permute.xlu0 %480
      %482 = vrot.lane.b32.xlu0 %v472, 123
      %v483 = vpop.permute.xlu0 %482
      %484 = vrot.lane.b32.xlu0 %v473, 123
      %v485 = vpop.permute.xlu0 %484
      %486 = vrot.lane.b32.xlu0 %v474, 123
      %v487 = vpop.permute.xlu0 %486
      %488 = vrot.lane.b32.xlu0 %v475, 123
      %v489 = vpop.permute.xlu0 %488
      %490 = vrot.lane.b32.xlu0 %v476, 123
      %v491 = vpop.permute.xlu0 %490
      %492 = vrot.lane.b32.xlu0 %v477, 123
      %v493 = vpop.permute.xlu0 %492
      %vm494 = vcmask 1006592
      %v495 = vsel %vm494, %v479, %v481
      %v496 = vsel %vm494, %v483, %v485
      %v497 = vsel %vm494, %v487, %v489
      %v498 = vsel %vm494, %v491, %v493
      %503 = vst [vmem:[#allocation2 + $0x80] sm:$0xff] %v495
      %504 = vst [vmem:[#allocation2 + $0x88] sm:$0xff] %v496
      %505 = vst [vmem:[#allocation2 + $0x90] sm:$0xff] %v497
      %506 = vst [vmem:[#allocation2 + $0x98] sm:$0xff] %v498
      %v507 = vld [vmem:[%s190] sm:$0xff]
      %v508 = vld [vmem:[%s190 + $0x8] sm:$0xff]
      %v509 = vld [vmem:[%s190 + $0x10] sm:$0xff]
      %v510 = vld [vmem:[%s190 + $0x18] sm:$0xff]
      %v511 = vld [vmem:[%s190 + $0x20] sm:$0xff]
      %v512 = vld [vmem:[%s190 + $0x28] sm:$0xff]
      %v513 = vld [vmem:[%s190 + $0x30] sm:$0xff]
      %v514 = vld [vmem:[%s190 + $0x38] sm:$0xff]
      %v523 = vunpack.c.l.b16 %v507
      %v524 = vunpack.c.h.b16 %v507
      %v525 = vunpack.c.l.b16 %v508
      %v526 = vunpack.c.h.b16 %v508
      %v527 = vunpack.c.l.b16 %v509
      %v528 = vunpack.c.h.b16 %v509
      %v529 = vunpack.c.l.b16 %v510
      %v530 = vunpack.c.h.b16 %v510
      %v531 = vunpack.c.l.b16 %v511
      %v532 = vunpack.c.h.b16 %v511
      %v533 = vunpack.c.l.b16 %v512
      %v534 = vunpack.c.h.b16 %v512
      %v535 = vunpack.c.l.b16 %v513
      %v536 = vunpack.c.h.b16 %v513
      %v537 = vunpack.c.l.b16 %v514
      %v538 = vunpack.c.h.b16 %v514
      %v539 = vpack.c.b16 %v525, %v523
      %v540 = vpack.c.b16 %v526, %v524
      %v541 = vpack.c.b16 %v529, %v527
      %v542 = vpack.c.b16 %v530, %v528
      %v543 = vpack.c.b16 %v533, %v531
      %v544 = vpack.c.b16 %v534, %v532
      %v545 = vpack.c.b16 %v537, %v535
      %v546 = vpack.c.b16 %v538, %v536
      %547 = vrot.lane.b32.xlu0 %v539, 122
      %v548 = vpop.permute.xlu0 %547
      %549 = vrot.lane.b32.xlu0 %v540, 122
      %v550 = vpop.permute.xlu0 %549
      %551 = vrot.lane.b32.xlu0 %v541, 122
      %v552 = vpop.permute.xlu0 %551
      %553 = vrot.lane.b32.xlu0 %v542, 122
      %v554 = vpop.permute.xlu0 %553
      %555 = vrot.lane.b32.xlu0 %v543, 122
      %v556 = vpop.permute.xlu0 %555
      %557 = vrot.lane.b32.xlu0 %v544, 122
      %v558 = vpop.permute.xlu0 %557
      %559 = vrot.lane.b32.xlu0 %v545, 122
      %v560 = vpop.permute.xlu0 %559
      %561 = vrot.lane.b32.xlu0 %v546, 122
      %v562 = vpop.permute.xlu0 %561
      %vm563 = vcmask 998400
      %v564 = vsel %vm563, %v548, %v550
      %v565 = vsel %vm563, %v552, %v554
      %v566 = vsel %vm563, %v556, %v558
      %v567 = vsel %vm563, %v560, %v562
      %572 = vst [vmem:[#allocation2 + $0xa0] sm:$0xff] %v564
      %573 = vst [vmem:[#allocation2 + $0xa8] sm:$0xff] %v565
      %574 = vst [vmem:[#allocation2 + $0xb0] sm:$0xff] %v566
      %575 = vst [vmem:[#allocation2 + $0xb8] sm:$0xff] %v567
      %v576 = vld [vmem:[%s190] sm:$0xff]
      %v577 = vld [vmem:[%s190 + $0x8] sm:$0xff]
      %v578 = vld [vmem:[%s190 + $0x10] sm:$0xff]
      %v579 = vld [vmem:[%s190 + $0x18] sm:$0xff]
      %v580 = vld [vmem:[%s190 + $0x20] sm:$0xff]
      %v581 = vld [vmem:[%s190 + $0x28] sm:$0xff]
      %v582 = vld [vmem:[%s190 + $0x30] sm:$0xff]
      %v583 = vld [vmem:[%s190 + $0x38] sm:$0xff]
      %v592 = vunpack.c.l.b16 %v576
      %v593 = vunpack.c.h.b16 %v576
      %v594 = vunpack.c.l.b16 %v577
      %v595 = vunpack.c.h.b16 %v577
      %v596 = vunpack.c.l.b16 %v578
      %v597 = vunpack.c.h.b16 %v578
      %v598 = vunpack.c.l.b16 %v579
      %v599 = vunpack.c.h.b16 %v579
      %v600 = vunpack.c.l.b16 %v580
      %v601 = vunpack.c.h.b16 %v580
      %v602 = vunpack.c.l.b16 %v581
      %v603 = vunpack.c.h.b16 %v581
      %v604 = vunpack.c.l.b16 %v582
      %v605 = vunpack.c.h.b16 %v582
      %v606 = vunpack.c.l.b16 %v583
      %v607 = vunpack.c.h.b16 %v583
      %v608 = vpack.c.b16 %v594, %v592
      %v609 = vpack.c.b16 %v595, %v593
      %v610 = vpack.c.b16 %v598, %v596
      %v611 = vpack.c.b16 %v599, %v597
      %v612 = vpack.c.b16 %v602, %v600
      %v613 = vpack.c.b16 %v603, %v601
      %v614 = vpack.c.b16 %v606, %v604
      %v615 = vpack.c.b16 %v607, %v605
      %616 = vrot.lane.b32.xlu0 %v608, 121
      %v617 = vpop.permute.xlu0 %616
      %618 = vrot.lane.b32.xlu0 %v609, 121
      %v619 = vpop.permute.xlu0 %618
      %620 = vrot.lane.b32.xlu0 %v610, 121
      %v621 = vpop.permute.xlu0 %620
      %622 = vrot.lane.b32.xlu0 %v611, 121
      %v623 = vpop.permute.xlu0 %622
      %624 = vrot.lane.b32.xlu0 %v612, 121
      %v625 = vpop.permute.xlu0 %624
      %626 = vrot.lane.b32.xlu0 %v613, 121
      %v627 = vpop.permute.xlu0 %626
      %628 = vrot.lane.b32.xlu0 %v614, 121
      %v629 = vpop.permute.xlu0 %628
      %630 = vrot.lane.b32.xlu0 %v615, 121
      %v631 = vpop.permute.xlu0 %630
      %vm632 = vcmask 990208
      %v633 = vsel %vm632, %v617, %v619
      %v634 = vsel %vm632, %v621, %v623
      %v635 = vsel %vm632, %v625, %v627
      %v636 = vsel %vm632, %v629, %v631
      %641 = vst [vmem:[#allocation2 + $0xc0] sm:$0xff] %v633
      %642 = vst [vmem:[#allocation2 + $0xc8] sm:$0xff] %v634
      %643 = vst [vmem:[#allocation2 + $0xd0] sm:$0xff] %v635
      %644 = vst [vmem:[#allocation2 + $0xd8] sm:$0xff] %v636
      %v645 = vld [vmem:[%s190] sm:$0xff]
      %v646 = vld [vmem:[%s190 + $0x8] sm:$0xff]
      %v647 = vld [vmem:[%s190 + $0x10] sm:$0xff]
      %v648 = vld [vmem:[%s190 + $0x18] sm:$0xff]
      %v649 = vld [vmem:[%s190 + $0x20] sm:$0xff]
      %v650 = vld [vmem:[%s190 + $0x28] sm:$0xff]
      %v651 = vld [vmem:[%s190 + $0x30] sm:$0xff]
      %v652 = vld [vmem:[%s190 + $0x38] sm:$0xff]
      %v661 = vunpack.c.l.b16 %v645
      %v662 = vunpack.c.h.b16 %v645
      %v663 = vunpack.c.l.b16 %v646
      %v664 = vunpack.c.h.b16 %v646
      %v665 = vunpack.c.l.b16 %v647
      %v666 = vunpack.c.h.b16 %v647
      %v667 = vunpack.c.l.b16 %v648
      %v668 = vunpack.c.h.b16 %v648
      %v669 = vunpack.c.l.b16 %v649
      %v670 = vunpack.c.h.b16 %v649
      %v671 = vunpack.c.l.b16 %v650
      %v672 = vunpack.c.h.b16 %v650
      %v673 = vunpack.c.l.b16 %v651
      %v674 = vunpack.c.h.b16 %v651
      %v675 = vunpack.c.l.b16 %v652
      %v676 = vunpack.c.h.b16 %v652
      %v677 = vpack.c.b16 %v663, %v661
      %v678 = vpack.c.b16 %v664, %v662
      %v679 = vpack.c.b16 %v667, %v665
      %v680 = vpack.c.b16 %v668, %v666
      %v681 = vpack.c.b16 %v671, %v669
      %v682 = vpack.c.b16 %v672, %v670
      %v683 = vpack.c.b16 %v675, %v673
      %v684 = vpack.c.b16 %v676, %v674
      %685 = vrot.lane.b32.xlu0 %v677, 120
      %v686 = vpop.permute.xlu0 %685
      %687 = vrot.lane.b32.xlu0 %v678, 120
      %v688 = vpop.permute.xlu0 %687
      %689 = vrot.lane.b32.xlu0 %v679, 120
      %v690 = vpop.permute.xlu0 %689
      %691 = vrot.lane.b32.xlu0 %v680, 120
      %v692 = vpop.permute.xlu0 %691
      %693 = vrot.lane.b32.xlu0 %v681, 120
      %v694 = vpop.permute.xlu0 %693
      %695 = vrot.lane.b32.xlu0 %v682, 120
      %v696 = vpop.permute.xlu0 %695
      %697 = vrot.lane.b32.xlu0 %v683, 120
      %v698 = vpop.permute.xlu0 %697
      %699 = vrot.lane.b32.xlu0 %v684, 120
      %v700 = vpop.permute.xlu0 %699
      %vm701 = vcmask 982016
      %v702 = vsel %vm701, %v686, %v688
      %v703 = vsel %vm701, %v690, %v692
      %v704 = vsel %vm701, %v694, %v696
      %v705 = vsel %vm701, %v698, %v700
      %710 = vst [vmem:[#allocation2 + $0xe0] sm:$0xff] %v702
      %711 = vst [vmem:[#allocation2 + $0xe8] sm:$0xff] %v703
      %712 = vst [vmem:[#allocation2 + $0xf0] sm:$0xff] %v704
      %713 = vst [vmem:[#allocation2 + $0xf8] sm:$0xff] %v705
      %v714 = vld [vmem:[%s190] sm:$0xff]
      %v715 = vld [vmem:[%s190 + $0x8] sm:$0xff]
      %v716 = vld [vmem:[%s190 + $0x10] sm:$0xff]
      %v717 = vld [vmem:[%s190 + $0x18] sm:$0xff]
      %v718 = vld [vmem:[%s190 + $0x20] sm:$0xff]
      %v719 = vld [vmem:[%s190 + $0x28] sm:$0xff]
      %v720 = vld [vmem:[%s190 + $0x30] sm:$0xff]
      %v721 = vld [vmem:[%s190 + $0x38] sm:$0xff]
      %v730 = vunpack.c.l.b16 %v714
      %v731 = vunpack.c.h.b16 %v714
      %v732 = vunpack.c.l.b16 %v715
      %v733 = vunpack.c.h.b16 %v715
      %v734 = vunpack.c.l.b16 %v716
      %v735 = vunpack.c.h.b16 %v716
      %v736 = vunpack.c.l.b16 %v717
      %v737 = vunpack.c.h.b16 %v717
      %v738 = vunpack.c.l.b16 %v718
      %v739 = vunpack.c.h.b16 %v718
      %v740 = vunpack.c.l.b16 %v719
      %v741 = vunpack.c.h.b16 %v719
      %v742 = vunpack.c.l.b16 %v720
      %v743 = vunpack.c.h.b16 %v720
      %v744 = vunpack.c.l.b16 %v721
      %v745 = vunpack.c.h.b16 %v721
      %v746 = vpack.c.b16 %v732, %v730
      %v747 = vpack.c.b16 %v733, %v731
      %v748 = vpack.c.b16 %v736, %v734
      %v749 = vpack.c.b16 %v737, %v735
      %v750 = vpack.c.b16 %v740, %v738
      %v751 = vpack.c.b16 %v741, %v739
      %v752 = vpack.c.b16 %v744, %v742
      %v753 = vpack.c.b16 %v745, %v743
      %754 = vrot.lane.b32.xlu0 %v746, 118
      %v755 = vpop.permute.xlu0 %754
      %756 = vrot.lane.b32.xlu0 %v747, 118
      %v757 = vpop.permute.xlu0 %756
      %758 = vrot.lane.b32.xlu0 %v748, 118
      %v759 = vpop.permute.xlu0 %758
      %760 = vrot.lane.b32.xlu0 %v749, 118
      %v761 = vpop.permute.xlu0 %760
      %762 = vrot.lane.b32.xlu0 %v750, 118
      %v763 = vpop.permute.xlu0 %762
      %764 = vrot.lane.b32.xlu0 %v751, 118
      %v765 = vpop.permute.xlu0 %764
      %766 = vrot.lane.b32.xlu0 %v752, 118
      %v767 = vpop.permute.xlu0 %766
      %768 = vrot.lane.b32.xlu0 %v753, 118
      %v769 = vpop.permute.xlu0 %768
      %vm770 = vcmask 965632
      %v771 = vsel %vm770, %v755, %v757
      %v772 = vsel %vm770, %v759, %v761
      %v773 = vsel %vm770, %v763, %v765
      %v774 = vsel %vm770, %v767, %v769
      %779 = vst [vmem:[#allocation2 + $0x100] sm:$0xff] %v771
      %780 = vst [vmem:[#allocation2 + $0x108] sm:$0xff] %v772
      %781 = vst [vmem:[#allocation2 + $0x110] sm:$0xff] %v773
      %782 = vst [vmem:[#allocation2 + $0x118] sm:$0xff] %v774
      %v783 = vld [vmem:[%s190] sm:$0xff]
      %v784 = vld [vmem:[%s190 + $0x8] sm:$0xff]
      %v785 = vld [vmem:[%s190 + $0x10] sm:$0xff]
      %v786 = vld [vmem:[%s190 + $0x18] sm:$0xff]
      %v787 = vld [vmem:[%s190 + $0x20] sm:$0xff]
      %v788 = vld [vmem:[%s190 + $0x28] sm:$0xff]
      %v789 = vld [vmem:[%s190 + $0x30] sm:$0xff]
      %v790 = vld [vmem:[%s190 + $0x38] sm:$0xff]
      %v799 = vunpack.c.l.b16 %v783
      %v800 = vunpack.c.h.b16 %v783
      %v801 = vunpack.c.l.b16 %v784
      %v802 = vunpack.c.h.b16 %v784
      %v803 = vunpack.c.l.b16 %v785
      %v804 = vunpack.c.h.b16 %v785
      %v805 = vunpack.c.l.b16 %v786
      %v806 = vunpack.c.h.b16 %v786
      %v807 = vunpack.c.l.b16 %v787
      %v808 = vunpack.c.h.b16 %v787
      %v809 = vunpack.c.l.b16 %v788
      %v810 = vunpack.c.h.b16 %v788
      %v811 = vunpack.c.l.b16 %v789
      %v812 = vunpack.c.h.b16 %v789
      %v813 = vunpack.c.l.b16 %v790
      %v814 = vunpack.c.h.b16 %v790
      %v815 = vpack.c.b16 %v801, %v799
      %v816 = vpack.c.b16 %v802, %v800
      %v817 = vpack.c.b16 %v805, %v803
      %v818 = vpack.c.b16 %v806, %v804
      %v819 = vpack.c.b16 %v809, %v807
      %v820 = vpack.c.b16 %v810, %v808
      %v821 = vpack.c.b16 %v813, %v811
      %v822 = vpack.c.b16 %v814, %v812
      %823 = vrot.lane.b32.xlu0 %v815, 117
      %v824 = vpop.permute.xlu0 %823
      %825 = vrot.lane.b32.xlu0 %v816, 117
      %v826 = vpop.permute.xlu0 %825
      %827 = vrot.lane.b32.xlu0 %v817, 117
      %v828 = vpop.permute.xlu0 %827
      %829 = vrot.lane.b32.xlu0 %v818, 117
      %v830 = vpop.permute.xlu0 %829
      %831 = vrot.lane.b32.xlu0 %v819, 117
      %v832 = vpop.permute.xlu0 %831
      %833 = vrot.lane.b32.xlu0 %v820, 117
      %v834 = vpop.permute.xlu0 %833
      %835 = vrot.lane.b32.xlu0 %v821, 117
      %v836 = vpop.permute.xlu0 %835
      %837 = vrot.lane.b32.xlu0 %v822, 117
      %v838 = vpop.permute.xlu0 %837
      %vm839 = vcmask 957440
      %v840 = vsel %vm839, %v824, %v826
      %v841 = vsel %vm839, %v828, %v830
      %v842 = vsel %vm839, %v832, %v834
      %v843 = vsel %vm839, %v836, %v838
      %848 = vst [vmem:[#allocation2 + $0x120] sm:$0xff] %v840
      %849 = vst [vmem:[#allocation2 + $0x128] sm:$0xff] %v841
      %850 = vst [vmem:[#allocation2 + $0x130] sm:$0xff] %v842
      %851 = vst [vmem:[#allocation2 + $0x138] sm:$0xff] %v843
      %v852 = vld [vmem:[%s190] sm:$0xff]
      %v853 = vld [vmem:[%s190 + $0x8] sm:$0xff]
      %v854 = vld [vmem:[%s190 + $0x10] sm:$0xff]
      %v855 = vld [vmem:[%s190 + $0x18] sm:$0xff]
      %v856 = vld [vmem:[%s190 + $0x20] sm:$0xff]
      %v857 = vld [vmem:[%s190 + $0x28] sm:$0xff]
      %v858 = vld [vmem:[%s190 + $0x30] sm:$0xff]
      %v859 = vld [vmem:[%s190 + $0x38] sm:$0xff]
      %v868 = vunpack.c.l.b16 %v852
      %v869 = vunpack.c.h.b16 %v852
      %v870 = vunpack.c.l.b16 %v853
      %v871 = vunpack.c.h.b16 %v853
      %v872 = vunpack.c.l.b16 %v854
      %v873 = vunpack.c.h.b16 %v854
      %v874 = vunpack.c.l.b16 %v855
      %v875 = vunpack.c.h.b16 %v855
      %v876 = vunpack.c.l.b16 %v856
      %v877 = vunpack.c.h.b16 %v856
      %v878 = vunpack.c.l.b16 %v857
      %v879 = vunpack.c.h.b16 %v857
      %v880 = vunpack.c.l.b16 %v858
      %v881 = vunpack.c.h.b16 %v858
      %v882 = vunpack.c.l.b16 %v859
      %v883 = vunpack.c.h.b16 %v859
      %v884 = vpack.c.b16 %v870, %v868
      %v885 = vpack.c.b16 %v871, %v869
      %v886 = vpack.c.b16 %v874, %v872
      %v887 = vpack.c.b16 %v875, %v873
      %v888 = vpack.c.b16 %v878, %v876
      %v889 = vpack.c.b16 %v879, %v877
      %v890 = vpack.c.b16 %v882, %v880
      %v891 = vpack.c.b16 %v883, %v881
      %892 = vrot.lane.b32.xlu0 %v884, 116
      %v893 = vpop.permute.xlu0 %892
      %894 = vrot.lane.b32.xlu0 %v885, 116
      %v895 = vpop.permute.xlu0 %894
      %896 = vrot.lane.b32.xlu0 %v886, 116
      %v897 = vpop.permute.xlu0 %896
      %898 = vrot.lane.b32.xlu0 %v887, 116
      %v899 = vpop.permute.xlu0 %898
      %900 = vrot.lane.b32.xlu0 %v888, 116
      %v901 = vpop.permute.xlu0 %900
      %902 = vrot.lane.b32.xlu0 %v889, 116
      %v903 = vpop.permute.xlu0 %902
      %904 = vrot.lane.b32.xlu0 %v890, 116
      %v905 = vpop.permute.xlu0 %904
      %906 = vrot.lane.b32.xlu0 %v891, 116
      %v907 = vpop.permute.xlu0 %906
      %vm908 = vcmask 949248
      %v909 = vsel %vm908, %v893, %v895
      %v910 = vsel %vm908, %v897, %v899
      %v911 = vsel %vm908, %v901, %v903
      %v912 = vsel %vm908, %v905, %v907
      %917 = vst [vmem:[#allocation2 + $0x140] sm:$0xff] %v909
      %918 = vst [vmem:[#allocation2 + $0x148] sm:$0xff] %v910
      %919 = vst [vmem:[#allocation2 + $0x150] sm:$0xff] %v911
      %920 = vst [vmem:[#allocation2 + $0x158] sm:$0xff] %v912
      %v921 = vld [vmem:[%s190] sm:$0xff]
      %v922 = vld [vmem:[%s190 + $0x8] sm:$0xff]
      %v923 = vld [vmem:[%s190 + $0x10] sm:$0xff]
      %v924 = vld [vmem:[%s190 + $0x18] sm:$0xff]
      %v925 = vld [vmem:[%s190 + $0x20] sm:$0xff]
      %v926 = vld [vmem:[%s190 + $0x28] sm:$0xff]
      %v927 = vld [vmem:[%s190 + $0x30] sm:$0xff]
      %v928 = vld [vmem:[%s190 + $0x38] sm:$0xff]
      %v937 = vunpack.c.l.b16 %v921
      %v938 = vunpack.c.h.b16 %v921
      %v939 = vunpack.c.l.b16 %v922
      %v940 = vunpack.c.h.b16 %v922
      %v941 = vunpack.c.l.b16 %v923
      %v942 = vunpack.c.h.b16 %v923
      %v943 = vunpack.c.l.b16 %v924
      %v944 = vunpack.c.h.b16 %v924
      %v945 = vunpack.c.l.b16 %v925
      %v946 = vunpack.c.h.b16 %v925
      %v947 = vunpack.c.l.b16 %v926
      %v948 = vunpack.c.h.b16 %v926
      %v949 = vunpack.c.l.b16 %v927
      %v950 = vunpack.c.h.b16 %v927
      %v951 = vunpack.c.l.b16 %v928
      %v952 = vunpack.c.h.b16 %v928
      %v953 = vpack.c.b16 %v939, %v937
      %v954 = vpack.c.b16 %v940, %v938
      %v955 = vpack.c.b16 %v943, %v941
      %v956 = vpack.c.b16 %v944, %v942
      %v957 = vpack.c.b16 %v947, %v945
      %v958 = vpack.c.b16 %v948, %v946
      %v959 = vpack.c.b16 %v951, %v949
      %v960 = vpack.c.b16 %v952, %v950
      %961 = vrot.lane.b32.xlu0 %v953, 115
      %v962 = vpop.permute.xlu0 %961
      %963 = vrot.lane.b32.xlu0 %v954, 115
      %v964 = vpop.permute.xlu0 %963
      %965 = vrot.lane.b32.xlu0 %v955, 115
      %v966 = vpop.permute.xlu0 %965
      %967 = vrot.lane.b32.xlu0 %v956, 115
      %v968 = vpop.permute.xlu0 %967
      %969 = vrot.lane.b32.xlu0 %v957, 115
      %v970 = vpop.permute.xlu0 %969
      %971 = vrot.lane.b32.xlu0 %v958, 115
      %v972 = vpop.permute.xlu0 %971
      %973 = vrot.lane.b32.xlu0 %v959, 115
      %v974 = vpop.permute.xlu0 %973
      %975 = vrot.lane.b32.xlu0 %v960, 115
      %v976 = vpop.permute.xlu0 %975
      %vm977 = vcmask 941056
      %v978 = vsel %vm977, %v962, %v964
      %v979 = vsel %vm977, %v966, %v968
      %v980 = vsel %vm977, %v970, %v972
      %v981 = vsel %vm977, %v974, %v976
      %986 = vst [vmem:[#allocation2 + $0x160] sm:$0xff] %v978
      %987 = vst [vmem:[#allocation2 + $0x168] sm:$0xff] %v979
      %988 = vst [vmem:[#allocation2 + $0x170] sm:$0xff] %v980
      %989 = vst [vmem:[#allocation2 + $0x178] sm:$0xff] %v981
      %v990 = vld [vmem:[%s190] sm:$0xff]
      %v991 = vld [vmem:[%s190 + $0x8] sm:$0xff]
      %v992 = vld [vmem:[%s190 + $0x10] sm:$0xff]
      %v993 = vld [vmem:[%s190 + $0x18] sm:$0xff]
      %v994 = vld [vmem:[%s190 + $0x20] sm:$0xff]
      %v995 = vld [vmem:[%s190 + $0x28] sm:$0xff]
      %v996 = vld [vmem:[%s190 + $0x30] sm:$0xff]
      %v997 = vld [vmem:[%s190 + $0x38] sm:$0xff]
      %v1006 = vunpack.c.l.b16 %v990
      %v1007 = vunpack.c.h.b16 %v990
      %v1008 = vunpack.c.l.b16 %v991
      %v1009 = vunpack.c.h.b16 %v991
      %v1010 = vunpack.c.l.b16 %v992
      %v1011 = vunpack.c.h.b16 %v992
      %v1012 = vunpack.c.l.b16 %v993
      %v1013 = vunpack.c.h.b16 %v993
      %v1014 = vunpack.c.l.b16 %v994
      %v1015 = vunpack.c.h.b16 %v994
      %v1016 = vunpack.c.l.b16 %v995
      %v1017 = vunpack.c.h.b16 %v995
      %v1018 = vunpack.c.l.b16 %v996
      %v1019 = vunpack.c.h.b16 %v996
      %v1020 = vunpack.c.l.b16 %v997
      %v1021 = vunpack.c.h.b16 %v997
      %v1022 = vpack.c.b16 %v1008, %v1006
      %v1023 = vpack.c.b16 %v1009, %v1007
      %v1024 = vpack.c.b16 %v1012, %v1010
      %v1025 = vpack.c.b16 %v1013, %v1011
      %v1026 = vpack.c.b16 %v1016, %v1014
      %v1027 = vpack.c.b16 %v1017, %v1015
      %v1028 = vpack.c.b16 %v1020, %v1018
      %v1029 = vpack.c.b16 %v1021, %v1019
      %1030 = vrot.lane.b32.xlu0 %v1022, 113
      %v1031 = vpop.permute.xlu0 %1030
      %1032 = vrot.lane.b32.xlu0 %v1023, 113
      %v1033 = vpop.permute.xlu0 %1032
      %1034 = vrot.lane.b32.xlu0 %v1024, 113
      %v1035 = vpop.permute.xlu0 %1034
      %1036 = vrot.lane.b32.xlu0 %v1025, 113
      %v1037 = vpop.permute.xlu0 %1036
      %1038 = vrot.lane.b32.xlu0 %v1026, 113
      %v1039 = vpop.permute.xlu0 %1038
      %1040 = vrot.lane.b32.xlu0 %v1027, 113
      %v1041 = vpop.permute.xlu0 %1040
      %1042 = vrot.lane.b32.xlu0 %v1028, 113
      %v1043 = vpop.permute.xlu0 %1042
      %1044 = vrot.lane.b32.xlu0 %v1029, 113
      %v1045 = vpop.permute.xlu0 %1044
      %vm1046 = vcmask 924672
      %v1047 = vsel %vm1046, %v1031, %v1033
      %v1048 = vsel %vm1046, %v1035, %v1037
      %v1049 = vsel %vm1046, %v1039, %v1041
      %v1050 = vsel %vm1046, %v1043, %v1045
      %1055 = vst [vmem:[#allocation2 + $0x180] sm:$0xff] %v1047
      %1056 = vst [vmem:[#allocation2 + $0x188] sm:$0xff] %v1048
      %1057 = vst [vmem:[#allocation2 + $0x190] sm:$0xff] %v1049
      %1058 = vst [vmem:[#allocation2 + $0x198] sm:$0xff] %v1050
      %v1059 = vld [vmem:[%s190] sm:$0xff]
      %v1060 = vld [vmem:[%s190 + $0x8] sm:$0xff]
      %v1061 = vld [vmem:[%s190 + $0x10] sm:$0xff]
      %v1062 = vld [vmem:[%s190 + $0x18] sm:$0xff]
      %v1063 = vld [vmem:[%s190 + $0x20] sm:$0xff]
      %v1064 = vld [vmem:[%s190 + $0x28] sm:$0xff]
      %v1065 = vld [vmem:[%s190 + $0x30] sm:$0xff]
      %v1066 = vld [vmem:[%s190 + $0x38] sm:$0xff]
      %v1075 = vunpack.c.l.b16 %v1059
      %v1076 = vunpack.c.h.b16 %v1059
      %v1077 = vunpack.c.l.b16 %v1060
      %v1078 = vunpack.c.h.b16 %v1060
      %v1079 = vunpack.c.l.b16 %v1061
      %v1080 = vunpack.c.h.b16 %v1061
      %v1081 = vunpack.c.l.b16 %v1062
      %v1082 = vunpack.c.h.b16 %v1062
      %v1083 = vunpack.c.l.b16 %v1063
      %v1084 = vunpack.c.h.b16 %v1063
      %v1085 = vunpack.c.l.b16 %v1064
      %v1086 = vunpack.c.h.b16 %v1064
      %v1087 = vunpack.c.l.b16 %v1065
      %v1088 = vunpack.c.h.b16 %v1065
      %v1089 = vunpack.c.l.b16 %v1066
      %v1090 = vunpack.c.h.b16 %v1066
      %v1091 = vpack.c.b16 %v1077, %v1075
      %v1092 = vpack.c.b16 %v1078, %v1076
      %v1093 = vpack.c.b16 %v1081, %v1079
      %v1094 = vpack.c.b16 %v1082, %v1080
      %v1095 = vpack.c.b16 %v1085, %v1083
      %v1096 = vpack.c.b16 %v1086, %v1084
      %v1097 = vpack.c.b16 %v1089, %v1087
      %v1098 = vpack.c.b16 %v1090, %v1088
      %1099 = vrot.lane.b32.xlu0 %v1091, 112
      %v1100 = vpop.permute.xlu0 %1099
      %1101 = vrot.lane.b32.xlu0 %v1092, 112
      %v1102 = vpop.permute.xlu0 %1101
      %1103 = vrot.lane.b32.xlu0 %v1093, 112
      %v1104 = vpop.permute.xlu0 %1103
      %1105 = vrot.lane.b32.xlu0 %v1094, 112
      %v1106 = vpop.permute.xlu0 %1105
      %1107 = vrot.lane.b32.xlu0 %v1095, 112
      %v1108 = vpop.permute.xlu0 %1107
      %1109 = vrot.lane.b32.xlu0 %v1096, 112
      %v1110 = vpop.permute.xlu0 %1109
      %1111 = vrot.lane.b32.xlu0 %v1097, 112
      %v1112 = vpop.permute.xlu0 %1111
      %1113 = vrot.lane.b32.xlu0 %v1098, 112
      %v1114 = vpop.permute.xlu0 %1113
      %vm1115 = vcmask 916480
      %v1116 = vsel %vm1115, %v1100, %v1102
      %v1117 = vsel %vm1115, %v1104, %v1106
      %v1118 = vsel %vm1115, %v1108, %v1110
      %v1119 = vsel %vm1115, %v1112, %v1114
      %1124 = vst [vmem:[#allocation2 + $0x1a0] sm:$0xff] %v1116
      %1125 = vst [vmem:[#allocation2 + $0x1a8] sm:$0xff] %v1117
      %1126 = vst [vmem:[#allocation2 + $0x1b0] sm:$0xff] %v1118
      %1127 = vst [vmem:[#allocation2 + $0x1b8] sm:$0xff] %v1119
      %v1128 = vld [vmem:[%s190] sm:$0xff]
      %v1129 = vld [vmem:[%s190 + $0x8] sm:$0xff]
      %v1130 = vld [vmem:[%s190 + $0x10] sm:$0xff]
      %v1131 = vld [vmem:[%s190 + $0x18] sm:$0xff]
      %v1132 = vld [vmem:[%s190 + $0x20] sm:$0xff]
      %v1133 = vld [vmem:[%s190 + $0x28] sm:$0xff]
      %v1134 = vld [vmem:[%s190 + $0x30] sm:$0xff]
      %v1135 = vld [vmem:[%s190 + $0x38] sm:$0xff]
      %v1144 = vunpack.c.l.b16 %v1128
      %v1145 = vunpack.c.h.b16 %v1128
      %v1146 = vunpack.c.l.b16 %v1129
      %v1147 = vunpack.c.h.b16 %v1129
      %v1148 = vunpack.c.l.b16 %v1130
      %v1149 = vunpack.c.h.b16 %v1130
      %v1150 = vunpack.c.l.b16 %v1131
      %v1151 = vunpack.c.h.b16 %v1131
      %v1152 = vunpack.c.l.b16 %v1132
      %v1153 = vunpack.c.h.b16 %v1132
      %v1154 = vunpack.c.l.b16 %v1133
      %v1155 = vunpack.c.h.b16 %v1133
      %v1156 = vunpack.c.l.b16 %v1134
      %v1157 = vunpack.c.h.b16 %v1134
      %v1158 = vunpack.c.l.b16 %v1135
      %v1159 = vunpack.c.h.b16 %v1135
      %v1160 = vpack.c.b16 %v1146, %v1144
      %v1161 = vpack.c.b16 %v1147, %v1145
      %v1162 = vpack.c.b16 %v1150, %v1148
      %v1163 = vpack.c.b16 %v1151, %v1149
      %v1164 = vpack.c.b16 %v1154, %v1152
      %v1165 = vpack.c.b16 %v1155, %v1153
      %v1166 = vpack.c.b16 %v1158, %v1156
      %v1167 = vpack.c.b16 %v1159, %v1157
      %1168 = vrot.lane.b32.xlu0 %v1160, 111
      %v1169 = vpop.permute.xlu0 %1168
      %1170 = vrot.lane.b32.xlu0 %v1161, 111
      %v1171 = vpop.permute.xlu0 %1170
      %1172 = vrot.lane.b32.xlu0 %v1162, 111
      %v1173 = vpop.permute.xlu0 %1172
      %1174 = vrot.lane.b32.xlu0 %v1163, 111
      %v1175 = vpop.permute.xlu0 %1174
      %1176 = vrot.lane.b32.xlu0 %v1164, 111
      %v1177 = vpop.permute.xlu0 %1176
      %1178 = vrot.lane.b32.xlu0 %v1165, 111
      %v1179 = vpop.permute.xlu0 %1178
      %1180 = vrot.lane.b32.xlu0 %v1166, 111
      %v1181 = vpop.permute.xlu0 %1180
      %1182 = vrot.lane.b32.xlu0 %v1167, 111
      %v1183 = vpop.permute.xlu0 %1182
      %vm1184 = vcmask 908288
      %v1185 = vsel %vm1184, %v1169, %v1171
      %v1186 = vsel %vm1184, %v1173, %v1175
      %v1187 = vsel %vm1184, %v1177, %v1179
      %v1188 = vsel %vm1184, %v1181, %v1183
      %1193 = vst [vmem:[#allocation2 + $0x1c0] sm:$0xff] %v1185
      %1194 = vst [vmem:[#allocation2 + $0x1c8] sm:$0xff] %v1186
      %1195 = vst [vmem:[#allocation2 + $0x1d0] sm:$0xff] %v1187
      %1196 = vst [vmem:[#allocation2 + $0x1d8] sm:$0xff] %v1188
      %v1197 = vld [vmem:[%s190] sm:$0xff]
      %v1198 = vld [vmem:[%s190 + $0x8] sm:$0xff]
      %v1199 = vld [vmem:[%s190 + $0x10] sm:$0xff]
      %v1200 = vld [vmem:[%s190 + $0x18] sm:$0xff]
      %v1201 = vld [vmem:[%s190 + $0x20] sm:$0xff]
      %v1202 = vld [vmem:[%s190 + $0x28] sm:$0xff]
      %v1203 = vld [vmem:[%s190 + $0x30] sm:$0xff]
      %v1204 = vld [vmem:[%s190 + $0x38] sm:$0xff]
      %v1213 = vunpack.c.l.b16 %v1197
      %v1214 = vunpack.c.h.b16 %v1197
      %v1215 = vunpack.c.l.b16 %v1198
      %v1216 = vunpack.c.h.b16 %v1198
      %v1217 = vunpack.c.l.b16 %v1199
      %v1218 = vunpack.c.h.b16 %v1199
      %v1219 = vunpack.c.l.b16 %v1200
      %v1220 = vunpack.c.h.b16 %v1200
      %v1221 = vunpack.c.l.b16 %v1201
      %v1222 = vunpack.c.h.b16 %v1201
      %v1223 = vunpack.c.l.b16 %v1202
      %v1224 = vunpack.c.h.b16 %v1202
      %v1225 = vunpack.c.l.b16 %v1203
      %v1226 = vunpack.c.h.b16 %v1203
      %v1227 = vunpack.c.l.b16 %v1204
      %v1228 = vunpack.c.h.b16 %v1204
      %v1229 = vpack.c.b16 %v1215, %v1213
      %v1230 = vpack.c.b16 %v1216, %v1214
      %v1231 = vpack.c.b16 %v1219, %v1217
      %v1232 = vpack.c.b16 %v1220, %v1218
      %v1233 = vpack.c.b16 %v1223, %v1221
      %v1234 = vpack.c.b16 %v1224, %v1222
      %v1235 = vpack.c.b16 %v1227, %v1225
      %v1236 = vpack.c.b16 %v1228, %v1226
      %1237 = vrot.lane.b32.xlu0 %v1229, 110
      %v1238 = vpop.permute.xlu0 %1237
      %1239 = vrot.lane.b32.xlu0 %v1230, 110
      %v1240 = vpop.permute.xlu0 %1239
      %1241 = vrot.lane.b32.xlu0 %v1231, 110
      %v1242 = vpop.permute.xlu0 %1241
      %1243 = vrot.lane.b32.xlu0 %v1232, 110
      %v1244 = vpop.permute.xlu0 %1243
      %1245 = vrot.lane.b32.xlu0 %v1233, 110
      %v1246 = vpop.permute.xlu0 %1245
      %1247 = vrot.lane.b32.xlu0 %v1234, 110
      %v1248 = vpop.permute.xlu0 %1247
      %1249 = vrot.lane.b32.xlu0 %v1235, 110
      %v1250 = vpop.permute.xlu0 %1249
      %1251 = vrot.lane.b32.xlu0 %v1236, 110
      %v1252 = vpop.permute.xlu0 %1251
      %vm1253 = vcmask 900096
      %v1254 = vsel %vm1253, %v1238, %v1240
      %v1255 = vsel %vm1253, %v1242, %v1244
      %v1256 = vsel %vm1253, %v1246, %v1248
      %v1257 = vsel %vm1253, %v1250, %v1252
      %1262 = vst [vmem:[#allocation2 + $0x1e0] sm:$0xff] %v1254
      %1263 = vst [vmem:[#allocation2 + $0x1e8] sm:$0xff] %v1255
      %1264 = vst [vmem:[#allocation2 + $0x1f0] sm:$0xff] %v1256
      %1265 = vst [vmem:[#allocation2 + $0x1f8] sm:$0xff] %v1257
      %v1266 = vld [vmem:[%s1] sm:$0xff]
      %v1267 = vld [vmem:[%s1 + $0x8] sm:$0xff]
      %v1268 = vld [vmem:[%s1 + $0x10] sm:$0xff]
      %v1269 = vld [vmem:[%s1 + $0x18] sm:$0xff]
      %v1270 = vld [vmem:[#allocation2] sm:$0xff]
      %v1271 = vld [vmem:[#allocation2 + $0x8] sm:$0xff]
      %v1272 = vld [vmem:[#allocation2 + $0x10] sm:$0xff]
      %v1273 = vld [vmem:[#allocation2 + $0x18] sm:$0xff]
      %v1274 = vld [vmem:[#allocation2 + $0x20] sm:$0xff]
      %v1275 = vld [vmem:[#allocation2 + $0x28] sm:$0xff]
      %v1276 = vld [vmem:[#allocation2 + $0x30] sm:$0xff]
      %v1277 = vld [vmem:[#allocation2 + $0x38] sm:$0xff]
      %v1278 = vld [vmem:[#allocation2 + $0x40] sm:$0xff]
      %v1279 = vld [vmem:[#allocation2 + $0x48] sm:$0xff]
      %v1280 = vld [vmem:[#allocation2 + $0x50] sm:$0xff]
      %v1281 = vld [vmem:[#allocation2 + $0x58] sm:$0xff]
      %v1282 = vld [vmem:[#allocation2 + $0x60] sm:$0xff]
      %v1283 = vld [vmem:[#allocation2 + $0x68] sm:$0xff]
      %v1284 = vld [vmem:[#allocation2 + $0x70] sm:$0xff]
      %v1285 = vld [vmem:[#allocation2 + $0x78] sm:$0xff]
      %v1286 = vld [vmem:[#allocation2 + $0x80] sm:$0xff]
      %v1287 = vld [vmem:[#allocation2 + $0x88] sm:$0xff]
      %v1288 = vld [vmem:[#allocation2 + $0x90] sm:$0xff]
      %v1289 = vld [vmem:[#allocation2 + $0x98] sm:$0xff]
      %v1290 = vld [vmem:[#allocation2 + $0xa0] sm:$0xff]
      %v1291 = vld [vmem:[#allocation2 + $0xa8] sm:$0xff]
      %v1292 = vld [vmem:[#allocation2 + $0xb0] sm:$0xff]
      %v1293 = vld [vmem:[#allocation2 + $0xb8] sm:$0xff]
      %v1294 = vld [vmem:[#allocation2 + $0xc0] sm:$0xff]
      %v1295 = vld [vmem:[#allocation2 + $0xc8] sm:$0xff]
      %v1296 = vld [vmem:[#allocation2 + $0xd0] sm:$0xff]
      %v1297 = vld [vmem:[#allocation2 + $0xd8] sm:$0xff]
      %v1298 = vld [vmem:[#allocation2 + $0xe0] sm:$0xff]
      %v1299 = vld [vmem:[#allocation2 + $0xe8] sm:$0xff]
      %v1300 = vld [vmem:[#allocation2 + $0xf0] sm:$0xff]
      %v1301 = vld [vmem:[#allocation2 + $0xf8] sm:$0xff]
      %v1302 = vld [vmem:[#allocation2 + $0x100] sm:$0xff]
      %v1303 = vld [vmem:[#allocation2 + $0x108] sm:$0xff]
      %v1304 = vld [vmem:[#allocation2 + $0x110] sm:$0xff]
      %v1305 = vld [vmem:[#allocation2 + $0x118] sm:$0xff]
      %v1306 = vld [vmem:[#allocation2 + $0x120] sm:$0xff]
      %v1307 = vld [vmem:[#allocation2 + $0x128] sm:$0xff]
      %v1308 = vld [vmem:[#allocation2 + $0x130] sm:$0xff]
      %v1309 = vld [vmem:[#allocation2 + $0x138] sm:$0xff]
      %v1310 = vld [vmem:[#allocation2 + $0x140] sm:$0xff]
      %v1311 = vld [vmem:[#allocation2 + $0x148] sm:$0xff]
      %v1312 = vld [vmem:[#allocation2 + $0x150] sm:$0xff]
      %v1313 = vld [vmem:[#allocation2 + $0x158] sm:$0xff]
      %v1314 = vld [vmem:[#allocation2 + $0x160] sm:$0xff]
      %v1315 = vld [vmem:[#allocation2 + $0x168] sm:$0xff]
      %v1316 = vld [vmem:[#allocation2 + $0x170] sm:$0xff]
      %v1317 = vld [vmem:[#allocation2 + $0x178] sm:$0xff]
      %v1318 = vld [vmem:[#allocation2 + $0x180] sm:$0xff]
      %v1319 = vld [vmem:[#allocation2 + $0x188] sm:$0xff]
      %v1320 = vld [vmem:[#allocation2 + $0x190] sm:$0xff]
      %v1321 = vld [vmem:[#allocation2 + $0x198] sm:$0xff]
      %v1322 = vld [vmem:[#allocation2 + $0x1a0] sm:$0xff]
      %v1323 = vld [vmem:[#allocation2 + $0x1a8] sm:$0xff]
      %v1324 = vld [vmem:[#allocation2 + $0x1b0] sm:$0xff]
      %v1325 = vld [vmem:[#allocation2 + $0x1b8] sm:$0xff]
      %v1326 = vld [vmem:[#allocation2 + $0x1c0] sm:$0xff]
      %v1327 = vld [vmem:[#allocation2 + $0x1c8] sm:$0xff]
      %v1328 = vld [vmem:[#allocation2 + $0x1d0] sm:$0xff]
      %v1329 = vld [vmem:[#allocation2 + $0x1d8] sm:$0xff]
      %v1330 = vld [vmem:[#allocation2 + $0x1e0] sm:$0xff]
      %v1331 = vld [vmem:[#allocation2 + $0x1e8] sm:$0xff]
      %v1332 = vld [vmem:[#allocation2 + $0x1f0] sm:$0xff]
      %v1333 = vld [vmem:[#allocation2 + $0x1f8] sm:$0xff]
      %v1334 = vld [vmem:[%s2] sm:$0xff]
      %1336 = vset.pattern.permute.xlu0 0
      %1337 = vperm.xlu0 %1336, %v1334
      %v1338 = vpop.permute.xlu0 %1337
      %v1344 = vunpack.c.l.b16 %v1266
      %v1345 = vunpack.c.h.b16 %v1266
      %v1346 = vunpack.c.l.b16 %v1267
      %v1347 = vunpack.c.h.b16 %v1267
      %v1348 = vunpack.c.l.b16 %v1268
      %v1349 = vunpack.c.h.b16 %v1268
      %v1350 = vunpack.c.l.b16 %v1269
      %v1351 = vunpack.c.h.b16 %v1269
      %v1352 = vpack.c.b16 %v1344, %v1344
      %v1353 = vpack.c.b16 %v1345, %v1345
      %v1354 = vpack.c.b16 %v1346, %v1346
      %v1355 = vpack.c.b16 %v1347, %v1347
      %v1356 = vpack.c.b16 %v1348, %v1348
      %v1357 = vpack.c.b16 %v1349, %v1349
      %v1358 = vpack.c.b16 %v1350, %v1350
      %v1359 = vpack.c.b16 %v1351, %v1351
      %1368 = vmatprep.subr.bf16.mxu0 0
      %1369 = vmatpush1.bf16.msra.mxu0 %v1270
      %1370 = vmatprep.subr.bf16.mxu0 0
      %1371 = vmatpush1.bf16.msra.mxu0 %v1271
      %1372 = vmatprep.subr.bf16.mxu0 0
      %1373 = vmatpush1.bf16.msra.mxu0 %v1272
      %1374 = vmatprep.subr.bf16.mxu0 0
      %1375 = vmatpush1.bf16.msra.mxu0 %v1273
      %1376 = vmatprep.subr.bf16.mxu0 0
      %1377 = vmatpush1.bf16.msra.mxu0 %v1274
      %1378 = vmatprep.subr.bf16.mxu0 0
      %1379 = vmatpush1.bf16.msra.mxu0 %v1275
      %1380 = vmatprep.subr.bf16.mxu0 0
      %1381 = vmatpush1.bf16.msra.mxu0 %v1276
      %1382 = vmatprep.subr.bf16.mxu0 0
      %1383 = vmatpush1.bf16.msra.mxu0 %v1277
      %1384 = vmatprep.subr.bf16.mxu0 0
      %1385 = vmatpush1.bf16.msra.mxu0 %v1278
      %1386 = vmatprep.subr.bf16.mxu0 0
      %1387 = vmatpush1.bf16.msra.mxu0 %v1279
      %1388 = vmatprep.subr.bf16.mxu0 0
      %1389 = vmatpush1.bf16.msra.mxu0 %v1280
      %1390 = vmatprep.subr.bf16.mxu0 0
      %1391 = vmatpush1.bf16.msra.mxu0 %v1281
      %1392 = vmatprep.subr.bf16.mxu0 0
      %1393 = vmatpush1.bf16.msra.mxu0 %v1282
      %1394 = vmatprep.subr.bf16.mxu0 0
      %1395 = vmatpush1.bf16.msra.mxu0 %v1283
      %1396 = vmatprep.subr.bf16.mxu0 0
      %1397 = vmatpush1.bf16.msra.mxu0 %v1284
      %1398 = vmatprep.subr.bf16.mxu0 0
      %1399 = vmatpush1.bf16.msra.mxu0 %v1285
      %1400 = vmatprep.mubr.bf16.mxu0 %v1353
      %1401 = vmatmul.mubr.bf16.gmra.mrb[0].mxu0 %v1352
      %v1402 = vpop.f32.mrb[0].mxu0
      %v1403 = vadd.f32 %v1338, %v1402
      %v1404 = vpop.f32.mrb[0].mxu0
      %v1405 = vpop.f32.mrb[0].mxu0
      %v1406 = vpop.f32.mrb[0].mxu0
      %1407 = vdwg.mxu0
      %1408 = vmatprep.subr.bf16.mxu0 0
      %1409 = vmatpush1.bf16.msra.mxu0 %v1286
      %1410 = vmatprep.subr.bf16.mxu0 0
      %1411 = vmatpush1.bf16.msra.mxu0 %v1287
      %1412 = vmatprep.subr.bf16.mxu0 0
      %1413 = vmatpush1.bf16.msra.mxu0 %v1288
      %1414 = vmatprep.subr.bf16.mxu0 0
      %1415 = vmatpush1.bf16.msra.mxu0 %v1289
      %1416 = vmatprep.subr.bf16.mxu0 0
      %1417 = vmatpush1.bf16.msra.mxu0 %v1290
      %1418 = vmatprep.subr.bf16.mxu0 0
      %1419 = vmatpush1.bf16.msra.mxu0 %v1291
      %1420 = vmatprep.subr.bf16.mxu0 0
      %1421 = vmatpush1.bf16.msra.mxu0 %v1292
      %1422 = vmatprep.subr.bf16.mxu0 0
      %1423 = vmatpush1.bf16.msra.mxu0 %v1293
      %1424 = vmatprep.subr.bf16.mxu0 0
      %1425 = vmatpush1.bf16.msra.mxu0 %v1294
      %1426 = vmatprep.subr.bf16.mxu0 0
      %1427 = vmatpush1.bf16.msra.mxu0 %v1295
      %1428 = vmatprep.subr.bf16.mxu0 0
      %1429 = vmatpush1.bf16.msra.mxu0 %v1296
      %1430 = vmatprep.subr.bf16.mxu0 0
      %1431 = vmatpush1.bf16.msra.mxu0 %v1297
      %1432 = vmatprep.subr.bf16.mxu0 0
      %1433 = vmatpush1.bf16.msra.mxu0 %v1298
      %1434 = vmatprep.subr.bf16.mxu0 0
      %1435 = vmatpush1.bf16.msra.mxu0 %v1299
      %1436 = vmatprep.subr.bf16.mxu0 0
      %1437 = vmatpush1.bf16.msra.mxu0 %v1300
      %1438 = vmatprep.subr.bf16.mxu0 0
      %1439 = vmatpush1.bf16.msra.mxu0 %v1301
      %1440 = vmatprep.mubr.bf16.mxu0 %v1355
      %1441 = vmatmul.mubr.bf16.gmra.mrb[0].mxu0 %v1354
      %v1442 = vpop.f32.mrb[0].mxu0
      %v1443 = vadd.f32 %v1403, %v1442
      %v1444 = vpop.f32.mrb[0].mxu0
      %v1445 = vpop.f32.mrb[0].mxu0
      %v1446 = vpop.f32.mrb[0].mxu0
      %1447 = vdwg.mxu0
      %1448 = vmatprep.subr.bf16.mxu0 0
      %1449 = vmatpush1.bf16.msra.mxu0 %v1302
      %1450 = vmatprep.subr.bf16.mxu0 0
      %1451 = vmatpush1.bf16.msra.mxu0 %v1303
      %1452 = vmatprep.subr.bf16.mxu0 0
      %1453 = vmatpush1.bf16.msra.mxu0 %v1304
      %1454 = vmatprep.subr.bf16.mxu0 0
      %1455 = vmatpush1.bf16.msra.mxu0 %v1305
      %1456 = vmatprep.subr.bf16.mxu0 0
      %1457 = vmatpush1.bf16.msra.mxu0 %v1306
      %1458 = vmatprep.subr.bf16.mxu0 0
      %1459 = vmatpush1.bf16.msra.mxu0 %v1307
      %1460 = vmatprep.subr.bf16.mxu0 0
      %1461 = vmatpush1.bf16.msra.mxu0 %v1308
      %1462 = vmatprep.subr.bf16.mxu0 0
      %1463 = vmatpush1.bf16.msra.mxu0 %v1309
      %1464 = vmatprep.subr.bf16.mxu0 0
      %1465 = vmatpush1.bf16.msra.mxu0 %v1310
      %1466 = vmatprep.subr.bf16.mxu0 0
      %1467 = vmatpush1.bf16.msra.mxu0 %v1311
      %1468 = vmatprep.subr.bf16.mxu0 0
      %1469 = vmatpush1.bf16.msra.mxu0 %v1312
      %1470 = vmatprep.subr.bf16.mxu0 0
      %1471 = vmatpush1.bf16.msra.mxu0 %v1313
      %1472 = vmatprep.subr.bf16.mxu0 0
      %1473 = vmatpush1.bf16.msra.mxu0 %v1314
      %1474 = vmatprep.subr.bf16.mxu0 0
      %1475 = vmatpush1.bf16.msra.mxu0 %v1315
      %1476 = vmatprep.subr.bf16.mxu0 0
      %1477 = vmatpush1.bf16.msra.mxu0 %v1316
      %1478 = vmatprep.subr.bf16.mxu0 0
      %1479 = vmatpush1.bf16.msra.mxu0 %v1317
      %1480 = vmatprep.mubr.bf16.mxu0 %v1357
      %1481 = vmatmul.mubr.bf16.gmra.mrb[0].mxu0 %v1356
      %v1482 = vpop.f32.mrb[0].mxu0
      %v1483 = vadd.f32 %v1443, %v1482
      %v1484 = vpop.f32.mrb[0].mxu0
      %v1485 = vpop.f32.mrb[0].mxu0
      %v1486 = vpop.f32.mrb[0].mxu0
      %1487 = vdwg.mxu0
      %1488 = vmatprep.subr.bf16.mxu0 0
      %1489 = vmatpush1.bf16.msra.mxu0 %v1318
      %1490 = vmatprep.subr.bf16.mxu0 0
      %1491 = vmatpush1.bf16.msra.mxu0 %v1319
      %1492 = vmatprep.subr.bf16.mxu0 0
      %1493 = vmatpush1.bf16.msra.mxu0 %v1320
      %1494 = vmatprep.subr.bf16.mxu0 0
      %1495 = vmatpush1.bf16.msra.mxu0 %v1321
      %1496 = vmatprep.subr.bf16.mxu0 0
      %1497 = vmatpush1.bf16.msra.mxu0 %v1322
      %1498 = vmatprep.subr.bf16.mxu0 0
      %1499 = vmatpush1.bf16.msra.mxu0 %v1323
      %1500 = vmatprep.subr.bf16.mxu0 0
      %1501 = vmatpush1.bf16.msra.mxu0 %v1324
      %1502 = vmatprep.subr.bf16.mxu0 0
      %1503 = vmatpush1.bf16.msra.mxu0 %v1325
      %1504 = vmatprep.subr.bf16.mxu0 0
      %1505 = vmatpush1.bf16.msra.mxu0 %v1326
      %1506 = vmatprep.subr.bf16.mxu0 0
      %1507 = vmatpush1.bf16.msra.mxu0 %v1327
      %1508 = vmatprep.subr.bf16.mxu0 0
      %1509 = vmatpush1.bf16.msra.mxu0 %v1328
      %1510 = vmatprep.subr.bf16.mxu0 0
      %1511 = vmatpush1.bf16.msra.mxu0 %v1329
      %1512 = vmatprep.subr.bf16.mxu0 0
      %1513 = vmatpush1.bf16.msra.mxu0 %v1330
      %1514 = vmatprep.subr.bf16.mxu0 0
      %1515 = vmatpush1.bf16.msra.mxu0 %v1331
      %1516 = vmatprep.subr.bf16.mxu0 0
      %1517 = vmatpush1.bf16.msra.mxu0 %v1332
      %1518 = vmatprep.subr.bf16.mxu0 0
      %1519 = vmatpush1.bf16.msra.mxu0 %v1333
      %1520 = vmatprep.mubr.bf16.mxu0 %v1359
      %1521 = vmatmul.mubr.bf16.gmra.mrb[0].mxu0 %v1358
      %v1522 = vpop.f32.mrb[0].mxu0
      %v1523 = vadd.f32 %v1483, %v1522
      %v1524 = vpop.f32.mrb[0].mxu0
      %v1525 = vpop.f32.mrb[0].mxu0
      %v1526 = vpop.f32.mrb[0].mxu0
      %1527 = vdwg.mxu0
      %v1528 = vmul.f32 %v1523, 0.5
      %v1529 = vtanh.pop %v1528
      %v1530 = vadd.f32 %v1529, 1.0
      %v1531 = vmul.f32 %v1530, 0.5
      %1532 = vst [vmem:[%s193] sm:$0x1] %v1531
      %p1533 = scmp.lt.s32.totalorder %s15, 1
      %s1534 = scalar_select %p1533, %s15, 1
      %s1535 = scalar_lea.vmem %s4, %s1534
      // Predicated region
      $region37: #{discriminator_forward.9} parent=35 // pred_check
        %p1536 = pneg %p122
      $region38: #{discriminator_forward.9} parent=35 // pred_check_branch
        %1538 = sbr.rel (%p1536) target = $region40
      $region39: #{discriminator_forward.9} parent=35 // pred_region
        _
      $region40: #{discriminator_forward.9} parent=35 // pred_fallthru
        _
    $region36: #{discriminator_forward.9} parent=5 // pred_fallthru
      _
    %p1539 = scmp.le.s32.totalorder 2, %s10
    // Predicated region
    $region41: #{discriminator_forward.9} parent=5 // pred_check
      %p1540 = pneg %p1539
    $region42: #{discriminator_forward.9} parent=5 // pred_check_branch
      %1542 = sbr.rel (%p1540) target = $region44
    $region43: #{discriminator_forward.9} parent=5 // pred_region
      %s1543 = ssub.s32 %s10, 2
      // Predicated region
      $region45: #{discriminator_forward.9} parent=43 // pred_check
        %p1544 = pneg %p128
      $region46: #{discriminator_forward.9} parent=43 // pred_check_branch
        %1546 = sbr.rel (%p1544) target = $region48
      $region47: #{discriminator_forward.9} parent=43 // pred_region
        %p1547 = scmp.lt.s32.totalorder %s16, 1
        %s1548 = scalar_select %p1547, %s16, 1
        %s1549 = scalar_lea.vmem %s4, %s1548
      $region48: #{discriminator_forward.9} parent=43 // pred_fallthru
        _
    $region44: #{discriminator_forward.9} parent=5 // pred_fallthru
      _
  $region6: #{discriminator_forward.9} parent=0 // loop_footer
    %s14 = sadd.s32 1, %s10
  $region7: #{discriminator_forward.9} parent=0 // loop_footer_branch
    %9 = sbr.rel target = $region3
  $region8: #{discriminator_forward.9} parent=0 // loop_exit
    _

</llo_original>
